<compile_context>
chip_gen: v6e
topology: v6e:2x2x1
jax: 0.10.0
libtpu: 0.0.40
codegen_flags: <defaults>
</compile_context>

<pallas_src>
import functools
import math

import jax
import jax.numpy as jnp
from jax.experimental import pallas as pl
from jax.experimental.pallas import tpu as pltpu


C_IN, C1, C2 = 128, 256, 512
N_CLASSES, N_PAD = 10, 128
NEG_INF = -1e30


# ---------------------------------------------------------------------------
# Fused Pallas kernel: whole M2 forward on VMEM-resident data
# ---------------------------------------------------------------------------
def _m2_fused_kernel(xp_ref, w1_ref, b1_ref, w2_ref, b2_ref, w3_ref, b3_ref,
                     wf_ref, bf_ref, out_ref, pool_scr, a2_scr, *, B, H, W):
    """
    xp_ref  : (B, H+2, W+2, C_IN) f32   zero-padded NHWC input
    w1_ref  : (9*C_IN, C1) bf16         conv1 weights, (i, j, cin) row order
    w2_ref  : (9*C1,  C2) bf16          conv2 weights, (i, j, cin) row order
    w3_ref  : (C2, C2)    bf16          conv3 (1x1) weights
    wf_ref  : (C2, N_PAD) bf16          fc weights, lane-padded to 128
    b*_ref  : (1, ·) f32                biases (fc bias padded with -1e30)
    out_ref : (B, N_PAD) f32            log-probs (lanes >= 10 are padding)
    pool_scr: (B*Hp*Wp, C1) f32         max-pooled conv1 activations (flat)
    a2_scr  : (B*Ho*Wo, 9*C1) f32       conv2 im2col patch matrix
    """
    Hp, Wp = H // 2, W // 2          # after 2x2 max pool
    Ho, Wo = Hp - 2, Wp - 2          # after 3x3 valid conv2

    # ---- conv1: 3x3 / pad=1, C_IN -> C1.  Implicit im2col: 9 per-tap
    #      bf16 MXU dots accumulated in f32.
    acc = jnp.zeros((B * H * W, C1), jnp.float32)
    for t in range(9):
        i, j = t // 3, t % 3
        a = xp_ref[:, i:i + H, j:j + W, :].reshape(B * H * W, C_IN)
        acc = acc + jnp.dot(a.astype(jnp.bfloat16),
                            w1_ref[t * C_IN:(t + 1) * C_IN, :],
                            preferred_element_type=jnp.float32)
    y1 = jnp.maximum(acc + b1_ref[...], 0.0).reshape(B, H, W, C1)

    # ---- 2x2 max pool fused epilogue -> pool_scr row = b*Hp*Wp + hp*Wp + wp
    for hp in range(Hp):
        hrow = jnp.maximum(y1[:, 2 * hp, :, :], y1[:, 2 * hp + 1, :, :])  # (B, W, C1)
        for wp in range(Wp):
            v = jnp.maximum(hrow[:, 2 * wp, :], hrow[:, 2 * wp + 1, :])   # (B, C1)
            for b in range(B):
                r = b * Hp * Wp + hp * Wp + wp
                pool_scr[r:r + 1, :] = v[b:b + 1, :]

    # ---- conv2: 3x3 / valid, C1 -> C2.  Assemble the (B*Ho*Wo, 9*C1) patch
    #      matrix in VMEM with contiguous row copies, then one MXU dot.
    for t in range(9):
        i, j = t // 3, t % 3
        for b in range(B):
            for ho in range(Ho):
                src = b * Hp * Wp + (ho + i) * Wp + j
                dst = b * Ho * Wo + ho * Wo
                a2_scr[dst:dst + Wo, t * C1:(t + 1) * C1] = pool_scr[src:src + Wo, :]
    z = jnp.dot(a2_scr[...].astype(jnp.bfloat16), w2_ref[...],
                preferred_element_type=jnp.float32)
    z = jnp.maximum(z + b2_ref[...], 0.0)                    # (B*Ho*Wo, C2)

    # ---- conv3 (1x1, C2 -> C2) applied twice with shared weights (per spec)
    w3 = w3_ref[...]
    b3 = b3_ref[...]
    for _ in range(2):
        z = jnp.dot(z.astype(jnp.bfloat16), w3, preferred_element_type=jnp.float32)
        z = jnp.maximum(z + b3, 0.0)

    # ---- global average pool + fc (lane-dense, padded) + log_softmax
    wf = wf_ref[...]
    bf = bf_ref[...]
    for b in range(B):
        gb = jnp.mean(z[b * Ho * Wo:(b + 1) * Ho * Wo, :], axis=0, keepdims=True)
        logit = jnp.dot(gb.astype(jnp.bfloat16), wf,
                        preferred_element_type=jnp.float32) + bf       # (1, N_PAD)
        m = jnp.max(logit, axis=-1, keepdims=True)
        s = logit - m
        lse = jnp.log(jnp.sum(jnp.exp(s), axis=-1, keepdims=True))
        out_ref[b:b + 1, :] = (s - lse).astype(out_ref.dtype)


# ---------------------------------------------------------------------------
# Wrapper
# ---------------------------------------------------------------------------
def m2_forward(x_nchw, prep):
    B, C, H, W = x_nchw.shape
    assert C == C_IN and H % 2 == 0 and W % 2 == 0 and H // 2 >= 3 and W // 2 >= 3
    Hp, Wp = H // 2, W // 2
    Ho, Wo = Hp - 2, Wp - 2

    # Layout plumbing only: NCHW -> NHWC and zero padding for conv1's pad=1.
    x = jnp.transpose(x_nchw, (0, 2, 3, 1)).astype(jnp.float32)
    xp = jnp.pad(x, ((0, 0), (1, 1), (1, 1), (0, 0)))

    kernel = functools.partial(_m2_fused_kernel, B=B, H=H, W=W)
    vmem = pl.BlockSpec(memory_space=pltpu.MemorySpace.VMEM)
    out = pl.pallas_call(
        kernel,
        out_shape=jax.ShapeDtypeStruct((B, N_PAD), jnp.float32),
        in_specs=[vmem] * 9,
        out_specs=vmem,
        scratch_shapes=[
            pltpu.VMEM((B * Hp * Wp, C1), jnp.float32),       # pooled map (flat)
            pltpu.VMEM((B * Ho * Wo, 9 * C1), jnp.float32),   # conv2 patches
        ],
    )(xp, prep["w1"], prep["b1"], prep["w2"], prep["b2"],
      prep["w3"], prep["b3"], prep["w_fc"], prep["b_fc"])
    return out[:, :N_CLASSES]


def prepare_params(params):
    """One-time conversion of PyTorch-layout params to matmul-ready layout."""
    def conv_mat(w):  # OIHW -> (kh*kw*Cin, Cout), rows ordered (i, j, cin)
        co, ci, kh, kw = w.shape
        return jnp.transpose(w, (2, 3, 1, 0)).reshape(kh * kw * ci, co).astype(jnp.bfloat16)

    wf = jnp.zeros((params["fc_w"].shape[1], N_PAD), jnp.float32)
    wf = wf.at[:, :N_CLASSES].set(params["fc_w"].T).astype(jnp.bfloat16)
    bf = jnp.full((1, N_PAD), NEG_INF, jnp.float32)
    bf = bf.at[0, :N_CLASSES].set(params["fc_b"])
    return dict(
        w1=conv_mat(params["w1"]), b1=params["b1"].reshape(1, -1).astype(jnp.float32),
        w2=conv_mat(params["w2"]), b2=params["b2"].reshape(1, -1).astype(jnp.float32),
        w3=conv_mat(params["w3"]), b3=params["b3"].reshape(1, -1).astype(jnp.float32),
        w_fc=wf, b_fc=bf)


# ---------------------------------------------------------------------------
# Pure-JAX reference (same bf16 weights) for validation
# ---------------------------------------------------------------------------
def m2_reference(x_nchw, prep):
    B, C, H, W = x_nchw.shape
    x = jnp.transpose(x_nchw, (0, 2, 3, 1)).astype(jnp.float32)
    xp = jnp.pad(x, ((0, 0), (1, 1), (1, 1), (0, 0)))
    cols = [xp[:, i:i + H, j:j + W, :] for i in range(3) for j in range(3)]
    a = jnp.concatenate(cols, axis=-1).reshape(B * H * W, 9 * C)
    y = jnp.dot(a.astype(jnp.bfloat16), prep["w1"],
                preferred_element_type=jnp.float32) + prep["b1"]
    y = jnp.maximum(y, 0.0).reshape(B, H, W, C1)
    y = jnp.maximum(jnp.maximum(y[:, 0::2, 0::2, :], y[:, 0::2, 1::2, :]),
                    jnp.maximum(y[:, 1::2, 0::2, :], y[:, 1::2, 1::2, :]))
    Hp, Wp = H // 2, W // 2
    Ho, Wo = Hp - 2, Wp - 2
    cols = [y[:, i:i + Ho, j:j + Wo, :] for i in range(3) for j in range(3)]
    a = jnp.concatenate(cols, axis=-1).reshape(B * Ho * Wo, 9 * C1)
    z = jnp.maximum(jnp.dot(a.astype(jnp.bfloat16), prep["w2"],
                            preferred_element_type=jnp.float32) + prep["b2"], 0.0)
    for _ in range(2):
        z = jnp.maximum(jnp.dot(z.astype(jnp.bfloat16), prep["w3"],
                                preferred_element_type=jnp.float32) + prep["b3"], 0.0)
    g = jnp.mean(z.reshape(B, Ho * Wo, C2), axis=1)
    logits = jnp.dot(g.astype(jnp.bfloat16), prep["w_fc"],
                     preferred_element_type=jnp.float32) + prep["b_fc"]
    return jax.nn.log_softmax(logits[:, :N_CLASSES], axis=-1)


def init_params(key):
    ks = jax.random.split(key, 8)

    def conv_init(kw_key, kb_key, cout, cin, kh, kw):
        fan_in = cin * kh * kw
        w = jax.random.normal(kw_key, (cout, cin, kh, kw), jnp.float32) / math.sqrt(fan_in)
        b = jax.random.normal(kb_key, (cout,), jnp.float32) * 0.01
        return w, b

    w1, b1 = conv_init(ks[0], ks[1], C1, C_IN, 3, 3)
    w2, b2 = conv_init(ks[2], ks[3], C2, C1, 3, 3)
    w3, b3 = conv_init(ks[4], ks[5], C2, C2, 1, 1)
    fc_w = jax.random.normal(ks[6], (N_CLASSES, C2), jnp.float32) / math.sqrt(C2)
    fc_b = jax.random.normal(ks[7], (N_CLASSES,), jnp.float32) * 0.01
    return dict(w1=w1, b1=b1, w2=w2, b2=b2, w3=w3, b3=b3, fc_w=fc_w, fc_b=fc_b)


if __name__ == "__main__":
    key = jax.random.PRNGKey(0)
    pkey, xkey = jax.random.split(key)
    params = init_params(pkey)
    prep = prepare_params(params)                 # one-time, outside jit

    # Small input consistent with the module: batch=2, 128 channels, 8x8 spatial.
    x = jax.random.normal(xkey, (2, C_IN, 8, 8), jnp.float32)

    out = jax.jit(m2_forward)(x, prep)
    out = jax.block_until_ready(out)
    assert out.shape == (2, N_CLASSES), out.shape

    # LogSoftmax rows must exp-sum to 1.
    row_sums = jnp.sum(jnp.exp(out), axis=1)
    assert bool(jnp.all(jnp.abs(row_sums - 1.0) < 1e-4)), row_sums

    # Cross-check against a pure-JAX reference using the same bf16 weights.
    ref = jax.block_until_ready(jax.jit(m2_reference)(x, prep))
    assert bool(jnp.all(jnp.abs(out - ref) < 2e-2)), float(jnp.max(jnp.abs(out - ref)))

    print("KERNEL_OK")
</pallas_src>

<mosaic_0001>
module attributes {stable_mosaic.version = 11 : i64} {
  func.func @_m2_fused_kernel(%arg0: memref<2x10x10x128xf32, #tpu.memory_space<vmem>>, %arg1: memref<1152x256xbf16, #tpu.memory_space<vmem>>, %arg2: memref<1x256xf32, #tpu.memory_space<vmem>>, %arg3: memref<2304x512xbf16, #tpu.memory_space<vmem>>, %arg4: memref<1x512xf32, #tpu.memory_space<vmem>>, %arg5: memref<512x512xbf16, #tpu.memory_space<vmem>>, %arg6: memref<1x512xf32, #tpu.memory_space<vmem>>, %arg7: memref<512x128xbf16, #tpu.memory_space<vmem>>, %arg8: memref<1x128xf32, #tpu.memory_space<vmem>>, %arg9: memref<2x128xf32, #tpu.memory_space<vmem>>, %arg10: memref<32x256xf32, #tpu.memory_space<vmem>>, %arg11: memref<8x2304xf32, #tpu.memory_space<vmem>>) attributes {dimension_semantics = [], scalar_prefetch = 0 : i64, scratch_operands = 2 : i64, tpu.core_type = #tpu.core_type<tc>} {
    %cst = arith.constant 0.000000e+00 : f32
    %0 = vector.broadcast %cst : f32 to vector<128x256xf32>
    %c0 = arith.constant 0 : index
    %c0_0 = arith.constant 0 : index
    %c0_1 = arith.constant 0 : index
    %c0_2 = arith.constant 0 : index
    %1 = vector.load %arg0[%c0, %c0_0, %c0_1, %c0_2] : memref<2x10x10x128xf32, #tpu.memory_space<vmem>>, vector<2x8x8x128xf32>
    %2 = vector.shape_cast %1 : vector<2x8x8x128xf32> to vector<128x128xf32>
    %3 = arith.truncf %2 : vector<128x128xf32> to vector<128x128xbf16>
    %c0_3 = arith.constant 0 : index
    %c0_4 = arith.constant 0 : index
    %4 = vector.load %arg1[%c0_3, %c0_4] : memref<1152x256xbf16, #tpu.memory_space<vmem>>, vector<128x256xbf16>
    %cst_5 = arith.constant dense<0.000000e+00> : vector<128x256xf32>
    %5 = tpu.matmul %3, %4, %cst_5 {dimension_numbers = #tpu.dot_dimension_numbers<[1], [0], [0], [1], [0, 0, 1, 1], [], []>} : vector<128x128xbf16>, vector<128x256xbf16>, vector<128x256xf32> -> vector<128x256xf32>
    %6 = arith.addf %0, %5 : vector<128x256xf32>
    %c0_6 = arith.constant 0 : index
    %c0_7 = arith.constant 0 : index
    %c1 = arith.constant 1 : index
    %c0_8 = arith.constant 0 : index
    %7 = vector.load %arg0[%c0_6, %c0_7, %c1, %c0_8] : memref<2x10x10x128xf32, #tpu.memory_space<vmem>>, vector<2x8x8x128xf32>
    %8 = vector.shape_cast %7 : vector<2x8x8x128xf32> to vector<128x128xf32>
    %9 = arith.truncf %8 : vector<128x128xf32> to vector<128x128xbf16>
    %c128 = arith.constant 128 : index
    %c0_9 = arith.constant 0 : index
    %10 = vector.load %arg1[%c128, %c0_9] : memref<1152x256xbf16, #tpu.memory_space<vmem>>, vector<128x256xbf16>
    %cst_10 = arith.constant dense<0.000000e+00> : vector<128x256xf32>
    %11 = tpu.matmul %9, %10, %cst_10 {dimension_numbers = #tpu.dot_dimension_numbers<[1], [0], [0], [1], [0, 0, 1, 1], [], []>} : vector<128x128xbf16>, vector<128x256xbf16>, vector<128x256xf32> -> vector<128x256xf32>
    %12 = arith.addf %6, %11 : vector<128x256xf32>
    %c0_11 = arith.constant 0 : index
    %c0_12 = arith.constant 0 : index
    %c2 = arith.constant 2 : index
    %c0_13 = arith.constant 0 : index
    %13 = vector.load %arg0[%c0_11, %c0_12, %c2, %c0_13] : memref<2x10x10x128xf32, #tpu.memory_space<vmem>>, vector<2x8x8x128xf32>
    %14 = vector.shape_cast %13 : vector<2x8x8x128xf32> to vector<128x128xf32>
    %15 = arith.truncf %14 : vector<128x128xf32> to vector<128x128xbf16>
    %c256 = arith.constant 256 : index
    %c0_14 = arith.constant 0 : index
    %16 = vector.load %arg1[%c256, %c0_14] : memref<1152x256xbf16, #tpu.memory_space<vmem>>, vector<128x256xbf16>
    %cst_15 = arith.constant dense<0.000000e+00> : vector<128x256xf32>
    %17 = tpu.matmul %15, %16, %cst_15 {dimension_numbers = #tpu.dot_dimension_numbers<[1], [0], [0], [1], [0, 0, 1, 1], [], []>} : vector<128x128xbf16>, vector<128x256xbf16>, vector<128x256xf32> -> vector<128x256xf32>
    %18 = arith.addf %12, %17 : vector<128x256xf32>
    %c0_16 = arith.constant 0 : index
    %c1_17 = arith.constant 1 : index
    %c0_18 = arith.constant 0 : index
    %c0_19 = arith.constant 0 : index
    %19 = vector.load %arg0[%c0_16, %c1_17, %c0_18, %c0_19] : memref<2x10x10x128xf32, #tpu.memory_space<vmem>>, vector<2x8x8x128xf32>
    %20 = vector.shape_cast %19 : vector<2x8x8x128xf32> to vector<128x128xf32>
    %21 = arith.truncf %20 : vector<128x128xf32> to vector<128x128xbf16>
    %c384 = arith.constant 384 : index
    %c0_20 = arith.constant 0 : index
    %22 = vector.load %arg1[%c384, %c0_20] : memref<1152x256xbf16, #tpu.memory_space<vmem>>, vector<128x256xbf16>
    %cst_21 = arith.constant dense<0.000000e+00> : vector<128x256xf32>
    %23 = tpu.matmul %21, %22, %cst_21 {dimension_numbers = #tpu.dot_dimension_numbers<[1], [0], [0], [1], [0, 0, 1, 1], [], []>} : vector<128x128xbf16>, vector<128x256xbf16>, vector<128x256xf32> -> vector<128x256xf32>
    %24 = arith.addf %18, %23 : vector<128x256xf32>
    %c0_22 = arith.constant 0 : index
    %c1_23 = arith.constant 1 : index
    %c1_24 = arith.constant 1 : index
    %c0_25 = arith.constant 0 : index
    %25 = vector.load %arg0[%c0_22, %c1_23, %c1_24, %c0_25] : memref<2x10x10x128xf32, #tpu.memory_space<vmem>>, vector<2x8x8x128xf32>
    %26 = vector.shape_cast %25 : vector<2x8x8x128xf32> to vector<128x128xf32>
    %27 = arith.truncf %26 : vector<128x128xf32> to vector<128x128xbf16>
    %c512 = arith.constant 512 : index
    %c0_26 = arith.constant 0 : index
    %28 = vector.load %arg1[%c512, %c0_26] : memref<1152x256xbf16, #tpu.memory_space<vmem>>, vector<128x256xbf16>
    %cst_27 = arith.constant dense<0.000000e+00> : vector<128x256xf32>
    %29 = tpu.matmul %27, %28, %cst_27 {dimension_numbers = #tpu.dot_dimension_numbers<[1], [0], [0], [1], [0, 0, 1, 1], [], []>} : vector<128x128xbf16>, vector<128x256xbf16>, vector<128x256xf32> -> vector<128x256xf32>
    %30 = arith.addf %24, %29 : vector<128x256xf32>
    %c0_28 = arith.constant 0 : index
    %c1_29 = arith.constant 1 : index
    %c2_30 = arith.constant 2 : index
    %c0_31 = arith.constant 0 : index
    %31 = vector.load %arg0[%c0_28, %c1_29, %c2_30, %c0_31] : memref<2x10x10x128xf32, #tpu.memory_space<vmem>>, vector<2x8x8x128xf32>
    %32 = vector.shape_cast %31 : vector<2x8x8x128xf32> to vector<128x128xf32>
    %33 = arith.truncf %32 : vector<128x128xf32> to vector<128x128xbf16>
    %c640 = arith.constant 640 : index
    %c0_32 = arith.constant 0 : index
    %34 = vector.load %arg1[%c640, %c0_32] : memref<1152x256xbf16, #tpu.memory_space<vmem>>, vector<128x256xbf16>
    %cst_33 = arith.constant dense<0.000000e+00> : vector<128x256xf32>
    %35 = tpu.matmul %33, %34, %cst_33 {dimension_numbers = #tpu.dot_dimension_numbers<[1], [0], [0], [1], [0, 0, 1, 1], [], []>} : vector<128x128xbf16>, vector<128x256xbf16>, vector<128x256xf32> -> vector<128x256xf32>
    %36 = arith.addf %30, %35 : vector<128x256xf32>
    %c0_34 = arith.constant 0 : index
    %c2_35 = arith.constant 2 : index
    %c0_36 = arith.constant 0 : index
    %c0_37 = arith.constant 0 : index
    %37 = vector.load %arg0[%c0_34, %c2_35, %c0_36, %c0_37] : memref<2x10x10x128xf32, #tpu.memory_space<vmem>>, vector<2x8x8x128xf32>
    %38 = vector.shape_cast %37 : vector<2x8x8x128xf32> to vector<128x128xf32>
    %39 = arith.truncf %38 : vector<128x128xf32> to vector<128x128xbf16>
    %c768 = arith.constant 768 : index
    %c0_38 = arith.constant 0 : index
    %40 = vector.load %arg1[%c768, %c0_38] : memref<1152x256xbf16, #tpu.memory_space<vmem>>, vector<128x256xbf16>
    %cst_39 = arith.constant dense<0.000000e+00> : vector<128x256xf32>
    %41 = tpu.matmul %39, %40, %cst_39 {dimension_numbers = #tpu.dot_dimension_numbers<[1], [0], [0], [1], [0, 0, 1, 1], [], []>} : vector<128x128xbf16>, vector<128x256xbf16>, vector<128x256xf32> -> vector<128x256xf32>
    %42 = arith.addf %36, %41 : vector<128x256xf32>
    %c0_40 = arith.constant 0 : index
    %c2_41 = arith.constant 2 : index
    %c1_42 = arith.constant 1 : index
    %c0_43 = arith.constant 0 : index
    %43 = vector.load %arg0[%c0_40, %c2_41, %c1_42, %c0_43] : memref<2x10x10x128xf32, #tpu.memory_space<vmem>>, vector<2x8x8x128xf32>
    %44 = vector.shape_cast %43 : vector<2x8x8x128xf32> to vector<128x128xf32>
    %45 = arith.truncf %44 : vector<128x128xf32> to vector<128x128xbf16>
    %c896 = arith.constant 896 : index
    %c0_44 = arith.constant 0 : index
    %46 = vector.load %arg1[%c896, %c0_44] : memref<1152x256xbf16, #tpu.memory_space<vmem>>, vector<128x256xbf16>
    %cst_45 = arith.constant dense<0.000000e+00> : vector<128x256xf32>
    %47 = tpu.matmul %45, %46, %cst_45 {dimension_numbers = #tpu.dot_dimension_numbers<[1], [0], [0], [1], [0, 0, 1, 1], [], []>} : vector<128x128xbf16>, vector<128x256xbf16>, vector<128x256xf32> -> vector<128x256xf32>
    %48 = arith.addf %42, %47 : vector<128x256xf32>
    %c0_46 = arith.constant 0 : index
    %c2_47 = arith.constant 2 : index
    %c2_48 = arith.constant 2 : index
    %c0_49 = arith.constant 0 : index
    %49 = vector.load %arg0[%c0_46, %c2_47, %c2_48, %c0_49] : memref<2x10x10x128xf32, #tpu.memory_space<vmem>>, vector<2x8x8x128xf32>
    %50 = vector.shape_cast %49 : vector<2x8x8x128xf32> to vector<128x128xf32>
    %51 = arith.truncf %50 : vector<128x128xf32> to vector<128x128xbf16>
    %c1024 = arith.constant 1024 : index
    %c0_50 = arith.constant 0 : index
    %52 = vector.load %arg1[%c1024, %c0_50] : memref<1152x256xbf16, #tpu.memory_space<vmem>>, vector<128x256xbf16>
    %cst_51 = arith.constant dense<0.000000e+00> : vector<128x256xf32>
    %53 = tpu.matmul %51, %52, %cst_51 {dimension_numbers = #tpu.dot_dimension_numbers<[1], [0], [0], [1], [0, 0, 1, 1], [], []>} : vector<128x128xbf16>, vector<128x256xbf16>, vector<128x256xf32> -> vector<128x256xf32>
    %54 = arith.addf %48, %53 : vector<128x256xf32>
    %c0_52 = arith.constant 0 : index
    %c0_53 = arith.constant 0 : index
    %55 = vector.load %arg2[%c0_52, %c0_53] : memref<1x256xf32, #tpu.memory_space<vmem>>, vector<1x256xf32>
    %56 = vector.broadcast %55 : vector<1x256xf32> to vector<128x256xf32>
    %57 = arith.addf %54, %56 : vector<128x256xf32>
    %cst_54 = arith.constant 0.000000e+00 : f32
    %58 = vector.broadcast %cst_54 : f32 to vector<128x256xf32>
    %59 = arith.maximumf %57, %58 : vector<128x256xf32>
    %60 = vector.shape_cast %59 : vector<128x256xf32> to vector<2x8x8x256xf32>
    %61 = vector.extract_strided_slice %60 {offsets = [0, 0, 0, 0], sizes = [2, 1, 8, 256], strides = [1, 1, 1, 1]} : vector<2x8x8x256xf32> to vector<2x1x8x256xf32>
    %62 = vector.shape_cast %61 : vector<2x1x8x256xf32> to vector<2x8x256xf32>
    %63 = vector.extract_strided_slice %60 {offsets = [0, 1, 0, 0], sizes = [2, 1, 8, 256], strides = [1, 1, 1, 1]} : vector<2x8x8x256xf32> to vector<2x1x8x256xf32>
    %64 = vector.shape_cast %63 : vector<2x1x8x256xf32> to vector<2x8x256xf32>
    %65 = arith.maximumf %62, %64 : vector<2x8x256xf32>
    %66 = vector.extract_strided_slice %65 {offsets = [0, 0, 0], sizes = [2, 1, 256], strides = [1, 1, 1]} : vector<2x8x256xf32> to vector<2x1x256xf32>
    %67 = vector.shape_cast %66 : vector<2x1x256xf32> to vector<2x256xf32>
    %68 = vector.extract_strided_slice %65 {offsets = [0, 1, 0], sizes = [2, 1, 256], strides = [1, 1, 1]} : vector<2x8x256xf32> to vector<2x1x256xf32>
    %69 = vector.shape_cast %68 : vector<2x1x256xf32> to vector<2x256xf32>
    %70 = arith.maximumf %67, %69 : vector<2x256xf32>
    %71 = vector.extract_strided_slice %70 {offsets = [0, 0], sizes = [1, 256], strides = [1, 1]} : vector<2x256xf32> to vector<1x256xf32>
    %c0_55 = arith.constant 0 : index
    %c0_56 = arith.constant 0 : index
    %72 = vector.load %arg10[%c0_55, %c0_56] : memref<32x256xf32, #tpu.memory_space<vmem>>, vector<1x256xf32>
    tpu.vector_store %arg10[%c0_55, %c0_56], %71 {strides = array<i32>} : memref<32x256xf32, #tpu.memory_space<vmem>>, vector<1x256xf32>,
    %73 = vector.extract_strided_slice %70 {offsets = [1, 0], sizes = [1, 256], strides = [1, 1]} : vector<2x256xf32> to vector<1x256xf32>
    %c16 = arith.constant 16 : index
    %c0_57 = arith.constant 0 : index
    %74 = vector.load %arg10[%c16, %c0_57] : memref<32x256xf32, #tpu.memory_space<vmem>>, vector<1x256xf32>
    tpu.vector_store %arg10[%c16, %c0_57], %73 {strides = array<i32>} : memref<32x256xf32, #tpu.memory_space<vmem>>, vector<1x256xf32>,
    %75 = vector.extract_strided_slice %65 {offsets = [0, 2, 0], sizes = [2, 1, 256], strides = [1, 1, 1]} : vector<2x8x256xf32> to vector<2x1x256xf32>
    %76 = vector.shape_cast %75 : vector<2x1x256xf32> to vector<2x256xf32>
    %77 = vector.extract_strided_slice %65 {offsets = [0, 3, 0], sizes = [2, 1, 256], strides = [1, 1, 1]} : vector<2x8x256xf32> to vector<2x1x256xf32>
    %78 = vector.shape_cast %77 : vector<2x1x256xf32> to vector<2x256xf32>
    %79 = arith.maximumf %76, %78 : vector<2x256xf32>
    %80 = vector.extract_strided_slice %79 {offsets = [0, 0], sizes = [1, 256], strides = [1, 1]} : vector<2x256xf32> to vector<1x256xf32>
    %c1_58 = arith.constant 1 : index
    %c0_59 = arith.constant 0 : index
    %81 = vector.load %arg10[%c1_58, %c0_59] : memref<32x256xf32, #tpu.memory_space<vmem>>, vector<1x256xf32>
    tpu.vector_store %arg10[%c1_58, %c0_59], %80 {strides = array<i32>} : memref<32x256xf32, #tpu.memory_space<vmem>>, vector<1x256xf32>,
    %82 = vector.extract_strided_slice %79 {offsets = [1, 0], sizes = [1, 256], strides = [1, 1]} : vector<2x256xf32> to vector<1x256xf32>
    %c17 = arith.constant 17 : index
    %c0_60 = arith.constant 0 : index
    %83 = vector.load %arg10[%c17, %c0_60] : memref<32x256xf32, #tpu.memory_space<vmem>>, vector<1x256xf32>
    tpu.vector_store %arg10[%c17, %c0_60], %82 {strides = array<i32>} : memref<32x256xf32, #tpu.memory_space<vmem>>, vector<1x256xf32>,
    %84 = vector.extract_strided_slice %65 {offsets = [0, 4, 0], sizes = [2, 1, 256], strides = [1, 1, 1]} : vector<2x8x256xf32> to vector<2x1x256xf32>
    %85 = vector.shape_cast %84 : vector<2x1x256xf32> to vector<2x256xf32>
    %86 = vector.extract_strided_slice %65 {offsets = [0, 5, 0], sizes = [2, 1, 256], strides = [1, 1, 1]} : vector<2x8x256xf32> to vector<2x1x256xf32>
    %87 = vector.shape_cast %86 : vector<2x1x256xf32> to vector<2x256xf32>
    %88 = arith.maximumf %85, %87 : vector<2x256xf32>
    %89 = vector.extract_strided_slice %88 {offsets = [0, 0], sizes = [1, 256], strides = [1, 1]} : vector<2x256xf32> to vector<1x256xf32>
    %c2_61 = arith.constant 2 : index
    %c0_62 = arith.constant 0 : index
    %90 = vector.load %arg10[%c2_61, %c0_62] : memref<32x256xf32, #tpu.memory_space<vmem>>, vector<1x256xf32>
    tpu.vector_store %arg10[%c2_61, %c0_62], %89 {strides = array<i32>} : memref<32x256xf32, #tpu.memory_space<vmem>>, vector<1x256xf32>,
    %91 = vector.extract_strided_slice %88 {offsets = [1, 0], sizes = [1, 256], strides = [1, 1]} : vector<2x256xf32> to vector<1x256xf32>
    %c18 = arith.constant 18 : index
    %c0_63 = arith.constant 0 : index
    %92 = vector.load %arg10[%c18, %c0_63] : memref<32x256xf32, #tpu.memory_space<vmem>>, vector<1x256xf32>
    tpu.vector_store %arg10[%c18, %c0_63], %91 {strides = array<i32>} : memref<32x256xf32, #tpu.memory_space<vmem>>, vector<1x256xf32>,
    %93 = vector.extract_strided_slice %65 {offsets = [0, 6, 0], sizes = [2, 1, 256], strides = [1, 1, 1]} : vector<2x8x256xf32> to vector<2x1x256xf32>
    %94 = vector.shape_cast %93 : vector<2x1x256xf32> to vector<2x256xf32>
    %95 = vector.extract_strided_slice %65 {offsets = [0, 7, 0], sizes = [2, 1, 256], strides = [1, 1, 1]} : vector<2x8x256xf32> to vector<2x1x256xf32>
    %96 = vector.shape_cast %95 : vector<2x1x256xf32> to vector<2x256xf32>
    %97 = arith.maximumf %94, %96 : vector<2x256xf32>
    %98 = vector.extract_strided_slice %97 {offsets = [0, 0], sizes = [1, 256], strides = [1, 1]} : vector<2x256xf32> to vector<1x256xf32>
    %c3 = arith.constant 3 : index
    %c0_64 = arith.constant 0 : index
    %99 = vector.load %arg10[%c3, %c0_64] : memref<32x256xf32, #tpu.memory_space<vmem>>, vector<1x256xf32>
    tpu.vector_store %arg10[%c3, %c0_64], %98 {strides = array<i32>} : memref<32x256xf32, #tpu.memory_space<vmem>>, vector<1x256xf32>,
    %100 = vector.extract_strided_slice %97 {offsets = [1, 0], sizes = [1, 256], strides = [1, 1]} : vector<2x256xf32> to vector<1x256xf32>
    %c19 = arith.constant 19 : index
    %c0_65 = arith.constant 0 : index
    %101 = vector.load %arg10[%c19, %c0_65] : memref<32x256xf32, #tpu.memory_space<vmem>>, vector<1x256xf32>
    tpu.vector_store %arg10[%c19, %c0_65], %100 {strides = array<i32>} : memref<32x256xf32, #tpu.memory_space<vmem>>, vector<1x256xf32>,
    %102 = vector.extract_strided_slice %60 {offsets = [0, 2, 0, 0], sizes = [2, 1, 8, 256], strides = [1, 1, 1, 1]} : vector<2x8x8x256xf32> to vector<2x1x8x256xf32>
    %103 = vector.shape_cast %102 : vector<2x1x8x256xf32> to vector<2x8x256xf32>
    %104 = vector.extract_strided_slice %60 {offsets = [0, 3, 0, 0], sizes = [2, 1, 8, 256], strides = [1, 1, 1, 1]} : vector<2x8x8x256xf32> to vector<2x1x8x256xf32>
    %105 = vector.shape_cast %104 : vector<2x1x8x256xf32> to vector<2x8x256xf32>
    %106 = arith.maximumf %103, %105 : vector<2x8x256xf32>
    %107 = vector.extract_strided_slice %106 {offsets = [0, 0, 0], sizes = [2, 1, 256], strides = [1, 1, 1]} : vector<2x8x256xf32> to vector<2x1x256xf32>
    %108 = vector.shape_cast %107 : vector<2x1x256xf32> to vector<2x256xf32>
    %109 = vector.extract_strided_slice %106 {offsets = [0, 1, 0], sizes = [2, 1, 256], strides = [1, 1, 1]} : vector<2x8x256xf32> to vector<2x1x256xf32>
    %110 = vector.shape_cast %109 : vector<2x1x256xf32> to vector<2x256xf32>
    %111 = arith.maximumf %108, %110 : vector<2x256xf32>
    %112 = vector.extract_strided_slice %111 {offsets = [0, 0], sizes = [1, 256], strides = [1, 1]} : vector<2x256xf32> to vector<1x256xf32>
    %c4 = arith.constant 4 : index
    %c0_66 = arith.constant 0 : index
    %113 = vector.load %arg10[%c4, %c0_66] : memref<32x256xf32, #tpu.memory_space<vmem>>, vector<1x256xf32>
    tpu.vector_store %arg10[%c4, %c0_66], %112 {strides = array<i32>} : memref<32x256xf32, #tpu.memory_space<vmem>>, vector<1x256xf32>,
    %114 = vector.extract_strided_slice %111 {offsets = [1, 0], sizes = [1, 256], strides = [1, 1]} : vector<2x256xf32> to vector<1x256xf32>
    %c20 = arith.constant 20 : index
    %c0_67 = arith.constant 0 : index
    %115 = vector.load %arg10[%c20, %c0_67] : memref<32x256xf32, #tpu.memory_space<vmem>>, vector<1x256xf32>
    tpu.vector_store %arg10[%c20, %c0_67], %114 {strides = array<i32>} : memref<32x256xf32, #tpu.memory_space<vmem>>, vector<1x256xf32>,
    %116 = vector.extract_strided_slice %106 {offsets = [0, 2, 0], sizes = [2, 1, 256], strides = [1, 1, 1]} : vector<2x8x256xf32> to vector<2x1x256xf32>
    %117 = vector.shape_cast %116 : vector<2x1x256xf32> to vector<2x256xf32>
    %118 = vector.extract_strided_slice %106 {offsets = [0, 3, 0], sizes = [2, 1, 256], strides = [1, 1, 1]} : vector<2x8x256xf32> to vector<2x1x256xf32>
    %119 = vector.shape_cast %118 : vector<2x1x256xf32> to vector<2x256xf32>
    %120 = arith.maximumf %117, %119 : vector<2x256xf32>
    %121 = vector.extract_strided_slice %120 {offsets = [0, 0], sizes = [1, 256], strides = [1, 1]} : vector<2x256xf32> to vector<1x256xf32>
    %c5 = arith.constant 5 : index
    %c0_68 = arith.constant 0 : index
    %122 = vector.load %arg10[%c5, %c0_68] : memref<32x256xf32, #tpu.memory_space<vmem>>, vector<1x256xf32>
    tpu.vector_store %arg10[%c5, %c0_68], %121 {strides = array<i32>} : memref<32x256xf32, #tpu.memory_space<vmem>>, vector<1x256xf32>,
    %123 = vector.extract_strided_slice %120 {offsets = [1, 0], sizes = [1, 256], strides = [1, 1]} : vector<2x256xf32> to vector<1x256xf32>
    %c21 = arith.constant 21 : index
    %c0_69 = arith.constant 0 : index
    %124 = vector.load %arg10[%c21, %c0_69] : memref<32x256xf32, #tpu.memory_space<vmem>>, vector<1x256xf32>
    tpu.vector_store %arg10[%c21, %c0_69], %123 {strides = array<i32>} : memref<32x256xf32, #tpu.memory_space<vmem>>, vector<1x256xf32>,
    %125 = vector.extract_strided_slice %106 {offsets = [0, 4, 0], sizes = [2, 1, 256], strides = [1, 1, 1]} : vector<2x8x256xf32> to vector<2x1x256xf32>
    %126 = vector.shape_cast %125 : vector<2x1x256xf32> to vector<2x256xf32>
    %127 = vector.extract_strided_slice %106 {offsets = [0, 5, 0], sizes = [2, 1, 256], strides = [1, 1, 1]} : vector<2x8x256xf32> to vector<2x1x256xf32>
    %128 = vector.shape_cast %127 : vector<2x1x256xf32> to vector<2x256xf32>
    %129 = arith.maximumf %126, %128 : vector<2x256xf32>
    %130 = vector.extract_strided_slice %129 {offsets = [0, 0], sizes = [1, 256], strides = [1, 1]} : vector<2x256xf32> to vector<1x256xf32>
    %c6 = arith.constant 6 : index
    %c0_70 = arith.constant 0 : index
    %131 = vector.load %arg10[%c6, %c0_70] : memref<32x256xf32, #tpu.memory_space<vmem>>, vector<1x256xf32>
    tpu.vector_store %arg10[%c6, %c0_70], %130 {strides = array<i32>} : memref<32x256xf32, #tpu.memory_space<vmem>>, vector<1x256xf32>,
    %132 = vector.extract_strided_slice %129 {offsets = [1, 0], sizes = [1, 256], strides = [1, 1]} : vector<2x256xf32> to vector<1x256xf32>
    %c22 = arith.constant 22 : index
    %c0_71 = arith.constant 0 : index
    %133 = vector.load %arg10[%c22, %c0_71] : memref<32x256xf32, #tpu.memory_space<vmem>>, vector<1x256xf32>
    tpu.vector_store %arg10[%c22, %c0_71], %132 {strides = array<i32>} : memref<32x256xf32, #tpu.memory_space<vmem>>, vector<1x256xf32>,
    %134 = vector.extract_strided_slice %106 {offsets = [0, 6, 0], sizes = [2, 1, 256], strides = [1, 1, 1]} : vector<2x8x256xf32> to vector<2x1x256xf32>
    %135 = vector.shape_cast %134 : vector<2x1x256xf32> to vector<2x256xf32>
    %136 = vector.extract_strided_slice %106 {offsets = [0, 7, 0], sizes = [2, 1, 256], strides = [1, 1, 1]} : vector<2x8x256xf32> to vector<2x1x256xf32>
    %137 = vector.shape_cast %136 : vector<2x1x256xf32> to vector<2x256xf32>
    %138 = arith.maximumf %135, %137 : vector<2x256xf32>
    %139 = vector.extract_strided_slice %138 {offsets = [0, 0], sizes = [1, 256], strides = [1, 1]} : vector<2x256xf32> to vector<1x256xf32>
    %c7 = arith.constant 7 : index
    %c0_72 = arith.constant 0 : index
    %140 = vector.load %arg10[%c7, %c0_72] : memref<32x256xf32, #tpu.memory_space<vmem>>, vector<1x256xf32>
    tpu.vector_store %arg10[%c7, %c0_72], %139 {strides = array<i32>} : memref<32x256xf32, #tpu.memory_space<vmem>>, vector<1x256xf32>,
    %141 = vector.extract_strided_slice %138 {offsets = [1, 0], sizes = [1, 256], strides = [1, 1]} : vector<2x256xf32> to vector<1x256xf32>
    %c23 = arith.constant 23 : index
    %c0_73 = arith.constant 0 : index
    %142 = vector.load %arg10[%c23, %c0_73] : memref<32x256xf32, #tpu.memory_space<vmem>>, vector<1x256xf32>
    tpu.vector_store %arg10[%c23, %c0_73], %141 {strides = array<i32>} : memref<32x256xf32, #tpu.memory_space<vmem>>, vector<1x256xf32>,
    %143 = vector.extract_strided_slice %60 {offsets = [0, 4, 0, 0], sizes = [2, 1, 8, 256], strides = [1, 1, 1, 1]} : vector<2x8x8x256xf32> to vector<2x1x8x256xf32>
    %144 = vector.shape_cast %143 : vector<2x1x8x256xf32> to vector<2x8x256xf32>
    %145 = vector.extract_strided_slice %60 {offsets = [0, 5, 0, 0], sizes = [2, 1, 8, 256], strides = [1, 1, 1, 1]} : vector<2x8x8x256xf32> to vector<2x1x8x256xf32>
    %146 = vector.shape_cast %145 : vector<2x1x8x256xf32> to vector<2x8x256xf32>
    %147 = arith.maximumf %144, %146 : vector<2x8x256xf32>
    %148 = vector.extract_strided_slice %147 {offsets = [0, 0, 0], sizes = [2, 1, 256], strides = [1, 1, 1]} : vector<2x8x256xf32> to vector<2x1x256xf32>
    %149 = vector.shape_cast %148 : vector<2x1x256xf32> to vector<2x256xf32>
    %150 = vector.extract_strided_slice %147 {offsets = [0, 1, 0], sizes = [2, 1, 256], strides = [1, 1, 1]} : vector<2x8x256xf32> to vector<2x1x256xf32>
    %151 = vector.shape_cast %150 : vector<2x1x256xf32> to vector<2x256xf32>
    %152 = arith.maximumf %149, %151 : vector<2x256xf32>
    %153 = vector.extract_strided_slice %152 {offsets = [0, 0], sizes = [1, 256], strides = [1, 1]} : vector<2x256xf32> to vector<1x256xf32>
    %c8 = arith.constant 8 : index
    %c0_74 = arith.constant 0 : index
    %154 = vector.load %arg10[%c8, %c0_74] : memref<32x256xf32, #tpu.memory_space<vmem>>, vector<1x256xf32>
    tpu.vector_store %arg10[%c8, %c0_74], %153 {strides = array<i32>} : memref<32x256xf32, #tpu.memory_space<vmem>>, vector<1x256xf32>,
    %155 = vector.extract_strided_slice %152 {offsets = [1, 0], sizes = [1, 256], strides = [1, 1]} : vector<2x256xf32> to vector<1x256xf32>
    %c24 = arith.constant 24 : index
    %c0_75 = arith.constant 0 : index
    %156 = vector.load %arg10[%c24, %c0_75] : memref<32x256xf32, #tpu.memory_space<vmem>>, vector<1x256xf32>
    tpu.vector_store %arg10[%c24, %c0_75], %155 {strides = array<i32>} : memref<32x256xf32, #tpu.memory_space<vmem>>, vector<1x256xf32>,
    %157 = vector.extract_strided_slice %147 {offsets = [0, 2, 0], sizes = [2, 1, 256], strides = [1, 1, 1]} : vector<2x8x256xf32> to vector<2x1x256xf32>
    %158 = vector.shape_cast %157 : vector<2x1x256xf32> to vector<2x256xf32>
    %159 = vector.extract_strided_slice %147 {offsets = [0, 3, 0], sizes = [2, 1, 256], strides = [1, 1, 1]} : vector<2x8x256xf32> to vector<2x1x256xf32>
    %160 = vector.shape_cast %159 : vector<2x1x256xf32> to vector<2x256xf32>
    %161 = arith.maximumf %158, %160 : vector<2x256xf32>
    %162 = vector.extract_strided_slice %161 {offsets = [0, 0], sizes = [1, 256], strides = [1, 1]} : vector<2x256xf32> to vector<1x256xf32>
    %c9 = arith.constant 9 : index
    %c0_76 = arith.constant 0 : index
    %163 = vector.load %arg10[%c9, %c0_76] : memref<32x256xf32, #tpu.memory_space<vmem>>, vector<1x256xf32>
    tpu.vector_store %arg10[%c9, %c0_76], %162 {strides = array<i32>} : memref<32x256xf32, #tpu.memory_space<vmem>>, vector<1x256xf32>,
    %164 = vector.extract_strided_slice %161 {offsets = [1, 0], sizes = [1, 256], strides = [1, 1]} : vector<2x256xf32> to vector<1x256xf32>
    %c25 = arith.constant 25 : index
    %c0_77 = arith.constant 0 : index
    %165 = vector.load %arg10[%c25, %c0_77] : memref<32x256xf32, #tpu.memory_space<vmem>>, vector<1x256xf32>
    tpu.vector_store %arg10[%c25, %c0_77], %164 {strides = array<i32>} : memref<32x256xf32, #tpu.memory_space<vmem>>, vector<1x256xf32>,
    %166 = vector.extract_strided_slice %147 {offsets = [0, 4, 0], sizes = [2, 1, 256], strides = [1, 1, 1]} : vector<2x8x256xf32> to vector<2x1x256xf32>
    %167 = vector.shape_cast %166 : vector<2x1x256xf32> to vector<2x256xf32>
    %168 = vector.extract_strided_slice %147 {offsets = [0, 5, 0], sizes = [2, 1, 256], strides = [1, 1, 1]} : vector<2x8x256xf32> to vector<2x1x256xf32>
    %169 = vector.shape_cast %168 : vector<2x1x256xf32> to vector<2x256xf32>
    %170 = arith.maximumf %167, %169 : vector<2x256xf32>
    %171 = vector.extract_strided_slice %170 {offsets = [0, 0], sizes = [1, 256], strides = [1, 1]} : vector<2x256xf32> to vector<1x256xf32>
    %c10 = arith.constant 10 : index
    %c0_78 = arith.constant 0 : index
    %172 = vector.load %arg10[%c10, %c0_78] : memref<32x256xf32, #tpu.memory_space<vmem>>, vector<1x256xf32>
    tpu.vector_store %arg10[%c10, %c0_78], %171 {strides = array<i32>} : memref<32x256xf32, #tpu.memory_space<vmem>>, vector<1x256xf32>,
    %173 = vector.extract_strided_slice %170 {offsets = [1, 0], sizes = [1, 256], strides = [1, 1]} : vector<2x256xf32> to vector<1x256xf32>
    %c26 = arith.constant 26 : index
    %c0_79 = arith.constant 0 : index
    %174 = vector.load %arg10[%c26, %c0_79] : memref<32x256xf32, #tpu.memory_space<vmem>>, vector<1x256xf32>
    tpu.vector_store %arg10[%c26, %c0_79], %173 {strides = array<i32>} : memref<32x256xf32, #tpu.memory_space<vmem>>, vector<1x256xf32>,
    %175 = vector.extract_strided_slice %147 {offsets = [0, 6, 0], sizes = [2, 1, 256], strides = [1, 1, 1]} : vector<2x8x256xf32> to vector<2x1x256xf32>
    %176 = vector.shape_cast %175 : vector<2x1x256xf32> to vector<2x256xf32>
    %177 = vector.extract_strided_slice %147 {offsets = [0, 7, 0], sizes = [2, 1, 256], strides = [1, 1, 1]} : vector<2x8x256xf32> to vector<2x1x256xf32>
    %178 = vector.shape_cast %177 : vector<2x1x256xf32> to vector<2x256xf32>
    %179 = arith.maximumf %176, %178 : vector<2x256xf32>
    %180 = vector.extract_strided_slice %179 {offsets = [0, 0], sizes = [1, 256], strides = [1, 1]} : vector<2x256xf32> to vector<1x256xf32>
    %c11 = arith.constant 11 : index
    %c0_80 = arith.constant 0 : index
    %181 = vector.load %arg10[%c11, %c0_80] : memref<32x256xf32, #tpu.memory_space<vmem>>, vector<1x256xf32>
    tpu.vector_store %arg10[%c11, %c0_80], %180 {strides = array<i32>} : memref<32x256xf32, #tpu.memory_space<vmem>>, vector<1x256xf32>,
    %182 = vector.extract_strided_slice %179 {offsets = [1, 0], sizes = [1, 256], strides = [1, 1]} : vector<2x256xf32> to vector<1x256xf32>
    %c27 = arith.constant 27 : index
    %c0_81 = arith.constant 0 : index
    %183 = vector.load %arg10[%c27, %c0_81] : memref<32x256xf32, #tpu.memory_space<vmem>>, vector<1x256xf32>
    tpu.vector_store %arg10[%c27, %c0_81], %182 {strides = array<i32>} : memref<32x256xf32, #tpu.memory_space<vmem>>, vector<1x256xf32>,
    %184 = vector.extract_strided_slice %60 {offsets = [0, 6, 0, 0], sizes = [2, 1, 8, 256], strides = [1, 1, 1, 1]} : vector<2x8x8x256xf32> to vector<2x1x8x256xf32>
    %185 = vector.shape_cast %184 : vector<2x1x8x256xf32> to vector<2x8x256xf32>
    %186 = vector.extract_strided_slice %60 {offsets = [0, 7, 0, 0], sizes = [2, 1, 8, 256], strides = [1, 1, 1, 1]} : vector<2x8x8x256xf32> to vector<2x1x8x256xf32>
    %187 = vector.shape_cast %186 : vector<2x1x8x256xf32> to vector<2x8x256xf32>
    %188 = arith.maximumf %185, %187 : vector<2x8x256xf32>
    %189 = vector.extract_strided_slice %188 {offsets = [0, 0, 0], sizes = [2, 1, 256], strides = [1, 1, 1]} : vector<2x8x256xf32> to vector<2x1x256xf32>
    %190 = vector.shape_cast %189 : vector<2x1x256xf32> to vector<2x256xf32>
    %191 = vector.extract_strided_slice %188 {offsets = [0, 1, 0], sizes = [2, 1, 256], strides = [1, 1, 1]} : vector<2x8x256xf32> to vector<2x1x256xf32>
    %192 = vector.shape_cast %191 : vector<2x1x256xf32> to vector<2x256xf32>
    %193 = arith.maximumf %190, %192 : vector<2x256xf32>
    %194 = vector.extract_strided_slice %193 {offsets = [0, 0], sizes = [1, 256], strides = [1, 1]} : vector<2x256xf32> to vector<1x256xf32>
    %c12 = arith.constant 12 : index
    %c0_82 = arith.constant 0 : index
    %195 = vector.load %arg10[%c12, %c0_82] : memref<32x256xf32, #tpu.memory_space<vmem>>, vector<1x256xf32>
    tpu.vector_store %arg10[%c12, %c0_82], %194 {strides = array<i32>} : memref<32x256xf32, #tpu.memory_space<vmem>>, vector<1x256xf32>,
    %196 = vector.extract_strided_slice %193 {offsets = [1, 0], sizes = [1, 256], strides = [1, 1]} : vector<2x256xf32> to vector<1x256xf32>
    %c28 = arith.constant 28 : index
    %c0_83 = arith.constant 0 : index
    %197 = vector.load %arg10[%c28, %c0_83] : memref<32x256xf32, #tpu.memory_space<vmem>>, vector<1x256xf32>
    tpu.vector_store %arg10[%c28, %c0_83], %196 {strides = array<i32>} : memref<32x256xf32, #tpu.memory_space<vmem>>, vector<1x256xf32>,
    %198 = vector.extract_strided_slice %188 {offsets = [0, 2, 0], sizes = [2, 1, 256], strides = [1, 1, 1]} : vector<2x8x256xf32> to vector<2x1x256xf32>
    %199 = vector.shape_cast %198 : vector<2x1x256xf32> to vector<2x256xf32>
    %200 = vector.extract_strided_slice %188 {offsets = [0, 3, 0], sizes = [2, 1, 256], strides = [1, 1, 1]} : vector<2x8x256xf32> to vector<2x1x256xf32>
    %201 = vector.shape_cast %200 : vector<2x1x256xf32> to vector<2x256xf32>
    %202 = arith.maximumf %199, %201 : vector<2x256xf32>
    %203 = vector.extract_strided_slice %202 {offsets = [0, 0], sizes = [1, 256], strides = [1, 1]} : vector<2x256xf32> to vector<1x256xf32>
    %c13 = arith.constant 13 : index
    %c0_84 = arith.constant 0 : index
    %204 = vector.load %arg10[%c13, %c0_84] : memref<32x256xf32, #tpu.memory_space<vmem>>, vector<1x256xf32>
    tpu.vector_store %arg10[%c13, %c0_84], %203 {strides = array<i32>} : memref<32x256xf32, #tpu.memory_space<vmem>>, vector<1x256xf32>,
    %205 = vector.extract_strided_slice %202 {offsets = [1, 0], sizes = [1, 256], strides = [1, 1]} : vector<2x256xf32> to vector<1x256xf32>
    %c29 = arith.constant 29 : index
    %c0_85 = arith.constant 0 : index
    %206 = vector.load %arg10[%c29, %c0_85] : memref<32x256xf32, #tpu.memory_space<vmem>>, vector<1x256xf32>
    tpu.vector_store %arg10[%c29, %c0_85], %205 {strides = array<i32>} : memref<32x256xf32, #tpu.memory_space<vmem>>, vector<1x256xf32>,
    %207 = vector.extract_strided_slice %188 {offsets = [0, 4, 0], sizes = [2, 1, 256], strides = [1, 1, 1]} : vector<2x8x256xf32> to vector<2x1x256xf32>
    %208 = vector.shape_cast %207 : vector<2x1x256xf32> to vector<2x256xf32>
    %209 = vector.extract_strided_slice %188 {offsets = [0, 5, 0], sizes = [2, 1, 256], strides = [1, 1, 1]} : vector<2x8x256xf32> to vector<2x1x256xf32>
    %210 = vector.shape_cast %209 : vector<2x1x256xf32> to vector<2x256xf32>
    %211 = arith.maximumf %208, %210 : vector<2x256xf32>
    %212 = vector.extract_strided_slice %211 {offsets = [0, 0], sizes = [1, 256], strides = [1, 1]} : vector<2x256xf32> to vector<1x256xf32>
    %c14 = arith.constant 14 : index
    %c0_86 = arith.constant 0 : index
    %213 = vector.load %arg10[%c14, %c0_86] : memref<32x256xf32, #tpu.memory_space<vmem>>, vector<1x256xf32>
    tpu.vector_store %arg10[%c14, %c0_86], %212 {strides = array<i32>} : memref<32x256xf32, #tpu.memory_space<vmem>>, vector<1x256xf32>,
    %214 = vector.extract_strided_slice %211 {offsets = [1, 0], sizes = [1, 256], strides = [1, 1]} : vector<2x256xf32> to vector<1x256xf32>
    %c30 = arith.constant 30 : index
    %c0_87 = arith.constant 0 : index
    %215 = vector.load %arg10[%c30, %c0_87] : memref<32x256xf32, #tpu.memory_space<vmem>>, vector<1x256xf32>
    tpu.vector_store %arg10[%c30, %c0_87], %214 {strides = array<i32>} : memref<32x256xf32, #tpu.memory_space<vmem>>, vector<1x256xf32>,
    %216 = vector.extract_strided_slice %188 {offsets = [0, 6, 0], sizes = [2, 1, 256], strides = [1, 1, 1]} : vector<2x8x256xf32> to vector<2x1x256xf32>
    %217 = vector.shape_cast %216 : vector<2x1x256xf32> to vector<2x256xf32>
    %218 = vector.extract_strided_slice %188 {offsets = [0, 7, 0], sizes = [2, 1, 256], strides = [1, 1, 1]} : vector<2x8x256xf32> to vector<2x1x256xf32>
    %219 = vector.shape_cast %218 : vector<2x1x256xf32> to vector<2x256xf32>
    %220 = arith.maximumf %217, %219 : vector<2x256xf32>
    %221 = vector.extract_strided_slice %220 {offsets = [0, 0], sizes = [1, 256], strides = [1, 1]} : vector<2x256xf32> to vector<1x256xf32>
    %c15 = arith.constant 15 : index
    %c0_88 = arith.constant 0 : index
    %222 = vector.load %arg10[%c15, %c0_88] : memref<32x256xf32, #tpu.memory_space<vmem>>, vector<1x256xf32>
    tpu.vector_store %arg10[%c15, %c0_88], %221 {strides = array<i32>} : memref<32x256xf32, #tpu.memory_space<vmem>>, vector<1x256xf32>,
    %223 = vector.extract_strided_slice %220 {offsets = [1, 0], sizes = [1, 256], strides = [1, 1]} : vector<2x256xf32> to vector<1x256xf32>
    %c31 = arith.constant 31 : index
    %c0_89 = arith.constant 0 : index
    %224 = vector.load %arg10[%c31, %c0_89] : memref<32x256xf32, #tpu.memory_space<vmem>>, vector<1x256xf32>
    tpu.vector_store %arg10[%c31, %c0_89], %223 {strides = array<i32>} : memref<32x256xf32, #tpu.memory_space<vmem>>, vector<1x256xf32>,
    %c0_90 = arith.constant 0 : index
    %c0_91 = arith.constant 0 : index
    %225 = vector.load %arg10[%c0_90, %c0_91] : memref<32x256xf32, #tpu.memory_space<vmem>>, vector<2x256xf32>
    %c0_92 = arith.constant 0 : index
    %c0_93 = arith.constant 0 : index
    %226 = vector.load %arg11[%c0_92, %c0_93] : memref<8x2304xf32, #tpu.memory_space<vmem>>, vector<2x256xf32>
    tpu.vector_store %arg11[%c0_92, %c0_93], %225 {strides = array<i32>} : memref<8x2304xf32, #tpu.memory_space<vmem>>, vector<2x256xf32>,
    %c4_94 = arith.constant 4 : index
    %c0_95 = arith.constant 0 : index
    %227 = vector.load %arg10[%c4_94, %c0_95] : memref<32x256xf32, #tpu.memory_space<vmem>>, vector<2x256xf32>
    %c2_96 = arith.constant 2 : index
    %c0_97 = arith.constant 0 : index
    %228 = vector.load %arg11[%c2_96, %c0_97] : memref<8x2304xf32, #tpu.memory_space<vmem>>, vector<2x256xf32>
    tpu.vector_store %arg11[%c2_96, %c0_97], %227 {strides = array<i32>} : memref<8x2304xf32, #tpu.memory_space<vmem>>, vector<2x256xf32>,
    %c16_98 = arith.constant 16 : index
    %c0_99 = arith.constant 0 : index
    %229 = vector.load %arg10[%c16_98, %c0_99] : memref<32x256xf32, #tpu.memory_space<vmem>>, vector<2x256xf32>
    %c4_100 = arith.constant 4 : index
    %c0_101 = arith.constant 0 : index
    %230 = vector.load %arg11[%c4_100, %c0_101] : memref<8x2304xf32, #tpu.memory_space<vmem>>, vector<2x256xf32>
    tpu.vector_store %arg11[%c4_100, %c0_101], %229 {strides = array<i32>} : memref<8x2304xf32, #tpu.memory_space<vmem>>, vector<2x256xf32>,
    %c20_102 = arith.constant 20 : index
    %c0_103 = arith.constant 0 : index
    %231 = vector.load %arg10[%c20_102, %c0_103] : memref<32x256xf32, #tpu.memory_space<vmem>>, vector<2x256xf32>
    %c6_104 = arith.constant 6 : index
    %c0_105 = arith.constant 0 : index
    %232 = vector.load %arg11[%c6_104, %c0_105] : memref<8x2304xf32, #tpu.memory_space<vmem>>, vector<2x256xf32>
    tpu.vector_store %arg11[%c6_104, %c0_105], %231 {strides = array<i32>} : memref<8x2304xf32, #tpu.memory_space<vmem>>, vector<2x256xf32>,
    %c1_106 = arith.constant 1 : index
    %c0_107 = arith.constant 0 : index
    %233 = vector.load %arg10[%c1_106, %c0_107] : memref<32x256xf32, #tpu.memory_space<vmem>>, vector<2x256xf32>
    %c0_108 = arith.constant 0 : index
    %c256_109 = arith.constant 256 : index
    %234 = vector.load %arg11[%c0_108, %c256_109] : memref<8x2304xf32, #tpu.memory_space<vmem>>, vector<2x256xf32>
    tpu.vector_store %arg11[%c0_108, %c256_109], %233 {strides = array<i32>} : memref<8x2304xf32, #tpu.memory_space<vmem>>, vector<2x256xf32>,
    %c5_110 = arith.constant 5 : index
    %c0_111 = arith.constant 0 : index
    %235 = vector.load %arg10[%c5_110, %c0_111] : memref<32x256xf32, #tpu.memory_space<vmem>>, vector<2x256xf32>
    %c2_112 = arith.constant 2 : index
    %c256_113 = arith.constant 256 : index
    %236 = vector.load %arg11[%c2_112, %c256_113] : memref<8x2304xf32, #tpu.memory_space<vmem>>, vector<2x256xf32>
    tpu.vector_store %arg11[%c2_112, %c256_113], %235 {strides = array<i32>} : memref<8x2304xf32, #tpu.memory_space<vmem>>, vector<2x256xf32>,
    %c17_114 = arith.constant 17 : index
    %c0_115 = arith.constant 0 : index
    %237 = vector.load %arg10[%c17_114, %c0_115] : memref<32x256xf32, #tpu.memory_space<vmem>>, vector<2x256xf32>
    %c4_116 = arith.constant 4 : index
    %c256_117 = arith.constant 256 : index
    %238 = vector.load %arg11[%c4_116, %c256_117] : memref<8x2304xf32, #tpu.memory_space<vmem>>, vector<2x256xf32>
    tpu.vector_store %arg11[%c4_116, %c256_117], %237 {strides = array<i32>} : memref<8x2304xf32, #tpu.memory_space<vmem>>, vector<2x256xf32>,
    %c21_118 = arith.constant 21 : index
    %c0_119 = arith.constant 0 : index
    %239 = vector.load %arg10[%c21_118, %c0_119] : memref<32x256xf32, #tpu.memory_space<vmem>>, vector<2x256xf32>
    %c6_120 = arith.constant 6 : index
    %c256_121 = arith.constant 256 : index
    %240 = vector.load %arg11[%c6_120, %c256_121] : memref<8x2304xf32, #tpu.memory_space<vmem>>, vector<2x256xf32>
    tpu.vector_store %arg11[%c6_120, %c256_121], %239 {strides = array<i32>} : memref<8x2304xf32, #tpu.memory_space<vmem>>, vector<2x256xf32>,
    %c2_122 = arith.constant 2 : index
    %c0_123 = arith.constant 0 : index
    %241 = vector.load %arg10[%c2_122, %c0_123] : memref<32x256xf32, #tpu.memory_space<vmem>>, vector<2x256xf32>
    %c0_124 = arith.constant 0 : index
    %c512_125 = arith.constant 512 : index
    %242 = vector.load %arg11[%c0_124, %c512_125] : memref<8x2304xf32, #tpu.memory_space<vmem>>, vector<2x256xf32>
    tpu.vector_store %arg11[%c0_124, %c512_125], %241 {strides = array<i32>} : memref<8x2304xf32, #tpu.memory_space<vmem>>, vector<2x256xf32>,
    %c6_126 = arith.constant 6 : index
    %c0_127 = arith.constant 0 : index
    %243 = vector.load %arg10[%c6_126, %c0_127] : memref<32x256xf32, #tpu.memory_space<vmem>>, vector<2x256xf32>
    %c2_128 = arith.constant 2 : index
    %c512_129 = arith.constant 512 : index
    %244 = vector.load %arg11[%c2_128, %c512_129] : memref<8x2304xf32, #tpu.memory_space<vmem>>, vector<2x256xf32>
    tpu.vector_store %arg11[%c2_128, %c512_129], %243 {strides = array<i32>} : memref<8x2304xf32, #tpu.memory_space<vmem>>, vector<2x256xf32>,
    %c18_130 = arith.constant 18 : index
    %c0_131 = arith.constant 0 : index
    %245 = vector.load %arg10[%c18_130, %c0_131] : memref<32x256xf32, #tpu.memory_space<vmem>>, vector<2x256xf32>
    %c4_132 = arith.constant 4 : index
    %c512_133 = arith.constant 512 : index
    %246 = vector.load %arg11[%c4_132, %c512_133] : memref<8x2304xf32, #tpu.memory_space<vmem>>, vector<2x256xf32>
    tpu.vector_store %arg11[%c4_132, %c512_133], %245 {strides = array<i32>} : memref<8x2304xf32, #tpu.memory_space<vmem>>, vector<2x256xf32>,
    %c22_134 = arith.constant 22 : index
    %c0_135 = arith.constant 0 : index
    %247 = vector.load %arg10[%c22_134, %c0_135] : memref<32x256xf32, #tpu.memory_space<vmem>>, vector<2x256xf32>
    %c6_136 = arith.constant 6 : index
    %c512_137 = arith.constant 512 : index
    %248 = vector.load %arg11[%c6_136, %c512_137] : memref<8x2304xf32, #tpu.memory_space<vmem>>, vector<2x256xf32>
    tpu.vector_store %arg11[%c6_136, %c512_137], %247 {strides = array<i32>} : memref<8x2304xf32, #tpu.memory_space<vmem>>, vector<2x256xf32>,
    %c4_138 = arith.constant 4 : index
    %c0_139 = arith.constant 0 : index
    %249 = vector.load %arg10[%c4_138, %c0_139] : memref<32x256xf32, #tpu.memory_space<vmem>>, vector<2x256xf32>
    %c0_140 = arith.constant 0 : index
    %c768_141 = arith.constant 768 : index
    %250 = vector.load %arg11[%c0_140, %c768_141] : memref<8x2304xf32, #tpu.memory_space<vmem>>, vector<2x256xf32>
    tpu.vector_store %arg11[%c0_140, %c768_141], %249 {strides = array<i32>} : memref<8x2304xf32, #tpu.memory_space<vmem>>, vector<2x256xf32>,
    %c8_142 = arith.constant 8 : index
    %c0_143 = arith.constant 0 : index
    %251 = vector.load %arg10[%c8_142, %c0_143] : memref<32x256xf32, #tpu.memory_space<vmem>>, vector<2x256xf32>
    %c2_144 = arith.constant 2 : index
    %c768_145 = arith.constant 768 : index
    %252 = vector.load %arg11[%c2_144, %c768_145] : memref<8x2304xf32, #tpu.memory_space<vmem>>, vector<2x256xf32>
    tpu.vector_store %arg11[%c2_144, %c768_145], %251 {strides = array<i32>} : memref<8x2304xf32, #tpu.memory_space<vmem>>, vector<2x256xf32>,
    %c20_146 = arith.constant 20 : index
    %c0_147 = arith.constant 0 : index
    %253 = vector.load %arg10[%c20_146, %c0_147] : memref<32x256xf32, #tpu.memory_space<vmem>>, vector<2x256xf32>
    %c4_148 = arith.constant 4 : index
    %c768_149 = arith.constant 768 : index
    %254 = vector.load %arg11[%c4_148, %c768_149] : memref<8x2304xf32, #tpu.memory_space<vmem>>, vector<2x256xf32>
    tpu.vector_store %arg11[%c4_148, %c768_149], %253 {strides = array<i32>} : memref<8x2304xf32, #tpu.memory_space<vmem>>, vector<2x256xf32>,
    %c24_150 = arith.constant 24 : index
    %c0_151 = arith.constant 0 : index
    %255 = vector.load %arg10[%c24_150, %c0_151] : memref<32x256xf32, #tpu.memory_space<vmem>>, vector<2x256xf32>
    %c6_152 = arith.constant 6 : index
    %c768_153 = arith.constant 768 : index
    %256 = vector.load %arg11[%c6_152, %c768_153] : memref<8x2304xf32, #tpu.memory_space<vmem>>, vector<2x256xf32>
    tpu.vector_store %arg11[%c6_152, %c768_153], %255 {strides = array<i32>} : memref<8x2304xf32, #tpu.memory_space<vmem>>, vector<2x256xf32>,
    %c5_154 = arith.constant 5 : index
    %c0_155 = arith.constant 0 : index
    %257 = vector.load %arg10[%c5_154, %c0_155] : memref<32x256xf32, #tpu.memory_space<vmem>>, vector<2x256xf32>
    %c0_156 = arith.constant 0 : index
    %c1024_157 = arith.constant 1024 : index
    %258 = vector.load %arg11[%c0_156, %c1024_157] : memref<8x2304xf32, #tpu.memory_space<vmem>>, vector<2x256xf32>
    tpu.vector_store %arg11[%c0_156, %c1024_157], %257 {strides = array<i32>} : memref<8x2304xf32, #tpu.memory_space<vmem>>, vector<2x256xf32>,
    %c9_158 = arith.constant 9 : index
    %c0_159 = arith.constant 0 : index
    %259 = vector.load %arg10[%c9_158, %c0_159] : memref<32x256xf32, #tpu.memory_space<vmem>>, vector<2x256xf32>
    %c2_160 = arith.constant 2 : index
    %c1024_161 = arith.constant 1024 : index
    %260 = vector.load %arg11[%c2_160, %c1024_161] : memref<8x2304xf32, #tpu.memory_space<vmem>>, vector<2x256xf32>
    tpu.vector_store %arg11[%c2_160, %c1024_161], %259 {strides = array<i32>} : memref<8x2304xf32, #tpu.memory_space<vmem>>, vector<2x256xf32>,
    %c21_162 = arith.constant 21 : index
    %c0_163 = arith.constant 0 : index
    %261 = vector.load %arg10[%c21_162, %c0_163] : memref<32x256xf32, #tpu.memory_space<vmem>>, vector<2x256xf32>
    %c4_164 = arith.constant 4 : index
    %c1024_165 = arith.constant 1024 : index
    %262 = vector.load %arg11[%c4_164, %c1024_165] : memref<8x2304xf32, #tpu.memory_space<vmem>>, vector<2x256xf32>
    tpu.vector_store %arg11[%c4_164, %c1024_165], %261 {strides = array<i32>} : memref<8x2304xf32, #tpu.memory_space<vmem>>, vector<2x256xf32>,
    %c25_166 = arith.constant 25 : index
    %c0_167 = arith.constant 0 : index
    %263 = vector.load %arg10[%c25_166, %c0_167] : memref<32x256xf32, #tpu.memory_space<vmem>>, vector<2x256xf32>
    %c6_168 = arith.constant 6 : index
    %c1024_169 = arith.constant 1024 : index
    %264 = vector.load %arg11[%c6_168, %c1024_169] : memref<8x2304xf32, #tpu.memory_space<vmem>>, vector<2x256xf32>
    tpu.vector_store %arg11[%c6_168, %c1024_169], %263 {strides = array<i32>} : memref<8x2304xf32, #tpu.memory_space<vmem>>, vector<2x256xf32>,
    %c6_170 = arith.constant 6 : index
    %c0_171 = arith.constant 0 : index
    %265 = vector.load %arg10[%c6_170, %c0_171] : memref<32x256xf32, #tpu.memory_space<vmem>>, vector<2x256xf32>
    %c0_172 = arith.constant 0 : index
    %c1280 = arith.constant 1280 : index
    %266 = vector.load %arg11[%c0_172, %c1280] : memref<8x2304xf32, #tpu.memory_space<vmem>>, vector<2x256xf32>
    tpu.vector_store %arg11[%c0_172, %c1280], %265 {strides = array<i32>} : memref<8x2304xf32, #tpu.memory_space<vmem>>, vector<2x256xf32>,
    %c10_173 = arith.constant 10 : index
    %c0_174 = arith.constant 0 : index
    %267 = vector.load %arg10[%c10_173, %c0_174] : memref<32x256xf32, #tpu.memory_space<vmem>>, vector<2x256xf32>
    %c2_175 = arith.constant 2 : index
    %c1280_176 = arith.constant 1280 : index
    %268 = vector.load %arg11[%c2_175, %c1280_176] : memref<8x2304xf32, #tpu.memory_space<vmem>>, vector<2x256xf32>
    tpu.vector_store %arg11[%c2_175, %c1280_176], %267 {strides = array<i32>} : memref<8x2304xf32, #tpu.memory_space<vmem>>, vector<2x256xf32>,
    %c22_177 = arith.constant 22 : index
    %c0_178 = arith.constant 0 : index
    %269 = vector.load %arg10[%c22_177, %c0_178] : memref<32x256xf32, #tpu.memory_space<vmem>>, vector<2x256xf32>
    %c4_179 = arith.constant 4 : index
    %c1280_180 = arith.constant 1280 : index
    %270 = vector.load %arg11[%c4_179, %c1280_180] : memref<8x2304xf32, #tpu.memory_space<vmem>>, vector<2x256xf32>
    tpu.vector_store %arg11[%c4_179, %c1280_180], %269 {strides = array<i32>} : memref<8x2304xf32, #tpu.memory_space<vmem>>, vector<2x256xf32>,
    %c26_181 = arith.constant 26 : index
    %c0_182 = arith.constant 0 : index
    %271 = vector.load %arg10[%c26_181, %c0_182] : memref<32x256xf32, #tpu.memory_space<vmem>>, vector<2x256xf32>
    %c6_183 = arith.constant 6 : index
    %c1280_184 = arith.constant 1280 : index
    %272 = vector.load %arg11[%c6_183, %c1280_184] : memref<8x2304xf32, #tpu.memory_space<vmem>>, vector<2x256xf32>
    tpu.vector_store %arg11[%c6_183, %c1280_184], %271 {strides = array<i32>} : memref<8x2304xf32, #tpu.memory_space<vmem>>, vector<2x256xf32>,
    %c8_185 = arith.constant 8 : index
    %c0_186 = arith.constant 0 : index
    %273 = vector.load %arg10[%c8_185, %c0_186] : memref<32x256xf32, #tpu.memory_space<vmem>>, vector<2x256xf32>
    %c0_187 = arith.constant 0 : index
    %c1536 = arith.constant 1536 : index
    %274 = vector.load %arg11[%c0_187, %c1536] : memref<8x2304xf32, #tpu.memory_space<vmem>>, vector<2x256xf32>
    tpu.vector_store %arg11[%c0_187, %c1536], %273 {strides = array<i32>} : memref<8x2304xf32, #tpu.memory_space<vmem>>, vector<2x256xf32>,
    %c12_188 = arith.constant 12 : index
    %c0_189 = arith.constant 0 : index
    %275 = vector.load %arg10[%c12_188, %c0_189] : memref<32x256xf32, #tpu.memory_space<vmem>>, vector<2x256xf32>
    %c2_190 = arith.constant 2 : index
    %c1536_191 = arith.constant 1536 : index
    %276 = vector.load %arg11[%c2_190, %c1536_191] : memref<8x2304xf32, #tpu.memory_space<vmem>>, vector<2x256xf32>
    tpu.vector_store %arg11[%c2_190, %c1536_191], %275 {strides = array<i32>} : memref<8x2304xf32, #tpu.memory_space<vmem>>, vector<2x256xf32>,
    %c24_192 = arith.constant 24 : index
    %c0_193 = arith.constant 0 : index
    %277 = vector.load %arg10[%c24_192, %c0_193] : memref<32x256xf32, #tpu.memory_space<vmem>>, vector<2x256xf32>
    %c4_194 = arith.constant 4 : index
    %c1536_195 = arith.constant 1536 : index
    %278 = vector.load %arg11[%c4_194, %c1536_195] : memref<8x2304xf32, #tpu.memory_space<vmem>>, vector<2x256xf32>
    tpu.vector_store %arg11[%c4_194, %c1536_195], %277 {strides = array<i32>} : memref<8x2304xf32, #tpu.memory_space<vmem>>, vector<2x256xf32>,
    %c28_196 = arith.constant 28 : index
    %c0_197 = arith.constant 0 : index
    %279 = vector.load %arg10[%c28_196, %c0_197] : memref<32x256xf32, #tpu.memory_space<vmem>>, vector<2x256xf32>
    %c6_198 = arith.constant 6 : index
    %c1536_199 = arith.constant 1536 : index
    %280 = vector.load %arg11[%c6_198, %c1536_199] : memref<8x2304xf32, #tpu.memory_space<vmem>>, vector<2x256xf32>
    tpu.vector_store %arg11[%c6_198, %c1536_199], %279 {strides = array<i32>} : memref<8x2304xf32, #tpu.memory_space<vmem>>, vector<2x256xf32>,
    %c9_200 = arith.constant 9 : index
    %c0_201 = arith.constant 0 : index
    %281 = vector.load %arg10[%c9_200, %c0_201] : memref<32x256xf32, #tpu.memory_space<vmem>>, vector<2x256xf32>
    %c0_202 = arith.constant 0 : index
    %c1792 = arith.constant 1792 : index
    %282 = vector.load %arg11[%c0_202, %c1792] : memref<8x2304xf32, #tpu.memory_space<vmem>>, vector<2x256xf32>
    tpu.vector_store %arg11[%c0_202, %c1792], %281 {strides = array<i32>} : memref<8x2304xf32, #tpu.memory_space<vmem>>, vector<2x256xf32>,
    %c13_203 = arith.constant 13 : index
    %c0_204 = arith.constant 0 : index
    %283 = vector.load %arg10[%c13_203, %c0_204] : memref<32x256xf32, #tpu.memory_space<vmem>>, vector<2x256xf32>
    %c2_205 = arith.constant 2 : index
    %c1792_206 = arith.constant 1792 : index
    %284 = vector.load %arg11[%c2_205, %c1792_206] : memref<8x2304xf32, #tpu.memory_space<vmem>>, vector<2x256xf32>
    tpu.vector_store %arg11[%c2_205, %c1792_206], %283 {strides = array<i32>} : memref<8x2304xf32, #tpu.memory_space<vmem>>, vector<2x256xf32>,
    %c25_207 = arith.constant 25 : index
    %c0_208 = arith.constant 0 : index
    %285 = vector.load %arg10[%c25_207, %c0_208] : memref<32x256xf32, #tpu.memory_space<vmem>>, vector<2x256xf32>
    %c4_209 = arith.constant 4 : index
    %c1792_210 = arith.constant 1792 : index
    %286 = vector.load %arg11[%c4_209, %c1792_210] : memref<8x2304xf32, #tpu.memory_space<vmem>>, vector<2x256xf32>
    tpu.vector_store %arg11[%c4_209, %c1792_210], %285 {strides = array<i32>} : memref<8x2304xf32, #tpu.memory_space<vmem>>, vector<2x256xf32>,
    %c29_211 = arith.constant 29 : index
    %c0_212 = arith.constant 0 : index
    %287 = vector.load %arg10[%c29_211, %c0_212] : memref<32x256xf32, #tpu.memory_space<vmem>>, vector<2x256xf32>
    %c6_213 = arith.constant 6 : index
    %c1792_214 = arith.constant 1792 : index
    %288 = vector.load %arg11[%c6_213, %c1792_214] : memref<8x2304xf32, #tpu.memory_space<vmem>>, vector<2x256xf32>
    tpu.vector_store %arg11[%c6_213, %c1792_214], %287 {strides = array<i32>} : memref<8x2304xf32, #tpu.memory_space<vmem>>, vector<2x256xf32>,
    %c10_215 = arith.constant 10 : index
    %c0_216 = arith.constant 0 : index
    %289 = vector.load %arg10[%c10_215, %c0_216] : memref<32x256xf32, #tpu.memory_space<vmem>>, vector<2x256xf32>
    %c0_217 = arith.constant 0 : index
    %c2048 = arith.constant 2048 : index
    %290 = vector.load %arg11[%c0_217, %c2048] : memref<8x2304xf32, #tpu.memory_space<vmem>>, vector<2x256xf32>
    tpu.vector_store %arg11[%c0_217, %c2048], %289 {strides = array<i32>} : memref<8x2304xf32, #tpu.memory_space<vmem>>, vector<2x256xf32>,
    %c14_218 = arith.constant 14 : index
    %c0_219 = arith.constant 0 : index
    %291 = vector.load %arg10[%c14_218, %c0_219] : memref<32x256xf32, #tpu.memory_space<vmem>>, vector<2x256xf32>
    %c2_220 = arith.constant 2 : index
    %c2048_221 = arith.constant 2048 : index
    %292 = vector.load %arg11[%c2_220, %c2048_221] : memref<8x2304xf32, #tpu.memory_space<vmem>>, vector<2x256xf32>
    tpu.vector_store %arg11[%c2_220, %c2048_221], %291 {strides = array<i32>} : memref<8x2304xf32, #tpu.memory_space<vmem>>, vector<2x256xf32>,
    %c26_222 = arith.constant 26 : index
    %c0_223 = arith.constant 0 : index
    %293 = vector.load %arg10[%c26_222, %c0_223] : memref<32x256xf32, #tpu.memory_space<vmem>>, vector<2x256xf32>
    %c4_224 = arith.constant 4 : index
    %c2048_225 = arith.constant 2048 : index
    %294 = vector.load %arg11[%c4_224, %c2048_225] : memref<8x2304xf32, #tpu.memory_space<vmem>>, vector<2x256xf32>
    tpu.vector_store %arg11[%c4_224, %c2048_225], %293 {strides = array<i32>} : memref<8x2304xf32, #tpu.memory_space<vmem>>, vector<2x256xf32>,
    %c30_226 = arith.constant 30 : index
    %c0_227 = arith.constant 0 : index
    %295 = vector.load %arg10[%c30_226, %c0_227] : memref<32x256xf32, #tpu.memory_space<vmem>>, vector<2x256xf32>
    %c6_228 = arith.constant 6 : index
    %c2048_229 = arith.constant 2048 : index
    %296 = vector.load %arg11[%c6_228, %c2048_229] : memref<8x2304xf32, #tpu.memory_space<vmem>>, vector<2x256xf32>
    tpu.vector_store %arg11[%c6_228, %c2048_229], %295 {strides = array<i32>} : memref<8x2304xf32, #tpu.memory_space<vmem>>, vector<2x256xf32>,
    %c0_230 = arith.constant 0 : index
    %c0_231 = arith.constant 0 : index
    %297 = vector.load %arg11[%c0_230, %c0_231] : memref<8x2304xf32, #tpu.memory_space<vmem>>, vector<8x2304xf32>
    %298 = arith.truncf %297 : vector<8x2304xf32> to vector<8x2304xbf16>
    %c0_232 = arith.constant 0 : index
    %c0_233 = arith.constant 0 : index
    %299 = vector.load %arg3[%c0_232, %c0_233] : memref<2304x512xbf16, #tpu.memory_space<vmem>>, vector<2304x512xbf16>
    %cst_234 = arith.constant dense<0.000000e+00> : vector<8x512xf32>
    %300 = tpu.matmul %298, %299, %cst_234 {dimension_numbers = #tpu.dot_dimension_numbers<[1], [0], [0], [1], [0, 0, 1, 1], [], []>} : vector<8x2304xbf16>, vector<2304x512xbf16>, vector<8x512xf32> -> vector<8x512xf32>
    %c0_235 = arith.constant 0 : index
    %c0_236 = arith.constant 0 : index
    %301 = vector.load %arg4[%c0_235, %c0_236] : memref<1x512xf32, #tpu.memory_space<vmem>>, vector<1x512xf32>
    %302 = vector.broadcast %301 : vector<1x512xf32> to vector<8x512xf32>
    %303 = arith.addf %300, %302 : vector<8x512xf32>
    %cst_237 = arith.constant 0.000000e+00 : f32
    %304 = vector.broadcast %cst_237 : f32 to vector<8x512xf32>
    %305 = arith.maximumf %303, %304 : vector<8x512xf32>
    %c0_238 = arith.constant 0 : index
    %c0_239 = arith.constant 0 : index
    %306 = vector.load %arg5[%c0_238, %c0_239] : memref<512x512xbf16, #tpu.memory_space<vmem>>, vector<512x512xbf16>
    %c0_240 = arith.constant 0 : index
    %c0_241 = arith.constant 0 : index
    %307 = vector.load %arg6[%c0_240, %c0_241] : memref<1x512xf32, #tpu.memory_space<vmem>>, vector<1x512xf32>
    %308 = arith.truncf %305 : vector<8x512xf32> to vector<8x512xbf16>
    %cst_242 = arith.constant dense<0.000000e+00> : vector<8x512xf32>
    %309 = tpu.matmul %308, %306, %cst_242 {dimension_numbers = #tpu.dot_dimension_numbers<[1], [0], [0], [1], [0, 0, 1, 1], [], []>} : vector<8x512xbf16>, vector<512x512xbf16>, vector<8x512xf32> -> vector<8x512xf32>
    %310 = vector.broadcast %307 : vector<1x512xf32> to vector<8x512xf32>
    %311 = arith.addf %309, %310 : vector<8x512xf32>
    %cst_243 = arith.constant 0.000000e+00 : f32
    %312 = vector.broadcast %cst_243 : f32 to vector<8x512xf32>
    %313 = arith.maximumf %311, %312 : vector<8x512xf32>
    %314 = arith.truncf %313 : vector<8x512xf32> to vector<8x512xbf16>
    %cst_244 = arith.constant dense<0.000000e+00> : vector<8x512xf32>
    %315 = tpu.matmul %314, %306, %cst_244 {dimension_numbers = #tpu.dot_dimension_numbers<[1], [0], [0], [1], [0, 0, 1, 1], [], []>} : vector<8x512xbf16>, vector<512x512xbf16>, vector<8x512xf32> -> vector<8x512xf32>
    %316 = vector.broadcast %307 : vector<1x512xf32> to vector<8x512xf32>
    %317 = arith.addf %315, %316 : vector<8x512xf32>
    %cst_245 = arith.constant 0.000000e+00 : f32
    %318 = vector.broadcast %cst_245 : f32 to vector<8x512xf32>
    %319 = arith.maximumf %317, %318 : vector<8x512xf32>
    %c0_246 = arith.constant 0 : index
    %c0_247 = arith.constant 0 : index
    %320 = vector.load %arg7[%c0_246, %c0_247] : memref<512x128xbf16, #tpu.memory_space<vmem>>, vector<512x128xbf16>
    %c0_248 = arith.constant 0 : index
    %c0_249 = arith.constant 0 : index
    %321 = vector.load %arg8[%c0_248, %c0_249] : memref<1x128xf32, #tpu.memory_space<vmem>>, vector<1x128xf32>
    %322 = vector.extract_strided_slice %319 {offsets = [0, 0], sizes = [4, 512], strides = [1, 1]} : vector<8x512xf32> to vector<4x512xf32>
    %cst_250 = arith.constant dense<0.000000e+00> : vector<512xf32>
    %323 = vector.multi_reduction <add>, %322, %cst_250 [0] : vector<4x512xf32> to vector<512xf32>
    %324 = vector.shape_cast %323 : vector<512xf32> to vector<1x512xf32>
    %cst_251 = arith.constant 4.000000e+00 : f32
    %325 = vector.broadcast %cst_251 : f32 to vector<1x512xf32>
    %326 = arith.divf %324, %325 : vector<1x512xf32>
    %327 = arith.truncf %326 : vector<1x512xf32> to vector<1x512xbf16>
    %cst_252 = arith.constant dense<0.000000e+00> : vector<1x128xf32>
    %328 = tpu.matmul %327, %320, %cst_252 {dimension_numbers = #tpu.dot_dimension_numbers<[1], [0], [0], [1], [0, 0, 1, 1], [], []>} : vector<1x512xbf16>, vector<512x128xbf16>, vector<1x128xf32> -> vector<1x128xf32>
    %329 = arith.addf %328, %321 : vector<1x128xf32>
    %cst_253 = arith.constant dense<0xFF800000> : vector<1xf32>
    %330 = vector.multi_reduction <maximumf>, %329, %cst_253 [1] : vector<1x128xf32> to vector<1xf32>
    %331 = vector.shape_cast %330 : vector<1xf32> to vector<1x1xf32>
    %332 = vector.broadcast %331 : vector<1x1xf32> to vector<1x128xf32>
    %333 = arith.subf %329, %332 : vector<1x128xf32>
    %334 = math.exp %333 : vector<1x128xf32>
    %cst_254 = arith.constant dense<0.000000e+00> : vector<1xf32>
    %335 = vector.multi_reduction <add>, %334, %cst_254 [1] : vector<1x128xf32> to vector<1xf32>
    %336 = vector.shape_cast %335 : vector<1xf32> to vector<1x1xf32>
    %337 = math.log %336 : vector<1x1xf32>
    %338 = vector.broadcast %337 : vector<1x1xf32> to vector<1x128xf32>
    %339 = arith.subf %333, %338 : vector<1x128xf32>
    %c0_255 = arith.constant 0 : index
    %c0_256 = arith.constant 0 : index
    %340 = vector.load %arg9[%c0_255, %c0_256] : memref<2x128xf32, #tpu.memory_space<vmem>>, vector<1x128xf32>
    tpu.vector_store %arg9[%c0_255, %c0_256], %339 {strides = array<i32>} : memref<2x128xf32, #tpu.memory_space<vmem>>, vector<1x128xf32>,
    %341 = vector.extract_strided_slice %319 {offsets = [4, 0], sizes = [4, 512], strides = [1, 1]} : vector<8x512xf32> to vector<4x512xf32>
    %cst_257 = arith.constant dense<0.000000e+00> : vector<512xf32>
    %342 = vector.multi_reduction <add>, %341, %cst_257 [0] : vector<4x512xf32> to vector<512xf32>
    %343 = vector.shape_cast %342 : vector<512xf32> to vector<1x512xf32>
    %cst_258 = arith.constant 4.000000e+00 : f32
    %344 = vector.broadcast %cst_258 : f32 to vector<1x512xf32>
    %345 = arith.divf %343, %344 : vector<1x512xf32>
    %346 = arith.truncf %345 : vector<1x512xf32> to vector<1x512xbf16>
    %cst_259 = arith.constant dense<0.000000e+00> : vector<1x128xf32>
    %347 = tpu.matmul %346, %320, %cst_259 {dimension_numbers = #tpu.dot_dimension_numbers<[1], [0], [0], [1], [0, 0, 1, 1], [], []>} : vector<1x512xbf16>, vector<512x128xbf16>, vector<1x128xf32> -> vector<1x128xf32>
    %348 = arith.addf %347, %321 : vector<1x128xf32>
    %cst_260 = arith.constant dense<0xFF800000> : vector<1xf32>
    %349 = vector.multi_reduction <maximumf>, %348, %cst_260 [1] : vector<1x128xf32> to vector<1xf32>
    %350 = vector.shape_cast %349 : vector<1xf32> to vector<1x1xf32>
    %351 = vector.broadcast %350 : vector<1x1xf32> to vector<1x128xf32>
    %352 = arith.subf %348, %351 : vector<1x128xf32>
    %353 = math.exp %352 : vector<1x128xf32>
    %cst_261 = arith.constant dense<0.000000e+00> : vector<1xf32>
    %354 = vector.multi_reduction <add>, %353, %cst_261 [1] : vector<1x128xf32> to vector<1xf32>
    %355 = vector.shape_cast %354 : vector<1xf32> to vector<1x1xf32>
    %356 = math.log %355 : vector<1x1xf32>
    %357 = vector.broadcast %356 : vector<1x1xf32> to vector<1x128xf32>
    %358 = arith.subf %352, %357 : vector<1x128xf32>
    %c1_262 = arith.constant 1 : index
    %c0_263 = arith.constant 0 : index
    %359 = vector.load %arg9[%c1_262, %c0_263] : memref<2x128xf32, #tpu.memory_space<vmem>>, vector<1x128xf32>
    tpu.vector_store %arg9[%c1_262, %c0_263], %358 {strides = array<i32>} : memref<2x128xf32, #tpu.memory_space<vmem>>, vector<1x128xf32>,
    return
  }
}

</mosaic_0001>

<llo_original>
// kernel: m2_forward.1
$region0: #{m2_forward.1}
  #allocation0 [shape = 'u32[]', space=smem, size = 0x4, offset = 0x4, fixed_abs, tag = 'smem constant byte address 0x4 - core index']
  #allocation1 [shape = 'u32[144,128]{1,0:T(1,128)}', space=vmem, size = 0x12000, scoped, tag = 'internal scratch']
  #allocation2 [shape = 'f32[32,256]{1,0:T(8,128)}', space=vmem, size = 0x8000, scoped, tag = 'scratch operand']
  #allocation3 [shape = 'f32[8,2304]{1,0:T(8,128)}', space=vmem, size = 0x12000, scoped, tag = 'scratch operand']
  %s0 = inlined_call_operand.vmem [shape: f32[2,10,10,128], index: 0, kind: input, shape index: {}]
  %s1 = inlined_call_operand.hbm [shape: bf16[1152,256], index: 1, kind: input, shape index: {}]
  %s2 = inlined_call_operand.hbm [shape: f32[1,256], index: 2, kind: input, shape index: {}]
  %s3 = inlined_call_operand.hbm [shape: bf16[2304,512], index: 3, kind: input, shape index: {}]
  %s4 = inlined_call_operand.hbm [shape: f32[1,512], index: 4, kind: input, shape index: {}]
  %s5 = inlined_call_operand.hbm [shape: bf16[512,512], index: 5, kind: input, shape index: {}]
  %s6 = inlined_call_operand.hbm [shape: f32[1,512], index: 6, kind: input, shape index: {}]
  %s7 = inlined_call_operand.hbm [shape: bf16[512,128], index: 7, kind: input, shape index: {}]
  %s8 = inlined_call_operand.hbm [shape: f32[1,128], index: 8, kind: input, shape index: {}]
  %s9 = inlined_call_operand.hbm [shape: f32[2,128], index: 9, kind: output, shape index: {}]
  %s10 = sld [smem:[#allocation0]]
  $region78: #{m2_forward.1} parent=0
    _
  %s12 = ssub.s32 1, %s10
  %s13 = scalar_select 0, %s12, %s10
  $region1: #{m2_forward.1} parent=0
    #allocation4 [shape = 'u8[589824]{0}', space=vmem, size = 0x90000, scoped, tag = 'input window, operand 1, single buffered']
    #allocation5 [shape = 's32[1]{0}', space=sflag, size = 0x4, scoped, tag = 'scoped memory for m2_forward.1']
    #allocation6 [shape = 's32[1]{0}', space=sflag, size = 0x4, scoped, tag = 'scoped memory for m2_forward.1']
    #allocation7 [shape = 'u8[1024]{0}', space=vmem, size = 0x400, scoped, tag = 'input window, operand 2, single buffered']
    #allocation8 [shape = 's32[1]{0}', space=sflag, size = 0x4, scoped, tag = 'scoped memory for m2_forward.1']
    #allocation9 [shape = 'u8[2359296]{0}', space=vmem, size = 0x240000, scoped, tag = 'input window, operand 3, single buffered']
    #allocation10 [shape = 'u8[2048]{0}', space=vmem, size = 0x800, scoped, tag = 'input window, operand 4, single buffered']
    #allocation11 [shape = 's32[1]{0}', space=sflag, size = 0x4, scoped, tag = 'scoped memory for m2_forward.1']
    #allocation12 [shape = 'u8[524288]{0}', space=vmem, size = 0x80000, scoped, tag = 'input window, operand 5, single buffered']
    #allocation13 [shape = 'u8[2048]{0}', space=vmem, size = 0x800, scoped, tag = 'input window, operand 6, single buffered']
    #allocation14 [shape = 's32[1]{0}', space=sflag, size = 0x4, scoped, tag = 'scoped memory for m2_forward.1']
    #allocation15 [shape = 'u8[131072]{0}', space=vmem, size = 0x20000, scoped, tag = 'input window, operand 7, single buffered']
    #allocation16 [shape = 'u8[512]{0}', space=vmem, size = 0x400, scoped, tag = 'input window, operand 8, single buffered']
    #allocation17 [shape = 's32[1]{0}', space=sflag, size = 0x4, scoped, tag = 'scoped memory for m2_forward.1']
    #allocation18 [shape = 'u8[1024]{0}', space=vmem, size = 0x400, scoped, tag = 'output window, operand 0, single buffered']
    %14 = vsyncpa [#allocation5], 0
    %15 = vsyncpa [#allocation8], 0
    %16 = vsyncpa [#allocation11], 0
    %17 = vsyncpa [#allocation14], 0
    %18 = vsyncpa [#allocation17], 0
    %19 = vsyncpa [#allocation6], 0
    // Predicated region
    $region2: #{m2_forward.1} parent=1 // pred_check
      _
    $region3: #{m2_forward.1} parent=1 // pred_check_branch
      %21 = sbr.rel (0) target = $region5
    $region4: #{m2_forward.1} parent=1 // pred_region
      _
    $region5: #{m2_forward.1} parent=1 // pred_fallthru
      _
    // Predicated region
    $region6: #{m2_forward.1} parent=1 // pred_check
      _
    $region7: #{m2_forward.1} parent=1 // pred_check_branch
      %23 = sbr.rel (0) target = $region9
    $region8: #{m2_forward.1} parent=1 // pred_region
      %s25 = ssub.s32 18432, 18432
      %26 = vsyncadd [#allocation5], %s25
      %s27 = sshll.u32 [#allocation4], 4
      %s28 = int_to_ptr.vmem [resolvable:$true] %s27
      %33 = dma.hbm_to_vmem [thread:$0]  %s1, 18432, %s28, [#allocation5], 128, 128, 8
    $region9: #{m2_forward.1} parent=1 // pred_fallthru
      _
    // Predicated region
    $region10: #{m2_forward.1} parent=1 // pred_check
      _
    $region11: #{m2_forward.1} parent=1 // pred_check_branch
      %35 = sbr.rel (0) target = $region13
    $region12: #{m2_forward.1} parent=1 // pred_region
      %s37 = ssub.s32 32, 32
      %38 = vsyncadd [#allocation8], %s37
      %s40 = sshll.u32 [#allocation7], 4
      %s41 = int_to_ptr.vmem [resolvable:$true] %s40
      %43 = dma.hbm_to_vmem [thread:$0]  %s2, 32, %s41, [#allocation8]
    $region13: #{m2_forward.1} parent=1 // pred_fallthru
      _
    // Predicated region
    $region14: #{m2_forward.1} parent=1 // pred_check
      _
    $region15: #{m2_forward.1} parent=1 // pred_check_branch
      %45 = sbr.rel (0) target = $region17
    $region16: #{m2_forward.1} parent=1 // pred_region
      %s47 = ssub.s32 73728, 73728
      %48 = vsyncadd [#allocation8], %s47
      %s49 = sshll.u32 [#allocation9], 4
      %s50 = int_to_ptr.vmem [resolvable:$true] %s49
      %55 = dma.hbm_to_vmem [thread:$0]  %s3, 73728, %s50, [#allocation8], 256, 256, 16
    $region17: #{m2_forward.1} parent=1 // pred_fallthru
      _
    // Predicated region
    $region18: #{m2_forward.1} parent=1 // pred_check
      _
    $region19: #{m2_forward.1} parent=1 // pred_check_branch
      %57 = sbr.rel (0) target = $region21
    $region20: #{m2_forward.1} parent=1 // pred_region
      %s59 = ssub.s32 64, 64
      %60 = vsyncadd [#allocation11], %s59
      %s62 = sshll.u32 [#allocation10], 4
      %s63 = int_to_ptr.vmem [resolvable:$true] %s62
      %65 = dma.hbm_to_vmem [thread:$0]  %s4, 64, %s63, [#allocation11]
    $region21: #{m2_forward.1} parent=1 // pred_fallthru
      _
    // Predicated region
    $region22: #{m2_forward.1} parent=1 // pred_check
      _
    $region23: #{m2_forward.1} parent=1 // pred_check_branch
      %67 = sbr.rel (0) target = $region25
    $region24: #{m2_forward.1} parent=1 // pred_region
      %s69 = ssub.s32 16384, 16384
      %70 = vsyncadd [#allocation11], %s69
      %s71 = sshll.u32 [#allocation12], 4
      %s72 = int_to_ptr.vmem [resolvable:$true] %s71
      %77 = dma.hbm_to_vmem [thread:$0]  %s5, 16384, %s72, [#allocation11], 256, 256, 16
    $region25: #{m2_forward.1} parent=1 // pred_fallthru
      _
    // Predicated region
    $region26: #{m2_forward.1} parent=1 // pred_check
      _
    $region27: #{m2_forward.1} parent=1 // pred_check_branch
      %79 = sbr.rel (0) target = $region29
    $region28: #{m2_forward.1} parent=1 // pred_region
      %s81 = ssub.s32 64, 64
      %82 = vsyncadd [#allocation14], %s81
      %s84 = sshll.u32 [#allocation13], 4
      %s85 = int_to_ptr.vmem [resolvable:$true] %s84
      %87 = dma.hbm_to_vmem [thread:$0]  %s6, 64, %s85, [#allocation14]
    $region29: #{m2_forward.1} parent=1 // pred_fallthru
      _
    // Predicated region
    $region30: #{m2_forward.1} parent=1 // pred_check
      _
    $region31: #{m2_forward.1} parent=1 // pred_check_branch
      %89 = sbr.rel (0) target = $region33
    $region32: #{m2_forward.1} parent=1 // pred_region
      %s91 = ssub.s32 4096, 4096
      %92 = vsyncadd [#allocation14], %s91
      %s93 = sshll.u32 [#allocation15], 4
      %s94 = int_to_ptr.vmem [resolvable:$true] %s93
      %99 = dma.hbm_to_vmem [thread:$0]  %s7, 4096, %s94, [#allocation14], 64, 64, 4
    $region33: #{m2_forward.1} parent=1 // pred_fallthru
      _
    // Predicated region
    $region34: #{m2_forward.1} parent=1 // pred_check
      _
    $region35: #{m2_forward.1} parent=1 // pred_check_branch
      %101 = sbr.rel (0) target = $region37
    $region36: #{m2_forward.1} parent=1 // pred_region
      %s103 = ssub.s32 16, 16
      %104 = vsyncadd [#allocation17], %s103
      %s106 = sshll.u32 [#allocation16], 4
      %s107 = int_to_ptr.vmem [resolvable:$true] %s106
      %109 = dma.hbm_to_vmem [thread:$0]  %s8, 16, %s107, [#allocation17]
    $region37: #{m2_forward.1} parent=1 // pred_fallthru
      _
    // Predicated region
    $region38: #{m2_forward.1} parent=1 // pred_check
      _
    $region39: #{m2_forward.1} parent=1 // pred_check_branch
      %111 = sbr.rel (0) target = $region41
    $region40: #{m2_forward.1} parent=1 // pred_region
      %112 = dma.done [#allocation5], 18432
    $region41: #{m2_forward.1} parent=1 // pred_fallthru
      _
    // Predicated region
    $region42: #{m2_forward.1} parent=1 // pred_check
      _
    $region43: #{m2_forward.1} parent=1 // pred_check_branch
      %114 = sbr.rel (0) target = $region45
    $region44: #{m2_forward.1} parent=1 // pred_region
      %115 = dma.done [#allocation8], 32
    $region45: #{m2_forward.1} parent=1 // pred_fallthru
      _
    // Predicated region
    $region46: #{m2_forward.1} parent=1 // pred_check
      _
    $region47: #{m2_forward.1} parent=1 // pred_check_branch
      %117 = sbr.rel (0) target = $region49
    $region48: #{m2_forward.1} parent=1 // pred_region
      %118 = dma.done [#allocation8], 73728
    $region49: #{m2_forward.1} parent=1 // pred_fallthru
      _
    // Predicated region
    $region50: #{m2_forward.1} parent=1 // pred_check
      _
    $region51: #{m2_forward.1} parent=1 // pred_check_branch
      %120 = sbr.rel (0) target = $region53
    $region52: #{m2_forward.1} parent=1 // pred_region
      %121 = dma.done [#allocation11], 64
    $region53: #{m2_forward.1} parent=1 // pred_fallthru
      _
    // Predicated region
    $region54: #{m2_forward.1} parent=1 // pred_check
      _
    $region55: #{m2_forward.1} parent=1 // pred_check_branch
      %123 = sbr.rel (0) target = $region57
    $region56: #{m2_forward.1} parent=1 // pred_region
      %124 = dma.done [#allocation11], 16384
    $region57: #{m2_forward.1} parent=1 // pred_fallthru
      _
    // Predicated region
    $region58: #{m2_forward.1} parent=1 // pred_check
      _
    $region59: #{m2_forward.1} parent=1 // pred_check_branch
      %126 = sbr.rel (0) target = $region61
    $region60: #{m2_forward.1} parent=1 // pred_region
      %127 = dma.done [#allocation14], 64
    $region61: #{m2_forward.1} parent=1 // pred_fallthru
      _
    // Predicated region
    $region62: #{m2_forward.1} parent=1 // pred_check
      _
    $region63: #{m2_forward.1} parent=1 // pred_check_branch
      %129 = sbr.rel (0) target = $region65
    $region64: #{m2_forward.1} parent=1 // pred_region
      %130 = dma.done [#allocation14], 4096
    $region65: #{m2_forward.1} parent=1 // pred_fallthru
      _
    // Predicated region
    $region66: #{m2_forward.1} parent=1 // pred_check
      _
    $region67: #{m2_forward.1} parent=1 // pred_check_branch
      %132 = sbr.rel (0) target = $region69
    $region68: #{m2_forward.1} parent=1 // pred_region
      %133 = dma.done [#allocation17], 16
    $region69: #{m2_forward.1} parent=1 // pred_fallthru
      _
    %v135 = vld [vmem:[%s0] sm:$0xff]
    %v136 = vld [vmem:[%s0 + $0x10] sm:$0xff]
    %v137 = vld [vmem:[%s0 + $0x20] sm:$0xff]
    %v138 = vld [vmem:[%s0 + $0x30] sm:$0xff]
    %v139 = vld [vmem:[%s0 + $0x40] sm:$0xff]
    %v140 = vld [vmem:[%s0 + $0x50] sm:$0xff]
    %v141 = vld [vmem:[%s0 + $0x60] sm:$0xff]
    %v142 = vld [vmem:[%s0 + $0x70] sm:$0xff]
    %v143 = vld [vmem:[%s0 + $0xa0] sm:$0xff]
    %v144 = vld [vmem:[%s0 + $0xb0] sm:$0xff]
    %v145 = vld [vmem:[%s0 + $0xc0] sm:$0xff]
    %v146 = vld [vmem:[%s0 + $0xd0] sm:$0xff]
    %v147 = vld [vmem:[%s0 + $0xe0] sm:$0xff]
    %v148 = vld [vmem:[%s0 + $0xf0] sm:$0xff]
    %v149 = vld [vmem:[%s0 + $0x100] sm:$0xff]
    %v150 = vld [vmem:[%s0 + $0x110] sm:$0xff]
    %v151 = vpack.c.bf16 %v136, %v135
    %v152 = vpack.c.bf16 %v138, %v137
    %v153 = vpack.c.bf16 %v140, %v139
    %v154 = vpack.c.bf16 %v142, %v141
    %v155 = vpack.c.bf16 %v144, %v143
    %v156 = vpack.c.bf16 %v146, %v145
    %v157 = vpack.c.bf16 %v148, %v147
    %v158 = vpack.c.bf16 %v150, %v149
    %v159 = vld [vmem:[#allocation4] sm:$0xff]
    %v160 = vld [vmem:[#allocation4 + $0x8] sm:$0xff]
    %v161 = vld [vmem:[#allocation4 + $0x10] sm:$0xff]
    %v162 = vld [vmem:[#allocation4 + $0x18] sm:$0xff]
    %v163 = vld [vmem:[#allocation4 + $0x20] sm:$0xff]
    %v164 = vld [vmem:[#allocation4 + $0x28] sm:$0xff]
    %v165 = vld [vmem:[#allocation4 + $0x30] sm:$0xff]
    %v166 = vld [vmem:[#allocation4 + $0x38] sm:$0xff]
    %v167 = vld [vmem:[#allocation4 + $0x40] sm:$0xff]
    %v168 = vld [vmem:[#allocation4 + $0x48] sm:$0xff]
    %v169 = vld [vmem:[#allocation4 + $0x50] sm:$0xff]
    %v170 = vld [vmem:[#allocation4 + $0x58] sm:$0xff]
    %v171 = vld [vmem:[#allocation4 + $0x60] sm:$0xff]
    %v172 = vld [vmem:[#allocation4 + $0x68] sm:$0xff]
    %v173 = vld [vmem:[#allocation4 + $0x70] sm:$0xff]
    %v174 = vld [vmem:[#allocation4 + $0x78] sm:$0xff]
    %v175 = vld [vmem:[%s0 + $0x1] sm:$0xff]
    %v176 = vld [vmem:[%s0 + $0x11] sm:$0xff]
    %v177 = vld [vmem:[%s0 + $0x21] sm:$0xff]
    %v178 = vld [vmem:[%s0 + $0x31] sm:$0xff]
    %v179 = vld [vmem:[%s0 + $0x41] sm:$0xff]
    %v180 = vld [vmem:[%s0 + $0x51] sm:$0xff]
    %v181 = vld [vmem:[%s0 + $0x61] sm:$0xff]
    %v182 = vld [vmem:[%s0 + $0x71] sm:$0xff]
    %v183 = vld [vmem:[%s0 + $0xa1] sm:$0xff]
    %v184 = vld [vmem:[%s0 + $0xb1] sm:$0xff]
    %v185 = vld [vmem:[%s0 + $0xc1] sm:$0xff]
    %v186 = vld [vmem:[%s0 + $0xd1] sm:$0xff]
    %v187 = vld [vmem:[%s0 + $0xe1] sm:$0xff]
    %v188 = vld [vmem:[%s0 + $0xf1] sm:$0xff]
    %v189 = vld [vmem:[%s0 + $0x101] sm:$0xff]
    %v190 = vld [vmem:[%s0 + $0x111] sm:$0xff]
    %v191 = vpack.c.bf16 %v176, %v175
    %v192 = vpack.c.bf16 %v178, %v177
    %v193 = vpack.c.bf16 %v180, %v179
    %v194 = vpack.c.bf16 %v182, %v181
    %v195 = vpack.c.bf16 %v184, %v183
    %v196 = vpack.c.bf16 %v186, %v185
    %v197 = vpack.c.bf16 %v188, %v187
    %v198 = vpack.c.bf16 %v190, %v189
    %v199 = vld [vmem:[#allocation4 + $0x80] sm:$0xff]
    %v200 = vld [vmem:[#allocation4 + $0x88] sm:$0xff]
    %v201 = vld [vmem:[#allocation4 + $0x90] sm:$0xff]
    %v202 = vld [vmem:[#allocation4 + $0x98] sm:$0xff]
    %v203 = vld [vmem:[#allocation4 + $0xa0] sm:$0xff]
    %v204 = vld [vmem:[#allocation4 + $0xa8] sm:$0xff]
    %v205 = vld [vmem:[#allocation4 + $0xb0] sm:$0xff]
    %v206 = vld [vmem:[#allocation4 + $0xb8] sm:$0xff]
    %v207 = vld [vmem:[#allocation4 + $0xc0] sm:$0xff]
    %v208 = vld [vmem:[#allocation4 + $0xc8] sm:$0xff]
    %v209 = vld [vmem:[#allocation4 + $0xd0] sm:$0xff]
    %v210 = vld [vmem:[#allocation4 + $0xd8] sm:$0xff]
    %v211 = vld [vmem:[#allocation4 + $0xe0] sm:$0xff]
    %v212 = vld [vmem:[#allocation4 + $0xe8] sm:$0xff]
    %v213 = vld [vmem:[#allocation4 + $0xf0] sm:$0xff]
    %v214 = vld [vmem:[#allocation4 + $0xf8] sm:$0xff]
    %v231 = vunpack.c.l.b16 %v199
    %v232 = vunpack.c.h.b16 %v199
    %v233 = vunpack.c.l.b16 %v200
    %v234 = vunpack.c.h.b16 %v200
    %v235 = vunpack.c.l.b16 %v201
    %v236 = vunpack.c.h.b16 %v201
    %v237 = vunpack.c.l.b16 %v202
    %v238 = vunpack.c.h.b16 %v202
    %v239 = vunpack.c.l.b16 %v203
    %v240 = vunpack.c.h.b16 %v203
    %v241 = vunpack.c.l.b16 %v204
    %v242 = vunpack.c.h.b16 %v204
    %v243 = vunpack.c.l.b16 %v205
    %v244 = vunpack.c.h.b16 %v205
    %v245 = vunpack.c.l.b16 %v206
    %v246 = vunpack.c.h.b16 %v206
    %v247 = vunpack.c.l.b16 %v207
    %v248 = vunpack.c.h.b16 %v207
    %v249 = vunpack.c.l.b16 %v208
    %v250 = vunpack.c.h.b16 %v208
    %v251 = vunpack.c.l.b16 %v209
    %v252 = vunpack.c.h.b16 %v209
    %v253 = vunpack.c.l.b16 %v210
    %v254 = vunpack.c.h.b16 %v210
    %v255 = vunpack.c.l.b16 %v211
    %v256 = vunpack.c.h.b16 %v211
    %v257 = vunpack.c.l.b16 %v212
    %v258 = vunpack.c.h.b16 %v212
    %v259 = vunpack.c.l.b16 %v213
    %v260 = vunpack.c.h.b16 %v213
    %v261 = vunpack.c.l.b16 %v214
    %v262 = vunpack.c.h.b16 %v214
    %v263 = vpack.c.b16 %v233, %v231
    %v264 = vpack.c.b16 %v234, %v232
    %v265 = vpack.c.b16 %v237, %v235
    %v266 = vpack.c.b16 %v238, %v236
    %v267 = vpack.c.b16 %v241, %v239
    %v268 = vpack.c.b16 %v242, %v240
    %v269 = vpack.c.b16 %v245, %v243
    %v270 = vpack.c.b16 %v246, %v244
    %v271 = vpack.c.b16 %v249, %v247
    %v272 = vpack.c.b16 %v250, %v248
    %v273 = vpack.c.b16 %v253, %v251
    %v274 = vpack.c.b16 %v254, %v252
    %v275 = vpack.c.b16 %v257, %v255
    %v276 = vpack.c.b16 %v258, %v256
    %v277 = vpack.c.b16 %v261, %v259
    %v278 = vpack.c.b16 %v262, %v260
    %295 = vmatprep.subr.bf16.mxu0 %v278
    %296 = vmatpush1.bf16.msra.mxu0 %v277
    %297 = vmatprep.subr.bf16.mxu0 %v276
    %298 = vmatpush1.bf16.msra.mxu0 %v275
    %299 = vmatprep.subr.bf16.mxu0 %v274
    %300 = vmatpush1.bf16.msra.mxu0 %v273
    %301 = vmatprep.subr.bf16.mxu0 %v272
    %302 = vmatpush1.bf16.msra.mxu0 %v271
    %303 = vmatprep.subr.bf16.mxu0 %v270
    %304 = vmatpush1.bf16.msra.mxu0 %v269
    %305 = vmatprep.subr.bf16.mxu0 %v268
    %306 = vmatpush1.bf16.msra.mxu0 %v267
    %307 = vmatprep.subr.bf16.mxu0 %v266
    %308 = vmatpush1.bf16.msra.mxu0 %v265
    %309 = vmatprep.subr.bf16.mxu0 %v264
    %310 = vmatpush1.bf16.msra.mxu0 %v263
    %311 = vmatprep.subr.bf16.mxu0 0
    %312 = vmatpush2.bf16.msra.mxu0 0
    %313 = vmatprep.subr.bf16.mxu0 0
    %314 = vmatpush2.bf16.msra.mxu0 0
    %315 = vmatprep.subr.bf16.mxu0 0
    %316 = vmatpush2.bf16.msra.mxu0 0
    %317 = vmatprep.subr.bf16.mxu0 0
    %318 = vmatpush2.bf16.msra.mxu0 0
    %319 = vmatprep.subr.bf16.mxu0 0
    %320 = vmatpush2.bf16.msra.mxu0 0
    %321 = vmatprep.subr.bf16.mxu0 0
    %322 = vmatpush2.bf16.msra.mxu0 0
    %323 = vmatprep.subr.bf16.mxu0 0
    %324 = vmatpush2.bf16.msra.mxu0 0
    %325 = vmatprep.subr.bf16.mxu0 0
    %326 = vmatpush2.bf16.msra.mxu0 0
    %327 = vmatprep.mubr.bf16.mxu0 0
    %328 = vmatmul.mubr.bf16.gmra.mxu0 %v191
    %v329 = vpop.f32.mrf.mxu0
    %v330 = vadd.f32 0.0, %v329
    %v331 = vpop.f32.mrf.mxu0
    %v332 = vadd.f32 0.0, %v331
    %v333 = vpop.f32.mrf.mxu0
    %v334 = vadd.f32 0.0, %v333
    %v335 = vpop.f32.mrf.mxu0
    %v336 = vadd.f32 0.0, %v335
    %337 = vmatprep.mubr.bf16.mxu0 0
    %338 = vmatmul.mubr.bf16.gmra.mxu0 %v192
    %v339 = vpop.f32.mrf.mxu0
    %v340 = vadd.f32 0.0, %v339
    %v341 = vpop.f32.mrf.mxu0
    %v342 = vadd.f32 0.0, %v341
    %v343 = vpop.f32.mrf.mxu0
    %v344 = vadd.f32 0.0, %v343
    %v345 = vpop.f32.mrf.mxu0
    %v346 = vadd.f32 0.0, %v345
    %347 = vmatprep.mubr.bf16.mxu0 0
    %348 = vmatmul.mubr.bf16.gmra.mxu0 %v193
    %v349 = vpop.f32.mrf.mxu0
    %v350 = vadd.f32 0.0, %v349
    %v351 = vpop.f32.mrf.mxu0
    %v352 = vadd.f32 0.0, %v351
    %v353 = vpop.f32.mrf.mxu0
    %v354 = vadd.f32 0.0, %v353
    %v355 = vpop.f32.mrf.mxu0
    %v356 = vadd.f32 0.0, %v355
    %357 = vmatprep.mubr.bf16.mxu0 0
    %358 = vmatmul.mubr.bf16.gmra.mxu0 %v194
    %v359 = vpop.f32.mrf.mxu0
    %v360 = vadd.f32 0.0, %v359
    %v361 = vpop.f32.mrf.mxu0
    %v362 = vadd.f32 0.0, %v361
    %v363 = vpop.f32.mrf.mxu0
    %v364 = vadd.f32 0.0, %v363
    %v365 = vpop.f32.mrf.mxu0
    %v366 = vadd.f32 0.0, %v365
    %367 = vmatprep.mubr.bf16.mxu0 0
    %368 = vmatmul.mubr.bf16.gmra.mxu0 %v195
    %v369 = vpop.f32.mrf.mxu0
    %v370 = vadd.f32 0.0, %v369
    %v371 = vpop.f32.mrf.mxu0
    %v372 = vadd.f32 0.0, %v371
    %v373 = vpop.f32.mrf.mxu0
    %v374 = vadd.f32 0.0, %v373
    %v375 = vpop.f32.mrf.mxu0
    %v376 = vadd.f32 0.0, %v375
    %377 = vmatprep.mubr.bf16.mxu0 0
    %378 = vmatmul.mubr.bf16.gmra.mxu0 %v196
    %v379 = vpop.f32.mrf.mxu0
    %v380 = vadd.f32 0.0, %v379
    %v381 = vpop.f32.mrf.mxu0
    %v382 = vadd.f32 0.0, %v381
    %v383 = vpop.f32.mrf.mxu0
    %v384 = vadd.f32 0.0, %v383
    %v385 = vpop.f32.mrf.mxu0
    %v386 = vadd.f32 0.0, %v385
    %387 = vmatprep.mubr.bf16.mxu0 0
    %388 = vmatmul.mubr.bf16.gmra.mxu0 %v197
    %v389 = vpop.f32.mrf.mxu0
    %v390 = vadd.f32 0.0, %v389
    %v391 = vpop.f32.mrf.mxu0
    %v392 = vadd.f32 0.0, %v391
    %v393 = vpop.f32.mrf.mxu0
    %v394 = vadd.f32 0.0, %v393
    %v395 = vpop.f32.mrf.mxu0
    %v396 = vadd.f32 0.0, %v395
    %397 = vmatprep.mubr.bf16.mxu0 0
    %398 = vmatmul.mubr.bf16.gmra.mxu0 %v198
    %v399 = vpop.f32.mrf.mxu0
    %v400 = vadd.f32 0.0, %v399
    %v401 = vpop.f32.mrf.mxu0
    %v402 = vadd.f32 0.0, %v401
    %v403 = vpop.f32.mrf.mxu0
    %v404 = vadd.f32 0.0, %v403
    %v405 = vpop.f32.mrf.mxu0
    %v406 = vadd.f32 0.0, %v405
    %407 = vdwg.mxu0
    %v424 = vunpack.c.l.b16 %v159
    %v425 = vunpack.c.h.b16 %v159
    %v426 = vunpack.c.l.b16 %v160
    %v427 = vunpack.c.h.b16 %v160
    %v428 = vunpack.c.l.b16 %v161
    %v429 = vunpack.c.h.b16 %v161
    %v430 = vunpack.c.l.b16 %v162
    %v431 = vunpack.c.h.b16 %v162
    %v432 = vunpack.c.l.b16 %v163
    %v433 = vunpack.c.h.b16 %v163
    %v434 = vunpack.c.l.b16 %v164
    %v435 = vunpack.c.h.b16 %v164
    %v436 = vunpack.c.l.b16 %v165
    %v437 = vunpack.c.h.b16 %v165
    %v438 = vunpack.c.l.b16 %v166
    %v439 = vunpack.c.h.b16 %v166
    %v440 = vunpack.c.l.b16 %v167
    %v441 = vunpack.c.h.b16 %v167
    %v442 = vunpack.c.l.b16 %v168
    %v443 = vunpack.c.h.b16 %v168
    %v444 = vunpack.c.l.b16 %v169
    %v445 = vunpack.c.h.b16 %v169
    %v446 = vunpack.c.l.b16 %v170
    %v447 = vunpack.c.h.b16 %v170
    %v448 = vunpack.c.l.b16 %v171
    %v449 = vunpack.c.h.b16 %v171
    %v450 = vunpack.c.l.b16 %v172
    %v451 = vunpack.c.h.b16 %v172
    %v452 = vunpack.c.l.b16 %v173
    %v453 = vunpack.c.h.b16 %v173
    %v454 = vunpack.c.l.b16 %v174
    %v455 = vunpack.c.h.b16 %v174
    %v456 = vpack.c.b16 %v426, %v424
    %v457 = vpack.c.b16 %v427, %v425
    %v458 = vpack.c.b16 %v430, %v428
    %v459 = vpack.c.b16 %v431, %v429
    %v460 = vpack.c.b16 %v434, %v432
    %v461 = vpack.c.b16 %v435, %v433
    %v462 = vpack.c.b16 %v438, %v436
    %v463 = vpack.c.b16 %v439, %v437
    %v464 = vpack.c.b16 %v442, %v440
    %v465 = vpack.c.b16 %v443, %v441
    %v466 = vpack.c.b16 %v446, %v444
    %v467 = vpack.c.b16 %v447, %v445
    %v468 = vpack.c.b16 %v450, %v448
    %v469 = vpack.c.b16 %v451, %v449
    %v470 = vpack.c.b16 %v454, %v452
    %v471 = vpack.c.b16 %v455, %v453
    %488 = vmatprep.subr.bf16.mxu0 %v471
    %489 = vmatpush1.bf16.msra.mxu0 %v470
    %490 = vmatprep.subr.bf16.mxu0 %v469
    %491 = vmatpush1.bf16.msra.mxu0 %v468
    %492 = vmatprep.subr.bf16.mxu0 %v467
    %493 = vmatpush1.bf16.msra.mxu0 %v466
    %494 = vmatprep.subr.bf16.mxu0 %v465
    %495 = vmatpush1.bf16.msra.mxu0 %v464
    %496 = vmatprep.subr.bf16.mxu0 %v463
    %497 = vmatpush1.bf16.msra.mxu0 %v462
    %498 = vmatprep.subr.bf16.mxu0 %v461
    %499 = vmatpush1.bf16.msra.mxu0 %v460
    %500 = vmatprep.subr.bf16.mxu0 %v459
    %501 = vmatpush1.bf16.msra.mxu0 %v458
    %502 = vmatprep.subr.bf16.mxu0 %v457
    %503 = vmatpush1.bf16.msra.mxu0 %v456
    %504 = vmatprep.subr.bf16.mxu0 0
    %505 = vmatpush2.bf16.msra.mxu0 0
    %506 = vmatprep.subr.bf16.mxu0 0
    %507 = vmatpush2.bf16.msra.mxu0 0
    %508 = vmatprep.subr.bf16.mxu0 0
    %509 = vmatpush2.bf16.msra.mxu0 0
    %510 = vmatprep.subr.bf16.mxu0 0
    %511 = vmatpush2.bf16.msra.mxu0 0
    %512 = vmatprep.subr.bf16.mxu0 0
    %513 = vmatpush2.bf16.msra.mxu0 0
    %514 = vmatprep.subr.bf16.mxu0 0
    %515 = vmatpush2.bf16.msra.mxu0 0
    %516 = vmatprep.subr.bf16.mxu0 0
    %517 = vmatpush2.bf16.msra.mxu0 0
    %518 = vmatprep.subr.bf16.mxu0 0
    %519 = vmatpush2.bf16.msra.mxu0 0
    %520 = vmatprep.mubr.bf16.mxu0 0
    %521 = vmatmul.mubr.bf16.gmra.mxu0 %v151
    %v522 = vpop.f32.mrf.mxu0
    %v523 = vadd.f32 %v330, %v522
    %v524 = vpop.f32.mrf.mxu0
    %v525 = vadd.f32 %v332, %v524
    %v526 = vpop.f32.mrf.mxu0
    %v527 = vadd.f32 %v334, %v526
    %v528 = vpop.f32.mrf.mxu0
    %v529 = vadd.f32 %v336, %v528
    %530 = vmatprep.mubr.bf16.mxu0 0
    %531 = vmatmul.mubr.bf16.gmra.mxu0 %v152
    %v532 = vpop.f32.mrf.mxu0
    %v533 = vadd.f32 %v340, %v532
    %v534 = vpop.f32.mrf.mxu0
    %v535 = vadd.f32 %v342, %v534
    %v536 = vpop.f32.mrf.mxu0
    %v537 = vadd.f32 %v344, %v536
    %v538 = vpop.f32.mrf.mxu0
    %v539 = vadd.f32 %v346, %v538
    %540 = vmatprep.mubr.bf16.mxu0 0
    %541 = vmatmul.mubr.bf16.gmra.mxu0 %v153
    %v542 = vpop.f32.mrf.mxu0
    %v543 = vadd.f32 %v350, %v542
    %v544 = vpop.f32.mrf.mxu0
    %v545 = vadd.f32 %v352, %v544
    %v546 = vpop.f32.mrf.mxu0
    %v547 = vadd.f32 %v354, %v546
    %v548 = vpop.f32.mrf.mxu0
    %v549 = vadd.f32 %v356, %v548
    %550 = vmatprep.mubr.bf16.mxu0 0
    %551 = vmatmul.mubr.bf16.gmra.mxu0 %v154
    %v552 = vpop.f32.mrf.mxu0
    %v553 = vadd.f32 %v360, %v552
    %v554 = vpop.f32.mrf.mxu0
    %v555 = vadd.f32 %v362, %v554
    %v556 = vpop.f32.mrf.mxu0
    %v557 = vadd.f32 %v364, %v556
    %v558 = vpop.f32.mrf.mxu0
    %v559 = vadd.f32 %v366, %v558
    %560 = vmatprep.mubr.bf16.mxu0 0
    %561 = vmatmul.mubr.bf16.gmra.mxu0 %v155
    %v562 = vpop.f32.mrf.mxu0
    %v563 = vadd.f32 %v370, %v562
    %v564 = vpop.f32.mrf.mxu0
    %v565 = vadd.f32 %v372, %v564
    %v566 = vpop.f32.mrf.mxu0
    %v567 = vadd.f32 %v374, %v566
    %v568 = vpop.f32.mrf.mxu0
    %v569 = vadd.f32 %v376, %v568
    %570 = vmatprep.mubr.bf16.mxu0 0
    %571 = vmatmul.mubr.bf16.gmra.mxu0 %v156
    %v572 = vpop.f32.mrf.mxu0
    %v573 = vadd.f32 %v380, %v572
    %v574 = vpop.f32.mrf.mxu0
    %v575 = vadd.f32 %v382, %v574
    %v576 = vpop.f32.mrf.mxu0
    %v577 = vadd.f32 %v384, %v576
    %v578 = vpop.f32.mrf.mxu0
    %v579 = vadd.f32 %v386, %v578
    %580 = vmatprep.mubr.bf16.mxu0 0
    %581 = vmatmul.mubr.bf16.gmra.mxu0 %v157
    %v582 = vpop.f32.mrf.mxu0
    %v583 = vadd.f32 %v390, %v582
    %v584 = vpop.f32.mrf.mxu0
    %v585 = vadd.f32 %v392, %v584
    %v586 = vpop.f32.mrf.mxu0
    %v587 = vadd.f32 %v394, %v586
    %v588 = vpop.f32.mrf.mxu0
    %v589 = vadd.f32 %v396, %v588
    %590 = vmatprep.mubr.bf16.mxu0 0
    %591 = vmatmul.mubr.bf16.gmra.mxu0 %v158
    %v592 = vpop.f32.mrf.mxu0
    %v593 = vadd.f32 %v400, %v592
    %v594 = vpop.f32.mrf.mxu0
    %v595 = vadd.f32 %v402, %v594
    %v596 = vpop.f32.mrf.mxu0
    %v597 = vadd.f32 %v404, %v596
    %v598 = vpop.f32.mrf.mxu0
    %v599 = vadd.f32 %v406, %v598
    %600 = vdwg.mxu0
    %v601 = vld [vmem:[%s0 + $0x2] sm:$0xff]
    %v602 = vld [vmem:[%s0 + $0x12] sm:$0xff]
    %v603 = vld [vmem:[%s0 + $0x22] sm:$0xff]
    %v604 = vld [vmem:[%s0 + $0x32] sm:$0xff]
    %v605 = vld [vmem:[%s0 + $0x42] sm:$0xff]
    %v606 = vld [vmem:[%s0 + $0x52] sm:$0xff]
    %v607 = vld [vmem:[%s0 + $0x62] sm:$0xff]
    %v608 = vld [vmem:[%s0 + $0x72] sm:$0xff]
    %v609 = vld [vmem:[%s0 + $0xa2] sm:$0xff]
    %v610 = vld [vmem:[%s0 + $0xb2] sm:$0xff]
    %v611 = vld [vmem:[%s0 + $0xc2] sm:$0xff]
    %v612 = vld [vmem:[%s0 + $0xd2] sm:$0xff]
    %v613 = vld [vmem:[%s0 + $0xe2] sm:$0xff]
    %v614 = vld [vmem:[%s0 + $0xf2] sm:$0xff]
    %v615 = vld [vmem:[%s0 + $0x102] sm:$0xff]
    %v616 = vld [vmem:[%s0 + $0x112] sm:$0xff]
    %v617 = vpack.c.bf16 %v602, %v601
    %v618 = vpack.c.bf16 %v604, %v603
    %v619 = vpack.c.bf16 %v606, %v605
    %v620 = vpack.c.bf16 %v608, %v607
    %v621 = vpack.c.bf16 %v610, %v609
    %v622 = vpack.c.bf16 %v612, %v611
    %v623 = vpack.c.bf16 %v614, %v613
    %v624 = vpack.c.bf16 %v616, %v615
    %v625 = vld [vmem:[#allocation4 + $0x100] sm:$0xff]
    %v626 = vld [vmem:[#allocation4 + $0x108] sm:$0xff]
    %v627 = vld [vmem:[#allocation4 + $0x110] sm:$0xff]
    %v628 = vld [vmem:[#allocation4 + $0x118] sm:$0xff]
    %v629 = vld [vmem:[#allocation4 + $0x120] sm:$0xff]
    %v630 = vld [vmem:[#allocation4 + $0x128] sm:$0xff]
    %v631 = vld [vmem:[#allocation4 + $0x130] sm:$0xff]
    %v632 = vld [vmem:[#allocation4 + $0x138] sm:$0xff]
    %v633 = vld [vmem:[#allocation4 + $0x140] sm:$0xff]
    %v634 = vld [vmem:[#allocation4 + $0x148] sm:$0xff]
    %v635 = vld [vmem:[#allocation4 + $0x150] sm:$0xff]
    %v636 = vld [vmem:[#allocation4 + $0x158] sm:$0xff]
    %v637 = vld [vmem:[#allocation4 + $0x160] sm:$0xff]
    %v638 = vld [vmem:[#allocation4 + $0x168] sm:$0xff]
    %v639 = vld [vmem:[#allocation4 + $0x170] sm:$0xff]
    %v640 = vld [vmem:[#allocation4 + $0x178] sm:$0xff]
    %v657 = vunpack.c.l.b16 %v625
    %v658 = vunpack.c.h.b16 %v625
    %v659 = vunpack.c.l.b16 %v626
    %v660 = vunpack.c.h.b16 %v626
    %v661 = vunpack.c.l.b16 %v627
    %v662 = vunpack.c.h.b16 %v627
    %v663 = vunpack.c.l.b16 %v628
    %v664 = vunpack.c.h.b16 %v628
    %v665 = vunpack.c.l.b16 %v629
    %v666 = vunpack.c.h.b16 %v629
    %v667 = vunpack.c.l.b16 %v630
    %v668 = vunpack.c.h.b16 %v630
    %v669 = vunpack.c.l.b16 %v631
    %v670 = vunpack.c.h.b16 %v631
    %v671 = vunpack.c.l.b16 %v632
    %v672 = vunpack.c.h.b16 %v632
    %v673 = vunpack.c.l.b16 %v633
    %v674 = vunpack.c.h.b16 %v633
    %v675 = vunpack.c.l.b16 %v634
    %v676 = vunpack.c.h.b16 %v634
    %v677 = vunpack.c.l.b16 %v635
    %v678 = vunpack.c.h.b16 %v635
    %v679 = vunpack.c.l.b16 %v636
    %v680 = vunpack.c.h.b16 %v636
    %v681 = vunpack.c.l.b16 %v637
    %v682 = vunpack.c.h.b16 %v637
    %v683 = vunpack.c.l.b16 %v638
    %v684 = vunpack.c.h.b16 %v638
    %v685 = vunpack.c.l.b16 %v639
    %v686 = vunpack.c.h.b16 %v639
    %v687 = vunpack.c.l.b16 %v640
    %v688 = vunpack.c.h.b16 %v640
    %v689 = vpack.c.b16 %v659, %v657
    %v690 = vpack.c.b16 %v660, %v658
    %v691 = vpack.c.b16 %v663, %v661
    %v692 = vpack.c.b16 %v664, %v662
    %v693 = vpack.c.b16 %v667, %v665
    %v694 = vpack.c.b16 %v668, %v666
    %v695 = vpack.c.b16 %v671, %v669
    %v696 = vpack.c.b16 %v672, %v670
    %v697 = vpack.c.b16 %v675, %v673
    %v698 = vpack.c.b16 %v676, %v674
    %v699 = vpack.c.b16 %v679, %v677
    %v700 = vpack.c.b16 %v680, %v678
    %v701 = vpack.c.b16 %v683, %v681
    %v702 = vpack.c.b16 %v684, %v682
    %v703 = vpack.c.b16 %v687, %v685
    %v704 = vpack.c.b16 %v688, %v686
    %721 = vmatprep.subr.bf16.mxu0 %v704
    %722 = vmatpush1.bf16.msra.mxu0 %v703
    %723 = vmatprep.subr.bf16.mxu0 %v702
    %724 = vmatpush1.bf16.msra.mxu0 %v701
    %725 = vmatprep.subr.bf16.mxu0 %v700
    %726 = vmatpush1.bf16.msra.mxu0 %v699
    %727 = vmatprep.subr.bf16.mxu0 %v698
    %728 = vmatpush1.bf16.msra.mxu0 %v697
    %729 = vmatprep.subr.bf16.mxu0 %v696
    %730 = vmatpush1.bf16.msra.mxu0 %v695
    %731 = vmatprep.subr.bf16.mxu0 %v694
    %732 = vmatpush1.bf16.msra.mxu0 %v693
    %733 = vmatprep.subr.bf16.mxu0 %v692
    %734 = vmatpush1.bf16.msra.mxu0 %v691
    %735 = vmatprep.subr.bf16.mxu0 %v690
    %736 = vmatpush1.bf16.msra.mxu0 %v689
    %737 = vmatprep.subr.bf16.mxu0 0
    %738 = vmatpush2.bf16.msra.mxu0 0
    %739 = vmatprep.subr.bf16.mxu0 0
    %740 = vmatpush2.bf16.msra.mxu0 0
    %741 = vmatprep.subr.bf16.mxu0 0
    %742 = vmatpush2.bf16.msra.mxu0 0
    %743 = vmatprep.subr.bf16.mxu0 0
    %744 = vmatpush2.bf16.msra.mxu0 0
    %745 = vmatprep.subr.bf16.mxu0 0
    %746 = vmatpush2.bf16.msra.mxu0 0
    %747 = vmatprep.subr.bf16.mxu0 0
    %748 = vmatpush2.bf16.msra.mxu0 0
    %749 = vmatprep.subr.bf16.mxu0 0
    %750 = vmatpush2.bf16.msra.mxu0 0
    %751 = vmatprep.subr.bf16.mxu0 0
    %752 = vmatpush2.bf16.msra.mxu0 0
    %753 = vmatprep.mubr.bf16.mxu0 0
    %754 = vmatmul.mubr.bf16.gmra.mxu0 %v617
    %v755 = vpop.f32.mrf.mxu0
    %v756 = vadd.f32 0.0, %v755
    %v757 = vpop.f32.mrf.mxu0
    %v758 = vadd.f32 0.0, %v757
    %v759 = vpop.f32.mrf.mxu0
    %v760 = vadd.f32 0.0, %v759
    %v761 = vpop.f32.mrf.mxu0
    %v762 = vadd.f32 0.0, %v761
    %763 = vmatprep.mubr.bf16.mxu0 0
    %764 = vmatmul.mubr.bf16.gmra.mxu0 %v618
    %v765 = vpop.f32.mrf.mxu0
    %v766 = vadd.f32 0.0, %v765
    %v767 = vpop.f32.mrf.mxu0
    %v768 = vadd.f32 0.0, %v767
    %v769 = vpop.f32.mrf.mxu0
    %v770 = vadd.f32 0.0, %v769
    %v771 = vpop.f32.mrf.mxu0
    %v772 = vadd.f32 0.0, %v771
    %773 = vmatprep.mubr.bf16.mxu0 0
    %774 = vmatmul.mubr.bf16.gmra.mxu0 %v619
    %v775 = vpop.f32.mrf.mxu0
    %v776 = vadd.f32 0.0, %v775
    %v777 = vpop.f32.mrf.mxu0
    %v778 = vadd.f32 0.0, %v777
    %v779 = vpop.f32.mrf.mxu0
    %v780 = vadd.f32 0.0, %v779
    %v781 = vpop.f32.mrf.mxu0
    %v782 = vadd.f32 0.0, %v781
    %783 = vmatprep.mubr.bf16.mxu0 0
    %784 = vmatmul.mubr.bf16.gmra.mxu0 %v620
    %v785 = vpop.f32.mrf.mxu0
    %v786 = vadd.f32 0.0, %v785
    %v787 = vpop.f32.mrf.mxu0
    %v788 = vadd.f32 0.0, %v787
    %v789 = vpop.f32.mrf.mxu0
    %v790 = vadd.f32 0.0, %v789
    %v791 = vpop.f32.mrf.mxu0
    %v792 = vadd.f32 0.0, %v791
    %793 = vmatprep.mubr.bf16.mxu0 0
    %794 = vmatmul.mubr.bf16.gmra.mxu0 %v621
    %v795 = vpop.f32.mrf.mxu0
    %v796 = vadd.f32 0.0, %v795
    %v797 = vpop.f32.mrf.mxu0
    %v798 = vadd.f32 0.0, %v797
    %v799 = vpop.f32.mrf.mxu0
    %v800 = vadd.f32 0.0, %v799
    %v801 = vpop.f32.mrf.mxu0
    %v802 = vadd.f32 0.0, %v801
    %803 = vmatprep.mubr.bf16.mxu0 0
    %804 = vmatmul.mubr.bf16.gmra.mxu0 %v622
    %v805 = vpop.f32.mrf.mxu0
    %v806 = vadd.f32 0.0, %v805
    %v807 = vpop.f32.mrf.mxu0
    %v808 = vadd.f32 0.0, %v807
    %v809 = vpop.f32.mrf.mxu0
    %v810 = vadd.f32 0.0, %v809
    %v811 = vpop.f32.mrf.mxu0
    %v812 = vadd.f32 0.0, %v811
    %813 = vmatprep.mubr.bf16.mxu0 0
    %814 = vmatmul.mubr.bf16.gmra.mxu0 %v623
    %v815 = vpop.f32.mrf.mxu0
    %v816 = vadd.f32 0.0, %v815
    %v817 = vpop.f32.mrf.mxu0
    %v818 = vadd.f32 0.0, %v817
    %v819 = vpop.f32.mrf.mxu0
    %v820 = vadd.f32 0.0, %v819
    %v821 = vpop.f32.mrf.mxu0
    %v822 = vadd.f32 0.0, %v821
    %823 = vmatprep.mubr.bf16.mxu0 0
    %824 = vmatmul.mubr.bf16.gmra.mxu0 %v624
    %v825 = vpop.f32.mrf.mxu0
    %v826 = vadd.f32 0.0, %v825
    %v827 = vpop.f32.mrf.mxu0
    %v828 = vadd.f32 0.0, %v827
    %v829 = vpop.f32.mrf.mxu0
    %v830 = vadd.f32 0.0, %v829
    %v831 = vpop.f32.mrf.mxu0
    %v832 = vadd.f32 0.0, %v831
    %833 = vdwg.mxu0
    %v834 = vadd.f32 %v523, %v756
    %v835 = vadd.f32 %v525, %v758
    %v836 = vadd.f32 %v527, %v760
    %v837 = vadd.f32 %v529, %v762
    %v838 = vadd.f32 %v533, %v766
    %v839 = vadd.f32 %v535, %v768
    %v840 = vadd.f32 %v537, %v770
    %v841 = vadd.f32 %v539, %v772
    %v842 = vadd.f32 %v543, %v776
    %v843 = vadd.f32 %v545, %v778
    %v844 = vadd.f32 %v547, %v780
    %v845 = vadd.f32 %v549, %v782
    %v846 = vadd.f32 %v553, %v786
    %v847 = vadd.f32 %v555, %v788
    %v848 = vadd.f32 %v557, %v790
    %v849 = vadd.f32 %v559, %v792
    %v850 = vadd.f32 %v563, %v796
    %v851 = vadd.f32 %v565, %v798
    %v852 = vadd.f32 %v567, %v800
    %v853 = vadd.f32 %v569, %v802
    %v854 = vadd.f32 %v573, %v806
    %v855 = vadd.f32 %v575, %v808
    %v856 = vadd.f32 %v577, %v810
    %v857 = vadd.f32 %v579, %v812
    %v858 = vadd.f32 %v583, %v816
    %v859 = vadd.f32 %v585, %v818
    %v860 = vadd.f32 %v587, %v820
    %v861 = vadd.f32 %v589, %v822
    %v862 = vadd.f32 %v593, %v826
    %v863 = vadd.f32 %v595, %v828
    %v864 = vadd.f32 %v597, %v830
    %v865 = vadd.f32 %v599, %v832
    %s866 = scalar_lea.vmem %s0, 16
    %v867 = vld [vmem:[%s866] sm:$0xff]
    %v868 = vld [vmem:[%s866 + $0x10] sm:$0xff]
    %v869 = vld [vmem:[%s866 + $0x20] sm:$0xff]
    %v870 = vld [vmem:[%s866 + $0x30] sm:$0xff]
    %v871 = vld [vmem:[%s866 + $0x40] sm:$0xff]
    %v872 = vld [vmem:[%s866 + $0x50] sm:$0xff]
    %v873 = vld [vmem:[%s866 + $0x60] sm:$0xff]
    %v874 = vld [vmem:[%s866 + $0x70] sm:$0xff]
    %v875 = vld [vmem:[%s866 + $0xa0] sm:$0xff]
    %v876 = vld [vmem:[%s866 + $0xb0] sm:$0xff]
    %v877 = vld [vmem:[%s866 + $0xc0] sm:$0xff]
    %v878 = vld [vmem:[%s866 + $0xd0] sm:$0xff]
    %v879 = vld [vmem:[%s866 + $0xe0] sm:$0xff]
    %v880 = vld [vmem:[%s866 + $0xf0] sm:$0xff]
    %v881 = vld [vmem:[%s866 + $0x100] sm:$0xff]
    %v882 = vld [vmem:[%s866 + $0x110] sm:$0xff]
    %v883 = vpack.c.bf16 %v868, %v867
    %v884 = vpack.c.bf16 %v870, %v869
    %v885 = vpack.c.bf16 %v872, %v871
    %v886 = vpack.c.bf16 %v874, %v873
    %v887 = vpack.c.bf16 %v876, %v875
    %v888 = vpack.c.bf16 %v878, %v877
    %v889 = vpack.c.bf16 %v880, %v879
    %v890 = vpack.c.bf16 %v882, %v881
    %v891 = vld [vmem:[#allocation4 + $0x180] sm:$0xff]
    %v892 = vld [vmem:[#allocation4 + $0x188] sm:$0xff]
    %v893 = vld [vmem:[#allocation4 + $0x190] sm:$0xff]
    %v894 = vld [vmem:[#allocation4 + $0x198] sm:$0xff]
    %v895 = vld [vmem:[#allocation4 + $0x1a0] sm:$0xff]
    %v896 = vld [vmem:[#allocation4 + $0x1a8] sm:$0xff]
    %v897 = vld [vmem:[#allocation4 + $0x1b0] sm:$0xff]
    %v898 = vld [vmem:[#allocation4 + $0x1b8] sm:$0xff]
    %v899 = vld [vmem:[#allocation4 + $0x1c0] sm:$0xff]
    %v900 = vld [vmem:[#allocation4 + $0x1c8] sm:$0xff]
    %v901 = vld [vmem:[#allocation4 + $0x1d0] sm:$0xff]
    %v902 = vld [vmem:[#allocation4 + $0x1d8] sm:$0xff]
    %v903 = vld [vmem:[#allocation4 + $0x1e0] sm:$0xff]
    %v904 = vld [vmem:[#allocation4 + $0x1e8] sm:$0xff]
    %v905 = vld [vmem:[#allocation4 + $0x1f0] sm:$0xff]
    %v906 = vld [vmem:[#allocation4 + $0x1f8] sm:$0xff]
    %v923 = vunpack.c.l.b16 %v891
    %v924 = vunpack.c.h.b16 %v891
    %v925 = vunpack.c.l.b16 %v892
    %v926 = vunpack.c.h.b16 %v892
    %v927 = vunpack.c.l.b16 %v893
    %v928 = vunpack.c.h.b16 %v893
    %v929 = vunpack.c.l.b16 %v894
    %v930 = vunpack.c.h.b16 %v894
    %v931 = vunpack.c.l.b16 %v895
    %v932 = vunpack.c.h.b16 %v895
    %v933 = vunpack.c.l.b16 %v896
    %v934 = vunpack.c.h.b16 %v896
    %v935 = vunpack.c.l.b16 %v897
    %v936 = vunpack.c.h.b16 %v897
    %v937 = vunpack.c.l.b16 %v898
    %v938 = vunpack.c.h.b16 %v898
    %v939 = vunpack.c.l.b16 %v899
    %v940 = vunpack.c.h.b16 %v899
    %v941 = vunpack.c.l.b16 %v900
    %v942 = vunpack.c.h.b16 %v900
    %v943 = vunpack.c.l.b16 %v901
    %v944 = vunpack.c.h.b16 %v901
    %v945 = vunpack.c.l.b16 %v902
    %v946 = vunpack.c.h.b16 %v902
    %v947 = vunpack.c.l.b16 %v903
    %v948 = vunpack.c.h.b16 %v903
    %v949 = vunpack.c.l.b16 %v904
    %v950 = vunpack.c.h.b16 %v904
    %v951 = vunpack.c.l.b16 %v905
    %v952 = vunpack.c.h.b16 %v905
    %v953 = vunpack.c.l.b16 %v906
    %v954 = vunpack.c.h.b16 %v906
    %v955 = vpack.c.b16 %v925, %v923
    %v956 = vpack.c.b16 %v926, %v924
    %v957 = vpack.c.b16 %v929, %v927
    %v958 = vpack.c.b16 %v930, %v928
    %v959 = vpack.c.b16 %v933, %v931
    %v960 = vpack.c.b16 %v934, %v932
    %v961 = vpack.c.b16 %v937, %v935
    %v962 = vpack.c.b16 %v938, %v936
    %v963 = vpack.c.b16 %v941, %v939
    %v964 = vpack.c.b16 %v942, %v940
    %v965 = vpack.c.b16 %v945, %v943
    %v966 = vpack.c.b16 %v946, %v944
    %v967 = vpack.c.b16 %v949, %v947
    %v968 = vpack.c.b16 %v950, %v948
    %v969 = vpack.c.b16 %v953, %v951
    %v970 = vpack.c.b16 %v954, %v952
    %987 = vmatprep.subr.bf16.mxu0 %v970
    %988 = vmatpush1.bf16.msra.mxu0 %v969
    %989 = vmatprep.subr.bf16.mxu0 %v968
    %990 = vmatpush1.bf16.msra.mxu0 %v967
    %991 = vmatprep.subr.bf16.mxu0 %v966
    %992 = vmatpush1.bf16.msra.mxu0 %v965
    %993 = vmatprep.subr.bf16.mxu0 %v964
    %994 = vmatpush1.bf16.msra.mxu0 %v963
    %995 = vmatprep.subr.bf16.mxu0 %v962
    %996 = vmatpush1.bf16.msra.mxu0 %v961
    %997 = vmatprep.subr.bf16.mxu0 %v960
    %998 = vmatpush1.bf16.msra.mxu0 %v959
    %999 = vmatprep.subr.bf16.mxu0 %v958
    %1000 = vmatpush1.bf16.msra.mxu0 %v957
    %1001 = vmatprep.subr.bf16.mxu0 %v956
    %1002 = vmatpush1.bf16.msra.mxu0 %v955
    %1003 = vmatprep.subr.bf16.mxu0 0
    %1004 = vmatpush2.bf16.msra.mxu0 0
    %1005 = vmatprep.subr.bf16.mxu0 0
    %1006 = vmatpush2.bf16.msra.mxu0 0
    %1007 = vmatprep.subr.bf16.mxu0 0
    %1008 = vmatpush2.bf16.msra.mxu0 0
    %1009 = vmatprep.subr.bf16.mxu0 0
    %1010 = vmatpush2.bf16.msra.mxu0 0
    %1011 = vmatprep.subr.bf16.mxu0 0
    %1012 = vmatpush2.bf16.msra.mxu0 0
    %1013 = vmatprep.subr.bf16.mxu0 0
    %1014 = vmatpush2.bf16.msra.mxu0 0
    %1015 = vmatprep.subr.bf16.mxu0 0
    %1016 = vmatpush2.bf16.msra.mxu0 0
    %1017 = vmatprep.subr.bf16.mxu0 0
    %1018 = vmatpush2.bf16.msra.mxu0 0
    %1019 = vmatprep.mubr.bf16.mxu0 0
    %1020 = vmatmul.mubr.bf16.gmra.mxu0 %v883
    %v1021 = vpop.f32.mrf.mxu0
    %v1022 = vadd.f32 0.0, %v1021
    %v1023 = vpop.f32.mrf.mxu0
    %v1024 = vadd.f32 0.0, %v1023
    %v1025 = vpop.f32.mrf.mxu0
    %v1026 = vadd.f32 0.0, %v1025
    %v1027 = vpop.f32.mrf.mxu0
    %v1028 = vadd.f32 0.0, %v1027
    %1029 = vmatprep.mubr.bf16.mxu0 0
    %1030 = vmatmul.mubr.bf16.gmra.mxu0 %v884
    %v1031 = vpop.f32.mrf.mxu0
    %v1032 = vadd.f32 0.0, %v1031
    %v1033 = vpop.f32.mrf.mxu0
    %v1034 = vadd.f32 0.0, %v1033
    %v1035 = vpop.f32.mrf.mxu0
    %v1036 = vadd.f32 0.0, %v1035
    %v1037 = vpop.f32.mrf.mxu0
    %v1038 = vadd.f32 0.0, %v1037
    %1039 = vmatprep.mubr.bf16.mxu0 0
    %1040 = vmatmul.mubr.bf16.gmra.mxu0 %v885
    %v1041 = vpop.f32.mrf.mxu0
    %v1042 = vadd.f32 0.0, %v1041
    %v1043 = vpop.f32.mrf.mxu0
    %v1044 = vadd.f32 0.0, %v1043
    %v1045 = vpop.f32.mrf.mxu0
    %v1046 = vadd.f32 0.0, %v1045
    %v1047 = vpop.f32.mrf.mxu0
    %v1048 = vadd.f32 0.0, %v1047
    %1049 = vmatprep.mubr.bf16.mxu0 0
    %1050 = vmatmul.mubr.bf16.gmra.mxu0 %v886
    %v1051 = vpop.f32.mrf.mxu0
    %v1052 = vadd.f32 0.0, %v1051
    %v1053 = vpop.f32.mrf.mxu0
    %v1054 = vadd.f32 0.0, %v1053
    %v1055 = vpop.f32.mrf.mxu0
    %v1056 = vadd.f32 0.0, %v1055
    %v1057 = vpop.f32.mrf.mxu0
    %v1058 = vadd.f32 0.0, %v1057
    %1059 = vmatprep.mubr.bf16.mxu0 0
    %1060 = vmatmul.mubr.bf16.gmra.mxu0 %v887
    %v1061 = vpop.f32.mrf.mxu0
    %v1062 = vadd.f32 0.0, %v1061
    %v1063 = vpop.f32.mrf.mxu0
    %v1064 = vadd.f32 0.0, %v1063
    %v1065 = vpop.f32.mrf.mxu0
    %v1066 = vadd.f32 0.0, %v1065
    %v1067 = vpop.f32.mrf.mxu0
    %v1068 = vadd.f32 0.0, %v1067
    %1069 = vmatprep.mubr.bf16.mxu0 0
    %1070 = vmatmul.mubr.bf16.gmra.mxu0 %v888
    %v1071 = vpop.f32.mrf.mxu0
    %v1072 = vadd.f32 0.0, %v1071
    %v1073 = vpop.f32.mrf.mxu0
    %v1074 = vadd.f32 0.0, %v1073
    %v1075 = vpop.f32.mrf.mxu0
    %v1076 = vadd.f32 0.0, %v1075
    %v1077 = vpop.f32.mrf.mxu0
    %v1078 = vadd.f32 0.0, %v1077
    %1079 = vmatprep.mubr.bf16.mxu0 0
    %1080 = vmatmul.mubr.bf16.gmra.mxu0 %v889
    %v1081 = vpop.f32.mrf.mxu0
    %v1082 = vadd.f32 0.0, %v1081
    %v1083 = vpop.f32.mrf.mxu0
    %v1084 = vadd.f32 0.0, %v1083
    %v1085 = vpop.f32.mrf.mxu0
    %v1086 = vadd.f32 0.0, %v1085
    %v1087 = vpop.f32.mrf.mxu0
    %v1088 = vadd.f32 0.0, %v1087
    %1089 = vmatprep.mubr.bf16.mxu0 0
    %1090 = vmatmul.mubr.bf16.gmra.mxu0 %v890
    %v1091 = vpop.f32.mrf.mxu0
    %v1092 = vadd.f32 0.0, %v1091
    %v1093 = vpop.f32.mrf.mxu0
    %v1094 = vadd.f32 0.0, %v1093
    %v1095 = vpop.f32.mrf.mxu0
    %v1096 = vadd.f32 0.0, %v1095
    %v1097 = vpop.f32.mrf.mxu0
    %v1098 = vadd.f32 0.0, %v1097
    %1099 = vdwg.mxu0
    %v1100 = vadd.f32 %v834, %v1022
    %v1101 = vadd.f32 %v835, %v1024
    %v1102 = vadd.f32 %v836, %v1026
    %v1103 = vadd.f32 %v837, %v1028
    %v1104 = vadd.f32 %v838, %v1032
    %v1105 = vadd.f32 %v839, %v1034
    %v1106 = vadd.f32 %v840, %v1036
    %v1107 = vadd.f32 %v841, %v1038
    %v1108 = vadd.f32 %v842, %v1042
    %v1109 = vadd.f32 %v843, %v1044
    %v1110 = vadd.f32 %v844, %v1046
    %v1111 = vadd.f32 %v845, %v1048
    %v1112 = vadd.f32 %v846, %v1052
    %v1113 = vadd.f32 %v847, %v1054
    %v1114 = vadd.f32 %v848, %v1056
    %v1115 = vadd.f32 %v849, %v1058
    %v1116 = vadd.f32 %v850, %v1062
    %v1117 = vadd.f32 %v851, %v1064
    %v1118 = vadd.f32 %v852, %v1066
    %v1119 = vadd.f32 %v853, %v1068
    %v1120 = vadd.f32 %v854, %v1072
    %v1121 = vadd.f32 %v855, %v1074
    %v1122 = vadd.f32 %v856, %v1076
    %v1123 = vadd.f32 %v857, %v1078
    %v1124 = vadd.f32 %v858, %v1082
    %v1125 = vadd.f32 %v859, %v1084
    %v1126 = vadd.f32 %v860, %v1086
    %v1127 = vadd.f32 %v861, %v1088
    %v1128 = vadd.f32 %v862, %v1092
    %v1129 = vadd.f32 %v863, %v1094
    %v1130 = vadd.f32 %v864, %v1096
    %v1131 = vadd.f32 %v865, %v1098
    %v1132 = vld [vmem:[%s866 + $0x1] sm:$0xff]
    %v1133 = vld [vmem:[%s866 + $0x11] sm:$0xff]
    %v1134 = vld [vmem:[%s866 + $0x21] sm:$0xff]
    %v1135 = vld [vmem:[%s866 + $0x31] sm:$0xff]
    %v1136 = vld [vmem:[%s866 + $0x41] sm:$0xff]
    %v1137 = vld [vmem:[%s866 + $0x51] sm:$0xff]
    %v1138 = vld [vmem:[%s866 + $0x61] sm:$0xff]
    %v1139 = vld [vmem:[%s866 + $0x71] sm:$0xff]
    %v1140 = vld [vmem:[%s866 + $0xa1] sm:$0xff]
    %v1141 = vld [vmem:[%s866 + $0xb1] sm:$0xff]
    %v1142 = vld [vmem:[%s866 + $0xc1] sm:$0xff]
    %v1143 = vld [vmem:[%s866 + $0xd1] sm:$0xff]
    %v1144 = vld [vmem:[%s866 + $0xe1] sm:$0xff]
    %v1145 = vld [vmem:[%s866 + $0xf1] sm:$0xff]
    %v1146 = vld [vmem:[%s866 + $0x101] sm:$0xff]
    %v1147 = vld [vmem:[%s866 + $0x111] sm:$0xff]
    %v1148 = vpack.c.bf16 %v1133, %v1132
    %v1149 = vpack.c.bf16 %v1135, %v1134
    %v1150 = vpack.c.bf16 %v1137, %v1136
    %v1151 = vpack.c.bf16 %v1139, %v1138
    %v1152 = vpack.c.bf16 %v1141, %v1140
    %v1153 = vpack.c.bf16 %v1143, %v1142
    %v1154 = vpack.c.bf16 %v1145, %v1144
    %v1155 = vpack.c.bf16 %v1147, %v1146
    %v1156 = vld [vmem:[#allocation4 + $0x200] sm:$0xff]
    %v1157 = vld [vmem:[#allocation4 + $0x208] sm:$0xff]
    %v1158 = vld [vmem:[#allocation4 + $0x210] sm:$0xff]
    %v1159 = vld [vmem:[#allocation4 + $0x218] sm:$0xff]
    %v1160 = vld [vmem:[#allocation4 + $0x220] sm:$0xff]
    %v1161 = vld [vmem:[#allocation4 + $0x228] sm:$0xff]
    %v1162 = vld [vmem:[#allocation4 + $0x230] sm:$0xff]
    %v1163 = vld [vmem:[#allocation4 + $0x238] sm:$0xff]
    %v1164 = vld [vmem:[#allocation4 + $0x240] sm:$0xff]
    %v1165 = vld [vmem:[#allocation4 + $0x248] sm:$0xff]
    %v1166 = vld [vmem:[#allocation4 + $0x250] sm:$0xff]
    %v1167 = vld [vmem:[#allocation4 + $0x258] sm:$0xff]
    %v1168 = vld [vmem:[#allocation4 + $0x260] sm:$0xff]
    %v1169 = vld [vmem:[#allocation4 + $0x268] sm:$0xff]
    %v1170 = vld [vmem:[#allocation4 + $0x270] sm:$0xff]
    %v1171 = vld [vmem:[#allocation4 + $0x278] sm:$0xff]
    %v1188 = vunpack.c.l.b16 %v1156
    %v1189 = vunpack.c.h.b16 %v1156
    %v1190 = vunpack.c.l.b16 %v1157
    %v1191 = vunpack.c.h.b16 %v1157
    %v1192 = vunpack.c.l.b16 %v1158
    %v1193 = vunpack.c.h.b16 %v1158
    %v1194 = vunpack.c.l.b16 %v1159
    %v1195 = vunpack.c.h.b16 %v1159
    %v1196 = vunpack.c.l.b16 %v1160
    %v1197 = vunpack.c.h.b16 %v1160
    %v1198 = vunpack.c.l.b16 %v1161
    %v1199 = vunpack.c.h.b16 %v1161
    %v1200 = vunpack.c.l.b16 %v1162
    %v1201 = vunpack.c.h.b16 %v1162
    %v1202 = vunpack.c.l.b16 %v1163
    %v1203 = vunpack.c.h.b16 %v1163
    %v1204 = vunpack.c.l.b16 %v1164
    %v1205 = vunpack.c.h.b16 %v1164
    %v1206 = vunpack.c.l.b16 %v1165
    %v1207 = vunpack.c.h.b16 %v1165
    %v1208 = vunpack.c.l.b16 %v1166
    %v1209 = vunpack.c.h.b16 %v1166
    %v1210 = vunpack.c.l.b16 %v1167
    %v1211 = vunpack.c.h.b16 %v1167
    %v1212 = vunpack.c.l.b16 %v1168
    %v1213 = vunpack.c.h.b16 %v1168
    %v1214 = vunpack.c.l.b16 %v1169
    %v1215 = vunpack.c.h.b16 %v1169
    %v1216 = vunpack.c.l.b16 %v1170
    %v1217 = vunpack.c.h.b16 %v1170
    %v1218 = vunpack.c.l.b16 %v1171
    %v1219 = vunpack.c.h.b16 %v1171
    %v1220 = vpack.c.b16 %v1190, %v1188
    %v1221 = vpack.c.b16 %v1191, %v1189
    %v1222 = vpack.c.b16 %v1194, %v1192
    %v1223 = vpack.c.b16 %v1195, %v1193
    %v1224 = vpack.c.b16 %v1198, %v1196
    %v1225 = vpack.c.b16 %v1199, %v1197
    %v1226 = vpack.c.b16 %v1202, %v1200
    %v1227 = vpack.c.b16 %v1203, %v1201
    %v1228 = vpack.c.b16 %v1206, %v1204
    %v1229 = vpack.c.b16 %v1207, %v1205
    %v1230 = vpack.c.b16 %v1210, %v1208
    %v1231 = vpack.c.b16 %v1211, %v1209
    %v1232 = vpack.c.b16 %v1214, %v1212
    %v1233 = vpack.c.b16 %v1215, %v1213
    %v1234 = vpack.c.b16 %v1218, %v1216
    %v1235 = vpack.c.b16 %v1219, %v1217
    %1252 = vmatprep.subr.bf16.mxu0 %v1235
    %1253 = vmatpush1.bf16.msra.mxu0 %v1234
    %1254 = vmatprep.subr.bf16.mxu0 %v1233
    %1255 = vmatpush1.bf16.msra.mxu0 %v1232
    %1256 = vmatprep.subr.bf16.mxu0 %v1231
    %1257 = vmatpush1.bf16.msra.mxu0 %v1230
    %1258 = vmatprep.subr.bf16.mxu0 %v1229
    %1259 = vmatpush1.bf16.msra.mxu0 %v1228
    %1260 = vmatprep.subr.bf16.mxu0 %v1227
    %1261 = vmatpush1.bf16.msra.mxu0 %v1226
    %1262 = vmatprep.subr.bf16.mxu0 %v1225
    %1263 = vmatpush1.bf16.msra.mxu0 %v1224
    %1264 = vmatprep.subr.bf16.mxu0 %v1223
    %1265 = vmatpush1.bf16.msra.mxu0 %v1222
    %1266 = vmatprep.subr.bf16.mxu0 %v1221
    %1267 = vmatpush1.bf16.msra.mxu0 %v1220
    %1268 = vmatprep.subr.bf16.mxu0 0
    %1269 = vmatpush2.bf16.msra.mxu0 0
    %1270 = vmatprep.subr.bf16.mxu0 0
    %1271 = vmatpush2.bf16.msra.mxu0 0
    %1272 = vmatprep.subr.bf16.mxu0 0
    %1273 = vmatpush2.bf16.msra.mxu0 0
    %1274 = vmatprep.subr.bf16.mxu0 0
    %1275 = vmatpush2.bf16.msra.mxu0 0
    %1276 = vmatprep.subr.bf16.mxu0 0
    %1277 = vmatpush2.bf16.msra.mxu0 0
    %1278 = vmatprep.subr.bf16.mxu0 0
    %1279 = vmatpush2.bf16.msra.mxu0 0
    %1280 = vmatprep.subr.bf16.mxu0 0
    %1281 = vmatpush2.bf16.msra.mxu0 0
    %1282 = vmatprep.subr.bf16.mxu0 0
    %1283 = vmatpush2.bf16.msra.mxu0 0
    %1284 = vmatprep.mubr.bf16.mxu0 0
    %1285 = vmatmul.mubr.bf16.gmra.mxu0 %v1148
    %v1286 = vpop.f32.mrf.mxu0
    %v1287 = vadd.f32 0.0, %v1286
    %v1288 = vpop.f32.mrf.mxu0
    %v1289 = vadd.f32 0.0, %v1288
    %v1290 = vpop.f32.mrf.mxu0
    %v1291 = vadd.f32 0.0, %v1290
    %v1292 = vpop.f32.mrf.mxu0
    %v1293 = vadd.f32 0.0, %v1292
    %1294 = vmatprep.mubr.bf16.mxu0 0
    %1295 = vmatmul.mubr.bf16.gmra.mxu0 %v1149
    %v1296 = vpop.f32.mrf.mxu0
    %v1297 = vadd.f32 0.0, %v1296
    %v1298 = vpop.f32.mrf.mxu0
    %v1299 = vadd.f32 0.0, %v1298
    %v1300 = vpop.f32.mrf.mxu0
    %v1301 = vadd.f32 0.0, %v1300
    %v1302 = vpop.f32.mrf.mxu0
    %v1303 = vadd.f32 0.0, %v1302
    %1304 = vmatprep.mubr.bf16.mxu0 0
    %1305 = vmatmul.mubr.bf16.gmra.mxu0 %v1150
    %v1306 = vpop.f32.mrf.mxu0
    %v1307 = vadd.f32 0.0, %v1306
    %v1308 = vpop.f32.mrf.mxu0
    %v1309 = vadd.f32 0.0, %v1308
    %v1310 = vpop.f32.mrf.mxu0
    %v1311 = vadd.f32 0.0, %v1310
    %v1312 = vpop.f32.mrf.mxu0
    %v1313 = vadd.f32 0.0, %v1312
    %1314 = vmatprep.mubr.bf16.mxu0 0
    %1315 = vmatmul.mubr.bf16.gmra.mxu0 %v1151
    %v1316 = vpop.f32.mrf.mxu0
    %v1317 = vadd.f32 0.0, %v1316
    %v1318 = vpop.f32.mrf.mxu0
    %v1319 = vadd.f32 0.0, %v1318
    %v1320 = vpop.f32.mrf.mxu0
    %v1321 = vadd.f32 0.0, %v1320
    %v1322 = vpop.f32.mrf.mxu0
    %v1323 = vadd.f32 0.0, %v1322
    %1324 = vmatprep.mubr.bf16.mxu0 0
    %1325 = vmatmul.mubr.bf16.gmra.mxu0 %v1152
    %v1326 = vpop.f32.mrf.mxu0
    %v1327 = vadd.f32 0.0, %v1326
    %v1328 = vpop.f32.mrf.mxu0
    %v1329 = vadd.f32 0.0, %v1328
    %v1330 = vpop.f32.mrf.mxu0
    %v1331 = vadd.f32 0.0, %v1330
    %v1332 = vpop.f32.mrf.mxu0
    %v1333 = vadd.f32 0.0, %v1332
    %1334 = vmatprep.mubr.bf16.mxu0 0
    %1335 = vmatmul.mubr.bf16.gmra.mxu0 %v1153
    %v1336 = vpop.f32.mrf.mxu0
    %v1337 = vadd.f32 0.0, %v1336
    %v1338 = vpop.f32.mrf.mxu0
    %v1339 = vadd.f32 0.0, %v1338
    %v1340 = vpop.f32.mrf.mxu0
    %v1341 = vadd.f32 0.0, %v1340
    %v1342 = vpop.f32.mrf.mxu0
    %v1343 = vadd.f32 0.0, %v1342
    %1344 = vmatprep.mubr.bf16.mxu0 0
    %1345 = vmatmul.mubr.bf16.gmra.mxu0 %v1154
    %v1346 = vpop.f32.mrf.mxu0
    %v1347 = vadd.f32 0.0, %v1346
    %v1348 = vpop.f32.mrf.mxu0
    %v1349 = vadd.f32 0.0, %v1348
    %v1350 = vpop.f32.mrf.mxu0
    %v1351 = vadd.f32 0.0, %v1350
    %v1352 = vpop.f32.mrf.mxu0
    %v1353 = vadd.f32 0.0, %v1352
    %1354 = vmatprep.mubr.bf16.mxu0 0
    %1355 = vmatmul.mubr.bf16.gmra.mxu0 %v1155
    %v1356 = vpop.f32.mrf.mxu0
    %v1357 = vadd.f32 0.0, %v1356
    %v1358 = vpop.f32.mrf.mxu0
    %v1359 = vadd.f32 0.0, %v1358
    %v1360 = vpop.f32.mrf.mxu0
    %v1361 = vadd.f32 0.0, %v1360
    %v1362 = vpop.f32.mrf.mxu0
    %v1363 = vadd.f32 0.0, %v1362
    %1364 = vdwg.mxu0
    %v1365 = vadd.f32 %v1100, %v1287
    %v1366 = vadd.f32 %v1101, %v1289
    %v1367 = vadd.f32 %v1102, %v1291
    %v1368 = vadd.f32 %v1103, %v1293
    %v1369 = vadd.f32 %v1104, %v1297
    %v1370 = vadd.f32 %v1105, %v1299
    %v1371 = vadd.f32 %v1106, %v1301
    %v1372 = vadd.f32 %v1107, %v1303
    %v1373 = vadd.f32 %v1108, %v1307
    %v1374 = vadd.f32 %v1109, %v1309
    %v1375 = vadd.f32 %v1110, %v1311
    %v1376 = vadd.f32 %v1111, %v1313
    %v1377 = vadd.f32 %v1112, %v1317
    %v1378 = vadd.f32 %v1113, %v1319
    %v1379 = vadd.f32 %v1114, %v1321
    %v1380 = vadd.f32 %v1115, %v1323
    %v1381 = vadd.f32 %v1116, %v1327
    %v1382 = vadd.f32 %v1117, %v1329
    %v1383 = vadd.f32 %v1118, %v1331
    %v1384 = vadd.f32 %v1119, %v1333
    %v1385 = vadd.f32 %v1120, %v1337
    %v1386 = vadd.f32 %v1121, %v1339
    %v1387 = vadd.f32 %v1122, %v1341
    %v1388 = vadd.f32 %v1123, %v1343
    %v1389 = vadd.f32 %v1124, %v1347
    %v1390 = vadd.f32 %v1125, %v1349
    %v1391 = vadd.f32 %v1126, %v1351
    %v1392 = vadd.f32 %v1127, %v1353
    %v1393 = vadd.f32 %v1128, %v1357
    %v1394 = vadd.f32 %v1129, %v1359
    %v1395 = vadd.f32 %v1130, %v1361
    %v1396 = vadd.f32 %v1131, %v1363
    %v1397 = vld [vmem:[%s866 + $0x2] sm:$0xff]
    %v1398 = vld [vmem:[%s866 + $0x12] sm:$0xff]
    %v1399 = vld [vmem:[%s866 + $0x22] sm:$0xff]
    %v1400 = vld [vmem:[%s866 + $0x32] sm:$0xff]
    %v1401 = vld [vmem:[%s866 + $0x42] sm:$0xff]
    %v1402 = vld [vmem:[%s866 + $0x52] sm:$0xff]
    %v1403 = vld [vmem:[%s866 + $0x62] sm:$0xff]
    %v1404 = vld [vmem:[%s866 + $0x72] sm:$0xff]
    %v1405 = vld [vmem:[%s866 + $0xa2] sm:$0xff]
    %v1406 = vld [vmem:[%s866 + $0xb2] sm:$0xff]
    %v1407 = vld [vmem:[%s866 + $0xc2] sm:$0xff]
    %v1408 = vld [vmem:[%s866 + $0xd2] sm:$0xff]
    %v1409 = vld [vmem:[%s866 + $0xe2] sm:$0xff]
    %v1410 = vld [vmem:[%s866 + $0xf2] sm:$0xff]
    %v1411 = vld [vmem:[%s866 + $0x102] sm:$0xff]
    %v1412 = vld [vmem:[%s866 + $0x112] sm:$0xff]
    %v1413 = vpack.c.bf16 %v1398, %v1397
    %v1414 = vpack.c.bf16 %v1400, %v1399
    %v1415 = vpack.c.bf16 %v1402, %v1401
    %v1416 = vpack.c.bf16 %v1404, %v1403
    %v1417 = vpack.c.bf16 %v1406, %v1405
    %v1418 = vpack.c.bf16 %v1408, %v1407
    %v1419 = vpack.c.bf16 %v1410, %v1409
    %v1420 = vpack.c.bf16 %v1412, %v1411
    %v1421 = vld [vmem:[#allocation4 + $0x280] sm:$0xff]
    %v1422 = vld [vmem:[#allocation4 + $0x288] sm:$0xff]
    %v1423 = vld [vmem:[#allocation4 + $0x290] sm:$0xff]
    %v1424 = vld [vmem:[#allocation4 + $0x298] sm:$0xff]
    %v1425 = vld [vmem:[#allocation4 + $0x2a0] sm:$0xff]
    %v1426 = vld [vmem:[#allocation4 + $0x2a8] sm:$0xff]
    %v1427 = vld [vmem:[#allocation4 + $0x2b0] sm:$0xff]
    %v1428 = vld [vmem:[#allocation4 + $0x2b8] sm:$0xff]
    %v1429 = vld [vmem:[#allocation4 + $0x2c0] sm:$0xff]
    %v1430 = vld [vmem:[#allocation4 + $0x2c8] sm:$0xff]
    %v1431 = vld [vmem:[#allocation4 + $0x2d0] sm:$0xff]
    %v1432 = vld [vmem:[#allocation4 + $0x2d8] sm:$0xff]
    %v1433 = vld [vmem:[#allocation4 + $0x2e0] sm:$0xff]
    %v1434 = vld [vmem:[#allocation4 + $0x2e8] sm:$0xff]
    %v1435 = vld [vmem:[#allocation4 + $0x2f0] sm:$0xff]
    %v1436 = vld [vmem:[#allocation4 + $0x2f8] sm:$0xff]
    %v1453 = vunpack.c.l.b16 %v1421
    %v1454 = vunpack.c.h.b16 %v1421
    %v1455 = vunpack.c.l.b16 %v1422
    %v1456 = vunpack.c.h.b16 %v1422
    %v1457 = vunpack.c.l.b16 %v1423
    %v1458 = vunpack.c.h.b16 %v1423
    %v1459 = vunpack.c.l.b16 %v1424
    %v1460 = vunpack.c.h.b16 %v1424
    %v1461 = vunpack.c.l.b16 %v1425
    %v1462 = vunpack.c.h.b16 %v1425
    %v1463 = vunpack.c.l.b16 %v1426
    %v1464 = vunpack.c.h.b16 %v1426
    %v1465 = vunpack.c.l.b16 %v1427
    %v1466 = vunpack.c.h.b16 %v1427
    %v1467 = vunpack.c.l.b16 %v1428
    %v1468 = vunpack.c.h.b16 %v1428
    %v1469 = vunpack.c.l.b16 %v1429
    %v1470 = vunpack.c.h.b16 %v1429
    %v1471 = vunpack.c.l.b16 %v1430
    %v1472 = vunpack.c.h.b16 %v1430
    %v1473 = vunpack.c.l.b16 %v1431
    %v1474 = vunpack.c.h.b16 %v1431
    %v1475 = vunpack.c.l.b16 %v1432
    %v1476 = vunpack.c.h.b16 %v1432
    %v1477 = vunpack.c.l.b16 %v1433
    %v1478 = vunpack.c.h.b16 %v1433
    %v1479 = vunpack.c.l.b16 %v1434
    %v1480 = vunpack.c.h.b16 %v1434
    %v1481 = vunpack.c.l.b16 %v1435
    %v1482 = vunpack.c.h.b16 %v1435
    %v1483 = vunpack.c.l.b16 %v1436
    %v1484 = vunpack.c.h.b16 %v1436
    %v1485 = vpack.c.b16 %v1455, %v1453
    %v1486 = vpack.c.b16 %v1456, %v1454
    %v1487 = vpack.c.b16 %v1459, %v1457
    %v1488 = vpack.c.b16 %v1460, %v1458
    %v1489 = vpack.c.b16 %v1463, %v1461
    %v1490 = vpack.c.b16 %v1464, %v1462
    %v1491 = vpack.c.b16 %v1467, %v1465
    %v1492 = vpack.c.b16 %v1468, %v1466
    %v1493 = vpack.c.b16 %v1471, %v1469
    %v1494 = vpack.c.b16 %v1472, %v1470
    %v1495 = vpack.c.b16 %v1475, %v1473
    %v1496 = vpack.c.b16 %v1476, %v1474
    %v1497 = vpack.c.b16 %v1479, %v1477
    %v1498 = vpack.c.b16 %v1480, %v1478
    %v1499 = vpack.c.b16 %v1483, %v1481
    %v1500 = vpack.c.b16 %v1484, %v1482
    %1517 = vmatprep.subr.bf16.mxu0 %v1500
    %1518 = vmatpush1.bf16.msra.mxu0 %v1499
    %1519 = vmatprep.subr.bf16.mxu0 %v1498
    %1520 = vmatpush1.bf16.msra.mxu0 %v1497
    %1521 = vmatprep.subr.bf16.mxu0 %v1496
    %1522 = vmatpush1.bf16.msra.mxu0 %v1495
    %1523 = vmatprep.subr.bf16.mxu0 %v1494
    %1524 = vmatpush1.bf16.msra.mxu0 %v1493
    %1525 = vmatprep.subr.bf16.mxu0 %v1492
    %1526 = vmatpush1.bf16.msra.mxu0 %v1491
    %1527 = vmatprep.subr.bf16.mxu0 %v1490
    %1528 = vmatpush1.bf16.msra.mxu0 %v1489
    %1529 = vmatprep.subr.bf16.mxu0 %v1488
    %1530 = vmatpush1.bf16.msra.mxu0 %v1487
    %1531 = vmatprep.subr.bf16.mxu0 %v1486
    %1532 = vmatpush1.bf16.msra.mxu0 %v1485
    %1533 = vmatprep.subr.bf16.mxu0 0
    %1534 = vmatpush2.bf16.msra.mxu0 0
    %1535 = vmatprep.subr.bf16.mxu0 0
    %1536 = vmatpush2.bf16.msra.mxu0 0
    %1537 = vmatprep.subr.bf16.mxu0 0
    %1538 = vmatpush2.bf16.msra.mxu0 0
    %1539 = vmatprep.subr.bf16.mxu0 0
    %1540 = vmatpush2.bf16.msra.mxu0 0
    %1541 = vmatprep.subr.bf16.mxu0 0
    %1542 = vmatpush2.bf16.msra.mxu0 0
    %1543 = vmatprep.subr.bf16.mxu0 0
    %1544 = vmatpush2.bf16.msra.mxu0 0
    %1545 = vmatprep.subr.bf16.mxu0 0
    %1546 = vmatpush2.bf16.msra.mxu0 0
    %1547 = vmatprep.subr.bf16.mxu0 0
    %1548 = vmatpush2.bf16.msra.mxu0 0
    %1549 = vmatprep.mubr.bf16.mxu0 0
    %1550 = vmatmul.mubr.bf16.gmra.mxu0 %v1413
    %v1551 = vpop.f32.mrf.mxu0
    %v1552 = vadd.f32 0.0, %v1551
    %v1553 = vpop.f32.mrf.mxu0
    %v1554 = vadd.f32 0.0, %v1553
    %v1555 = vpop.f32.mrf.mxu0
    %v1556 = vadd.f32 0.0, %v1555
    %v1557 = vpop.f32.mrf.mxu0
    %v1558 = vadd.f32 0.0, %v1557
    %1559 = vmatprep.mubr.bf16.mxu0 0
    %1560 = vmatmul.mubr.bf16.gmra.mxu0 %v1414
    %v1561 = vpop.f32.mrf.mxu0
    %v1562 = vadd.f32 0.0, %v1561
    %v1563 = vpop.f32.mrf.mxu0
    %v1564 = vadd.f32 0.0, %v1563
    %v1565 = vpop.f32.mrf.mxu0
    %v1566 = vadd.f32 0.0, %v1565
    %v1567 = vpop.f32.mrf.mxu0
    %v1568 = vadd.f32 0.0, %v1567
    %1569 = vmatprep.mubr.bf16.mxu0 0
    %1570 = vmatmul.mubr.bf16.gmra.mxu0 %v1415
    %v1571 = vpop.f32.mrf.mxu0
    %v1572 = vadd.f32 0.0, %v1571
    %v1573 = vpop.f32.mrf.mxu0
    %v1574 = vadd.f32 0.0, %v1573
    %v1575 = vpop.f32.mrf.mxu0
    %v1576 = vadd.f32 0.0, %v1575
    %v1577 = vpop.f32.mrf.mxu0
    %v1578 = vadd.f32 0.0, %v1577
    %1579 = vmatprep.mubr.bf16.mxu0 0
    %1580 = vmatmul.mubr.bf16.gmra.mxu0 %v1416
    %v1581 = vpop.f32.mrf.mxu0
    %v1582 = vadd.f32 0.0, %v1581
    %v1583 = vpop.f32.mrf.mxu0
    %v1584 = vadd.f32 0.0, %v1583
    %v1585 = vpop.f32.mrf.mxu0
    %v1586 = vadd.f32 0.0, %v1585
    %v1587 = vpop.f32.mrf.mxu0
    %v1588 = vadd.f32 0.0, %v1587
    %1589 = vmatprep.mubr.bf16.mxu0 0
    %1590 = vmatmul.mubr.bf16.gmra.mxu0 %v1417
    %v1591 = vpop.f32.mrf.mxu0
    %v1592 = vadd.f32 0.0, %v1591
    %v1593 = vpop.f32.mrf.mxu0
    %v1594 = vadd.f32 0.0, %v1593
    %v1595 = vpop.f32.mrf.mxu0
    %v1596 = vadd.f32 0.0, %v1595
    %v1597 = vpop.f32.mrf.mxu0
    %v1598 = vadd.f32 0.0, %v1597
    %1599 = vmatprep.mubr.bf16.mxu0 0
    %1600 = vmatmul.mubr.bf16.gmra.mxu0 %v1418
    %v1601 = vpop.f32.mrf.mxu0
    %v1602 = vadd.f32 0.0, %v1601
    %v1603 = vpop.f32.mrf.mxu0
    %v1604 = vadd.f32 0.0, %v1603
    %v1605 = vpop.f32.mrf.mxu0
    %v1606 = vadd.f32 0.0, %v1605
    %v1607 = vpop.f32.mrf.mxu0
    %v1608 = vadd.f32 0.0, %v1607
    %1609 = vmatprep.mubr.bf16.mxu0 0
    %1610 = vmatmul.mubr.bf16.gmra.mxu0 %v1419
    %v1611 = vpop.f32.mrf.mxu0
    %v1612 = vadd.f32 0.0, %v1611
    %v1613 = vpop.f32.mrf.mxu0
    %v1614 = vadd.f32 0.0, %v1613
    %v1615 = vpop.f32.mrf.mxu0
    %v1616 = vadd.f32 0.0, %v1615
    %v1617 = vpop.f32.mrf.mxu0
    %v1618 = vadd.f32 0.0, %v1617
    %1619 = vmatprep.mubr.bf16.mxu0 0
    %1620 = vmatmul.mubr.bf16.gmra.mxu0 %v1420
    %v1621 = vpop.f32.mrf.mxu0
    %v1622 = vadd.f32 0.0, %v1621
    %v1623 = vpop.f32.mrf.mxu0
    %v1624 = vadd.f32 0.0, %v1623
    %v1625 = vpop.f32.mrf.mxu0
    %v1626 = vadd.f32 0.0, %v1625
    %v1627 = vpop.f32.mrf.mxu0
    %v1628 = vadd.f32 0.0, %v1627
    %1629 = vdwg.mxu0
    %v1630 = vadd.f32 %v1365, %v1552
    %v1631 = vadd.f32 %v1366, %v1554
    %v1632 = vadd.f32 %v1367, %v1556
    %v1633 = vadd.f32 %v1368, %v1558
    %v1634 = vadd.f32 %v1369, %v1562
    %v1635 = vadd.f32 %v1370, %v1564
    %v1636 = vadd.f32 %v1371, %v1566
    %v1637 = vadd.f32 %v1372, %v1568
    %v1638 = vadd.f32 %v1373, %v1572
    %v1639 = vadd.f32 %v1374, %v1574
    %v1640 = vadd.f32 %v1375, %v1576
    %v1641 = vadd.f32 %v1376, %v1578
    %v1642 = vadd.f32 %v1377, %v1582
    %v1643 = vadd.f32 %v1378, %v1584
    %v1644 = vadd.f32 %v1379, %v1586
    %v1645 = vadd.f32 %v1380, %v1588
    %v1646 = vadd.f32 %v1381, %v1592
    %v1647 = vadd.f32 %v1382, %v1594
    %v1648 = vadd.f32 %v1383, %v1596
    %v1649 = vadd.f32 %v1384, %v1598
    %v1650 = vadd.f32 %v1385, %v1602
    %v1651 = vadd.f32 %v1386, %v1604
    %v1652 = vadd.f32 %v1387, %v1606
    %v1653 = vadd.f32 %v1388, %v1608
    %v1654 = vadd.f32 %v1389, %v1612
    %v1655 = vadd.f32 %v1390, %v1614
    %v1656 = vadd.f32 %v1391, %v1616
    %v1657 = vadd.f32 %v1392, %v1618
    %v1658 = vadd.f32 %v1393, %v1622
    %v1659 = vadd.f32 %v1394, %v1624
    %v1660 = vadd.f32 %v1395, %v1626
    %v1661 = vadd.f32 %v1396, %v1628
    %s1662 = scalar_lea.vmem %s0, 32
    %v1663 = vld [vmem:[%s1662] sm:$0xff]
    %v1664 = vld [vmem:[%s1662 + $0x10] sm:$0xff]
    %v1665 = vld [vmem:[%s1662 + $0x20] sm:$0xff]
    %v1666 = vld [vmem:[%s1662 + $0x30] sm:$0xff]
    %v1667 = vld [vmem:[%s1662 + $0x40] sm:$0xff]
    %v1668 = vld [vmem:[%s1662 + $0x50] sm:$0xff]
    %v1669 = vld [vmem:[%s1662 + $0x60] sm:$0xff]
    %v1670 = vld [vmem:[%s1662 + $0x70] sm:$0xff]
    %v1671 = vld [vmem:[%s1662 + $0xa0] sm:$0xff]
    %v1672 = vld [vmem:[%s1662 + $0xb0] sm:$0xff]
    %v1673 = vld [vmem:[%s1662 + $0xc0] sm:$0xff]
    %v1674 = vld [vmem:[%s1662 + $0xd0] sm:$0xff]
    %v1675 = vld [vmem:[%s1662 + $0xe0] sm:$0xff]
    %v1676 = vld [vmem:[%s1662 + $0xf0] sm:$0xff]
    %v1677 = vld [vmem:[%s1662 + $0x100] sm:$0xff]
    %v1678 = vld [vmem:[%s1662 + $0x110] sm:$0xff]
    %v1679 = vpack.c.bf16 %v1664, %v1663
    %v1680 = vpack.c.bf16 %v1666, %v1665
    %v1681 = vpack.c.bf16 %v1668, %v1667
    %v1682 = vpack.c.bf16 %v1670, %v1669
    %v1683 = vpack.c.bf16 %v1672, %v1671
    %v1684 = vpack.c.bf16 %v1674, %v1673
    %v1685 = vpack.c.bf16 %v1676, %v1675
    %v1686 = vpack.c.bf16 %v1678, %v1677
    %v1687 = vld [vmem:[#allocation4 + $0x300] sm:$0xff]
    %v1688 = vld [vmem:[#allocation4 + $0x308] sm:$0xff]
    %v1689 = vld [vmem:[#allocation4 + $0x310] sm:$0xff]
    %v1690 = vld [vmem:[#allocation4 + $0x318] sm:$0xff]
    %v1691 = vld [vmem:[#allocation4 + $0x320] sm:$0xff]
    %v1692 = vld [vmem:[#allocation4 + $0x328] sm:$0xff]
    %v1693 = vld [vmem:[#allocation4 + $0x330] sm:$0xff]
    %v1694 = vld [vmem:[#allocation4 + $0x338] sm:$0xff]
    %v1695 = vld [vmem:[#allocation4 + $0x340] sm:$0xff]
    %v1696 = vld [vmem:[#allocation4 + $0x348] sm:$0xff]
    %v1697 = vld [vmem:[#allocation4 + $0x350] sm:$0xff]
    %v1698 = vld [vmem:[#allocation4 + $0x358] sm:$0xff]
    %v1699 = vld [vmem:[#allocation4 + $0x360] sm:$0xff]
    %v1700 = vld [vmem:[#allocation4 + $0x368] sm:$0xff]
    %v1701 = vld [vmem:[#allocation4 + $0x370] sm:$0xff]
    %v1702 = vld [vmem:[#allocation4 + $0x378] sm:$0xff]
    %v1719 = vunpack.c.l.b16 %v1687
    %v1720 = vunpack.c.h.b16 %v1687
    %v1721 = vunpack.c.l.b16 %v1688
    %v1722 = vunpack.c.h.b16 %v1688
    %v1723 = vunpack.c.l.b16 %v1689
    %v1724 = vunpack.c.h.b16 %v1689
    %v1725 = vunpack.c.l.b16 %v1690
    %v1726 = vunpack.c.h.b16 %v1690
    %v1727 = vunpack.c.l.b16 %v1691
    %v1728 = vunpack.c.h.b16 %v1691
    %v1729 = vunpack.c.l.b16 %v1692
    %v1730 = vunpack.c.h.b16 %v1692
    %v1731 = vunpack.c.l.b16 %v1693
    %v1732 = vunpack.c.h.b16 %v1693
    %v1733 = vunpack.c.l.b16 %v1694
    %v1734 = vunpack.c.h.b16 %v1694
    %v1735 = vunpack.c.l.b16 %v1695
    %v1736 = vunpack.c.h.b16 %v1695
    %v1737 = vunpack.c.l.b16 %v1696
    %v1738 = vunpack.c.h.b16 %v1696
    %v1739 = vunpack.c.l.b16 %v1697
    %v1740 = vunpack.c.h.b16 %v1697
    %v1741 = vunpack.c.l.b16 %v1698
    %v1742 = vunpack.c.h.b16 %v1698
    %v1743 = vunpack.c.l.b16 %v1699
    %v1744 = vunpack.c.h.b16 %v1699
    %v1745 = vunpack.c.l.b16 %v1700
    %v1746 = vunpack.c.h.b16 %v1700
    %v1747 = vunpack.c.l.b16 %v1701
    %v1748 = vunpack.c.h.b16 %v1701
    %v1749 = vunpack.c.l.b16 %v1702
    %v1750 = vunpack.c.h.b16 %v1702
    %v1751 = vpack.c.b16 %v1721, %v1719
    %v1752 = vpack.c.b16 %v1722, %v1720
    %v1753 = vpack.c.b16 %v1725, %v1723
    %v1754 = vpack.c.b16 %v1726, %v1724
    %v1755 = vpack.c.b16 %v1729, %v1727
    %v1756 = vpack.c.b16 %v1730, %v1728
    %v1757 = vpack.c.b16 %v1733, %v1731
    %v1758 = vpack.c.b16 %v1734, %v1732
    %v1759 = vpack.c.b16 %v1737, %v1735
    %v1760 = vpack.c.b16 %v1738, %v1736
    %v1761 = vpack.c.b16 %v1741, %v1739
    %v1762 = vpack.c.b16 %v1742, %v1740
    %v1763 = vpack.c.b16 %v1745, %v1743
    %v1764 = vpack.c.b16 %v1746, %v1744
    %v1765 = vpack.c.b16 %v1749, %v1747
    %v1766 = vpack.c.b16 %v1750, %v1748
    %1783 = vmatprep.subr.bf16.mxu0 %v1766
    %1784 = vmatpush1.bf16.msra.mxu0 %v1765
    %1785 = vmatprep.subr.bf16.mxu0 %v1764
    %1786 = vmatpush1.bf16.msra.mxu0 %v1763
    %1787 = vmatprep.subr.bf16.mxu0 %v1762
    %1788 = vmatpush1.bf16.msra.mxu0 %v1761
    %1789 = vmatprep.subr.bf16.mxu0 %v1760
    %1790 = vmatpush1.bf16.msra.mxu0 %v1759
    %1791 = vmatprep.subr.bf16.mxu0 %v1758
    %1792 = vmatpush1.bf16.msra.mxu0 %v1757
    %1793 = vmatprep.subr.bf16.mxu0 %v1756
    %1794 = vmatpush1.bf16.msra.mxu0 %v1755
    %1795 = vmatprep.subr.bf16.mxu0 %v1754
    %1796 = vmatpush1.bf16.msra.mxu0 %v1753
    %1797 = vmatprep.subr.bf16.mxu0 %v1752
    %1798 = vmatpush1.bf16.msra.mxu0 %v1751
    %1799 = vmatprep.subr.bf16.mxu0 0
    %1800 = vmatpush2.bf16.msra.mxu0 0
    %1801 = vmatprep.subr.bf16.mxu0 0
    %1802 = vmatpush2.bf16.msra.mxu0 0
    %1803 = vmatprep.subr.bf16.mxu0 0
    %1804 = vmatpush2.bf16.msra.mxu0 0
    %1805 = vmatprep.subr.bf16.mxu0 0
    %1806 = vmatpush2.bf16.msra.mxu0 0
    %1807 = vmatprep.subr.bf16.mxu0 0
    %1808 = vmatpush2.bf16.msra.mxu0 0
    %1809 = vmatprep.subr.bf16.mxu0 0
    %1810 = vmatpush2.bf16.msra.mxu0 0
    %1811 = vmatprep.subr.bf16.mxu0 0
    %1812 = vmatpush2.bf16.msra.mxu0 0
    %1813 = vmatprep.subr.bf16.mxu0 0
    %1814 = vmatpush2.bf16.msra.mxu0 0
    %1815 = vmatprep.mubr.bf16.mxu0 0
    %1816 = vmatmul.mubr.bf16.gmra.mxu0 %v1679
    %v1817 = vpop.f32.mrf.mxu0
    %v1818 = vadd.f32 0.0, %v1817
    %v1819 = vpop.f32.mrf.mxu0
    %v1820 = vadd.f32 0.0, %v1819
    %v1821 = vpop.f32.mrf.mxu0
    %v1822 = vadd.f32 0.0, %v1821
    %v1823 = vpop.f32.mrf.mxu0
    %v1824 = vadd.f32 0.0, %v1823
    %1825 = vmatprep.mubr.bf16.mxu0 0
    %1826 = vmatmul.mubr.bf16.gmra.mxu0 %v1680
    %v1827 = vpop.f32.mrf.mxu0
    %v1828 = vadd.f32 0.0, %v1827
    %v1829 = vpop.f32.mrf.mxu0
    %v1830 = vadd.f32 0.0, %v1829
    %v1831 = vpop.f32.mrf.mxu0
    %v1832 = vadd.f32 0.0, %v1831
    %v1833 = vpop.f32.mrf.mxu0
    %v1834 = vadd.f32 0.0, %v1833
    %1835 = vmatprep.mubr.bf16.mxu0 0
    %1836 = vmatmul.mubr.bf16.gmra.mxu0 %v1681
    %v1837 = vpop.f32.mrf.mxu0
    %v1838 = vadd.f32 0.0, %v1837
    %v1839 = vpop.f32.mrf.mxu0
    %v1840 = vadd.f32 0.0, %v1839
    %v1841 = vpop.f32.mrf.mxu0
    %v1842 = vadd.f32 0.0, %v1841
    %v1843 = vpop.f32.mrf.mxu0
    %v1844 = vadd.f32 0.0, %v1843
    %1845 = vmatprep.mubr.bf16.mxu0 0
    %1846 = vmatmul.mubr.bf16.gmra.mxu0 %v1682
    %v1847 = vpop.f32.mrf.mxu0
    %v1848 = vadd.f32 0.0, %v1847
    %v1849 = vpop.f32.mrf.mxu0
    %v1850 = vadd.f32 0.0, %v1849
    %v1851 = vpop.f32.mrf.mxu0
    %v1852 = vadd.f32 0.0, %v1851
    %v1853 = vpop.f32.mrf.mxu0
    %v1854 = vadd.f32 0.0, %v1853
    %1855 = vmatprep.mubr.bf16.mxu0 0
    %1856 = vmatmul.mubr.bf16.gmra.mxu0 %v1683
    %v1857 = vpop.f32.mrf.mxu0
    %v1858 = vadd.f32 0.0, %v1857
    %v1859 = vpop.f32.mrf.mxu0
    %v1860 = vadd.f32 0.0, %v1859
    %v1861 = vpop.f32.mrf.mxu0
    %v1862 = vadd.f32 0.0, %v1861
    %v1863 = vpop.f32.mrf.mxu0
    %v1864 = vadd.f32 0.0, %v1863
    %1865 = vmatprep.mubr.bf16.mxu0 0
    %1866 = vmatmul.mubr.bf16.gmra.mxu0 %v1684
    %v1867 = vpop.f32.mrf.mxu0
    %v1868 = vadd.f32 0.0, %v1867
    %v1869 = vpop.f32.mrf.mxu0
    %v1870 = vadd.f32 0.0, %v1869
    %v1871 = vpop.f32.mrf.mxu0
    %v1872 = vadd.f32 0.0, %v1871
    %v1873 = vpop.f32.mrf.mxu0
    %v1874 = vadd.f32 0.0, %v1873
    %1875 = vmatprep.mubr.bf16.mxu0 0
    %1876 = vmatmul.mubr.bf16.gmra.mxu0 %v1685
    %v1877 = vpop.f32.mrf.mxu0
    %v1878 = vadd.f32 0.0, %v1877
    %v1879 = vpop.f32.mrf.mxu0
    %v1880 = vadd.f32 0.0, %v1879
    %v1881 = vpop.f32.mrf.mxu0
    %v1882 = vadd.f32 0.0, %v1881
    %v1883 = vpop.f32.mrf.mxu0
    %v1884 = vadd.f32 0.0, %v1883
    %1885 = vmatprep.mubr.bf16.mxu0 0
    %1886 = vmatmul.mubr.bf16.gmra.mxu0 %v1686
    %v1887 = vpop.f32.mrf.mxu0
    %v1888 = vadd.f32 0.0, %v1887
    %v1889 = vpop.f32.mrf.mxu0
    %v1890 = vadd.f32 0.0, %v1889
    %v1891 = vpop.f32.mrf.mxu0
    %v1892 = vadd.f32 0.0, %v1891
    %v1893 = vpop.f32.mrf.mxu0
    %v1894 = vadd.f32 0.0, %v1893
    %1895 = vdwg.mxu0
    %v1896 = vadd.f32 %v1630, %v1818
    %v1897 = vadd.f32 %v1631, %v1820
    %v1898 = vadd.f32 %v1632, %v1822
    %v1899 = vadd.f32 %v1633, %v1824
    %v1900 = vadd.f32 %v1634, %v1828
    %v1901 = vadd.f32 %v1635, %v1830
    %v1902 = vadd.f32 %v1636, %v1832
    %v1903 = vadd.f32 %v1637, %v1834
    %v1904 = vadd.f32 %v1638, %v1838
    %v1905 = vadd.f32 %v1639, %v1840
    %v1906 = vadd.f32 %v1640, %v1842
    %v1907 = vadd.f32 %v1641, %v1844
    %v1908 = vadd.f32 %v1642, %v1848
    %v1909 = vadd.f32 %v1643, %v1850
    %v1910 = vadd.f32 %v1644, %v1852
    %v1911 = vadd.f32 %v1645, %v1854
    %v1912 = vadd.f32 %v1646, %v1858
    %v1913 = vadd.f32 %v1647, %v1860
    %v1914 = vadd.f32 %v1648, %v1862
    %v1915 = vadd.f32 %v1649, %v1864
    %v1916 = vadd.f32 %v1650, %v1868
    %v1917 = vadd.f32 %v1651, %v1870
    %v1918 = vadd.f32 %v1652, %v1872
    %v1919 = vadd.f32 %v1653, %v1874
    %v1920 = vadd.f32 %v1654, %v1878
    %v1921 = vadd.f32 %v1655, %v1880
    %v1922 = vadd.f32 %v1656, %v1882
    %v1923 = vadd.f32 %v1657, %v1884
    %v1924 = vadd.f32 %v1658, %v1888
    %v1925 = vadd.f32 %v1659, %v1890
    %v1926 = vadd.f32 %v1660, %v1892
    %v1927 = vadd.f32 %v1661, %v1894
    %v1928 = vld [vmem:[%s1662 + $0x1] sm:$0xff]
    %v1929 = vld [vmem:[%s1662 + $0x11] sm:$0xff]
    %v1930 = vld [vmem:[%s1662 + $0x21] sm:$0xff]
    %v1931 = vld [vmem:[%s1662 + $0x31] sm:$0xff]
    %v1932 = vld [vmem:[%s1662 + $0x41] sm:$0xff]
    %v1933 = vld [vmem:[%s1662 + $0x51] sm:$0xff]
    %v1934 = vld [vmem:[%s1662 + $0x61] sm:$0xff]
    %v1935 = vld [vmem:[%s1662 + $0x71] sm:$0xff]
    %v1936 = vld [vmem:[%s1662 + $0xa1] sm:$0xff]
    %v1937 = vld [vmem:[%s1662 + $0xb1] sm:$0xff]
    %v1938 = vld [vmem:[%s1662 + $0xc1] sm:$0xff]
    %v1939 = vld [vmem:[%s1662 + $0xd1] sm:$0xff]
    %v1940 = vld [vmem:[%s1662 + $0xe1] sm:$0xff]
    %v1941 = vld [vmem:[%s1662 + $0xf1] sm:$0xff]
    %v1942 = vld [vmem:[%s1662 + $0x101] sm:$0xff]
    %v1943 = vld [vmem:[%s1662 + $0x111] sm:$0xff]
    %v1944 = vpack.c.bf16 %v1929, %v1928
    %v1945 = vpack.c.bf16 %v1931, %v1930
    %v1946 = vpack.c.bf16 %v1933, %v1932
    %v1947 = vpack.c.bf16 %v1935, %v1934
    %v1948 = vpack.c.bf16 %v1937, %v1936
    %v1949 = vpack.c.bf16 %v1939, %v1938
    %v1950 = vpack.c.bf16 %v1941, %v1940
    %v1951 = vpack.c.bf16 %v1943, %v1942
    %v1952 = vld [vmem:[#allocation4 + $0x380] sm:$0xff]
    %v1953 = vld [vmem:[#allocation4 + $0x388] sm:$0xff]
    %v1954 = vld [vmem:[#allocation4 + $0x390] sm:$0xff]
    %v1955 = vld [vmem:[#allocation4 + $0x398] sm:$0xff]
    %v1956 = vld [vmem:[#allocation4 + $0x3a0] sm:$0xff]
    %v1957 = vld [vmem:[#allocation4 + $0x3a8] sm:$0xff]
    %v1958 = vld [vmem:[#allocation4 + $0x3b0] sm:$0xff]
    %v1959 = vld [vmem:[#allocation4 + $0x3b8] sm:$0xff]
    %v1960 = vld [vmem:[#allocation4 + $0x3c0] sm:$0xff]
    %v1961 = vld [vmem:[#allocation4 + $0x3c8] sm:$0xff]
    %v1962 = vld [vmem:[#allocation4 + $0x3d0] sm:$0xff]
    %v1963 = vld [vmem:[#allocation4 + $0x3d8] sm:$0xff]
    %v1964 = vld [vmem:[#allocation4 + $0x3e0] sm:$0xff]
    %v1965 = vld [vmem:[#allocation4 + $0x3e8] sm:$0xff]
    %v1966 = vld [vmem:[#allocation4 + $0x3f0] sm:$0xff]
    %v1967 = vld [vmem:[#allocation4 + $0x3f8] sm:$0xff]
    %v1984 = vunpack.c.l.b16 %v1952
    %v1985 = vunpack.c.h.b16 %v1952
    %v1986 = vunpack.c.l.b16 %v1953
    %v1987 = vunpack.c.h.b16 %v1953
    %v1988 = vunpack.c.l.b16 %v1954
    %v1989 = vunpack.c.h.b16 %v1954
    %v1990 = vunpack.c.l.b16 %v1955
    %v1991 = vunpack.c.h.b16 %v1955
    %v1992 = vunpack.c.l.b16 %v1956
    %v1993 = vunpack.c.h.b16 %v1956
    %v1994 = vunpack.c.l.b16 %v1957
    %v1995 = vunpack.c.h.b16 %v1957
    %v1996 = vunpack.c.l.b16 %v1958
    %v1997 = vunpack.c.h.b16 %v1958
    %v1998 = vunpack.c.l.b16 %v1959
    %v1999 = vunpack.c.h.b16 %v1959
    %v2000 = vunpack.c.l.b16 %v1960
    %v2001 = vunpack.c.h.b16 %v1960
    %v2002 = vunpack.c.l.b16 %v1961
    %v2003 = vunpack.c.h.b16 %v1961
    %v2004 = vunpack.c.l.b16 %v1962
    %v2005 = vunpack.c.h.b16 %v1962
    %v2006 = vunpack.c.l.b16 %v1963
    %v2007 = vunpack.c.h.b16 %v1963
    %v2008 = vunpack.c.l.b16 %v1964
    %v2009 = vunpack.c.h.b16 %v1964
    %v2010 = vunpack.c.l.b16 %v1965
    %v2011 = vunpack.c.h.b16 %v1965
    %v2012 = vunpack.c.l.b16 %v1966
    %v2013 = vunpack.c.h.b16 %v1966
    %v2014 = vunpack.c.l.b16 %v1967
    %v2015 = vunpack.c.h.b16 %v1967
    %v2016 = vpack.c.b16 %v1986, %v1984
    %v2017 = vpack.c.b16 %v1987, %v1985
    %v2018 = vpack.c.b16 %v1990, %v1988
    %v2019 = vpack.c.b16 %v1991, %v1989
    %v2020 = vpack.c.b16 %v1994, %v1992
    %v2021 = vpack.c.b16 %v1995, %v1993
    %v2022 = vpack.c.b16 %v1998, %v1996
    %v2023 = vpack.c.b16 %v1999, %v1997
    %v2024 = vpack.c.b16 %v2002, %v2000
    %v2025 = vpack.c.b16 %v2003, %v2001
    %v2026 = vpack.c.b16 %v2006, %v2004
    %v2027 = vpack.c.b16 %v2007, %v2005
    %v2028 = vpack.c.b16 %v2010, %v2008
    %v2029 = vpack.c.b16 %v2011, %v2009
    %v2030 = vpack.c.b16 %v2014, %v2012
    %v2031 = vpack.c.b16 %v2015, %v2013
    %2048 = vmatprep.subr.bf16.mxu0 %v2031
    %2049 = vmatpush1.bf16.msra.mxu0 %v2030
    %2050 = vmatprep.subr.bf16.mxu0 %v2029
    %2051 = vmatpush1.bf16.msra.mxu0 %v2028
    %2052 = vmatprep.subr.bf16.mxu0 %v2027
    %2053 = vmatpush1.bf16.msra.mxu0 %v2026
    %2054 = vmatprep.subr.bf16.mxu0 %v2025
    %2055 = vmatpush1.bf16.msra.mxu0 %v2024
    %2056 = vmatprep.subr.bf16.mxu0 %v2023
    %2057 = vmatpush1.bf16.msra.mxu0 %v2022
    %2058 = vmatprep.subr.bf16.mxu0 %v2021
    %2059 = vmatpush1.bf16.msra.mxu0 %v2020
    %2060 = vmatprep.subr.bf16.mxu0 %v2019
    %2061 = vmatpush1.bf16.msra.mxu0 %v2018
    %2062 = vmatprep.subr.bf16.mxu0 %v2017
    %2063 = vmatpush1.bf16.msra.mxu0 %v2016
    %2064 = vmatprep.subr.bf16.mxu0 0
    %2065 = vmatpush2.bf16.msra.mxu0 0
    %2066 = vmatprep.subr.bf16.mxu0 0
    %2067 = vmatpush2.bf16.msra.mxu0 0
    %2068 = vmatprep.subr.bf16.mxu0 0
    %2069 = vmatpush2.bf16.msra.mxu0 0
    %2070 = vmatprep.subr.bf16.mxu0 0
    %2071 = vmatpush2.bf16.msra.mxu0 0
    %2072 = vmatprep.subr.bf16.mxu0 0
    %2073 = vmatpush2.bf16.msra.mxu0 0
    %2074 = vmatprep.subr.bf16.mxu0 0
    %2075 = vmatpush2.bf16.msra.mxu0 0
    %2076 = vmatprep.subr.bf16.mxu0 0
    %2077 = vmatpush2.bf16.msra.mxu0 0
    %2078 = vmatprep.subr.bf16.mxu0 0
    %2079 = vmatpush2.bf16.msra.mxu0 0
    %2080 = vmatprep.mubr.bf16.mxu0 0
    %2081 = vmatmul.mubr.bf16.gmra.mxu0 %v1944
    %v2082 = vpop.f32.mrf.mxu0
    %v2083 = vadd.f32 0.0, %v2082
    %v2084 = vpop.f32.mrf.mxu0
    %v2085 = vadd.f32 0.0, %v2084
    %v2086 = vpop.f32.mrf.mxu0
    %v2087 = vadd.f32 0.0, %v2086
    %v2088 = vpop.f32.mrf.mxu0
    %v2089 = vadd.f32 0.0, %v2088
    %2090 = vmatprep.mubr.bf16.mxu0 0
    %2091 = vmatmul.mubr.bf16.gmra.mxu0 %v1945
    %v2092 = vpop.f32.mrf.mxu0
    %v2093 = vadd.f32 0.0, %v2092
    %v2094 = vpop.f32.mrf.mxu0
    %v2095 = vadd.f32 0.0, %v2094
    %v2096 = vpop.f32.mrf.mxu0
    %v2097 = vadd.f32 0.0, %v2096
    %v2098 = vpop.f32.mrf.mxu0
    %v2099 = vadd.f32 0.0, %v2098
    %2100 = vmatprep.mubr.bf16.mxu0 0
    %2101 = vmatmul.mubr.bf16.gmra.mxu0 %v1946
    %v2102 = vpop.f32.mrf.mxu0
    %v2103 = vadd.f32 0.0, %v2102
    %v2104 = vpop.f32.mrf.mxu0
    %v2105 = vadd.f32 0.0, %v2104
    %v2106 = vpop.f32.mrf.mxu0
    %v2107 = vadd.f32 0.0, %v2106
    %v2108 = vpop.f32.mrf.mxu0
    %v2109 = vadd.f32 0.0, %v2108
    %2110 = vmatprep.mubr.bf16.mxu0 0
    %2111 = vmatmul.mubr.bf16.gmra.mxu0 %v1947
    %v2112 = vpop.f32.mrf.mxu0
    %v2113 = vadd.f32 0.0, %v2112
    %v2114 = vpop.f32.mrf.mxu0
    %v2115 = vadd.f32 0.0, %v2114
    %v2116 = vpop.f32.mrf.mxu0
    %v2117 = vadd.f32 0.0, %v2116
    %v2118 = vpop.f32.mrf.mxu0
    %v2119 = vadd.f32 0.0, %v2118
    %2120 = vmatprep.mubr.bf16.mxu0 0
    %2121 = vmatmul.mubr.bf16.gmra.mxu0 %v1948
    %v2122 = vpop.f32.mrf.mxu0
    %v2123 = vadd.f32 0.0, %v2122
    %v2124 = vpop.f32.mrf.mxu0
    %v2125 = vadd.f32 0.0, %v2124
    %v2126 = vpop.f32.mrf.mxu0
    %v2127 = vadd.f32 0.0, %v2126
    %v2128 = vpop.f32.mrf.mxu0
    %v2129 = vadd.f32 0.0, %v2128
    %2130 = vmatprep.mubr.bf16.mxu0 0
    %2131 = vmatmul.mubr.bf16.gmra.mxu0 %v1949
    %v2132 = vpop.f32.mrf.mxu0
    %v2133 = vadd.f32 0.0, %v2132
    %v2134 = vpop.f32.mrf.mxu0
    %v2135 = vadd.f32 0.0, %v2134
    %v2136 = vpop.f32.mrf.mxu0
    %v2137 = vadd.f32 0.0, %v2136
    %v2138 = vpop.f32.mrf.mxu0
    %v2139 = vadd.f32 0.0, %v2138
    %2140 = vmatprep.mubr.bf16.mxu0 0
    %2141 = vmatmul.mubr.bf16.gmra.mxu0 %v1950
    %v2142 = vpop.f32.mrf.mxu0
    %v2143 = vadd.f32 0.0, %v2142
    %v2144 = vpop.f32.mrf.mxu0
    %v2145 = vadd.f32 0.0, %v2144
    %v2146 = vpop.f32.mrf.mxu0
    %v2147 = vadd.f32 0.0, %v2146
    %v2148 = vpop.f32.mrf.mxu0
    %v2149 = vadd.f32 0.0, %v2148
    %2150 = vmatprep.mubr.bf16.mxu0 0
    %2151 = vmatmul.mubr.bf16.gmra.mxu0 %v1951
    %v2152 = vpop.f32.mrf.mxu0
    %v2153 = vadd.f32 0.0, %v2152
    %v2154 = vpop.f32.mrf.mxu0
    %v2155 = vadd.f32 0.0, %v2154
    %v2156 = vpop.f32.mrf.mxu0
    %v2157 = vadd.f32 0.0, %v2156
    %v2158 = vpop.f32.mrf.mxu0
    %v2159 = vadd.f32 0.0, %v2158
    %2160 = vdwg.mxu0
    %v2161 = vadd.f32 %v1896, %v2083
    %v2162 = vadd.f32 %v1897, %v2085
    %v2163 = vadd.f32 %v1898, %v2087
    %v2164 = vadd.f32 %v1899, %v2089
    %v2165 = vadd.f32 %v1900, %v2093
    %v2166 = vadd.f32 %v1901, %v2095
    %v2167 = vadd.f32 %v1902, %v2097
    %v2168 = vadd.f32 %v1903, %v2099
    %v2169 = vadd.f32 %v1904, %v2103
    %v2170 = vadd.f32 %v1905, %v2105
    %v2171 = vadd.f32 %v1906, %v2107
    %v2172 = vadd.f32 %v1907, %v2109
    %v2173 = vadd.f32 %v1908, %v2113
    %v2174 = vadd.f32 %v1909, %v2115
    %v2175 = vadd.f32 %v1910, %v2117
    %v2176 = vadd.f32 %v1911, %v2119
    %v2177 = vadd.f32 %v1912, %v2123
    %v2178 = vadd.f32 %v1913, %v2125
    %v2179 = vadd.f32 %v1914, %v2127
    %v2180 = vadd.f32 %v1915, %v2129
    %v2181 = vadd.f32 %v1916, %v2133
    %v2182 = vadd.f32 %v1917, %v2135
    %v2183 = vadd.f32 %v1918, %v2137
    %v2184 = vadd.f32 %v1919, %v2139
    %v2185 = vadd.f32 %v1920, %v2143
    %v2186 = vadd.f32 %v1921, %v2145
    %v2187 = vadd.f32 %v1922, %v2147
    %v2188 = vadd.f32 %v1923, %v2149
    %v2189 = vadd.f32 %v1924, %v2153
    %v2190 = vadd.f32 %v1925, %v2155
    %v2191 = vadd.f32 %v1926, %v2157
    %v2192 = vadd.f32 %v1927, %v2159
    %v2193 = vld [vmem:[%s1662 + $0x2] sm:$0xff]
    %v2194 = vld [vmem:[%s1662 + $0x12] sm:$0xff]
    %v2195 = vld [vmem:[%s1662 + $0x22] sm:$0xff]
    %v2196 = vld [vmem:[%s1662 + $0x32] sm:$0xff]
    %v2197 = vld [vmem:[%s1662 + $0x42] sm:$0xff]
    %v2198 = vld [vmem:[%s1662 + $0x52] sm:$0xff]
    %v2199 = vld [vmem:[%s1662 + $0x62] sm:$0xff]
    %v2200 = vld [vmem:[%s1662 + $0x72] sm:$0xff]
    %v2201 = vld [vmem:[%s1662 + $0xa2] sm:$0xff]
    %v2202 = vld [vmem:[%s1662 + $0xb2] sm:$0xff]
    %v2203 = vld [vmem:[%s1662 + $0xc2] sm:$0xff]
    %v2204 = vld [vmem:[%s1662 + $0xd2] sm:$0xff]
    %v2205 = vld [vmem:[%s1662 + $0xe2] sm:$0xff]
    %v2206 = vld [vmem:[%s1662 + $0xf2] sm:$0xff]
    %v2207 = vld [vmem:[%s1662 + $0x102] sm:$0xff]
    %v2208 = vld [vmem:[%s1662 + $0x112] sm:$0xff]
    %v2209 = vpack.c.bf16 %v2194, %v2193
    %v2210 = vpack.c.bf16 %v2196, %v2195
    %v2211 = vpack.c.bf16 %v2198, %v2197
    %v2212 = vpack.c.bf16 %v2200, %v2199
    %v2213 = vpack.c.bf16 %v2202, %v2201
    %v2214 = vpack.c.bf16 %v2204, %v2203
    %v2215 = vpack.c.bf16 %v2206, %v2205
    %v2216 = vpack.c.bf16 %v2208, %v2207
    %v2217 = vld [vmem:[#allocation4 + $0x400] sm:$0xff]
    %v2218 = vld [vmem:[#allocation4 + $0x408] sm:$0xff]
    %v2219 = vld [vmem:[#allocation4 + $0x410] sm:$0xff]
    %v2220 = vld [vmem:[#allocation4 + $0x418] sm:$0xff]
    %v2221 = vld [vmem:[#allocation4 + $0x420] sm:$0xff]
    %v2222 = vld [vmem:[#allocation4 + $0x428] sm:$0xff]
    %v2223 = vld [vmem:[#allocation4 + $0x430] sm:$0xff]
    %v2224 = vld [vmem:[#allocation4 + $0x438] sm:$0xff]
    %v2225 = vld [vmem:[#allocation4 + $0x440] sm:$0xff]
    %v2226 = vld [vmem:[#allocation4 + $0x448] sm:$0xff]
    %v2227 = vld [vmem:[#allocation4 + $0x450] sm:$0xff]
    %v2228 = vld [vmem:[#allocation4 + $0x458] sm:$0xff]
    %v2229 = vld [vmem:[#allocation4 + $0x460] sm:$0xff]
    %v2230 = vld [vmem:[#allocation4 + $0x468] sm:$0xff]
    %v2231 = vld [vmem:[#allocation4 + $0x470] sm:$0xff]
    %v2232 = vld [vmem:[#allocation4 + $0x478] sm:$0xff]
    %v2249 = vunpack.c.l.b16 %v2217
    %v2250 = vunpack.c.h.b16 %v2217
    %v2251 = vunpack.c.l.b16 %v2218
    %v2252 = vunpack.c.h.b16 %v2218
    %v2253 = vunpack.c.l.b16 %v2219
    %v2254 = vunpack.c.h.b16 %v2219
    %v2255 = vunpack.c.l.b16 %v2220
    %v2256 = vunpack.c.h.b16 %v2220
    %v2257 = vunpack.c.l.b16 %v2221
    %v2258 = vunpack.c.h.b16 %v2221
    %v2259 = vunpack.c.l.b16 %v2222
    %v2260 = vunpack.c.h.b16 %v2222
    %v2261 = vunpack.c.l.b16 %v2223
    %v2262 = vunpack.c.h.b16 %v2223
    %v2263 = vunpack.c.l.b16 %v2224
    %v2264 = vunpack.c.h.b16 %v2224
    %v2265 = vunpack.c.l.b16 %v2225
    %v2266 = vunpack.c.h.b16 %v2225
    %v2267 = vunpack.c.l.b16 %v2226
    %v2268 = vunpack.c.h.b16 %v2226
    %v2269 = vunpack.c.l.b16 %v2227
    %v2270 = vunpack.c.h.b16 %v2227
    %v2271 = vunpack.c.l.b16 %v2228
    %v2272 = vunpack.c.h.b16 %v2228
    %v2273 = vunpack.c.l.b16 %v2229
    %v2274 = vunpack.c.h.b16 %v2229
    %v2275 = vunpack.c.l.b16 %v2230
    %v2276 = vunpack.c.h.b16 %v2230
    %v2277 = vunpack.c.l.b16 %v2231
    %v2278 = vunpack.c.h.b16 %v2231
    %v2279 = vunpack.c.l.b16 %v2232
    %v2280 = vunpack.c.h.b16 %v2232
    %v2281 = vpack.c.b16 %v2251, %v2249
    %v2282 = vpack.c.b16 %v2252, %v2250
    %v2283 = vpack.c.b16 %v2255, %v2253
    %v2284 = vpack.c.b16 %v2256, %v2254
    %v2285 = vpack.c.b16 %v2259, %v2257
    %v2286 = vpack.c.b16 %v2260, %v2258
    %v2287 = vpack.c.b16 %v2263, %v2261
    %v2288 = vpack.c.b16 %v2264, %v2262
    %v2289 = vpack.c.b16 %v2267, %v2265
    %v2290 = vpack.c.b16 %v2268, %v2266
    %v2291 = vpack.c.b16 %v2271, %v2269
    %v2292 = vpack.c.b16 %v2272, %v2270
    %v2293 = vpack.c.b16 %v2275, %v2273
    %v2294 = vpack.c.b16 %v2276, %v2274
    %v2295 = vpack.c.b16 %v2279, %v2277
    %v2296 = vpack.c.b16 %v2280, %v2278
    %2313 = vmatprep.subr.bf16.mxu0 %v2296
    %2314 = vmatpush1.bf16.msra.mxu0 %v2295
    %2315 = vmatprep.subr.bf16.mxu0 %v2294
    %2316 = vmatpush1.bf16.msra.mxu0 %v2293
    %2317 = vmatprep.subr.bf16.mxu0 %v2292
    %2318 = vmatpush1.bf16.msra.mxu0 %v2291
    %2319 = vmatprep.subr.bf16.mxu0 %v2290
    %2320 = vmatpush1.bf16.msra.mxu0 %v2289
    %2321 = vmatprep.subr.bf16.mxu0 %v2288
    %2322 = vmatpush1.bf16.msra.mxu0 %v2287
    %2323 = vmatprep.subr.bf16.mxu0 %v2286
    %2324 = vmatpush1.bf16.msra.mxu0 %v2285
    %2325 = vmatprep.subr.bf16.mxu0 %v2284
    %2326 = vmatpush1.bf16.msra.mxu0 %v2283
    %2327 = vmatprep.subr.bf16.mxu0 %v2282
    %2328 = vmatpush1.bf16.msra.mxu0 %v2281
    %2329 = vmatprep.subr.bf16.mxu0 0
    %2330 = vmatpush2.bf16.msra.mxu0 0
    %2331 = vmatprep.subr.bf16.mxu0 0
    %2332 = vmatpush2.bf16.msra.mxu0 0
    %2333 = vmatprep.subr.bf16.mxu0 0
    %2334 = vmatpush2.bf16.msra.mxu0 0
    %2335 = vmatprep.subr.bf16.mxu0 0
    %2336 = vmatpush2.bf16.msra.mxu0 0
    %2337 = vmatprep.subr.bf16.mxu0 0
    %2338 = vmatpush2.bf16.msra.mxu0 0
    %2339 = vmatprep.subr.bf16.mxu0 0
    %2340 = vmatpush2.bf16.msra.mxu0 0
    %2341 = vmatprep.subr.bf16.mxu0 0
    %2342 = vmatpush2.bf16.msra.mxu0 0
    %2343 = vmatprep.subr.bf16.mxu0 0
    %2344 = vmatpush2.bf16.msra.mxu0 0
    %2345 = vmatprep.mubr.bf16.mxu0 0
    %2346 = vmatmul.mubr.bf16.gmra.mxu0 %v2209
    %v2347 = vpop.f32.mrf.mxu0
    %v2348 = vadd.f32 0.0, %v2347
    %v2349 = vpop.f32.mrf.mxu0
    %v2350 = vadd.f32 0.0, %v2349
    %v2351 = vpop.f32.mrf.mxu0
    %v2352 = vadd.f32 0.0, %v2351
    %v2353 = vpop.f32.mrf.mxu0
    %v2354 = vadd.f32 0.0, %v2353
    %2355 = vmatprep.mubr.bf16.mxu0 0
    %2356 = vmatmul.mubr.bf16.gmra.mxu0 %v2210
    %v2357 = vpop.f32.mrf.mxu0
    %v2358 = vadd.f32 0.0, %v2357
    %v2359 = vpop.f32.mrf.mxu0
    %v2360 = vadd.f32 0.0, %v2359
    %v2361 = vpop.f32.mrf.mxu0
    %v2362 = vadd.f32 0.0, %v2361
    %v2363 = vpop.f32.mrf.mxu0
    %v2364 = vadd.f32 0.0, %v2363
    %2365 = vmatprep.mubr.bf16.mxu0 0
    %2366 = vmatmul.mubr.bf16.gmra.mxu0 %v2211
    %v2367 = vpop.f32.mrf.mxu0
    %v2368 = vadd.f32 0.0, %v2367
    %v2369 = vpop.f32.mrf.mxu0
    %v2370 = vadd.f32 0.0, %v2369
    %v2371 = vpop.f32.mrf.mxu0
    %v2372 = vadd.f32 0.0, %v2371
    %v2373 = vpop.f32.mrf.mxu0
    %v2374 = vadd.f32 0.0, %v2373
    %2375 = vmatprep.mubr.bf16.mxu0 0
    %2376 = vmatmul.mubr.bf16.gmra.mxu0 %v2212
    %v2377 = vpop.f32.mrf.mxu0
    %v2378 = vadd.f32 0.0, %v2377
    %v2379 = vpop.f32.mrf.mxu0
    %v2380 = vadd.f32 0.0, %v2379
    %v2381 = vpop.f32.mrf.mxu0
    %v2382 = vadd.f32 0.0, %v2381
    %v2383 = vpop.f32.mrf.mxu0
    %v2384 = vadd.f32 0.0, %v2383
    %2385 = vmatprep.mubr.bf16.mxu0 0
    %2386 = vmatmul.mubr.bf16.gmra.mxu0 %v2213
    %v2387 = vpop.f32.mrf.mxu0
    %v2388 = vadd.f32 0.0, %v2387
    %v2389 = vpop.f32.mrf.mxu0
    %v2390 = vadd.f32 0.0, %v2389
    %v2391 = vpop.f32.mrf.mxu0
    %v2392 = vadd.f32 0.0, %v2391
    %v2393 = vpop.f32.mrf.mxu0
    %v2394 = vadd.f32 0.0, %v2393
    %2395 = vmatprep.mubr.bf16.mxu0 0
    %2396 = vmatmul.mubr.bf16.gmra.mxu0 %v2214
    %v2397 = vpop.f32.mrf.mxu0
    %v2398 = vadd.f32 0.0, %v2397
    %v2399 = vpop.f32.mrf.mxu0
    %v2400 = vadd.f32 0.0, %v2399
    %v2401 = vpop.f32.mrf.mxu0
    %v2402 = vadd.f32 0.0, %v2401
    %v2403 = vpop.f32.mrf.mxu0
    %v2404 = vadd.f32 0.0, %v2403
    %2405 = vmatprep.mubr.bf16.mxu0 0
    %2406 = vmatmul.mubr.bf16.gmra.mxu0 %v2215
    %v2407 = vpop.f32.mrf.mxu0
    %v2408 = vadd.f32 0.0, %v2407
    %v2409 = vpop.f32.mrf.mxu0
    %v2410 = vadd.f32 0.0, %v2409
    %v2411 = vpop.f32.mrf.mxu0
    %v2412 = vadd.f32 0.0, %v2411
    %v2413 = vpop.f32.mrf.mxu0
    %v2414 = vadd.f32 0.0, %v2413
    %2415 = vmatprep.mubr.bf16.mxu0 0
    %2416 = vmatmul.mubr.bf16.gmra.mxu0 %v2216
    %v2417 = vpop.f32.mrf.mxu0
    %v2418 = vadd.f32 0.0, %v2417
    %v2419 = vpop.f32.mrf.mxu0
    %v2420 = vadd.f32 0.0, %v2419
    %v2421 = vpop.f32.mrf.mxu0
    %v2422 = vadd.f32 0.0, %v2421
    %v2423 = vpop.f32.mrf.mxu0
    %v2424 = vadd.f32 0.0, %v2423
    %2425 = vdwg.mxu0
    %v2426 = vadd.f32 %v2161, %v2348
    %v2427 = vadd.f32 %v2162, %v2350
    %v2428 = vadd.f32 %v2163, %v2352
    %v2429 = vadd.f32 %v2164, %v2354
    %v2430 = vadd.f32 %v2165, %v2358
    %v2431 = vadd.f32 %v2166, %v2360
    %v2432 = vadd.f32 %v2167, %v2362
    %v2433 = vadd.f32 %v2168, %v2364
    %v2434 = vadd.f32 %v2169, %v2368
    %v2435 = vadd.f32 %v2170, %v2370
    %v2436 = vadd.f32 %v2171, %v2372
    %v2437 = vadd.f32 %v2172, %v2374
    %v2438 = vadd.f32 %v2173, %v2378
    %v2439 = vadd.f32 %v2174, %v2380
    %v2440 = vadd.f32 %v2175, %v2382
    %v2441 = vadd.f32 %v2176, %v2384
    %v2442 = vadd.f32 %v2177, %v2388
    %v2443 = vadd.f32 %v2178, %v2390
    %v2444 = vadd.f32 %v2179, %v2392
    %v2445 = vadd.f32 %v2180, %v2394
    %v2446 = vadd.f32 %v2181, %v2398
    %v2447 = vadd.f32 %v2182, %v2400
    %v2448 = vadd.f32 %v2183, %v2402
    %v2449 = vadd.f32 %v2184, %v2404
    %v2450 = vadd.f32 %v2185, %v2408
    %v2451 = vadd.f32 %v2186, %v2410
    %v2452 = vadd.f32 %v2187, %v2412
    %v2453 = vadd.f32 %v2188, %v2414
    %v2454 = vadd.f32 %v2189, %v2418
    %v2455 = vadd.f32 %v2190, %v2420
    %v2456 = vadd.f32 %v2191, %v2422
    %v2457 = vadd.f32 %v2192, %v2424
    %v2458 = vld [vmem:[#allocation7] sm:$0x3]
    %v2460 = vlaneseq
    %v2461 = vshrl.u32 %v2460, 7
    %v2462 = vsub.s32 0, %v2461
    %v2463 = vrot.slane %v2458, %v2462
    %v2464 = vlaneseq
    %v2465 = vshrl.u32 %v2464, 7
    %v2466 = vsub.s32 1, %v2465
    %v2467 = vrot.slane %v2458, %v2466
    %v2470 = vadd.f32 %v2426, %v2463
    %v2471 = vadd.f32 %v2427, %v2467
    %v2472 = vadd.f32 %v2428, %v2463
    %v2473 = vadd.f32 %v2429, %v2467
    %v2474 = vadd.f32 %v2430, %v2463
    %v2475 = vadd.f32 %v2431, %v2467
    %v2476 = vadd.f32 %v2432, %v2463
    %v2477 = vadd.f32 %v2433, %v2467
    %v2478 = vadd.f32 %v2434, %v2463
    %v2479 = vadd.f32 %v2435, %v2467
    %v2480 = vadd.f32 %v2436, %v2463
    %v2481 = vadd.f32 %v2437, %v2467
    %v2482 = vadd.f32 %v2438, %v2463
    %v2483 = vadd.f32 %v2439, %v2467
    %v2484 = vadd.f32 %v2440, %v2463
    %v2485 = vadd.f32 %v2441, %v2467
    %v2486 = vadd.f32 %v2442, %v2463
    %v2487 = vadd.f32 %v2443, %v2467
    %v2488 = vadd.f32 %v2444, %v2463
    %v2489 = vadd.f32 %v2445, %v2467
    %v2490 = vadd.f32 %v2446, %v2463
    %v2491 = vadd.f32 %v2447, %v2467
    %v2492 = vadd.f32 %v2448, %v2463
    %v2493 = vadd.f32 %v2449, %v2467
    %v2494 = vadd.f32 %v2450, %v2463
    %v2495 = vadd.f32 %v2451, %v2467
    %v2496 = vadd.f32 %v2452, %v2463
    %v2497 = vadd.f32 %v2453, %v2467
    %v2498 = vadd.f32 %v2454, %v2463
    %v2499 = vadd.f32 %v2455, %v2467
    %v2500 = vadd.f32 %v2456, %v2463
    %v2501 = vadd.f32 %v2457, %v2467
    %v2502 = vmax.f32 %v2470, 0.0
    %v2503 = vmax.f32 %v2471, 0.0
    %v2504 = vmax.f32 %v2472, 0.0
    %v2505 = vmax.f32 %v2473, 0.0
    %v2506 = vmax.f32 %v2474, 0.0
    %v2507 = vmax.f32 %v2475, 0.0
    %v2508 = vmax.f32 %v2476, 0.0
    %v2509 = vmax.f32 %v2477, 0.0
    %v2510 = vmax.f32 %v2478, 0.0
    %v2511 = vmax.f32 %v2479, 0.0
    %v2512 = vmax.f32 %v2480, 0.0
    %v2513 = vmax.f32 %v2481, 0.0
    %v2514 = vmax.f32 %v2482, 0.0
    %v2515 = vmax.f32 %v2483, 0.0
    %v2516 = vmax.f32 %v2484, 0.0
    %v2517 = vmax.f32 %v2485, 0.0
    %v2518 = vmax.f32 %v2486, 0.0
    %v2519 = vmax.f32 %v2487, 0.0
    %v2520 = vmax.f32 %v2488, 0.0
    %v2521 = vmax.f32 %v2489, 0.0
    %v2522 = vmax.f32 %v2490, 0.0
    %v2523 = vmax.f32 %v2491, 0.0
    %v2524 = vmax.f32 %v2492, 0.0
    %v2525 = vmax.f32 %v2493, 0.0
    %v2526 = vmax.f32 %v2494, 0.0
    %v2527 = vmax.f32 %v2495, 0.0
    %v2528 = vmax.f32 %v2496, 0.0
    %v2529 = vmax.f32 %v2497, 0.0
    %v2530 = vmax.f32 %v2498, 0.0
    %v2531 = vmax.f32 %v2499, 0.0
    %v2532 = vmax.f32 %v2500, 0.0
    %v2533 = vmax.f32 %v2501, 0.0
    %v2534 = vmax.f32 %v2502, %v2504
    %v2535 = vmax.f32 %v2503, %v2505
    %v2536 = vmax.f32 %v2518, %v2520
    %v2537 = vmax.f32 %v2519, %v2521
    %v2542 = vrot.slane %v2534, 1
    %v2543 = vrot.slane %v2535, 1
    %v2544 = vrot.slane %v2536, 1
    %v2545 = vrot.slane %v2537, 1
    %v2550 = vmax.f32 %v2534, %v2542
    %v2551 = vmax.f32 %v2535, %v2543
    %v2552 = vmax.f32 %v2536, %v2544
    %v2553 = vmax.f32 %v2537, %v2545
    %v2556 = vcombine.low %v2550, %v2551
    %v2558 = vunpack.c.l.s4 1966171168
    %v2559 = vunpack.c.0.s8 %v2558
    %v2560 = vlaneseq
    %v2561 = vshrl.u32 %v2560, 7
    %v2562 = vsub.s32 %v2559, %v2561
    %v2563 = vrot.slane %v2556, %v2562
    %v2565 = vunpack.c.l.s4 1966171168
    %v2566 = vunpack.c.0.s8 %v2565
    %v2567 = vlaneseq
    %v2568 = vshrl.u32 %v2567, 7
    %v2569 = vsub.s32 %v2566, %v2568
    %v2570 = vrot.slane %v2563, %v2569
    %v2572 = vlaneseq
    %vm2573 = vcmp.ge.s32.totalorder %v2572, 0
    %vm2574 = vcmp.lt.s32.totalorder %v2572, 256
    %vm2575 = vmand %vm2573, %vm2574
    %2576 = vst.msk [vmem:[#allocation2] ss:$8 sm:$0x3] %vm2575, %v2570
    %2577 = vst.msk [vmem:[#allocation2] ss:$8 sm:$0x0] %vm2575, %v2570
    %v2580 = vcombine.low %v2552, %v2553
    %v2582 = vunpack.c.l.s4 1966171168
    %v2583 = vunpack.c.0.s8 %v2582
    %v2584 = vlaneseq
    %v2585 = vshrl.u32 %v2584, 7
    %v2586 = vsub.s32 %v2583, %v2585
    %v2587 = vrot.slane %v2580, %v2586
    %v2589 = vunpack.c.l.s4 1966171168
    %v2590 = vunpack.c.0.s8 %v2589
    %v2591 = vlaneseq
    %v2592 = vshrl.u32 %v2591, 7
    %v2593 = vsub.s32 %v2590, %v2592
    %v2594 = vrot.slane %v2587, %v2593
    %s2596 = scalar_lea.vmem [#allocation2], 32
    %2597 = vst.msk [vmem:[%s2596] ss:$8 sm:$0x3] %vm2575, %v2594
    %2598 = vst.msk [vmem:[%s2596] ss:$8 sm:$0x0] %vm2575, %v2594
    %v2599 = vcombine.high %v2570, %v2570
    %s2601 = scalar_lea.vmem [#allocation2], 1
    %2602 = vst.msk [vmem:[%s2601] ss:$8 sm:$0x3] %vm2575, %v2599
    %2603 = vst.msk [vmem:[%s2601] ss:$8 sm:$0x0] %vm2575, %v2599
    %v2604 = vcombine.high %v2594, %v2594
    %s2606 = scalar_lea.vmem [#allocation2], 33
    %2607 = vst.msk [vmem:[%s2606] ss:$8 sm:$0x3] %vm2575, %v2604
    %2608 = vst.msk [vmem:[%s2606] ss:$8 sm:$0x0] %vm2575, %v2604
    %v2609 = vcombine.high %v2550, %v2551
    %v2611 = vunpack.c.l.s4 1966171168
    %v2612 = vunpack.c.0.s8 %v2611
    %v2613 = vlaneseq
    %v2614 = vshrl.u32 %v2613, 7
    %v2615 = vsub.s32 %v2612, %v2614
    %v2616 = vrot.slane %v2609, %v2615
    %v2618 = vunpack.c.l.s4 1966171168
    %v2619 = vunpack.c.0.s8 %v2618
    %v2620 = vlaneseq
    %v2621 = vshrl.u32 %v2620, 7
    %v2622 = vsub.s32 %v2619, %v2621
    %v2623 = vrot.slane %v2616, %v2622
    %s2625 = scalar_lea.vmem [#allocation2], 2
    %2626 = vst.msk [vmem:[%s2625] ss:$8 sm:$0x3] %vm2575, %v2623
    %2627 = vst.msk [vmem:[%s2625] ss:$8 sm:$0x0] %vm2575, %v2623
    %v2628 = vcombine.high %v2552, %v2553
    %v2630 = vunpack.c.l.s4 1966171168
    %v2631 = vunpack.c.0.s8 %v2630
    %v2632 = vlaneseq
    %v2633 = vshrl.u32 %v2632, 7
    %v2634 = vsub.s32 %v2631, %v2633
    %v2635 = vrot.slane %v2628, %v2634
    %v2637 = vunpack.c.l.s4 1966171168
    %v2638 = vunpack.c.0.s8 %v2637
    %v2639 = vlaneseq
    %v2640 = vshrl.u32 %v2639, 7
    %v2641 = vsub.s32 %v2638, %v2640
    %v2642 = vrot.slane %v2635, %v2641
    %s2644 = scalar_lea.vmem [#allocation2], 34
    %2645 = vst.msk [vmem:[%s2644] ss:$8 sm:$0x3] %vm2575, %v2642
    %2646 = vst.msk [vmem:[%s2644] ss:$8 sm:$0x0] %vm2575, %v2642
    %v2647 = vcombine.high %v2623, %v2623
    %s2649 = scalar_lea.vmem [#allocation2], 3
    %2650 = vst.msk [vmem:[%s2649] ss:$8 sm:$0x3] %vm2575, %v2647
    %2651 = vst.msk [vmem:[%s2649] ss:$8 sm:$0x0] %vm2575, %v2647
    %v2652 = vcombine.high %v2642, %v2642
    %s2654 = scalar_lea.vmem [#allocation2], 35
    %2655 = vst.msk [vmem:[%s2654] ss:$8 sm:$0x3] %vm2575, %v2652
    %2656 = vst.msk [vmem:[%s2654] ss:$8 sm:$0x0] %vm2575, %v2652
    %v2657 = vmax.f32 %v2506, %v2508
    %v2658 = vmax.f32 %v2507, %v2509
    %v2659 = vmax.f32 %v2522, %v2524
    %v2660 = vmax.f32 %v2523, %v2525
    %v2665 = vrot.slane %v2657, 1
    %v2666 = vrot.slane %v2658, 1
    %v2667 = vrot.slane %v2659, 1
    %v2668 = vrot.slane %v2660, 1
    %v2673 = vmax.f32 %v2657, %v2665
    %v2674 = vmax.f32 %v2658, %v2666
    %v2675 = vmax.f32 %v2659, %v2667
    %v2676 = vmax.f32 %v2660, %v2668
    %v2679 = vcombine.low %v2673, %v2674
    %v2681 = vunpack.c.l.s4 1966171168
    %v2682 = vunpack.c.0.s8 %v2681
    %v2683 = vlaneseq
    %v2684 = vshrl.u32 %v2683, 7
    %v2685 = vsub.s32 %v2682, %v2684
    %v2686 = vrot.slane %v2679, %v2685
    %v2688 = vunpack.c.l.s4 1966171168
    %v2689 = vunpack.c.0.s8 %v2688
    %v2690 = vlaneseq
    %v2691 = vshrl.u32 %v2690, 7
    %v2692 = vsub.s32 %v2689, %v2691
    %v2693 = vrot.slane %v2686, %v2692
    %s2695 = scalar_lea.vmem [#allocation2], 4
    %2696 = vst.msk [vmem:[%s2695] ss:$8 sm:$0x3] %vm2575, %v2693
    %2697 = vst.msk [vmem:[%s2695] ss:$8 sm:$0x0] %vm2575, %v2693
    %v2700 = vcombine.low %v2675, %v2676
    %v2702 = vunpack.c.l.s4 1966171168
    %v2703 = vunpack.c.0.s8 %v2702
    %v2704 = vlaneseq
    %v2705 = vshrl.u32 %v2704, 7
    %v2706 = vsub.s32 %v2703, %v2705
    %v2707 = vrot.slane %v2700, %v2706
    %v2709 = vunpack.c.l.s4 1966171168
    %v2710 = vunpack.c.0.s8 %v2709
    %v2711 = vlaneseq
    %v2712 = vshrl.u32 %v2711, 7
    %v2713 = vsub.s32 %v2710, %v2712
    %v2714 = vrot.slane %v2707, %v2713
    %s2716 = scalar_lea.vmem [#allocation2], 36
    %2717 = vst.msk [vmem:[%s2716] ss:$8 sm:$0x3] %vm2575, %v2714
    %2718 = vst.msk [vmem:[%s2716] ss:$8 sm:$0x0] %vm2575, %v2714
    %v2719 = vcombine.high %v2693, %v2693
    %s2721 = scalar_lea.vmem [#allocation2], 5
    %2722 = vst.msk [vmem:[%s2721] ss:$8 sm:$0x3] %vm2575, %v2719
    %2723 = vst.msk [vmem:[%s2721] ss:$8 sm:$0x0] %vm2575, %v2719
    %v2724 = vcombine.high %v2714, %v2714
    %s2726 = scalar_lea.vmem [#allocation2], 37
    %2727 = vst.msk [vmem:[%s2726] ss:$8 sm:$0x3] %vm2575, %v2724
    %2728 = vst.msk [vmem:[%s2726] ss:$8 sm:$0x0] %vm2575, %v2724
    %v2729 = vcombine.high %v2673, %v2674
    %v2731 = vunpack.c.l.s4 1966171168
    %v2732 = vunpack.c.0.s8 %v2731
    %v2733 = vlaneseq
    %v2734 = vshrl.u32 %v2733, 7
    %v2735 = vsub.s32 %v2732, %v2734
    %v2736 = vrot.slane %v2729, %v2735
    %v2738 = vunpack.c.l.s4 1966171168
    %v2739 = vunpack.c.0.s8 %v2738
    %v2740 = vlaneseq
    %v2741 = vshrl.u32 %v2740, 7
    %v2742 = vsub.s32 %v2739, %v2741
    %v2743 = vrot.slane %v2736, %v2742
    %s2745 = scalar_lea.vmem [#allocation2], 6
    %2746 = vst.msk [vmem:[%s2745] ss:$8 sm:$0x3] %vm2575, %v2743
    %2747 = vst.msk [vmem:[%s2745] ss:$8 sm:$0x0] %vm2575, %v2743
    %v2748 = vcombine.high %v2675, %v2676
    %v2750 = vunpack.c.l.s4 1966171168
    %v2751 = vunpack.c.0.s8 %v2750
    %v2752 = vlaneseq
    %v2753 = vshrl.u32 %v2752, 7
    %v2754 = vsub.s32 %v2751, %v2753
    %v2755 = vrot.slane %v2748, %v2754
    %v2757 = vunpack.c.l.s4 1966171168
    %v2758 = vunpack.c.0.s8 %v2757
    %v2759 = vlaneseq
    %v2760 = vshrl.u32 %v2759, 7
    %v2761 = vsub.s32 %v2758, %v2760
    %v2762 = vrot.slane %v2755, %v2761
    %s2764 = scalar_lea.vmem [#allocation2], 38
    %2765 = vst.msk [vmem:[%s2764] ss:$8 sm:$0x3] %vm2575, %v2762
    %2766 = vst.msk [vmem:[%s2764] ss:$8 sm:$0x0] %vm2575, %v2762
    %v2767 = vcombine.high %v2743, %v2743
    %s2769 = scalar_lea.vmem [#allocation2], 7
    %2770 = vst.msk [vmem:[%s2769] ss:$8 sm:$0x3] %vm2575, %v2767
    %2771 = vst.msk [vmem:[%s2769] ss:$8 sm:$0x0] %vm2575, %v2767
    %v2772 = vcombine.high %v2762, %v2762
    %s2774 = scalar_lea.vmem [#allocation2], 39
    %2775 = vst.msk [vmem:[%s2774] ss:$8 sm:$0x3] %vm2575, %v2772
    %2776 = vst.msk [vmem:[%s2774] ss:$8 sm:$0x0] %vm2575, %v2772
    %v2777 = vmax.f32 %v2510, %v2512
    %v2778 = vmax.f32 %v2511, %v2513
    %v2779 = vmax.f32 %v2526, %v2528
    %v2780 = vmax.f32 %v2527, %v2529
    %v2785 = vrot.slane %v2777, 1
    %v2786 = vrot.slane %v2778, 1
    %v2787 = vrot.slane %v2779, 1
    %v2788 = vrot.slane %v2780, 1
    %v2793 = vmax.f32 %v2777, %v2785
    %v2794 = vmax.f32 %v2778, %v2786
    %v2795 = vmax.f32 %v2779, %v2787
    %v2796 = vmax.f32 %v2780, %v2788
    %v2799 = vcombine.low %v2793, %v2794
    %v2801 = vunpack.c.l.s4 1966171168
    %v2802 = vunpack.c.0.s8 %v2801
    %v2803 = vlaneseq
    %v2804 = vshrl.u32 %v2803, 7
    %v2805 = vsub.s32 %v2802, %v2804
    %v2806 = vrot.slane %v2799, %v2805
    %v2808 = vunpack.c.l.s4 1966171168
    %v2809 = vunpack.c.0.s8 %v2808
    %v2810 = vlaneseq
    %v2811 = vshrl.u32 %v2810, 7
    %v2812 = vsub.s32 %v2809, %v2811
    %v2813 = vrot.slane %v2806, %v2812
    %s2815 = scalar_lea.vmem [#allocation2], 16
    %2816 = vst.msk [vmem:[%s2815] ss:$8 sm:$0x3] %vm2575, %v2813
    %2817 = vst.msk [vmem:[%s2815] ss:$8 sm:$0x0] %vm2575, %v2813
    %v2820 = vcombine.low %v2795, %v2796
    %v2822 = vunpack.c.l.s4 1966171168
    %v2823 = vunpack.c.0.s8 %v2822
    %v2824 = vlaneseq
    %v2825 = vshrl.u32 %v2824, 7
    %v2826 = vsub.s32 %v2823, %v2825
    %v2827 = vrot.slane %v2820, %v2826
    %v2829 = vunpack.c.l.s4 1966171168
    %v2830 = vunpack.c.0.s8 %v2829
    %v2831 = vlaneseq
    %v2832 = vshrl.u32 %v2831, 7
    %v2833 = vsub.s32 %v2830, %v2832
    %v2834 = vrot.slane %v2827, %v2833
    %s2836 = scalar_lea.vmem [#allocation2], 48
    %2837 = vst.msk [vmem:[%s2836] ss:$8 sm:$0x3] %vm2575, %v2834
    %2838 = vst.msk [vmem:[%s2836] ss:$8 sm:$0x0] %vm2575, %v2834
    %v2839 = vcombine.high %v2813, %v2813
    %s2841 = scalar_lea.vmem [#allocation2], 17
    %2842 = vst.msk [vmem:[%s2841] ss:$8 sm:$0x3] %vm2575, %v2839
    %2843 = vst.msk [vmem:[%s2841] ss:$8 sm:$0x0] %vm2575, %v2839
    %v2844 = vcombine.high %v2834, %v2834
    %s2846 = scalar_lea.vmem [#allocation2], 49
    %2847 = vst.msk [vmem:[%s2846] ss:$8 sm:$0x3] %vm2575, %v2844
    %2848 = vst.msk [vmem:[%s2846] ss:$8 sm:$0x0] %vm2575, %v2844
    %v2849 = vcombine.high %v2793, %v2794
    %v2851 = vunpack.c.l.s4 1966171168
    %v2852 = vunpack.c.0.s8 %v2851
    %v2853 = vlaneseq
    %v2854 = vshrl.u32 %v2853, 7
    %v2855 = vsub.s32 %v2852, %v2854
    %v2856 = vrot.slane %v2849, %v2855
    %v2858 = vunpack.c.l.s4 1966171168
    %v2859 = vunpack.c.0.s8 %v2858
    %v2860 = vlaneseq
    %v2861 = vshrl.u32 %v2860, 7
    %v2862 = vsub.s32 %v2859, %v2861
    %v2863 = vrot.slane %v2856, %v2862
    %s2865 = scalar_lea.vmem [#allocation2], 18
    %2866 = vst.msk [vmem:[%s2865] ss:$8 sm:$0x3] %vm2575, %v2863
    %2867 = vst.msk [vmem:[%s2865] ss:$8 sm:$0x0] %vm2575, %v2863
    %v2868 = vcombine.high %v2795, %v2796
    %v2870 = vunpack.c.l.s4 1966171168
    %v2871 = vunpack.c.0.s8 %v2870
    %v2872 = vlaneseq
    %v2873 = vshrl.u32 %v2872, 7
    %v2874 = vsub.s32 %v2871, %v2873
    %v2875 = vrot.slane %v2868, %v2874
    %v2877 = vunpack.c.l.s4 1966171168
    %v2878 = vunpack.c.0.s8 %v2877
    %v2879 = vlaneseq
    %v2880 = vshrl.u32 %v2879, 7
    %v2881 = vsub.s32 %v2878, %v2880
    %v2882 = vrot.slane %v2875, %v2881
    %s2884 = scalar_lea.vmem [#allocation2], 50
    %2885 = vst.msk [vmem:[%s2884] ss:$8 sm:$0x3] %vm2575, %v2882
    %2886 = vst.msk [vmem:[%s2884] ss:$8 sm:$0x0] %vm2575, %v2882
    %v2887 = vcombine.high %v2863, %v2863
    %s2889 = scalar_lea.vmem [#allocation2], 19
    %2890 = vst.msk [vmem:[%s2889] ss:$8 sm:$0x3] %vm2575, %v2887
    %2891 = vst.msk [vmem:[%s2889] ss:$8 sm:$0x0] %vm2575, %v2887
    %v2892 = vcombine.high %v2882, %v2882
    %s2894 = scalar_lea.vmem [#allocation2], 51
    %2895 = vst.msk [vmem:[%s2894] ss:$8 sm:$0x3] %vm2575, %v2892
    %2896 = vst.msk [vmem:[%s2894] ss:$8 sm:$0x0] %vm2575, %v2892
    %v2897 = vmax.f32 %v2514, %v2516
    %v2898 = vmax.f32 %v2515, %v2517
    %v2899 = vmax.f32 %v2530, %v2532
    %v2900 = vmax.f32 %v2531, %v2533
    %v2905 = vrot.slane %v2897, 1
    %v2906 = vrot.slane %v2898, 1
    %v2907 = vrot.slane %v2899, 1
    %v2908 = vrot.slane %v2900, 1
    %v2913 = vmax.f32 %v2897, %v2905
    %v2914 = vmax.f32 %v2898, %v2906
    %v2915 = vmax.f32 %v2899, %v2907
    %v2916 = vmax.f32 %v2900, %v2908
    %v2919 = vcombine.low %v2913, %v2914
    %v2921 = vunpack.c.l.s4 1966171168
    %v2922 = vunpack.c.0.s8 %v2921
    %v2923 = vlaneseq
    %v2924 = vshrl.u32 %v2923, 7
    %v2925 = vsub.s32 %v2922, %v2924
    %v2926 = vrot.slane %v2919, %v2925
    %v2928 = vunpack.c.l.s4 1966171168
    %v2929 = vunpack.c.0.s8 %v2928
    %v2930 = vlaneseq
    %v2931 = vshrl.u32 %v2930, 7
    %v2932 = vsub.s32 %v2929, %v2931
    %v2933 = vrot.slane %v2926, %v2932
    %s2935 = scalar_lea.vmem [#allocation2], 20
    %2936 = vst.msk [vmem:[%s2935] ss:$8 sm:$0x3] %vm2575, %v2933
    %2937 = vst.msk [vmem:[%s2935] ss:$8 sm:$0x0] %vm2575, %v2933
    %v2940 = vcombine.low %v2915, %v2916
    %v2942 = vunpack.c.l.s4 1966171168
    %v2943 = vunpack.c.0.s8 %v2942
    %v2944 = vlaneseq
    %v2945 = vshrl.u32 %v2944, 7
    %v2946 = vsub.s32 %v2943, %v2945
    %v2947 = vrot.slane %v2940, %v2946
    %v2949 = vunpack.c.l.s4 1966171168
    %v2950 = vunpack.c.0.s8 %v2949
    %v2951 = vlaneseq
    %v2952 = vshrl.u32 %v2951, 7
    %v2953 = vsub.s32 %v2950, %v2952
    %v2954 = vrot.slane %v2947, %v2953
    %s2956 = scalar_lea.vmem [#allocation2], 52
    %2957 = vst.msk [vmem:[%s2956] ss:$8 sm:$0x3] %vm2575, %v2954
    %2958 = vst.msk [vmem:[%s2956] ss:$8 sm:$0x0] %vm2575, %v2954
    %v2959 = vcombine.high %v2933, %v2933
    %s2961 = scalar_lea.vmem [#allocation2], 21
    %2962 = vst.msk [vmem:[%s2961] ss:$8 sm:$0x3] %vm2575, %v2959
    %2963 = vst.msk [vmem:[%s2961] ss:$8 sm:$0x0] %vm2575, %v2959
    %v2964 = vcombine.high %v2954, %v2954
    %s2966 = scalar_lea.vmem [#allocation2], 53
    %2967 = vst.msk [vmem:[%s2966] ss:$8 sm:$0x3] %vm2575, %v2964
    %2968 = vst.msk [vmem:[%s2966] ss:$8 sm:$0x0] %vm2575, %v2964
    %v2969 = vcombine.high %v2913, %v2914
    %v2971 = vunpack.c.l.s4 1966171168
    %v2972 = vunpack.c.0.s8 %v2971
    %v2973 = vlaneseq
    %v2974 = vshrl.u32 %v2973, 7
    %v2975 = vsub.s32 %v2972, %v2974
    %v2976 = vrot.slane %v2969, %v2975
    %v2978 = vunpack.c.l.s4 1966171168
    %v2979 = vunpack.c.0.s8 %v2978
    %v2980 = vlaneseq
    %v2981 = vshrl.u32 %v2980, 7
    %v2982 = vsub.s32 %v2979, %v2981
    %v2983 = vrot.slane %v2976, %v2982
    %s2985 = scalar_lea.vmem [#allocation2], 22
    %2986 = vst.msk [vmem:[%s2985] ss:$8 sm:$0x3] %vm2575, %v2983
    %2987 = vst.msk [vmem:[%s2985] ss:$8 sm:$0x0] %vm2575, %v2983
    %v2988 = vcombine.high %v2915, %v2916
    %v2990 = vunpack.c.l.s4 1966171168
    %v2991 = vunpack.c.0.s8 %v2990
    %v2992 = vlaneseq
    %v2993 = vshrl.u32 %v2992, 7
    %v2994 = vsub.s32 %v2991, %v2993
    %v2995 = vrot.slane %v2988, %v2994
    %v2997 = vunpack.c.l.s4 1966171168
    %v2998 = vunpack.c.0.s8 %v2997
    %v2999 = vlaneseq
    %v3000 = vshrl.u32 %v2999, 7
    %v3001 = vsub.s32 %v2998, %v3000
    %v3002 = vrot.slane %v2995, %v3001
    %s3004 = scalar_lea.vmem [#allocation2], 54
    %3005 = vst.msk [vmem:[%s3004] ss:$8 sm:$0x3] %vm2575, %v3002
    %3006 = vst.msk [vmem:[%s3004] ss:$8 sm:$0x0] %vm2575, %v3002
    %v3007 = vcombine.high %v2983, %v2983
    %s3009 = scalar_lea.vmem [#allocation2], 23
    %3010 = vst.msk [vmem:[%s3009] ss:$8 sm:$0x3] %vm2575, %v3007
    %3011 = vst.msk [vmem:[%s3009] ss:$8 sm:$0x0] %vm2575, %v3007
    %v3012 = vcombine.high %v3002, %v3002
    %s3014 = scalar_lea.vmem [#allocation2], 55
    %3015 = vst.msk [vmem:[%s3014] ss:$8 sm:$0x3] %vm2575, %v3012
    %3016 = vst.msk [vmem:[%s3014] ss:$8 sm:$0x0] %vm2575, %v3012
    %v3017 = vld [vmem:[#allocation2] sm:$0x3]
    %v3018 = vld [vmem:[#allocation2 + $0x8] sm:$0x3]
    %3019 = vst [vmem:[#allocation3] sm:$0x3] %v3017
    %3020 = vst [vmem:[#allocation3 + $0x8] sm:$0x3] %v3018
    %v3021 = vld [vmem:[#allocation2] sm:$0x30]
    %v3022 = vld [vmem:[#allocation2 + $0x8] sm:$0x30]
    %v3025 = vrot.slane %v3021, 2
    %v3026 = vrot.slane %v3022, 2
    %3029 = vst [vmem:[#allocation3] sm:$0xc] %v3025
    %3030 = vst [vmem:[#allocation3 + $0x8] sm:$0xc] %v3026
    %v3031 = vld [vmem:[#allocation2 + $0x20] sm:$0x3]
    %v3032 = vld [vmem:[#allocation2 + $0x28] sm:$0x3]
    %v3035 = vrot.slane %v3031, 4
    %v3036 = vrot.slane %v3032, 4
    %3039 = vst [vmem:[#allocation3] sm:$0x30] %v3035
    %3040 = vst [vmem:[#allocation3 + $0x8] sm:$0x30] %v3036
    %v3041 = vld [vmem:[#allocation2 + $0x20] sm:$0x30]
    %v3042 = vld [vmem:[#allocation2 + $0x28] sm:$0x30]
    %v3045 = vrot.slane %v3041, 6
    %v3046 = vrot.slane %v3042, 6
    %3049 = vst [vmem:[#allocation3] sm:$0xc0] %v3045
    %3050 = vst [vmem:[#allocation3 + $0x8] sm:$0xc0] %v3046
    %v3051 = vld [vmem:[#allocation2] sm:$0x6]
    %v3052 = vld [vmem:[#allocation2 + $0x8] sm:$0x6]
    %v3055 = vrot.slane %v3051, 1
    %v3056 = vrot.slane %v3052, 1
    %3059 = vst [vmem:[#allocation3 + $0x10] sm:$0x3] %v3055
    %3060 = vst [vmem:[#allocation3 + $0x18] sm:$0x3] %v3056
    %v3061 = vld [vmem:[#allocation2] sm:$0x60]
    %v3062 = vld [vmem:[#allocation2 + $0x8] sm:$0x60]
    %v3065 = vrot.slane %v3061, 3
    %v3066 = vrot.slane %v3062, 3
    %3069 = vst [vmem:[#allocation3 + $0x10] sm:$0xc] %v3065
    %3070 = vst [vmem:[#allocation3 + $0x18] sm:$0xc] %v3066
    %v3071 = vld [vmem:[#allocation2 + $0x20] sm:$0x6]
    %v3072 = vld [vmem:[#allocation2 + $0x28] sm:$0x6]
    %v3075 = vrot.slane %v3071, 5
    %v3076 = vrot.slane %v3072, 5
    %3079 = vst [vmem:[#allocation3 + $0x10] sm:$0x30] %v3075
    %3080 = vst [vmem:[#allocation3 + $0x18] sm:$0x30] %v3076
    %v3081 = vld [vmem:[#allocation2 + $0x20] sm:$0x60]
    %v3082 = vld [vmem:[#allocation2 + $0x28] sm:$0x60]
    %v3085 = vrot.slane %v3081, 7
    %v3086 = vrot.slane %v3082, 7
    %3089 = vst [vmem:[#allocation3 + $0x10] sm:$0xc0] %v3085
    %3090 = vst [vmem:[#allocation3 + $0x18] sm:$0xc0] %v3086
    %v3091 = vld [vmem:[#allocation2] sm:$0xc]
    %v3092 = vld [vmem:[#allocation2 + $0x8] sm:$0xc]
    %v3095 = vrot.slane %v3091, 2
    %v3096 = vrot.slane %v3092, 2
    %3099 = vst [vmem:[#allocation3 + $0x20] sm:$0x3] %v3095
    %3100 = vst [vmem:[#allocation3 + $0x28] sm:$0x3] %v3096
    %v3101 = vld [vmem:[#allocation2] sm:$0xc0]
    %v3102 = vld [vmem:[#allocation2 + $0x8] sm:$0xc0]
    %v3105 = vrot.slane %v3101, 4
    %v3106 = vrot.slane %v3102, 4
    %3109 = vst [vmem:[#allocation3 + $0x20] sm:$0xc] %v3105
    %3110 = vst [vmem:[#allocation3 + $0x28] sm:$0xc] %v3106
    %v3111 = vld [vmem:[#allocation2 + $0x20] sm:$0xc]
    %v3112 = vld [vmem:[#allocation2 + $0x28] sm:$0xc]
    %v3115 = vrot.slane %v3111, 6
    %v3116 = vrot.slane %v3112, 6
    %3119 = vst [vmem:[#allocation3 + $0x20] sm:$0x30] %v3115
    %3120 = vst [vmem:[#allocation3 + $0x28] sm:$0x30] %v3116
    %v3121 = vld [vmem:[#allocation2 + $0x20] sm:$0xc0]
    %v3122 = vld [vmem:[#allocation2 + $0x28] sm:$0xc0]
    %3123 = vst [vmem:[#allocation3 + $0x20] sm:$0xc0] %v3121
    %3124 = vst [vmem:[#allocation3 + $0x28] sm:$0xc0] %v3122
    %v3125 = vld [vmem:[#allocation2] sm:$0x30]
    %v3126 = vld [vmem:[#allocation2 + $0x8] sm:$0x30]
    %v3129 = vrot.slane %v3125, 4
    %v3130 = vrot.slane %v3126, 4
    %3133 = vst [vmem:[#allocation3 + $0x30] sm:$0x3] %v3129
    %3134 = vst [vmem:[#allocation3 + $0x38] sm:$0x3] %v3130
    %v3135 = vld [vmem:[#allocation2 + $0x10] sm:$0x3]
    %v3136 = vld [vmem:[#allocation2 + $0x18] sm:$0x3]
    %v3139 = vrot.slane %v3135, 6
    %v3140 = vrot.slane %v3136, 6
    %3143 = vst [vmem:[#allocation3 + $0x30] sm:$0xc] %v3139
    %3144 = vst [vmem:[#allocation3 + $0x38] sm:$0xc] %v3140
    %v3145 = vld [vmem:[#allocation2 + $0x20] sm:$0x30]
    %v3146 = vld [vmem:[#allocation2 + $0x28] sm:$0x30]
    %3147 = vst [vmem:[#allocation3 + $0x30] sm:$0x30] %v3145
    %3148 = vst [vmem:[#allocation3 + $0x38] sm:$0x30] %v3146
    %v3149 = vld [vmem:[#allocation2 + $0x30] sm:$0x3]
    %v3150 = vld [vmem:[#allocation2 + $0x38] sm:$0x3]
    %v3153 = vrot.slane %v3149, 2
    %v3154 = vrot.slane %v3150, 2
    %3157 = vst [vmem:[#allocation3 + $0x30] sm:$0xc0] %v3153
    %3158 = vst [vmem:[#allocation3 + $0x38] sm:$0xc0] %v3154
    %v3159 = vld [vmem:[#allocation2] sm:$0x60]
    %v3160 = vld [vmem:[#allocation2 + $0x8] sm:$0x60]
    %v3163 = vrot.slane %v3159, 5
    %v3164 = vrot.slane %v3160, 5
    %3167 = vst [vmem:[#allocation3 + $0x40] sm:$0x3] %v3163
    %3168 = vst [vmem:[#allocation3 + $0x48] sm:$0x3] %v3164
    %v3169 = vld [vmem:[#allocation2 + $0x10] sm:$0x6]
    %v3170 = vld [vmem:[#allocation2 + $0x18] sm:$0x6]
    %v3173 = vrot.slane %v3169, 7
    %v3174 = vrot.slane %v3170, 7
    %3177 = vst [vmem:[#allocation3 + $0x40] sm:$0xc] %v3173
    %3178 = vst [vmem:[#allocation3 + $0x48] sm:$0xc] %v3174
    %v3179 = vld [vmem:[#allocation2 + $0x20] sm:$0x60]
    %v3180 = vld [vmem:[#allocation2 + $0x28] sm:$0x60]
    %v3183 = vrot.slane %v3179, 1
    %v3184 = vrot.slane %v3180, 1
    %3187 = vst [vmem:[#allocation3 + $0x40] sm:$0x30] %v3183
    %3188 = vst [vmem:[#allocation3 + $0x48] sm:$0x30] %v3184
    %v3189 = vld [vmem:[#allocation2 + $0x30] sm:$0x6]
    %v3190 = vld [vmem:[#allocation2 + $0x38] sm:$0x6]
    %v3193 = vrot.slane %v3189, 3
    %v3194 = vrot.slane %v3190, 3
    %3197 = vst [vmem:[#allocation3 + $0x40] sm:$0xc0] %v3193
    %3198 = vst [vmem:[#allocation3 + $0x48] sm:$0xc0] %v3194
    %v3199 = vld [vmem:[#allocation2] sm:$0xc0]
    %v3200 = vld [vmem:[#allocation2 + $0x8] sm:$0xc0]
    %v3203 = vrot.slane %v3199, 6
    %v3204 = vrot.slane %v3200, 6
    %3207 = vst [vmem:[#allocation3 + $0x50] sm:$0x3] %v3203
    %3208 = vst [vmem:[#allocation3 + $0x58] sm:$0x3] %v3204
    %v3209 = vld [vmem:[#allocation2 + $0x10] sm:$0xc]
    %v3210 = vld [vmem:[#allocation2 + $0x18] sm:$0xc]
    %3211 = vst [vmem:[#allocation3 + $0x50] sm:$0xc] %v3209
    %3212 = vst [vmem:[#allocation3 + $0x58] sm:$0xc] %v3210
    %v3213 = vld [vmem:[#allocation2 + $0x20] sm:$0xc0]
    %v3214 = vld [vmem:[#allocation2 + $0x28] sm:$0xc0]
    %v3217 = vrot.slane %v3213, 2
    %v3218 = vrot.slane %v3214, 2
    %3221 = vst [vmem:[#allocation3 + $0x50] sm:$0x30] %v3217
    %3222 = vst [vmem:[#allocation3 + $0x58] sm:$0x30] %v3218
    %v3223 = vld [vmem:[#allocation2 + $0x30] sm:$0xc]
    %v3224 = vld [vmem:[#allocation2 + $0x38] sm:$0xc]
    %v3227 = vrot.slane %v3223, 4
    %v3228 = vrot.slane %v3224, 4
    %3231 = vst [vmem:[#allocation3 + $0x50] sm:$0xc0] %v3227
    %3232 = vst [vmem:[#allocation3 + $0x58] sm:$0xc0] %v3228
    %v3233 = vld [vmem:[#allocation2 + $0x10] sm:$0x3]
    %v3234 = vld [vmem:[#allocation2 + $0x18] sm:$0x3]
    %3235 = vst [vmem:[#allocation3 + $0x60] sm:$0x3] %v3233
    %3236 = vst [vmem:[#allocation3 + $0x68] sm:$0x3] %v3234
    %v3237 = vld [vmem:[#allocation2 + $0x10] sm:$0x30]
    %v3238 = vld [vmem:[#allocation2 + $0x18] sm:$0x30]
    %v3241 = vrot.slane %v3237, 2
    %v3242 = vrot.slane %v3238, 2
    %3245 = vst [vmem:[#allocation3 + $0x60] sm:$0xc] %v3241
    %3246 = vst [vmem:[#allocation3 + $0x68] sm:$0xc] %v3242
    %v3247 = vld [vmem:[#allocation2 + $0x30] sm:$0x3]
    %v3248 = vld [vmem:[#allocation2 + $0x38] sm:$0x3]
    %v3251 = vrot.slane %v3247, 4
    %v3252 = vrot.slane %v3248, 4
    %3255 = vst [vmem:[#allocation3 + $0x60] sm:$0x30] %v3251
    %3256 = vst [vmem:[#allocation3 + $0x68] sm:$0x30] %v3252
    %v3257 = vld [vmem:[#allocation2 + $0x30] sm:$0x30]
    %v3258 = vld [vmem:[#allocation2 + $0x38] sm:$0x30]
    %v3261 = vrot.slane %v3257, 6
    %v3262 = vrot.slane %v3258, 6
    %3265 = vst [vmem:[#allocation3 + $0x60] sm:$0xc0] %v3261
    %3266 = vst [vmem:[#allocation3 + $0x68] sm:$0xc0] %v3262
    %v3267 = vld [vmem:[#allocation2 + $0x10] sm:$0x6]
    %v3268 = vld [vmem:[#allocation2 + $0x18] sm:$0x6]
    %v3271 = vrot.slane %v3267, 1
    %v3272 = vrot.slane %v3268, 1
    %3275 = vst [vmem:[#allocation3 + $0x70] sm:$0x3] %v3271
    %3276 = vst [vmem:[#allocation3 + $0x78] sm:$0x3] %v3272
    %v3277 = vld [vmem:[#allocation2 + $0x10] sm:$0x60]
    %v3278 = vld [vmem:[#allocation2 + $0x18] sm:$0x60]
    %v3281 = vrot.slane %v3277, 3
    %v3282 = vrot.slane %v3278, 3
    %3285 = vst [vmem:[#allocation3 + $0x70] sm:$0xc] %v3281
    %3286 = vst [vmem:[#allocation3 + $0x78] sm:$0xc] %v3282
    %v3287 = vld [vmem:[#allocation2 + $0x30] sm:$0x6]
    %v3288 = vld [vmem:[#allocation2 + $0x38] sm:$0x6]
    %v3291 = vrot.slane %v3287, 5
    %v3292 = vrot.slane %v3288, 5
    %3295 = vst [vmem:[#allocation3 + $0x70] sm:$0x30] %v3291
    %3296 = vst [vmem:[#allocation3 + $0x78] sm:$0x30] %v3292
    %v3297 = vld [vmem:[#allocation2 + $0x30] sm:$0x60]
    %v3298 = vld [vmem:[#allocation2 + $0x38] sm:$0x60]
    %v3301 = vrot.slane %v3297, 7
    %v3302 = vrot.slane %v3298, 7
    %3305 = vst [vmem:[#allocation3 + $0x70] sm:$0xc0] %v3301
    %3306 = vst [vmem:[#allocation3 + $0x78] sm:$0xc0] %v3302
    %v3307 = vld [vmem:[#allocation2 + $0x10] sm:$0xc]
    %v3308 = vld [vmem:[#allocation2 + $0x18] sm:$0xc]
    %v3311 = vrot.slane %v3307, 2
    %v3312 = vrot.slane %v3308, 2
    %3315 = vst [vmem:[#allocation3 + $0x80] sm:$0x3] %v3311
    %3316 = vst [vmem:[#allocation3 + $0x88] sm:$0x3] %v3312
    %v3317 = vld [vmem:[#allocation2 + $0x10] sm:$0xc0]
    %v3318 = vld [vmem:[#allocation2 + $0x18] sm:$0xc0]
    %v3321 = vrot.slane %v3317, 4
    %v3322 = vrot.slane %v3318, 4
    %3325 = vst [vmem:[#allocation3 + $0x80] sm:$0xc] %v3321
    %3326 = vst [vmem:[#allocation3 + $0x88] sm:$0xc] %v3322
    %v3327 = vld [vmem:[#allocation2 + $0x30] sm:$0xc]
    %v3328 = vld [vmem:[#allocation2 + $0x38] sm:$0xc]
    %v3331 = vrot.slane %v3327, 6
    %v3332 = vrot.slane %v3328, 6
    %3335 = vst [vmem:[#allocation3 + $0x80] sm:$0x30] %v3331
    %3336 = vst [vmem:[#allocation3 + $0x88] sm:$0x30] %v3332
    %v3337 = vld [vmem:[#allocation2 + $0x30] sm:$0xc0]
    %v3338 = vld [vmem:[#allocation2 + $0x38] sm:$0xc0]
    %3339 = vst [vmem:[#allocation3 + $0x80] sm:$0xc0] %v3337
    %3340 = vst [vmem:[#allocation3 + $0x88] sm:$0xc0] %v3338
    %v3341 = vld [vmem:[#allocation3] sm:$0xff]
    %v3342 = vld [vmem:[#allocation3 + $0x8] sm:$0xff]
    %v3343 = vld [vmem:[#allocation3 + $0x10] sm:$0xff]
    %v3344 = vld [vmem:[#allocation3 + $0x18] sm:$0xff]
    %v3345 = vld [vmem:[#allocation3 + $0x20] sm:$0xff]
    %v3346 = vld [vmem:[#allocation3 + $0x28] sm:$0xff]
    %v3347 = vld [vmem:[#allocation3 + $0x30] sm:$0xff]
    %v3348 = vld [vmem:[#allocation3 + $0x38] sm:$0xff]
    %v3349 = vld [vmem:[#allocation3 + $0x40] sm:$0xff]
    %v3350 = vld [vmem:[#allocation3 + $0x48] sm:$0xff]
    %v3351 = vld [vmem:[#allocation3 + $0x50] sm:$0xff]
    %v3352 = vld [vmem:[#allocation3 + $0x58] sm:$0xff]
    %v3353 = vld [vmem:[#allocation3 + $0x60] sm:$0xff]
    %v3354 = vld [vmem:[#allocation3 + $0x68] sm:$0xff]
    %v3355 = vld [vmem:[#allocation3 + $0x70] sm:$0xff]
    %v3356 = vld [vmem:[#allocation3 + $0x78] sm:$0xff]
    %v3357 = vld [vmem:[#allocation3 + $0x80] sm:$0xff]
    %v3358 = vld [vmem:[#allocation3 + $0x88] sm:$0xff]
    %v3359 = vpack.c.bf16 %v3341, %v3341
    %v3360 = vpack.c.bf16 %v3342, %v3342
    %v3361 = vpack.c.bf16 %v3343, %v3343
    %v3362 = vpack.c.bf16 %v3344, %v3344
    %v3363 = vpack.c.bf16 %v3345, %v3345
    %v3364 = vpack.c.bf16 %v3346, %v3346
    %v3365 = vpack.c.bf16 %v3347, %v3347
    %v3366 = vpack.c.bf16 %v3348, %v3348
    %v3367 = vpack.c.bf16 %v3349, %v3349
    %v3368 = vpack.c.bf16 %v3350, %v3350
    %v3369 = vpack.c.bf16 %v3351, %v3351
    %v3370 = vpack.c.bf16 %v3352, %v3352
    %v3371 = vpack.c.bf16 %v3353, %v3353
    %v3372 = vpack.c.bf16 %v3354, %v3354
    %v3373 = vpack.c.bf16 %v3355, %v3355
    %v3374 = vpack.c.bf16 %v3356, %v3356
    %v3375 = vpack.c.bf16 %v3357, %v3357
    %v3376 = vpack.c.bf16 %v3358, %v3358
    %v3377 = vld [vmem:[#allocation9] sm:$0xff]
    %v3378 = vld [vmem:[#allocation9 + $0x8] sm:$0xff]
    %v3379 = vld [vmem:[#allocation9 + $0x10] sm:$0xff]
    %v3380 = vld [vmem:[#allocation9 + $0x18] sm:$0xff]
    %v3381 = vld [vmem:[#allocation9 + $0x20] sm:$0xff]
    %v3382 = vld [vmem:[#allocation9 + $0x28] sm:$0xff]
    %v3383 = vld [vmem:[#allocation9 + $0x30] sm:$0xff]
    %v3384 = vld [vmem:[#allocation9 + $0x38] sm:$0xff]
    %v3385 = vld [vmem:[#allocation9 + $0x40] sm:$0xff]
    %v3386 = vld [vmem:[#allocation9 + $0x48] sm:$0xff]
    %v3387 = vld [vmem:[#allocation9 + $0x50] sm:$0xff]
    %v3388 = vld [vmem:[#allocation9 + $0x58] sm:$0xff]
    %v3389 = vld [vmem:[#allocation9 + $0x60] sm:$0xff]
    %v3390 = vld [vmem:[#allocation9 + $0x68] sm:$0xff]
    %v3391 = vld [vmem:[#allocation9 + $0x70] sm:$0xff]
    %v3392 = vld [vmem:[#allocation9 + $0x78] sm:$0xff]
    %v3393 = vld [vmem:[#allocation9 + $0x80] sm:$0xff]
    %v3394 = vld [vmem:[#allocation9 + $0x88] sm:$0xff]
    %v3395 = vld [vmem:[#allocation9 + $0x90] sm:$0xff]
    %v3396 = vld [vmem:[#allocation9 + $0x98] sm:$0xff]
    %v3397 = vld [vmem:[#allocation9 + $0xa0] sm:$0xff]
    %v3398 = vld [vmem:[#allocation9 + $0xa8] sm:$0xff]
    %v3399 = vld [vmem:[#allocation9 + $0xb0] sm:$0xff]
    %v3400 = vld [vmem:[#allocation9 + $0xb8] sm:$0xff]
    %v3401 = vld [vmem:[#allocation9 + $0xc0] sm:$0xff]
    %v3402 = vld [vmem:[#allocation9 + $0xc8] sm:$0xff]
    %v3403 = vld [vmem:[#allocation9 + $0xd0] sm:$0xff]
    %v3404 = vld [vmem:[#allocation9 + $0xd8] sm:$0xff]
    %v3405 = vld [vmem:[#allocation9 + $0xe0] sm:$0xff]
    %v3406 = vld [vmem:[#allocation9 + $0xe8] sm:$0xff]
    %v3407 = vld [vmem:[#allocation9 + $0xf0] sm:$0xff]
    %v3408 = vld [vmem:[#allocation9 + $0xf8] sm:$0xff]
    %v3409 = vld [vmem:[#allocation9 + $0x100] sm:$0xff]
    %v3410 = vld [vmem:[#allocation9 + $0x108] sm:$0xff]
    %v3411 = vld [vmem:[#allocation9 + $0x110] sm:$0xff]
    %v3412 = vld [vmem:[#allocation9 + $0x118] sm:$0xff]
    %v3413 = vld [vmem:[#allocation9 + $0x120] sm:$0xff]
    %v3414 = vld [vmem:[#allocation9 + $0x128] sm:$0xff]
    %v3415 = vld [vmem:[#allocation9 + $0x130] sm:$0xff]
    %v3416 = vld [vmem:[#allocation9 + $0x138] sm:$0xff]
    %v3417 = vld [vmem:[#allocation9 + $0x140] sm:$0xff]
    %v3418 = vld [vmem:[#allocation9 + $0x148] sm:$0xff]
    %v3419 = vld [vmem:[#allocation9 + $0x150] sm:$0xff]
    %v3420 = vld [vmem:[#allocation9 + $0x158] sm:$0xff]
    %v3421 = vld [vmem:[#allocation9 + $0x160] sm:$0xff]
    %v3422 = vld [vmem:[#allocation9 + $0x168] sm:$0xff]
    %v3423 = vld [vmem:[#allocation9 + $0x170] sm:$0xff]
    %v3424 = vld [vmem:[#allocation9 + $0x178] sm:$0xff]
    %v3425 = vld [vmem:[#allocation9 + $0x180] sm:$0xff]
    %v3426 = vld [vmem:[#allocation9 + $0x188] sm:$0xff]
    %v3427 = vld [vmem:[#allocation9 + $0x190] sm:$0xff]
    %v3428 = vld [vmem:[#allocation9 + $0x198] sm:$0xff]
    %v3429 = vld [vmem:[#allocation9 + $0x1a0] sm:$0xff]
    %v3430 = vld [vmem:[#allocation9 + $0x1a8] sm:$0xff]
    %v3431 = vld [vmem:[#allocation9 + $0x1b0] sm:$0xff]
    %v3432 = vld [vmem:[#allocation9 + $0x1b8] sm:$0xff]
    %v3433 = vld [vmem:[#allocation9 + $0x1c0] sm:$0xff]
    %v3434 = vld [vmem:[#allocation9 + $0x1c8] sm:$0xff]
    %v3435 = vld [vmem:[#allocation9 + $0x1d0] sm:$0xff]
    %v3436 = vld [vmem:[#allocation9 + $0x1d8] sm:$0xff]
    %v3437 = vld [vmem:[#allocation9 + $0x1e0] sm:$0xff]
    %v3438 = vld [vmem:[#allocation9 + $0x1e8] sm:$0xff]
    %v3439 = vld [vmem:[#allocation9 + $0x1f0] sm:$0xff]
    %v3440 = vld [vmem:[#allocation9 + $0x1f8] sm:$0xff]
    %v3441 = vld [vmem:[#allocation9 + $0x200] sm:$0xff]
    %v3442 = vld [vmem:[#allocation9 + $0x208] sm:$0xff]
    %v3443 = vld [vmem:[#allocation9 + $0x210] sm:$0xff]
    %v3444 = vld [vmem:[#allocation9 + $0x218] sm:$0xff]
    %v3445 = vld [vmem:[#allocation9 + $0x220] sm:$0xff]
    %v3446 = vld [vmem:[#allocation9 + $0x228] sm:$0xff]
    %v3447 = vld [vmem:[#allocation9 + $0x230] sm:$0xff]
    %v3448 = vld [vmem:[#allocation9 + $0x238] sm:$0xff]
    %v3449 = vld [vmem:[#allocation9 + $0x240] sm:$0xff]
    %v3450 = vld [vmem:[#allocation9 + $0x248] sm:$0xff]
    %v3451 = vld [vmem:[#allocation9 + $0x250] sm:$0xff]
    %v3452 = vld [vmem:[#allocation9 + $0x258] sm:$0xff]
    %v3453 = vld [vmem:[#allocation9 + $0x260] sm:$0xff]
    %v3454 = vld [vmem:[#allocation9 + $0x268] sm:$0xff]
    %v3455 = vld [vmem:[#allocation9 + $0x270] sm:$0xff]
    %v3456 = vld [vmem:[#allocation9 + $0x278] sm:$0xff]
    %v3457 = vld [vmem:[#allocation9 + $0x280] sm:$0xff]
    %v3458 = vld [vmem:[#allocation9 + $0x288] sm:$0xff]
    %v3459 = vld [vmem:[#allocation9 + $0x290] sm:$0xff]
    %v3460 = vld [vmem:[#allocation9 + $0x298] sm:$0xff]
    %v3461 = vld [vmem:[#allocation9 + $0x2a0] sm:$0xff]
    %v3462 = vld [vmem:[#allocation9 + $0x2a8] sm:$0xff]
    %v3463 = vld [vmem:[#allocation9 + $0x2b0] sm:$0xff]
    %v3464 = vld [vmem:[#allocation9 + $0x2b8] sm:$0xff]
    %v3465 = vld [vmem:[#allocation9 + $0x2c0] sm:$0xff]
    %v3466 = vld [vmem:[#allocation9 + $0x2c8] sm:$0xff]
    %v3467 = vld [vmem:[#allocation9 + $0x2d0] sm:$0xff]
    %v3468 = vld [vmem:[#allocation9 + $0x2d8] sm:$0xff]
    %v3469 = vld [vmem:[#allocation9 + $0x2e0] sm:$0xff]
    %v3470 = vld [vmem:[#allocation9 + $0x2e8] sm:$0xff]
    %v3471 = vld [vmem:[#allocation9 + $0x2f0] sm:$0xff]
    %v3472 = vld [vmem:[#allocation9 + $0x2f8] sm:$0xff]
    %v3473 = vld [vmem:[#allocation9 + $0x300] sm:$0xff]
    %v3474 = vld [vmem:[#allocation9 + $0x308] sm:$0xff]
    %v3475 = vld [vmem:[#allocation9 + $0x310] sm:$0xff]
    %v3476 = vld [vmem:[#allocation9 + $0x318] sm:$0xff]
    %v3477 = vld [vmem:[#allocation9 + $0x320] sm:$0xff]
    %v3478 = vld [vmem:[#allocation9 + $0x328] sm:$0xff]
    %v3479 = vld [vmem:[#allocation9 + $0x330] sm:$0xff]
    %v3480 = vld [vmem:[#allocation9 + $0x338] sm:$0xff]
    %v3481 = vld [vmem:[#allocation9 + $0x340] sm:$0xff]
    %v3482 = vld [vmem:[#allocation9 + $0x348] sm:$0xff]
    %v3483 = vld [vmem:[#allocation9 + $0x350] sm:$0xff]
    %v3484 = vld [vmem:[#allocation9 + $0x358] sm:$0xff]
    %v3485 = vld [vmem:[#allocation9 + $0x360] sm:$0xff]
    %v3486 = vld [vmem:[#allocation9 + $0x368] sm:$0xff]
    %v3487 = vld [vmem:[#allocation9 + $0x370] sm:$0xff]
    %v3488 = vld [vmem:[#allocation9 + $0x378] sm:$0xff]
    %v3489 = vld [vmem:[#allocation9 + $0x380] sm:$0xff]
    %v3490 = vld [vmem:[#allocation9 + $0x388] sm:$0xff]
    %v3491 = vld [vmem:[#allocation9 + $0x390] sm:$0xff]
    %v3492 = vld [vmem:[#allocation9 + $0x398] sm:$0xff]
    %v3493 = vld [vmem:[#allocation9 + $0x3a0] sm:$0xff]
    %v3494 = vld [vmem:[#allocation9 + $0x3a8] sm:$0xff]
    %v3495 = vld [vmem:[#allocation9 + $0x3b0] sm:$0xff]
    %v3496 = vld [vmem:[#allocation9 + $0x3b8] sm:$0xff]
    %v3497 = vld [vmem:[#allocation9 + $0x3c0] sm:$0xff]
    %v3498 = vld [vmem:[#allocation9 + $0x3c8] sm:$0xff]
    %v3499 = vld [vmem:[#allocation9 + $0x3d0] sm:$0xff]
    %v3500 = vld [vmem:[#allocation9 + $0x3d8] sm:$0xff]
    %v3501 = vld [vmem:[#allocation9 + $0x3e0] sm:$0xff]
    %v3502 = vld [vmem:[#allocation9 + $0x3e8] sm:$0xff]
    %v3503 = vld [vmem:[#allocation9 + $0x3f0] sm:$0xff]
    %v3504 = vld [vmem:[#allocation9 + $0x3f8] sm:$0xff]
    %v3505 = vld [vmem:[#allocation9 + $0x400] sm:$0xff]
    %v3506 = vld [vmem:[#allocation9 + $0x408] sm:$0xff]
    %v3507 = vld [vmem:[#allocation9 + $0x410] sm:$0xff]
    %v3508 = vld [vmem:[#allocation9 + $0x418] sm:$0xff]
    %v3509 = vld [vmem:[#allocation9 + $0x420] sm:$0xff]
    %v3510 = vld [vmem:[#allocation9 + $0x428] sm:$0xff]
    %v3511 = vld [vmem:[#allocation9 + $0x430] sm:$0xff]
    %v3512 = vld [vmem:[#allocation9 + $0x438] sm:$0xff]
    %v3513 = vld [vmem:[#allocation9 + $0x440] sm:$0xff]
    %v3514 = vld [vmem:[#allocation9 + $0x448] sm:$0xff]
    %v3515 = vld [vmem:[#allocation9 + $0x450] sm:$0xff]
    %v3516 = vld [vmem:[#allocation9 + $0x458] sm:$0xff]
    %v3517 = vld [vmem:[#allocation9 + $0x460] sm:$0xff]
    %v3518 = vld [vmem:[#allocation9 + $0x468] sm:$0xff]
    %v3519 = vld [vmem:[#allocation9 + $0x470] sm:$0xff]
    %v3520 = vld [vmem:[#allocation9 + $0x478] sm:$0xff]
    %v3521 = vld [vmem:[#allocation9 + $0x480] sm:$0xff]
    %v3522 = vld [vmem:[#allocation9 + $0x488] sm:$0xff]
    %v3523 = vld [vmem:[#allocation9 + $0x490] sm:$0xff]
    %v3524 = vld [vmem:[#allocation9 + $0x498] sm:$0xff]
    %v3525 = vld [vmem:[#allocation9 + $0x4a0] sm:$0xff]
    %v3526 = vld [vmem:[#allocation9 + $0x4a8] sm:$0xff]
    %v3527 = vld [vmem:[#allocation9 + $0x4b0] sm:$0xff]
    %v3528 = vld [vmem:[#allocation9 + $0x4b8] sm:$0xff]
    %v3529 = vld [vmem:[#allocation9 + $0x4c0] sm:$0xff]
    %v3530 = vld [vmem:[#allocation9 + $0x4c8] sm:$0xff]
    %v3531 = vld [vmem:[#allocation9 + $0x4d0] sm:$0xff]
    %v3532 = vld [vmem:[#allocation9 + $0x4d8] sm:$0xff]
    %v3533 = vld [vmem:[#allocation9 + $0x4e0] sm:$0xff]
    %v3534 = vld [vmem:[#allocation9 + $0x4e8] sm:$0xff]
    %v3535 = vld [vmem:[#allocation9 + $0x4f0] sm:$0xff]
    %v3536 = vld [vmem:[#allocation9 + $0x4f8] sm:$0xff]
    %v3537 = vld [vmem:[#allocation9 + $0x500] sm:$0xff]
    %v3538 = vld [vmem:[#allocation9 + $0x508] sm:$0xff]
    %v3539 = vld [vmem:[#allocation9 + $0x510] sm:$0xff]
    %v3540 = vld [vmem:[#allocation9 + $0x518] sm:$0xff]
    %v3541 = vld [vmem:[#allocation9 + $0x520] sm:$0xff]
    %v3542 = vld [vmem:[#allocation9 + $0x528] sm:$0xff]
    %v3543 = vld [vmem:[#allocation9 + $0x530] sm:$0xff]
    %v3544 = vld [vmem:[#allocation9 + $0x538] sm:$0xff]
    %v3545 = vld [vmem:[#allocation9 + $0x540] sm:$0xff]
    %v3546 = vld [vmem:[#allocation9 + $0x548] sm:$0xff]
    %v3547 = vld [vmem:[#allocation9 + $0x550] sm:$0xff]
    %v3548 = vld [vmem:[#allocation9 + $0x558] sm:$0xff]
    %v3549 = vld [vmem:[#allocation9 + $0x560] sm:$0xff]
    %v3550 = vld [vmem:[#allocation9 + $0x568] sm:$0xff]
    %v3551 = vld [vmem:[#allocation9 + $0x570] sm:$0xff]
    %v3552 = vld [vmem:[#allocation9 + $0x578] sm:$0xff]
    %v3553 = vld [vmem:[#allocation9 + $0x580] sm:$0xff]
    %v3554 = vld [vmem:[#allocation9 + $0x588] sm:$0xff]
    %v3555 = vld [vmem:[#allocation9 + $0x590] sm:$0xff]
    %v3556 = vld [vmem:[#allocation9 + $0x598] sm:$0xff]
    %v3557 = vld [vmem:[#allocation9 + $0x5a0] sm:$0xff]
    %v3558 = vld [vmem:[#allocation9 + $0x5a8] sm:$0xff]
    %v3559 = vld [vmem:[#allocation9 + $0x5b0] sm:$0xff]
    %v3560 = vld [vmem:[#allocation9 + $0x5b8] sm:$0xff]
    %v3561 = vld [vmem:[#allocation9 + $0x5c0] sm:$0xff]
    %v3562 = vld [vmem:[#allocation9 + $0x5c8] sm:$0xff]
    %v3563 = vld [vmem:[#allocation9 + $0x5d0] sm:$0xff]
    %v3564 = vld [vmem:[#allocation9 + $0x5d8] sm:$0xff]
    %v3565 = vld [vmem:[#allocation9 + $0x5e0] sm:$0xff]
    %v3566 = vld [vmem:[#allocation9 + $0x5e8] sm:$0xff]
    %v3567 = vld [vmem:[#allocation9 + $0x5f0] sm:$0xff]
    %v3568 = vld [vmem:[#allocation9 + $0x5f8] sm:$0xff]
    %v3569 = vld [vmem:[#allocation9 + $0x600] sm:$0xff]
    %v3570 = vld [vmem:[#allocation9 + $0x608] sm:$0xff]
    %v3571 = vld [vmem:[#allocation9 + $0x610] sm:$0xff]
    %v3572 = vld [vmem:[#allocation9 + $0x618] sm:$0xff]
    %v3573 = vld [vmem:[#allocation9 + $0x620] sm:$0xff]
    %v3574 = vld [vmem:[#allocation9 + $0x628] sm:$0xff]
    %v3575 = vld [vmem:[#allocation9 + $0x630] sm:$0xff]
    %v3576 = vld [vmem:[#allocation9 + $0x638] sm:$0xff]
    %v3577 = vld [vmem:[#allocation9 + $0x640] sm:$0xff]
    %v3578 = vld [vmem:[#allocation9 + $0x648] sm:$0xff]
    %v3579 = vld [vmem:[#allocation9 + $0x650] sm:$0xff]
    %v3580 = vld [vmem:[#allocation9 + $0x658] sm:$0xff]
    %v3581 = vld [vmem:[#allocation9 + $0x660] sm:$0xff]
    %v3582 = vld [vmem:[#allocation9 + $0x668] sm:$0xff]
    %v3583 = vld [vmem:[#allocation9 + $0x670] sm:$0xff]
    %v3584 = vld [vmem:[#allocation9 + $0x678] sm:$0xff]
    %v3585 = vld [vmem:[#allocation9 + $0x680] sm:$0xff]
    %v3586 = vld [vmem:[#allocation9 + $0x688] sm:$0xff]
    %v3587 = vld [vmem:[#allocation9 + $0x690] sm:$0xff]
    %v3588 = vld [vmem:[#allocation9 + $0x698] sm:$0xff]
    %v3589 = vld [vmem:[#allocation9 + $0x6a0] sm:$0xff]
    %v3590 = vld [vmem:[#allocation9 + $0x6a8] sm:$0xff]
    %v3591 = vld [vmem:[#allocation9 + $0x6b0] sm:$0xff]
    %v3592 = vld [vmem:[#allocation9 + $0x6b8] sm:$0xff]
    %v3593 = vld [vmem:[#allocation9 + $0x6c0] sm:$0xff]
    %v3594 = vld [vmem:[#allocation9 + $0x6c8] sm:$0xff]
    %v3595 = vld [vmem:[#allocation9 + $0x6d0] sm:$0xff]
    %v3596 = vld [vmem:[#allocation9 + $0x6d8] sm:$0xff]
    %v3597 = vld [vmem:[#allocation9 + $0x6e0] sm:$0xff]
    %v3598 = vld [vmem:[#allocation9 + $0x6e8] sm:$0xff]
    %v3599 = vld [vmem:[#allocation9 + $0x6f0] sm:$0xff]
    %v3600 = vld [vmem:[#allocation9 + $0x6f8] sm:$0xff]
    %v3601 = vld [vmem:[#allocation9 + $0x700] sm:$0xff]
    %v3602 = vld [vmem:[#allocation9 + $0x708] sm:$0xff]
    %v3603 = vld [vmem:[#allocation9 + $0x710] sm:$0xff]
    %v3604 = vld [vmem:[#allocation9 + $0x718] sm:$0xff]
    %v3605 = vld [vmem:[#allocation9 + $0x720] sm:$0xff]
    %v3606 = vld [vmem:[#allocation9 + $0x728] sm:$0xff]
    %v3607 = vld [vmem:[#allocation9 + $0x730] sm:$0xff]
    %v3608 = vld [vmem:[#allocation9 + $0x738] sm:$0xff]
    %v3609 = vld [vmem:[#allocation9 + $0x740] sm:$0xff]
    %v3610 = vld [vmem:[#allocation9 + $0x748] sm:$0xff]
    %v3611 = vld [vmem:[#allocation9 + $0x750] sm:$0xff]
    %v3612 = vld [vmem:[#allocation9 + $0x758] sm:$0xff]
    %v3613 = vld [vmem:[#allocation9 + $0x760] sm:$0xff]
    %v3614 = vld [vmem:[#allocation9 + $0x768] sm:$0xff]
    %v3615 = vld [vmem:[#allocation9 + $0x770] sm:$0xff]
    %v3616 = vld [vmem:[#allocation9 + $0x778] sm:$0xff]
    %v3617 = vld [vmem:[#allocation9 + $0x780] sm:$0xff]
    %v3618 = vld [vmem:[#allocation9 + $0x788] sm:$0xff]
    %v3619 = vld [vmem:[#allocation9 + $0x790] sm:$0xff]
    %v3620 = vld [vmem:[#allocation9 + $0x798] sm:$0xff]
    %v3621 = vld [vmem:[#allocation9 + $0x7a0] sm:$0xff]
    %v3622 = vld [vmem:[#allocation9 + $0x7a8] sm:$0xff]
    %v3623 = vld [vmem:[#allocation9 + $0x7b0] sm:$0xff]
    %v3624 = vld [vmem:[#allocation9 + $0x7b8] sm:$0xff]
    %v3625 = vld [vmem:[#allocation9 + $0x7c0] sm:$0xff]
    %v3626 = vld [vmem:[#allocation9 + $0x7c8] sm:$0xff]
    %v3627 = vld [vmem:[#allocation9 + $0x7d0] sm:$0xff]
    %v3628 = vld [vmem:[#allocation9 + $0x7d8] sm:$0xff]
    %v3629 = vld [vmem:[#allocation9 + $0x7e0] sm:$0xff]
    %v3630 = vld [vmem:[#allocation9 + $0x7e8] sm:$0xff]
    %v3631 = vld [vmem:[#allocation9 + $0x7f0] sm:$0xff]
    %v3632 = vld [vmem:[#allocation9 + $0x7f8] sm:$0xff]
    %v3633 = vld [vmem:[#allocation9 + $0x800] sm:$0xff]
    %v3634 = vld [vmem:[#allocation9 + $0x808] sm:$0xff]
    %v3635 = vld [vmem:[#allocation9 + $0x810] sm:$0xff]
    %v3636 = vld [vmem:[#allocation9 + $0x818] sm:$0xff]
    %v3637 = vld [vmem:[#allocation9 + $0x820] sm:$0xff]
    %v3638 = vld [vmem:[#allocation9 + $0x828] sm:$0xff]
    %v3639 = vld [vmem:[#allocation9 + $0x830] sm:$0xff]
    %v3640 = vld [vmem:[#allocation9 + $0x838] sm:$0xff]
    %v3641 = vld [vmem:[#allocation9 + $0x840] sm:$0xff]
    %v3642 = vld [vmem:[#allocation9 + $0x848] sm:$0xff]
    %v3643 = vld [vmem:[#allocation9 + $0x850] sm:$0xff]
    %v3644 = vld [vmem:[#allocation9 + $0x858] sm:$0xff]
    %v3645 = vld [vmem:[#allocation9 + $0x860] sm:$0xff]
    %v3646 = vld [vmem:[#allocation9 + $0x868] sm:$0xff]
    %v3647 = vld [vmem:[#allocation9 + $0x870] sm:$0xff]
    %v3648 = vld [vmem:[#allocation9 + $0x878] sm:$0xff]
    %v3649 = vld [vmem:[#allocation9 + $0x880] sm:$0xff]
    %v3650 = vld [vmem:[#allocation9 + $0x888] sm:$0xff]
    %v3651 = vld [vmem:[#allocation9 + $0x890] sm:$0xff]
    %v3652 = vld [vmem:[#allocation9 + $0x898] sm:$0xff]
    %v3653 = vld [vmem:[#allocation9 + $0x8a0] sm:$0xff]
    %v3654 = vld [vmem:[#allocation9 + $0x8a8] sm:$0xff]
    %v3655 = vld [vmem:[#allocation9 + $0x8b0] sm:$0xff]
    %v3656 = vld [vmem:[#allocation9 + $0x8b8] sm:$0xff]
    %v3657 = vld [vmem:[#allocation9 + $0x8c0] sm:$0xff]
    %v3658 = vld [vmem:[#allocation9 + $0x8c8] sm:$0xff]
    %v3659 = vld [vmem:[#allocation9 + $0x8d0] sm:$0xff]
    %v3660 = vld [vmem:[#allocation9 + $0x8d8] sm:$0xff]
    %v3661 = vld [vmem:[#allocation9 + $0x8e0] sm:$0xff]
    %v3662 = vld [vmem:[#allocation9 + $0x8e8] sm:$0xff]
    %v3663 = vld [vmem:[#allocation9 + $0x8f0] sm:$0xff]
    %v3664 = vld [vmem:[#allocation9 + $0x8f8] sm:$0xff]
    %v3665 = vld [vmem:[#allocation9 + $0x900] sm:$0xff]
    %v3666 = vld [vmem:[#allocation9 + $0x908] sm:$0xff]
    %v3667 = vld [vmem:[#allocation9 + $0x910] sm:$0xff]
    %v3668 = vld [vmem:[#allocation9 + $0x918] sm:$0xff]
    %v3669 = vld [vmem:[#allocation9 + $0x920] sm:$0xff]
    %v3670 = vld [vmem:[#allocation9 + $0x928] sm:$0xff]
    %v3671 = vld [vmem:[#allocation9 + $0x930] sm:$0xff]
    %v3672 = vld [vmem:[#allocation9 + $0x938] sm:$0xff]
    %v3673 = vld [vmem:[#allocation9 + $0x940] sm:$0xff]
    %v3674 = vld [vmem:[#allocation9 + $0x948] sm:$0xff]
    %v3675 = vld [vmem:[#allocation9 + $0x950] sm:$0xff]
    %v3676 = vld [vmem:[#allocation9 + $0x958] sm:$0xff]
    %v3677 = vld [vmem:[#allocation9 + $0x960] sm:$0xff]
    %v3678 = vld [vmem:[#allocation9 + $0x968] sm:$0xff]
    %v3679 = vld [vmem:[#allocation9 + $0x970] sm:$0xff]
    %v3680 = vld [vmem:[#allocation9 + $0x978] sm:$0xff]
    %v3681 = vld [vmem:[#allocation9 + $0x980] sm:$0xff]
    %v3682 = vld [vmem:[#allocation9 + $0x988] sm:$0xff]
    %v3683 = vld [vmem:[#allocation9 + $0x990] sm:$0xff]
    %v3684 = vld [vmem:[#allocation9 + $0x998] sm:$0xff]
    %v3685 = vld [vmem:[#allocation9 + $0x9a0] sm:$0xff]
    %v3686 = vld [vmem:[#allocation9 + $0x9a8] sm:$0xff]
    %v3687 = vld [vmem:[#allocation9 + $0x9b0] sm:$0xff]
    %v3688 = vld [vmem:[#allocation9 + $0x9b8] sm:$0xff]
    %v3689 = vld [vmem:[#allocation9 + $0x9c0] sm:$0xff]
    %v3690 = vld [vmem:[#allocation9 + $0x9c8] sm:$0xff]
    %v3691 = vld [vmem:[#allocation9 + $0x9d0] sm:$0xff]
    %v3692 = vld [vmem:[#allocation9 + $0x9d8] sm:$0xff]
    %v3693 = vld [vmem:[#allocation9 + $0x9e0] sm:$0xff]
    %v3694 = vld [vmem:[#allocation9 + $0x9e8] sm:$0xff]
    %v3695 = vld [vmem:[#allocation9 + $0x9f0] sm:$0xff]
    %v3696 = vld [vmem:[#allocation9 + $0x9f8] sm:$0xff]
    %v3697 = vld [vmem:[#allocation9 + $0xa00] sm:$0xff]
    %v3698 = vld [vmem:[#allocation9 + $0xa08] sm:$0xff]
    %v3699 = vld [vmem:[#allocation9 + $0xa10] sm:$0xff]
    %v3700 = vld [vmem:[#allocation9 + $0xa18] sm:$0xff]
    %v3701 = vld [vmem:[#allocation9 + $0xa20] sm:$0xff]
    %v3702 = vld [vmem:[#allocation9 + $0xa28] sm:$0xff]
    %v3703 = vld [vmem:[#allocation9 + $0xa30] sm:$0xff]
    %v3704 = vld [vmem:[#allocation9 + $0xa38] sm:$0xff]
    %v3705 = vld [vmem:[#allocation9 + $0xa40] sm:$0xff]
    %v3706 = vld [vmem:[#allocation9 + $0xa48] sm:$0xff]
    %v3707 = vld [vmem:[#allocation9 + $0xa50] sm:$0xff]
    %v3708 = vld [vmem:[#allocation9 + $0xa58] sm:$0xff]
    %v3709 = vld [vmem:[#allocation9 + $0xa60] sm:$0xff]
    %v3710 = vld [vmem:[#allocation9 + $0xa68] sm:$0xff]
    %v3711 = vld [vmem:[#allocation9 + $0xa70] sm:$0xff]
    %v3712 = vld [vmem:[#allocation9 + $0xa78] sm:$0xff]
    %v3713 = vld [vmem:[#allocation9 + $0xa80] sm:$0xff]
    %v3714 = vld [vmem:[#allocation9 + $0xa88] sm:$0xff]
    %v3715 = vld [vmem:[#allocation9 + $0xa90] sm:$0xff]
    %v3716 = vld [vmem:[#allocation9 + $0xa98] sm:$0xff]
    %v3717 = vld [vmem:[#allocation9 + $0xaa0] sm:$0xff]
    %v3718 = vld [vmem:[#allocation9 + $0xaa8] sm:$0xff]
    %v3719 = vld [vmem:[#allocation9 + $0xab0] sm:$0xff]
    %v3720 = vld [vmem:[#allocation9 + $0xab8] sm:$0xff]
    %v3721 = vld [vmem:[#allocation9 + $0xac0] sm:$0xff]
    %v3722 = vld [vmem:[#allocation9 + $0xac8] sm:$0xff]
    %v3723 = vld [vmem:[#allocation9 + $0xad0] sm:$0xff]
    %v3724 = vld [vmem:[#allocation9 + $0xad8] sm:$0xff]
    %v3725 = vld [vmem:[#allocation9 + $0xae0] sm:$0xff]
    %v3726 = vld [vmem:[#allocation9 + $0xae8] sm:$0xff]
    %v3727 = vld [vmem:[#allocation9 + $0xaf0] sm:$0xff]
    %v3728 = vld [vmem:[#allocation9 + $0xaf8] sm:$0xff]
    %v3729 = vld [vmem:[#allocation9 + $0xb00] sm:$0xff]
    %v3730 = vld [vmem:[#allocation9 + $0xb08] sm:$0xff]
    %v3731 = vld [vmem:[#allocation9 + $0xb10] sm:$0xff]
    %v3732 = vld [vmem:[#allocation9 + $0xb18] sm:$0xff]
    %v3733 = vld [vmem:[#allocation9 + $0xb20] sm:$0xff]
    %v3734 = vld [vmem:[#allocation9 + $0xb28] sm:$0xff]
    %v3735 = vld [vmem:[#allocation9 + $0xb30] sm:$0xff]
    %v3736 = vld [vmem:[#allocation9 + $0xb38] sm:$0xff]
    %v3737 = vld [vmem:[#allocation9 + $0xb40] sm:$0xff]
    %v3738 = vld [vmem:[#allocation9 + $0xb48] sm:$0xff]
    %v3739 = vld [vmem:[#allocation9 + $0xb50] sm:$0xff]
    %v3740 = vld [vmem:[#allocation9 + $0xb58] sm:$0xff]
    %v3741 = vld [vmem:[#allocation9 + $0xb60] sm:$0xff]
    %v3742 = vld [vmem:[#allocation9 + $0xb68] sm:$0xff]
    %v3743 = vld [vmem:[#allocation9 + $0xb70] sm:$0xff]
    %v3744 = vld [vmem:[#allocation9 + $0xb78] sm:$0xff]
    %v3745 = vld [vmem:[#allocation9 + $0xb80] sm:$0xff]
    %v3746 = vld [vmem:[#allocation9 + $0xb88] sm:$0xff]
    %v3747 = vld [vmem:[#allocation9 + $0xb90] sm:$0xff]
    %v3748 = vld [vmem:[#allocation9 + $0xb98] sm:$0xff]
    %v3749 = vld [vmem:[#allocation9 + $0xba0] sm:$0xff]
    %v3750 = vld [vmem:[#allocation9 + $0xba8] sm:$0xff]
    %v3751 = vld [vmem:[#allocation9 + $0xbb0] sm:$0xff]
    %v3752 = vld [vmem:[#allocation9 + $0xbb8] sm:$0xff]
    %v3753 = vld [vmem:[#allocation9 + $0xbc0] sm:$0xff]
    %v3754 = vld [vmem:[#allocation9 + $0xbc8] sm:$0xff]
    %v3755 = vld [vmem:[#allocation9 + $0xbd0] sm:$0xff]
    %v3756 = vld [vmem:[#allocation9 + $0xbd8] sm:$0xff]
    %v3757 = vld [vmem:[#allocation9 + $0xbe0] sm:$0xff]
    %v3758 = vld [vmem:[#allocation9 + $0xbe8] sm:$0xff]
    %v3759 = vld [vmem:[#allocation9 + $0xbf0] sm:$0xff]
    %v3760 = vld [vmem:[#allocation9 + $0xbf8] sm:$0xff]
    %v3761 = vld [vmem:[#allocation9 + $0xc00] sm:$0xff]
    %v3762 = vld [vmem:[#allocation9 + $0xc08] sm:$0xff]
    %v3763 = vld [vmem:[#allocation9 + $0xc10] sm:$0xff]
    %v3764 = vld [vmem:[#allocation9 + $0xc18] sm:$0xff]
    %v3765 = vld [vmem:[#allocation9 + $0xc20] sm:$0xff]
    %v3766 = vld [vmem:[#allocation9 + $0xc28] sm:$0xff]
    %v3767 = vld [vmem:[#allocation9 + $0xc30] sm:$0xff]
    %v3768 = vld [vmem:[#allocation9 + $0xc38] sm:$0xff]
    %v3769 = vld [vmem:[#allocation9 + $0xc40] sm:$0xff]
    %v3770 = vld [vmem:[#allocation9 + $0xc48] sm:$0xff]
    %v3771 = vld [vmem:[#allocation9 + $0xc50] sm:$0xff]
    %v3772 = vld [vmem:[#allocation9 + $0xc58] sm:$0xff]
    %v3773 = vld [vmem:[#allocation9 + $0xc60] sm:$0xff]
    %v3774 = vld [vmem:[#allocation9 + $0xc68] sm:$0xff]
    %v3775 = vld [vmem:[#allocation9 + $0xc70] sm:$0xff]
    %v3776 = vld [vmem:[#allocation9 + $0xc78] sm:$0xff]
    %v3777 = vld [vmem:[#allocation9 + $0xc80] sm:$0xff]
    %v3778 = vld [vmem:[#allocation9 + $0xc88] sm:$0xff]
    %v3779 = vld [vmem:[#allocation9 + $0xc90] sm:$0xff]
    %v3780 = vld [vmem:[#allocation9 + $0xc98] sm:$0xff]
    %v3781 = vld [vmem:[#allocation9 + $0xca0] sm:$0xff]
    %v3782 = vld [vmem:[#allocation9 + $0xca8] sm:$0xff]
    %v3783 = vld [vmem:[#allocation9 + $0xcb0] sm:$0xff]
    %v3784 = vld [vmem:[#allocation9 + $0xcb8] sm:$0xff]
    %v3785 = vld [vmem:[#allocation9 + $0xcc0] sm:$0xff]
    %v3786 = vld [vmem:[#allocation9 + $0xcc8] sm:$0xff]
    %v3787 = vld [vmem:[#allocation9 + $0xcd0] sm:$0xff]
    %v3788 = vld [vmem:[#allocation9 + $0xcd8] sm:$0xff]
    %v3789 = vld [vmem:[#allocation9 + $0xce0] sm:$0xff]
    %v3790 = vld [vmem:[#allocation9 + $0xce8] sm:$0xff]
    %v3791 = vld [vmem:[#allocation9 + $0xcf0] sm:$0xff]
    %v3792 = vld [vmem:[#allocation9 + $0xcf8] sm:$0xff]
    %v3793 = vld [vmem:[#allocation9 + $0xd00] sm:$0xff]
    %v3794 = vld [vmem:[#allocation9 + $0xd08] sm:$0xff]
    %v3795 = vld [vmem:[#allocation9 + $0xd10] sm:$0xff]
    %v3796 = vld [vmem:[#allocation9 + $0xd18] sm:$0xff]
    %v3797 = vld [vmem:[#allocation9 + $0xd20] sm:$0xff]
    %v3798 = vld [vmem:[#allocation9 + $0xd28] sm:$0xff]
    %v3799 = vld [vmem:[#allocation9 + $0xd30] sm:$0xff]
    %v3800 = vld [vmem:[#allocation9 + $0xd38] sm:$0xff]
    %v3801 = vld [vmem:[#allocation9 + $0xd40] sm:$0xff]
    %v3802 = vld [vmem:[#allocation9 + $0xd48] sm:$0xff]
    %v3803 = vld [vmem:[#allocation9 + $0xd50] sm:$0xff]
    %v3804 = vld [vmem:[#allocation9 + $0xd58] sm:$0xff]
    %v3805 = vld [vmem:[#allocation9 + $0xd60] sm:$0xff]
    %v3806 = vld [vmem:[#allocation9 + $0xd68] sm:$0xff]
    %v3807 = vld [vmem:[#allocation9 + $0xd70] sm:$0xff]
    %v3808 = vld [vmem:[#allocation9 + $0xd78] sm:$0xff]
    %v3809 = vld [vmem:[#allocation9 + $0xd80] sm:$0xff]
    %v3810 = vld [vmem:[#allocation9 + $0xd88] sm:$0xff]
    %v3811 = vld [vmem:[#allocation9 + $0xd90] sm:$0xff]
    %v3812 = vld [vmem:[#allocation9 + $0xd98] sm:$0xff]
    %v3813 = vld [vmem:[#allocation9 + $0xda0] sm:$0xff]
    %v3814 = vld [vmem:[#allocation9 + $0xda8] sm:$0xff]
    %v3815 = vld [vmem:[#allocation9 + $0xdb0] sm:$0xff]
    %v3816 = vld [vmem:[#allocation9 + $0xdb8] sm:$0xff]
    %v3817 = vld [vmem:[#allocation9 + $0xdc0] sm:$0xff]
    %v3818 = vld [vmem:[#allocation9 + $0xdc8] sm:$0xff]
    %v3819 = vld [vmem:[#allocation9 + $0xdd0] sm:$0xff]
    %v3820 = vld [vmem:[#allocation9 + $0xdd8] sm:$0xff]
    %v3821 = vld [vmem:[#allocation9 + $0xde0] sm:$0xff]
    %v3822 = vld [vmem:[#allocation9 + $0xde8] sm:$0xff]
    %v3823 = vld [vmem:[#allocation9 + $0xdf0] sm:$0xff]
    %v3824 = vld [vmem:[#allocation9 + $0xdf8] sm:$0xff]
    %v3825 = vld [vmem:[#allocation9 + $0xe00] sm:$0xff]
    %v3826 = vld [vmem:[#allocation9 + $0xe08] sm:$0xff]
    %v3827 = vld [vmem:[#allocation9 + $0xe10] sm:$0xff]
    %v3828 = vld [vmem:[#allocation9 + $0xe18] sm:$0xff]
    %v3829 = vld [vmem:[#allocation9 + $0xe20] sm:$0xff]
    %v3830 = vld [vmem:[#allocation9 + $0xe28] sm:$0xff]
    %v3831 = vld [vmem:[#allocation9 + $0xe30] sm:$0xff]
    %v3832 = vld [vmem:[#allocation9 + $0xe38] sm:$0xff]
    %v3833 = vld [vmem:[#allocation9 + $0xe40] sm:$0xff]
    %v3834 = vld [vmem:[#allocation9 + $0xe48] sm:$0xff]
    %v3835 = vld [vmem:[#allocation9 + $0xe50] sm:$0xff]
    %v3836 = vld [vmem:[#allocation9 + $0xe58] sm:$0xff]
    %v3837 = vld [vmem:[#allocation9 + $0xe60] sm:$0xff]
    %v3838 = vld [vmem:[#allocation9 + $0xe68] sm:$0xff]
    %v3839 = vld [vmem:[#allocation9 + $0xe70] sm:$0xff]
    %v3840 = vld [vmem:[#allocation9 + $0xe78] sm:$0xff]
    %v3841 = vld [vmem:[#allocation9 + $0xe80] sm:$0xff]
    %v3842 = vld [vmem:[#allocation9 + $0xe88] sm:$0xff]
    %v3843 = vld [vmem:[#allocation9 + $0xe90] sm:$0xff]
    %v3844 = vld [vmem:[#allocation9 + $0xe98] sm:$0xff]
    %v3845 = vld [vmem:[#allocation9 + $0xea0] sm:$0xff]
    %v3846 = vld [vmem:[#allocation9 + $0xea8] sm:$0xff]
    %v3847 = vld [vmem:[#allocation9 + $0xeb0] sm:$0xff]
    %v3848 = vld [vmem:[#allocation9 + $0xeb8] sm:$0xff]
    %v3849 = vld [vmem:[#allocation9 + $0xec0] sm:$0xff]
    %v3850 = vld [vmem:[#allocation9 + $0xec8] sm:$0xff]
    %v3851 = vld [vmem:[#allocation9 + $0xed0] sm:$0xff]
    %v3852 = vld [vmem:[#allocation9 + $0xed8] sm:$0xff]
    %v3853 = vld [vmem:[#allocation9 + $0xee0] sm:$0xff]
    %v3854 = vld [vmem:[#allocation9 + $0xee8] sm:$0xff]
    %v3855 = vld [vmem:[#allocation9 + $0xef0] sm:$0xff]
    %v3856 = vld [vmem:[#allocation9 + $0xef8] sm:$0xff]
    %v3857 = vld [vmem:[#allocation9 + $0xf00] sm:$0xff]
    %v3858 = vld [vmem:[#allocation9 + $0xf08] sm:$0xff]
    %v3859 = vld [vmem:[#allocation9 + $0xf10] sm:$0xff]
    %v3860 = vld [vmem:[#allocation9 + $0xf18] sm:$0xff]
    %v3861 = vld [vmem:[#allocation9 + $0xf20] sm:$0xff]
    %v3862 = vld [vmem:[#allocation9 + $0xf28] sm:$0xff]
    %v3863 = vld [vmem:[#allocation9 + $0xf30] sm:$0xff]
    %v3864 = vld [vmem:[#allocation9 + $0xf38] sm:$0xff]
    %v3865 = vld [vmem:[#allocation9 + $0xf40] sm:$0xff]
    %v3866 = vld [vmem:[#allocation9 + $0xf48] sm:$0xff]
    %v3867 = vld [vmem:[#allocation9 + $0xf50] sm:$0xff]
    %v3868 = vld [vmem:[#allocation9 + $0xf58] sm:$0xff]
    %v3869 = vld [vmem:[#allocation9 + $0xf60] sm:$0xff]
    %v3870 = vld [vmem:[#allocation9 + $0xf68] sm:$0xff]
    %v3871 = vld [vmem:[#allocation9 + $0xf70] sm:$0xff]
    %v3872 = vld [vmem:[#allocation9 + $0xf78] sm:$0xff]
    %v3873 = vld [vmem:[#allocation9 + $0xf80] sm:$0xff]
    %v3874 = vld [vmem:[#allocation9 + $0xf88] sm:$0xff]
    %v3875 = vld [vmem:[#allocation9 + $0xf90] sm:$0xff]
    %v3876 = vld [vmem:[#allocation9 + $0xf98] sm:$0xff]
    %v3877 = vld [vmem:[#allocation9 + $0xfa0] sm:$0xff]
    %v3878 = vld [vmem:[#allocation9 + $0xfa8] sm:$0xff]
    %v3879 = vld [vmem:[#allocation9 + $0xfb0] sm:$0xff]
    %v3880 = vld [vmem:[#allocation9 + $0xfb8] sm:$0xff]
    %v3881 = vld [vmem:[#allocation9 + $0xfc0] sm:$0xff]
    %v3882 = vld [vmem:[#allocation9 + $0xfc8] sm:$0xff]
    %v3883 = vld [vmem:[#allocation9 + $0xfd0] sm:$0xff]
    %v3884 = vld [vmem:[#allocation9 + $0xfd8] sm:$0xff]
    %v3885 = vld [vmem:[#allocation9 + $0xfe0] sm:$0xff]
    %v3886 = vld [vmem:[#allocation9 + $0xfe8] sm:$0xff]
    %v3887 = vld [vmem:[#allocation9 + $0xff0] sm:$0xff]
    %v3888 = vld [vmem:[#allocation9 + $0xff8] sm:$0xff]
    %v3889 = vld [vmem:[#allocation9 + $0x1000] sm:$0xff]
    %v3890 = vld [vmem:[#allocation9 + $0x1008] sm:$0xff]
    %v3891 = vld [vmem:[#allocation9 + $0x1010] sm:$0xff]
    %v3892 = vld [vmem:[#allocation9 + $0x1018] sm:$0xff]
    %v3893 = vld [vmem:[#allocation9 + $0x1020] sm:$0xff]
    %v3894 = vld [vmem:[#allocation9 + $0x1028] sm:$0xff]
    %v3895 = vld [vmem:[#allocation9 + $0x1030] sm:$0xff]
    %v3896 = vld [vmem:[#allocation9 + $0x1038] sm:$0xff]
    %v3897 = vld [vmem:[#allocation9 + $0x1040] sm:$0xff]
    %v3898 = vld [vmem:[#allocation9 + $0x1048] sm:$0xff]
    %v3899 = vld [vmem:[#allocation9 + $0x1050] sm:$0xff]
    %v3900 = vld [vmem:[#allocation9 + $0x1058] sm:$0xff]
    %v3901 = vld [vmem:[#allocation9 + $0x1060] sm:$0xff]
    %v3902 = vld [vmem:[#allocation9 + $0x1068] sm:$0xff]
    %v3903 = vld [vmem:[#allocation9 + $0x1070] sm:$0xff]
    %v3904 = vld [vmem:[#allocation9 + $0x1078] sm:$0xff]
    %v3905 = vld [vmem:[#allocation9 + $0x1080] sm:$0xff]
    %v3906 = vld [vmem:[#allocation9 + $0x1088] sm:$0xff]
    %v3907 = vld [vmem:[#allocation9 + $0x1090] sm:$0xff]
    %v3908 = vld [vmem:[#allocation9 + $0x1098] sm:$0xff]
    %v3909 = vld [vmem:[#allocation9 + $0x10a0] sm:$0xff]
    %v3910 = vld [vmem:[#allocation9 + $0x10a8] sm:$0xff]
    %v3911 = vld [vmem:[#allocation9 + $0x10b0] sm:$0xff]
    %v3912 = vld [vmem:[#allocation9 + $0x10b8] sm:$0xff]
    %v3913 = vld [vmem:[#allocation9 + $0x10c0] sm:$0xff]
    %v3914 = vld [vmem:[#allocation9 + $0x10c8] sm:$0xff]
    %v3915 = vld [vmem:[#allocation9 + $0x10d0] sm:$0xff]
    %v3916 = vld [vmem:[#allocation9 + $0x10d8] sm:$0xff]
    %v3917 = vld [vmem:[#allocation9 + $0x10e0] sm:$0xff]
    %v3918 = vld [vmem:[#allocation9 + $0x10e8] sm:$0xff]
    %v3919 = vld [vmem:[#allocation9 + $0x10f0] sm:$0xff]
    %v3920 = vld [vmem:[#allocation9 + $0x10f8] sm:$0xff]
    %v3921 = vld [vmem:[#allocation9 + $0x1100] sm:$0xff]
    %v3922 = vld [vmem:[#allocation9 + $0x1108] sm:$0xff]
    %v3923 = vld [vmem:[#allocation9 + $0x1110] sm:$0xff]
    %v3924 = vld [vmem:[#allocation9 + $0x1118] sm:$0xff]
    %v3925 = vld [vmem:[#allocation9 + $0x1120] sm:$0xff]
    %v3926 = vld [vmem:[#allocation9 + $0x1128] sm:$0xff]
    %v3927 = vld [vmem:[#allocation9 + $0x1130] sm:$0xff]
    %v3928 = vld [vmem:[#allocation9 + $0x1138] sm:$0xff]
    %v3929 = vld [vmem:[#allocation9 + $0x1140] sm:$0xff]
    %v3930 = vld [vmem:[#allocation9 + $0x1148] sm:$0xff]
    %v3931 = vld [vmem:[#allocation9 + $0x1150] sm:$0xff]
    %v3932 = vld [vmem:[#allocation9 + $0x1158] sm:$0xff]
    %v3933 = vld [vmem:[#allocation9 + $0x1160] sm:$0xff]
    %v3934 = vld [vmem:[#allocation9 + $0x1168] sm:$0xff]
    %v3935 = vld [vmem:[#allocation9 + $0x1170] sm:$0xff]
    %v3936 = vld [vmem:[#allocation9 + $0x1178] sm:$0xff]
    %v3937 = vld [vmem:[#allocation9 + $0x1180] sm:$0xff]
    %v3938 = vld [vmem:[#allocation9 + $0x1188] sm:$0xff]
    %v3939 = vld [vmem:[#allocation9 + $0x1190] sm:$0xff]
    %v3940 = vld [vmem:[#allocation9 + $0x1198] sm:$0xff]
    %v3941 = vld [vmem:[#allocation9 + $0x11a0] sm:$0xff]
    %v3942 = vld [vmem:[#allocation9 + $0x11a8] sm:$0xff]
    %v3943 = vld [vmem:[#allocation9 + $0x11b0] sm:$0xff]
    %v3944 = vld [vmem:[#allocation9 + $0x11b8] sm:$0xff]
    %v3945 = vld [vmem:[#allocation9 + $0x11c0] sm:$0xff]
    %v3946 = vld [vmem:[#allocation9 + $0x11c8] sm:$0xff]
    %v3947 = vld [vmem:[#allocation9 + $0x11d0] sm:$0xff]
    %v3948 = vld [vmem:[#allocation9 + $0x11d8] sm:$0xff]
    %v3949 = vld [vmem:[#allocation9 + $0x11e0] sm:$0xff]
    %v3950 = vld [vmem:[#allocation9 + $0x11e8] sm:$0xff]
    %v3951 = vld [vmem:[#allocation9 + $0x11f0] sm:$0xff]
    %v3952 = vld [vmem:[#allocation9 + $0x11f8] sm:$0xff]
    %v3953 = vld [vmem:[#allocation10] sm:$0xf]
    %v3955 = vlaneseq
    %v3956 = vshrl.u32 %v3955, 7
    %v3957 = vsub.s32 0, %v3956
    %v3958 = vrot.slane %v3953, %v3957
    %v3959 = vlaneseq
    %v3960 = vshrl.u32 %v3959, 7
    %v3961 = vsub.s32 1, %v3960
    %v3962 = vrot.slane %v3953, %v3961
    %v3963 = vlaneseq
    %v3964 = vshrl.u32 %v3963, 7
    %v3965 = vsub.s32 2, %v3964
    %v3966 = vrot.slane %v3953, %v3965
    %v3967 = vlaneseq
    %v3968 = vshrl.u32 %v3967, 7
    %v3969 = vsub.s32 3, %v3968
    %v3970 = vrot.slane %v3953, %v3969
    %v4551 = vunpack.c.l.b16 %v3377
    %v4552 = vunpack.c.h.b16 %v3377
    %v4553 = vunpack.c.l.b16 %v3378
    %v4554 = vunpack.c.h.b16 %v3378
    %v4555 = vunpack.c.l.b16 %v3379
    %v4556 = vunpack.c.h.b16 %v3379
    %v4557 = vunpack.c.l.b16 %v3380
    %v4558 = vunpack.c.h.b16 %v3380
    %v4559 = vunpack.c.l.b16 %v3381
    %v4560 = vunpack.c.h.b16 %v3381
    %v4561 = vunpack.c.l.b16 %v3382
    %v4562 = vunpack.c.h.b16 %v3382
    %v4563 = vunpack.c.l.b16 %v3383
    %v4564 = vunpack.c.h.b16 %v3383
    %v4565 = vunpack.c.l.b16 %v3384
    %v4566 = vunpack.c.h.b16 %v3384
    %v4567 = vunpack.c.l.b16 %v3385
    %v4568 = vunpack.c.h.b16 %v3385
    %v4569 = vunpack.c.l.b16 %v3386
    %v4570 = vunpack.c.h.b16 %v3386
    %v4571 = vunpack.c.l.b16 %v3387
    %v4572 = vunpack.c.h.b16 %v3387
    %v4573 = vunpack.c.l.b16 %v3388
    %v4574 = vunpack.c.h.b16 %v3388
    %v4575 = vunpack.c.l.b16 %v3389
    %v4576 = vunpack.c.h.b16 %v3389
    %v4577 = vunpack.c.l.b16 %v3390
    %v4578 = vunpack.c.h.b16 %v3390
    %v4579 = vunpack.c.l.b16 %v3391
    %v4580 = vunpack.c.h.b16 %v3391
    %v4581 = vunpack.c.l.b16 %v3392
    %v4582 = vunpack.c.h.b16 %v3392
    %v4583 = vunpack.c.l.b16 %v3393
    %v4584 = vunpack.c.h.b16 %v3393
    %v4585 = vunpack.c.l.b16 %v3394
    %v4586 = vunpack.c.h.b16 %v3394
    %v4587 = vunpack.c.l.b16 %v3395
    %v4588 = vunpack.c.h.b16 %v3395
    %v4589 = vunpack.c.l.b16 %v3396
    %v4590 = vunpack.c.h.b16 %v3396
    %v4591 = vunpack.c.l.b16 %v3397
    %v4592 = vunpack.c.h.b16 %v3397
    %v4593 = vunpack.c.l.b16 %v3398
    %v4594 = vunpack.c.h.b16 %v3398
    %v4595 = vunpack.c.l.b16 %v3399
    %v4596 = vunpack.c.h.b16 %v3399
    %v4597 = vunpack.c.l.b16 %v3400
    %v4598 = vunpack.c.h.b16 %v3400
    %v4599 = vunpack.c.l.b16 %v3401
    %v4600 = vunpack.c.h.b16 %v3401
    %v4601 = vunpack.c.l.b16 %v3402
    %v4602 = vunpack.c.h.b16 %v3402
    %v4603 = vunpack.c.l.b16 %v3403
    %v4604 = vunpack.c.h.b16 %v3403
    %v4605 = vunpack.c.l.b16 %v3404
    %v4606 = vunpack.c.h.b16 %v3404
    %v4607 = vunpack.c.l.b16 %v3405
    %v4608 = vunpack.c.h.b16 %v3405
    %v4609 = vunpack.c.l.b16 %v3406
    %v4610 = vunpack.c.h.b16 %v3406
    %v4611 = vunpack.c.l.b16 %v3407
    %v4612 = vunpack.c.h.b16 %v3407
    %v4613 = vunpack.c.l.b16 %v3408
    %v4614 = vunpack.c.h.b16 %v3408
    %v4615 = vunpack.c.l.b16 %v3409
    %v4616 = vunpack.c.h.b16 %v3409
    %v4617 = vunpack.c.l.b16 %v3410
    %v4618 = vunpack.c.h.b16 %v3410
    %v4619 = vunpack.c.l.b16 %v3411
    %v4620 = vunpack.c.h.b16 %v3411
    %v4621 = vunpack.c.l.b16 %v3412
    %v4622 = vunpack.c.h.b16 %v3412
    %v4623 = vunpack.c.l.b16 %v3413
    %v4624 = vunpack.c.h.b16 %v3413
    %v4625 = vunpack.c.l.b16 %v3414
    %v4626 = vunpack.c.h.b16 %v3414
    %v4627 = vunpack.c.l.b16 %v3415
    %v4628 = vunpack.c.h.b16 %v3415
    %v4629 = vunpack.c.l.b16 %v3416
    %v4630 = vunpack.c.h.b16 %v3416
    %v4631 = vunpack.c.l.b16 %v3417
    %v4632 = vunpack.c.h.b16 %v3417
    %v4633 = vunpack.c.l.b16 %v3418
    %v4634 = vunpack.c.h.b16 %v3418
    %v4635 = vunpack.c.l.b16 %v3419
    %v4636 = vunpack.c.h.b16 %v3419
    %v4637 = vunpack.c.l.b16 %v3420
    %v4638 = vunpack.c.h.b16 %v3420
    %v4639 = vunpack.c.l.b16 %v3421
    %v4640 = vunpack.c.h.b16 %v3421
    %v4641 = vunpack.c.l.b16 %v3422
    %v4642 = vunpack.c.h.b16 %v3422
    %v4643 = vunpack.c.l.b16 %v3423
    %v4644 = vunpack.c.h.b16 %v3423
    %v4645 = vunpack.c.l.b16 %v3424
    %v4646 = vunpack.c.h.b16 %v3424
    %v4647 = vunpack.c.l.b16 %v3425
    %v4648 = vunpack.c.h.b16 %v3425
    %v4649 = vunpack.c.l.b16 %v3426
    %v4650 = vunpack.c.h.b16 %v3426
    %v4651 = vunpack.c.l.b16 %v3427
    %v4652 = vunpack.c.h.b16 %v3427
    %v4653 = vunpack.c.l.b16 %v3428
    %v4654 = vunpack.c.h.b16 %v3428
    %v4655 = vunpack.c.l.b16 %v3429
    %v4656 = vunpack.c.h.b16 %v3429
    %v4657 = vunpack.c.l.b16 %v3430
    %v4658 = vunpack.c.h.b16 %v3430
    %v4659 = vunpack.c.l.b16 %v3431
    %v4660 = vunpack.c.h.b16 %v3431
    %v4661 = vunpack.c.l.b16 %v3432
    %v4662 = vunpack.c.h.b16 %v3432
    %v4663 = vunpack.c.l.b16 %v3433
    %v4664 = vunpack.c.h.b16 %v3433
    %v4665 = vunpack.c.l.b16 %v3434
    %v4666 = vunpack.c.h.b16 %v3434
    %v4667 = vunpack.c.l.b16 %v3435
    %v4668 = vunpack.c.h.b16 %v3435
    %v4669 = vunpack.c.l.b16 %v3436
    %v4670 = vunpack.c.h.b16 %v3436
    %v4671 = vunpack.c.l.b16 %v3437
    %v4672 = vunpack.c.h.b16 %v3437
    %v4673 = vunpack.c.l.b16 %v3438
    %v4674 = vunpack.c.h.b16 %v3438
    %v4675 = vunpack.c.l.b16 %v3439
    %v4676 = vunpack.c.h.b16 %v3439
    %v4677 = vunpack.c.l.b16 %v3440
    %v4678 = vunpack.c.h.b16 %v3440
    %v4679 = vunpack.c.l.b16 %v3441
    %v4680 = vunpack.c.h.b16 %v3441
    %v4681 = vunpack.c.l.b16 %v3442
    %v4682 = vunpack.c.h.b16 %v3442
    %v4683 = vunpack.c.l.b16 %v3443
    %v4684 = vunpack.c.h.b16 %v3443
    %v4685 = vunpack.c.l.b16 %v3444
    %v4686 = vunpack.c.h.b16 %v3444
    %v4687 = vunpack.c.l.b16 %v3445
    %v4688 = vunpack.c.h.b16 %v3445
    %v4689 = vunpack.c.l.b16 %v3446
    %v4690 = vunpack.c.h.b16 %v3446
    %v4691 = vunpack.c.l.b16 %v3447
    %v4692 = vunpack.c.h.b16 %v3447
    %v4693 = vunpack.c.l.b16 %v3448
    %v4694 = vunpack.c.h.b16 %v3448
    %v4695 = vunpack.c.l.b16 %v3449
    %v4696 = vunpack.c.h.b16 %v3449
    %v4697 = vunpack.c.l.b16 %v3450
    %v4698 = vunpack.c.h.b16 %v3450
    %v4699 = vunpack.c.l.b16 %v3451
    %v4700 = vunpack.c.h.b16 %v3451
    %v4701 = vunpack.c.l.b16 %v3452
    %v4702 = vunpack.c.h.b16 %v3452
    %v4703 = vunpack.c.l.b16 %v3453
    %v4704 = vunpack.c.h.b16 %v3453
    %v4705 = vunpack.c.l.b16 %v3454
    %v4706 = vunpack.c.h.b16 %v3454
    %v4707 = vunpack.c.l.b16 %v3455
    %v4708 = vunpack.c.h.b16 %v3455
    %v4709 = vunpack.c.l.b16 %v3456
    %v4710 = vunpack.c.h.b16 %v3456
    %v4711 = vunpack.c.l.b16 %v3457
    %v4712 = vunpack.c.h.b16 %v3457
    %v4713 = vunpack.c.l.b16 %v3458
    %v4714 = vunpack.c.h.b16 %v3458
    %v4715 = vunpack.c.l.b16 %v3459
    %v4716 = vunpack.c.h.b16 %v3459
    %v4717 = vunpack.c.l.b16 %v3460
    %v4718 = vunpack.c.h.b16 %v3460
    %v4719 = vunpack.c.l.b16 %v3461
    %v4720 = vunpack.c.h.b16 %v3461
    %v4721 = vunpack.c.l.b16 %v3462
    %v4722 = vunpack.c.h.b16 %v3462
    %v4723 = vunpack.c.l.b16 %v3463
    %v4724 = vunpack.c.h.b16 %v3463
    %v4725 = vunpack.c.l.b16 %v3464
    %v4726 = vunpack.c.h.b16 %v3464
    %v4727 = vunpack.c.l.b16 %v3465
    %v4728 = vunpack.c.h.b16 %v3465
    %v4729 = vunpack.c.l.b16 %v3466
    %v4730 = vunpack.c.h.b16 %v3466
    %v4731 = vunpack.c.l.b16 %v3467
    %v4732 = vunpack.c.h.b16 %v3467
    %v4733 = vunpack.c.l.b16 %v3468
    %v4734 = vunpack.c.h.b16 %v3468
    %v4735 = vunpack.c.l.b16 %v3469
    %v4736 = vunpack.c.h.b16 %v3469
    %v4737 = vunpack.c.l.b16 %v3470
    %v4738 = vunpack.c.h.b16 %v3470
    %v4739 = vunpack.c.l.b16 %v3471
    %v4740 = vunpack.c.h.b16 %v3471
    %v4741 = vunpack.c.l.b16 %v3472
    %v4742 = vunpack.c.h.b16 %v3472
    %v4743 = vunpack.c.l.b16 %v3473
    %v4744 = vunpack.c.h.b16 %v3473
    %v4745 = vunpack.c.l.b16 %v3474
    %v4746 = vunpack.c.h.b16 %v3474
    %v4747 = vunpack.c.l.b16 %v3475
    %v4748 = vunpack.c.h.b16 %v3475
    %v4749 = vunpack.c.l.b16 %v3476
    %v4750 = vunpack.c.h.b16 %v3476
    %v4751 = vunpack.c.l.b16 %v3477
    %v4752 = vunpack.c.h.b16 %v3477
    %v4753 = vunpack.c.l.b16 %v3478
    %v4754 = vunpack.c.h.b16 %v3478
    %v4755 = vunpack.c.l.b16 %v3479
    %v4756 = vunpack.c.h.b16 %v3479
    %v4757 = vunpack.c.l.b16 %v3480
    %v4758 = vunpack.c.h.b16 %v3480
    %v4759 = vunpack.c.l.b16 %v3481
    %v4760 = vunpack.c.h.b16 %v3481
    %v4761 = vunpack.c.l.b16 %v3482
    %v4762 = vunpack.c.h.b16 %v3482
    %v4763 = vunpack.c.l.b16 %v3483
    %v4764 = vunpack.c.h.b16 %v3483
    %v4765 = vunpack.c.l.b16 %v3484
    %v4766 = vunpack.c.h.b16 %v3484
    %v4767 = vunpack.c.l.b16 %v3485
    %v4768 = vunpack.c.h.b16 %v3485
    %v4769 = vunpack.c.l.b16 %v3486
    %v4770 = vunpack.c.h.b16 %v3486
    %v4771 = vunpack.c.l.b16 %v3487
    %v4772 = vunpack.c.h.b16 %v3487
    %v4773 = vunpack.c.l.b16 %v3488
    %v4774 = vunpack.c.h.b16 %v3488
    %v4775 = vunpack.c.l.b16 %v3489
    %v4776 = vunpack.c.h.b16 %v3489
    %v4777 = vunpack.c.l.b16 %v3490
    %v4778 = vunpack.c.h.b16 %v3490
    %v4779 = vunpack.c.l.b16 %v3491
    %v4780 = vunpack.c.h.b16 %v3491
    %v4781 = vunpack.c.l.b16 %v3492
    %v4782 = vunpack.c.h.b16 %v3492
    %v4783 = vunpack.c.l.b16 %v3493
    %v4784 = vunpack.c.h.b16 %v3493
    %v4785 = vunpack.c.l.b16 %v3494
    %v4786 = vunpack.c.h.b16 %v3494
    %v4787 = vunpack.c.l.b16 %v3495
    %v4788 = vunpack.c.h.b16 %v3495
    %v4789 = vunpack.c.l.b16 %v3496
    %v4790 = vunpack.c.h.b16 %v3496
    %v4791 = vunpack.c.l.b16 %v3497
    %v4792 = vunpack.c.h.b16 %v3497
    %v4793 = vunpack.c.l.b16 %v3498
    %v4794 = vunpack.c.h.b16 %v3498
    %v4795 = vunpack.c.l.b16 %v3499
    %v4796 = vunpack.c.h.b16 %v3499
    %v4797 = vunpack.c.l.b16 %v3500
    %v4798 = vunpack.c.h.b16 %v3500
    %v4799 = vunpack.c.l.b16 %v3501
    %v4800 = vunpack.c.h.b16 %v3501
    %v4801 = vunpack.c.l.b16 %v3502
    %v4802 = vunpack.c.h.b16 %v3502
    %v4803 = vunpack.c.l.b16 %v3503
    %v4804 = vunpack.c.h.b16 %v3503
    %v4805 = vunpack.c.l.b16 %v3504
    %v4806 = vunpack.c.h.b16 %v3504
    %v4807 = vunpack.c.l.b16 %v3505
    %v4808 = vunpack.c.h.b16 %v3505
    %v4809 = vunpack.c.l.b16 %v3506
    %v4810 = vunpack.c.h.b16 %v3506
    %v4811 = vunpack.c.l.b16 %v3507
    %v4812 = vunpack.c.h.b16 %v3507
    %v4813 = vunpack.c.l.b16 %v3508
    %v4814 = vunpack.c.h.b16 %v3508
    %v4815 = vunpack.c.l.b16 %v3509
    %v4816 = vunpack.c.h.b16 %v3509
    %v4817 = vunpack.c.l.b16 %v3510
    %v4818 = vunpack.c.h.b16 %v3510
    %v4819 = vunpack.c.l.b16 %v3511
    %v4820 = vunpack.c.h.b16 %v3511
    %v4821 = vunpack.c.l.b16 %v3512
    %v4822 = vunpack.c.h.b16 %v3512
    %v4823 = vunpack.c.l.b16 %v3513
    %v4824 = vunpack.c.h.b16 %v3513
    %v4825 = vunpack.c.l.b16 %v3514
    %v4826 = vunpack.c.h.b16 %v3514
    %v4827 = vunpack.c.l.b16 %v3515
    %v4828 = vunpack.c.h.b16 %v3515
    %v4829 = vunpack.c.l.b16 %v3516
    %v4830 = vunpack.c.h.b16 %v3516
    %v4831 = vunpack.c.l.b16 %v3517
    %v4832 = vunpack.c.h.b16 %v3517
    %v4833 = vunpack.c.l.b16 %v3518
    %v4834 = vunpack.c.h.b16 %v3518
    %v4835 = vunpack.c.l.b16 %v3519
    %v4836 = vunpack.c.h.b16 %v3519
    %v4837 = vunpack.c.l.b16 %v3520
    %v4838 = vunpack.c.h.b16 %v3520
    %v4839 = vunpack.c.l.b16 %v3521
    %v4840 = vunpack.c.h.b16 %v3521
    %v4841 = vunpack.c.l.b16 %v3522
    %v4842 = vunpack.c.h.b16 %v3522
    %v4843 = vunpack.c.l.b16 %v3523
    %v4844 = vunpack.c.h.b16 %v3523
    %v4845 = vunpack.c.l.b16 %v3524
    %v4846 = vunpack.c.h.b16 %v3524
    %v4847 = vunpack.c.l.b16 %v3525
    %v4848 = vunpack.c.h.b16 %v3525
    %v4849 = vunpack.c.l.b16 %v3526
    %v4850 = vunpack.c.h.b16 %v3526
    %v4851 = vunpack.c.l.b16 %v3527
    %v4852 = vunpack.c.h.b16 %v3527
    %v4853 = vunpack.c.l.b16 %v3528
    %v4854 = vunpack.c.h.b16 %v3528
    %v4855 = vunpack.c.l.b16 %v3529
    %v4856 = vunpack.c.h.b16 %v3529
    %v4857 = vunpack.c.l.b16 %v3530
    %v4858 = vunpack.c.h.b16 %v3530
    %v4859 = vunpack.c.l.b16 %v3531
    %v4860 = vunpack.c.h.b16 %v3531
    %v4861 = vunpack.c.l.b16 %v3532
    %v4862 = vunpack.c.h.b16 %v3532
    %v4863 = vunpack.c.l.b16 %v3533
    %v4864 = vunpack.c.h.b16 %v3533
    %v4865 = vunpack.c.l.b16 %v3534
    %v4866 = vunpack.c.h.b16 %v3534
    %v4867 = vunpack.c.l.b16 %v3535
    %v4868 = vunpack.c.h.b16 %v3535
    %v4869 = vunpack.c.l.b16 %v3536
    %v4870 = vunpack.c.h.b16 %v3536
    %v4871 = vunpack.c.l.b16 %v3537
    %v4872 = vunpack.c.h.b16 %v3537
    %v4873 = vunpack.c.l.b16 %v3538
    %v4874 = vunpack.c.h.b16 %v3538
    %v4875 = vunpack.c.l.b16 %v3539
    %v4876 = vunpack.c.h.b16 %v3539
    %v4877 = vunpack.c.l.b16 %v3540
    %v4878 = vunpack.c.h.b16 %v3540
    %v4879 = vunpack.c.l.b16 %v3541
    %v4880 = vunpack.c.h.b16 %v3541
    %v4881 = vunpack.c.l.b16 %v3542
    %v4882 = vunpack.c.h.b16 %v3542
    %v4883 = vunpack.c.l.b16 %v3543
    %v4884 = vunpack.c.h.b16 %v3543
    %v4885 = vunpack.c.l.b16 %v3544
    %v4886 = vunpack.c.h.b16 %v3544
    %v4887 = vunpack.c.l.b16 %v3545
    %v4888 = vunpack.c.h.b16 %v3545
    %v4889 = vunpack.c.l.b16 %v3546
    %v4890 = vunpack.c.h.b16 %v3546
    %v4891 = vunpack.c.l.b16 %v3547
    %v4892 = vunpack.c.h.b16 %v3547
    %v4893 = vunpack.c.l.b16 %v3548
    %v4894 = vunpack.c.h.b16 %v3548
    %v4895 = vunpack.c.l.b16 %v3549
    %v4896 = vunpack.c.h.b16 %v3549
    %v4897 = vunpack.c.l.b16 %v3550
    %v4898 = vunpack.c.h.b16 %v3550
    %v4899 = vunpack.c.l.b16 %v3551
    %v4900 = vunpack.c.h.b16 %v3551
    %v4901 = vunpack.c.l.b16 %v3552
    %v4902 = vunpack.c.h.b16 %v3552
    %v4903 = vunpack.c.l.b16 %v3553
    %v4904 = vunpack.c.h.b16 %v3553
    %v4905 = vunpack.c.l.b16 %v3554
    %v4906 = vunpack.c.h.b16 %v3554
    %v4907 = vunpack.c.l.b16 %v3555
    %v4908 = vunpack.c.h.b16 %v3555
    %v4909 = vunpack.c.l.b16 %v3556
    %v4910 = vunpack.c.h.b16 %v3556
    %v4911 = vunpack.c.l.b16 %v3557
    %v4912 = vunpack.c.h.b16 %v3557
    %v4913 = vunpack.c.l.b16 %v3558
    %v4914 = vunpack.c.h.b16 %v3558
    %v4915 = vunpack.c.l.b16 %v3559
    %v4916 = vunpack.c.h.b16 %v3559
    %v4917 = vunpack.c.l.b16 %v3560
    %v4918 = vunpack.c.h.b16 %v3560
    %v4919 = vunpack.c.l.b16 %v3561
    %v4920 = vunpack.c.h.b16 %v3561
    %v4921 = vunpack.c.l.b16 %v3562
    %v4922 = vunpack.c.h.b16 %v3562
    %v4923 = vunpack.c.l.b16 %v3563
    %v4924 = vunpack.c.h.b16 %v3563
    %v4925 = vunpack.c.l.b16 %v3564
    %v4926 = vunpack.c.h.b16 %v3564
    %v4927 = vunpack.c.l.b16 %v3565
    %v4928 = vunpack.c.h.b16 %v3565
    %v4929 = vunpack.c.l.b16 %v3566
    %v4930 = vunpack.c.h.b16 %v3566
    %v4931 = vunpack.c.l.b16 %v3567
    %v4932 = vunpack.c.h.b16 %v3567
    %v4933 = vunpack.c.l.b16 %v3568
    %v4934 = vunpack.c.h.b16 %v3568
    %v4935 = vunpack.c.l.b16 %v3569
    %v4936 = vunpack.c.h.b16 %v3569
    %v4937 = vunpack.c.l.b16 %v3570
    %v4938 = vunpack.c.h.b16 %v3570
    %v4939 = vunpack.c.l.b16 %v3571
    %v4940 = vunpack.c.h.b16 %v3571
    %v4941 = vunpack.c.l.b16 %v3572
    %v4942 = vunpack.c.h.b16 %v3572
    %v4943 = vunpack.c.l.b16 %v3573
    %v4944 = vunpack.c.h.b16 %v3573
    %v4945 = vunpack.c.l.b16 %v3574
    %v4946 = vunpack.c.h.b16 %v3574
    %v4947 = vunpack.c.l.b16 %v3575
    %v4948 = vunpack.c.h.b16 %v3575
    %v4949 = vunpack.c.l.b16 %v3576
    %v4950 = vunpack.c.h.b16 %v3576
    %v4951 = vunpack.c.l.b16 %v3577
    %v4952 = vunpack.c.h.b16 %v3577
    %v4953 = vunpack.c.l.b16 %v3578
    %v4954 = vunpack.c.h.b16 %v3578
    %v4955 = vunpack.c.l.b16 %v3579
    %v4956 = vunpack.c.h.b16 %v3579
    %v4957 = vunpack.c.l.b16 %v3580
    %v4958 = vunpack.c.h.b16 %v3580
    %v4959 = vunpack.c.l.b16 %v3581
    %v4960 = vunpack.c.h.b16 %v3581
    %v4961 = vunpack.c.l.b16 %v3582
    %v4962 = vunpack.c.h.b16 %v3582
    %v4963 = vunpack.c.l.b16 %v3583
    %v4964 = vunpack.c.h.b16 %v3583
    %v4965 = vunpack.c.l.b16 %v3584
    %v4966 = vunpack.c.h.b16 %v3584
    %v4967 = vunpack.c.l.b16 %v3585
    %v4968 = vunpack.c.h.b16 %v3585
    %v4969 = vunpack.c.l.b16 %v3586
    %v4970 = vunpack.c.h.b16 %v3586
    %v4971 = vunpack.c.l.b16 %v3587
    %v4972 = vunpack.c.h.b16 %v3587
    %v4973 = vunpack.c.l.b16 %v3588
    %v4974 = vunpack.c.h.b16 %v3588
    %v4975 = vunpack.c.l.b16 %v3589
    %v4976 = vunpack.c.h.b16 %v3589
    %v4977 = vunpack.c.l.b16 %v3590
    %v4978 = vunpack.c.h.b16 %v3590
    %v4979 = vunpack.c.l.b16 %v3591
    %v4980 = vunpack.c.h.b16 %v3591
    %v4981 = vunpack.c.l.b16 %v3592
    %v4982 = vunpack.c.h.b16 %v3592
    %v4983 = vunpack.c.l.b16 %v3593
    %v4984 = vunpack.c.h.b16 %v3593
    %v4985 = vunpack.c.l.b16 %v3594
    %v4986 = vunpack.c.h.b16 %v3594
    %v4987 = vunpack.c.l.b16 %v3595
    %v4988 = vunpack.c.h.b16 %v3595
    %v4989 = vunpack.c.l.b16 %v3596
    %v4990 = vunpack.c.h.b16 %v3596
    %v4991 = vunpack.c.l.b16 %v3597
    %v4992 = vunpack.c.h.b16 %v3597
    %v4993 = vunpack.c.l.b16 %v3598
    %v4994 = vunpack.c.h.b16 %v3598
    %v4995 = vunpack.c.l.b16 %v3599
    %v4996 = vunpack.c.h.b16 %v3599
    %v4997 = vunpack.c.l.b16 %v3600
    %v4998 = vunpack.c.h.b16 %v3600
    %v4999 = vunpack.c.l.b16 %v3601
    %v5000 = vunpack.c.h.b16 %v3601
    %v5001 = vunpack.c.l.b16 %v3602
    %v5002 = vunpack.c.h.b16 %v3602
    %v5003 = vunpack.c.l.b16 %v3603
    %v5004 = vunpack.c.h.b16 %v3603
    %v5005 = vunpack.c.l.b16 %v3604
    %v5006 = vunpack.c.h.b16 %v3604
    %v5007 = vunpack.c.l.b16 %v3605
    %v5008 = vunpack.c.h.b16 %v3605
    %v5009 = vunpack.c.l.b16 %v3606
    %v5010 = vunpack.c.h.b16 %v3606
    %v5011 = vunpack.c.l.b16 %v3607
    %v5012 = vunpack.c.h.b16 %v3607
    %v5013 = vunpack.c.l.b16 %v3608
    %v5014 = vunpack.c.h.b16 %v3608
    %v5015 = vunpack.c.l.b16 %v3609
    %v5016 = vunpack.c.h.b16 %v3609
    %v5017 = vunpack.c.l.b16 %v3610
    %v5018 = vunpack.c.h.b16 %v3610
    %v5019 = vunpack.c.l.b16 %v3611
    %v5020 = vunpack.c.h.b16 %v3611
    %v5021 = vunpack.c.l.b16 %v3612
    %v5022 = vunpack.c.h.b16 %v3612
    %v5023 = vunpack.c.l.b16 %v3613
    %v5024 = vunpack.c.h.b16 %v3613
    %v5025 = vunpack.c.l.b16 %v3614
    %v5026 = vunpack.c.h.b16 %v3614
    %v5027 = vunpack.c.l.b16 %v3615
    %v5028 = vunpack.c.h.b16 %v3615
    %v5029 = vunpack.c.l.b16 %v3616
    %v5030 = vunpack.c.h.b16 %v3616
    %v5031 = vunpack.c.l.b16 %v3617
    %v5032 = vunpack.c.h.b16 %v3617
    %v5033 = vunpack.c.l.b16 %v3618
    %v5034 = vunpack.c.h.b16 %v3618
    %v5035 = vunpack.c.l.b16 %v3619
    %v5036 = vunpack.c.h.b16 %v3619
    %v5037 = vunpack.c.l.b16 %v3620
    %v5038 = vunpack.c.h.b16 %v3620
    %v5039 = vunpack.c.l.b16 %v3621
    %v5040 = vunpack.c.h.b16 %v3621
    %v5041 = vunpack.c.l.b16 %v3622
    %v5042 = vunpack.c.h.b16 %v3622
    %v5043 = vunpack.c.l.b16 %v3623
    %v5044 = vunpack.c.h.b16 %v3623
    %v5045 = vunpack.c.l.b16 %v3624
    %v5046 = vunpack.c.h.b16 %v3624
    %v5047 = vunpack.c.l.b16 %v3625
    %v5048 = vunpack.c.h.b16 %v3625
    %v5049 = vunpack.c.l.b16 %v3626
    %v5050 = vunpack.c.h.b16 %v3626
    %v5051 = vunpack.c.l.b16 %v3627
    %v5052 = vunpack.c.h.b16 %v3627
    %v5053 = vunpack.c.l.b16 %v3628
    %v5054 = vunpack.c.h.b16 %v3628
    %v5055 = vunpack.c.l.b16 %v3629
    %v5056 = vunpack.c.h.b16 %v3629
    %v5057 = vunpack.c.l.b16 %v3630
    %v5058 = vunpack.c.h.b16 %v3630
    %v5059 = vunpack.c.l.b16 %v3631
    %v5060 = vunpack.c.h.b16 %v3631
    %v5061 = vunpack.c.l.b16 %v3632
    %v5062 = vunpack.c.h.b16 %v3632
    %v5063 = vunpack.c.l.b16 %v3633
    %v5064 = vunpack.c.h.b16 %v3633
    %v5065 = vunpack.c.l.b16 %v3634
    %v5066 = vunpack.c.h.b16 %v3634
    %v5067 = vunpack.c.l.b16 %v3635
    %v5068 = vunpack.c.h.b16 %v3635
    %v5069 = vunpack.c.l.b16 %v3636
    %v5070 = vunpack.c.h.b16 %v3636
    %v5071 = vunpack.c.l.b16 %v3637
    %v5072 = vunpack.c.h.b16 %v3637
    %v5073 = vunpack.c.l.b16 %v3638
    %v5074 = vunpack.c.h.b16 %v3638
    %v5075 = vunpack.c.l.b16 %v3639
    %v5076 = vunpack.c.h.b16 %v3639
    %v5077 = vunpack.c.l.b16 %v3640
    %v5078 = vunpack.c.h.b16 %v3640
    %v5079 = vunpack.c.l.b16 %v3641
    %v5080 = vunpack.c.h.b16 %v3641
    %v5081 = vunpack.c.l.b16 %v3642
    %v5082 = vunpack.c.h.b16 %v3642
    %v5083 = vunpack.c.l.b16 %v3643
    %v5084 = vunpack.c.h.b16 %v3643
    %v5085 = vunpack.c.l.b16 %v3644
    %v5086 = vunpack.c.h.b16 %v3644
    %v5087 = vunpack.c.l.b16 %v3645
    %v5088 = vunpack.c.h.b16 %v3645
    %v5089 = vunpack.c.l.b16 %v3646
    %v5090 = vunpack.c.h.b16 %v3646
    %v5091 = vunpack.c.l.b16 %v3647
    %v5092 = vunpack.c.h.b16 %v3647
    %v5093 = vunpack.c.l.b16 %v3648
    %v5094 = vunpack.c.h.b16 %v3648
    %v5095 = vunpack.c.l.b16 %v3649
    %v5096 = vunpack.c.h.b16 %v3649
    %v5097 = vunpack.c.l.b16 %v3650
    %v5098 = vunpack.c.h.b16 %v3650
    %v5099 = vunpack.c.l.b16 %v3651
    %v5100 = vunpack.c.h.b16 %v3651
    %v5101 = vunpack.c.l.b16 %v3652
    %v5102 = vunpack.c.h.b16 %v3652
    %v5103 = vunpack.c.l.b16 %v3653
    %v5104 = vunpack.c.h.b16 %v3653
    %v5105 = vunpack.c.l.b16 %v3654
    %v5106 = vunpack.c.h.b16 %v3654
    %v5107 = vunpack.c.l.b16 %v3655
    %v5108 = vunpack.c.h.b16 %v3655
    %v5109 = vunpack.c.l.b16 %v3656
    %v5110 = vunpack.c.h.b16 %v3656
    %v5111 = vunpack.c.l.b16 %v3657
    %v5112 = vunpack.c.h.b16 %v3657
    %v5113 = vunpack.c.l.b16 %v3658
    %v5114 = vunpack.c.h.b16 %v3658
    %v5115 = vunpack.c.l.b16 %v3659
    %v5116 = vunpack.c.h.b16 %v3659
    %v5117 = vunpack.c.l.b16 %v3660
    %v5118 = vunpack.c.h.b16 %v3660
    %v5119 = vunpack.c.l.b16 %v3661
    %v5120 = vunpack.c.h.b16 %v3661
    %v5121 = vunpack.c.l.b16 %v3662
    %v5122 = vunpack.c.h.b16 %v3662
    %v5123 = vunpack.c.l.b16 %v3663
    %v5124 = vunpack.c.h.b16 %v3663
    %v5125 = vunpack.c.l.b16 %v3664
    %v5126 = vunpack.c.h.b16 %v3664
    %v5127 = vunpack.c.l.b16 %v3665
    %v5128 = vunpack.c.h.b16 %v3665
    %v5129 = vunpack.c.l.b16 %v3666
    %v5130 = vunpack.c.h.b16 %v3666
    %v5131 = vunpack.c.l.b16 %v3667
    %v5132 = vunpack.c.h.b16 %v3667
    %v5133 = vunpack.c.l.b16 %v3668
    %v5134 = vunpack.c.h.b16 %v3668
    %v5135 = vunpack.c.l.b16 %v3669
    %v5136 = vunpack.c.h.b16 %v3669
    %v5137 = vunpack.c.l.b16 %v3670
    %v5138 = vunpack.c.h.b16 %v3670
    %v5139 = vunpack.c.l.b16 %v3671
    %v5140 = vunpack.c.h.b16 %v3671
    %v5141 = vunpack.c.l.b16 %v3672
    %v5142 = vunpack.c.h.b16 %v3672
    %v5143 = vunpack.c.l.b16 %v3673
    %v5144 = vunpack.c.h.b16 %v3673
    %v5145 = vunpack.c.l.b16 %v3674
    %v5146 = vunpack.c.h.b16 %v3674
    %v5147 = vunpack.c.l.b16 %v3675
    %v5148 = vunpack.c.h.b16 %v3675
    %v5149 = vunpack.c.l.b16 %v3676
    %v5150 = vunpack.c.h.b16 %v3676
    %v5151 = vunpack.c.l.b16 %v3677
    %v5152 = vunpack.c.h.b16 %v3677
    %v5153 = vunpack.c.l.b16 %v3678
    %v5154 = vunpack.c.h.b16 %v3678
    %v5155 = vunpack.c.l.b16 %v3679
    %v5156 = vunpack.c.h.b16 %v3679
    %v5157 = vunpack.c.l.b16 %v3680
    %v5158 = vunpack.c.h.b16 %v3680
    %v5159 = vunpack.c.l.b16 %v3681
    %v5160 = vunpack.c.h.b16 %v3681
    %v5161 = vunpack.c.l.b16 %v3682
    %v5162 = vunpack.c.h.b16 %v3682
    %v5163 = vunpack.c.l.b16 %v3683
    %v5164 = vunpack.c.h.b16 %v3683
    %v5165 = vunpack.c.l.b16 %v3684
    %v5166 = vunpack.c.h.b16 %v3684
    %v5167 = vunpack.c.l.b16 %v3685
    %v5168 = vunpack.c.h.b16 %v3685
    %v5169 = vunpack.c.l.b16 %v3686
    %v5170 = vunpack.c.h.b16 %v3686
    %v5171 = vunpack.c.l.b16 %v3687
    %v5172 = vunpack.c.h.b16 %v3687
    %v5173 = vunpack.c.l.b16 %v3688
    %v5174 = vunpack.c.h.b16 %v3688
    %v5175 = vunpack.c.l.b16 %v3689
    %v5176 = vunpack.c.h.b16 %v3689
    %v5177 = vunpack.c.l.b16 %v3690
    %v5178 = vunpack.c.h.b16 %v3690
    %v5179 = vunpack.c.l.b16 %v3691
    %v5180 = vunpack.c.h.b16 %v3691
    %v5181 = vunpack.c.l.b16 %v3692
    %v5182 = vunpack.c.h.b16 %v3692
    %v5183 = vunpack.c.l.b16 %v3693
    %v5184 = vunpack.c.h.b16 %v3693
    %v5185 = vunpack.c.l.b16 %v3694
    %v5186 = vunpack.c.h.b16 %v3694
    %v5187 = vunpack.c.l.b16 %v3695
    %v5188 = vunpack.c.h.b16 %v3695
    %v5189 = vunpack.c.l.b16 %v3696
    %v5190 = vunpack.c.h.b16 %v3696
    %v5191 = vunpack.c.l.b16 %v3697
    %v5192 = vunpack.c.h.b16 %v3697
    %v5193 = vunpack.c.l.b16 %v3698
    %v5194 = vunpack.c.h.b16 %v3698
    %v5195 = vunpack.c.l.b16 %v3699
    %v5196 = vunpack.c.h.b16 %v3699
    %v5197 = vunpack.c.l.b16 %v3700
    %v5198 = vunpack.c.h.b16 %v3700
    %v5199 = vunpack.c.l.b16 %v3701
    %v5200 = vunpack.c.h.b16 %v3701
    %v5201 = vunpack.c.l.b16 %v3702
    %v5202 = vunpack.c.h.b16 %v3702
    %v5203 = vunpack.c.l.b16 %v3703
    %v5204 = vunpack.c.h.b16 %v3703
    %v5205 = vunpack.c.l.b16 %v3704
    %v5206 = vunpack.c.h.b16 %v3704
    %v5207 = vunpack.c.l.b16 %v3705
    %v5208 = vunpack.c.h.b16 %v3705
    %v5209 = vunpack.c.l.b16 %v3706
    %v5210 = vunpack.c.h.b16 %v3706
    %v5211 = vunpack.c.l.b16 %v3707
    %v5212 = vunpack.c.h.b16 %v3707
    %v5213 = vunpack.c.l.b16 %v3708
    %v5214 = vunpack.c.h.b16 %v3708
    %v5215 = vunpack.c.l.b16 %v3709
    %v5216 = vunpack.c.h.b16 %v3709
    %v5217 = vunpack.c.l.b16 %v3710
    %v5218 = vunpack.c.h.b16 %v3710
    %v5219 = vunpack.c.l.b16 %v3711
    %v5220 = vunpack.c.h.b16 %v3711
    %v5221 = vunpack.c.l.b16 %v3712
    %v5222 = vunpack.c.h.b16 %v3712
    %v5223 = vunpack.c.l.b16 %v3713
    %v5224 = vunpack.c.h.b16 %v3713
    %v5225 = vunpack.c.l.b16 %v3714
    %v5226 = vunpack.c.h.b16 %v3714
    %v5227 = vunpack.c.l.b16 %v3715
    %v5228 = vunpack.c.h.b16 %v3715
    %v5229 = vunpack.c.l.b16 %v3716
    %v5230 = vunpack.c.h.b16 %v3716
    %v5231 = vunpack.c.l.b16 %v3717
    %v5232 = vunpack.c.h.b16 %v3717
    %v5233 = vunpack.c.l.b16 %v3718
    %v5234 = vunpack.c.h.b16 %v3718
    %v5235 = vunpack.c.l.b16 %v3719
    %v5236 = vunpack.c.h.b16 %v3719
    %v5237 = vunpack.c.l.b16 %v3720
    %v5238 = vunpack.c.h.b16 %v3720
    %v5239 = vunpack.c.l.b16 %v3721
    %v5240 = vunpack.c.h.b16 %v3721
    %v5241 = vunpack.c.l.b16 %v3722
    %v5242 = vunpack.c.h.b16 %v3722
    %v5243 = vunpack.c.l.b16 %v3723
    %v5244 = vunpack.c.h.b16 %v3723
    %v5245 = vunpack.c.l.b16 %v3724
    %v5246 = vunpack.c.h.b16 %v3724
    %v5247 = vunpack.c.l.b16 %v3725
    %v5248 = vunpack.c.h.b16 %v3725
    %v5249 = vunpack.c.l.b16 %v3726
    %v5250 = vunpack.c.h.b16 %v3726
    %v5251 = vunpack.c.l.b16 %v3727
    %v5252 = vunpack.c.h.b16 %v3727
    %v5253 = vunpack.c.l.b16 %v3728
    %v5254 = vunpack.c.h.b16 %v3728
    %v5255 = vunpack.c.l.b16 %v3729
    %v5256 = vunpack.c.h.b16 %v3729
    %v5257 = vunpack.c.l.b16 %v3730
    %v5258 = vunpack.c.h.b16 %v3730
    %v5259 = vunpack.c.l.b16 %v3731
    %v5260 = vunpack.c.h.b16 %v3731
    %v5261 = vunpack.c.l.b16 %v3732
    %v5262 = vunpack.c.h.b16 %v3732
    %v5263 = vunpack.c.l.b16 %v3733
    %v5264 = vunpack.c.h.b16 %v3733
    %v5265 = vunpack.c.l.b16 %v3734
    %v5266 = vunpack.c.h.b16 %v3734
    %v5267 = vunpack.c.l.b16 %v3735
    %v5268 = vunpack.c.h.b16 %v3735
    %v5269 = vunpack.c.l.b16 %v3736
    %v5270 = vunpack.c.h.b16 %v3736
    %v5271 = vunpack.c.l.b16 %v3737
    %v5272 = vunpack.c.h.b16 %v3737
    %v5273 = vunpack.c.l.b16 %v3738
    %v5274 = vunpack.c.h.b16 %v3738
    %v5275 = vunpack.c.l.b16 %v3739
    %v5276 = vunpack.c.h.b16 %v3739
    %v5277 = vunpack.c.l.b16 %v3740
    %v5278 = vunpack.c.h.b16 %v3740
    %v5279 = vunpack.c.l.b16 %v3741
    %v5280 = vunpack.c.h.b16 %v3741
    %v5281 = vunpack.c.l.b16 %v3742
    %v5282 = vunpack.c.h.b16 %v3742
    %v5283 = vunpack.c.l.b16 %v3743
    %v5284 = vunpack.c.h.b16 %v3743
    %v5285 = vunpack.c.l.b16 %v3744
    %v5286 = vunpack.c.h.b16 %v3744
    %v5287 = vunpack.c.l.b16 %v3745
    %v5288 = vunpack.c.h.b16 %v3745
    %v5289 = vunpack.c.l.b16 %v3746
    %v5290 = vunpack.c.h.b16 %v3746
    %v5291 = vunpack.c.l.b16 %v3747
    %v5292 = vunpack.c.h.b16 %v3747
    %v5293 = vunpack.c.l.b16 %v3748
    %v5294 = vunpack.c.h.b16 %v3748
    %v5295 = vunpack.c.l.b16 %v3749
    %v5296 = vunpack.c.h.b16 %v3749
    %v5297 = vunpack.c.l.b16 %v3750
    %v5298 = vunpack.c.h.b16 %v3750
    %v5299 = vunpack.c.l.b16 %v3751
    %v5300 = vunpack.c.h.b16 %v3751
    %v5301 = vunpack.c.l.b16 %v3752
    %v5302 = vunpack.c.h.b16 %v3752
    %v5303 = vunpack.c.l.b16 %v3753
    %v5304 = vunpack.c.h.b16 %v3753
    %v5305 = vunpack.c.l.b16 %v3754
    %v5306 = vunpack.c.h.b16 %v3754
    %v5307 = vunpack.c.l.b16 %v3755
    %v5308 = vunpack.c.h.b16 %v3755
    %v5309 = vunpack.c.l.b16 %v3756
    %v5310 = vunpack.c.h.b16 %v3756
    %v5311 = vunpack.c.l.b16 %v3757
    %v5312 = vunpack.c.h.b16 %v3757
    %v5313 = vunpack.c.l.b16 %v3758
    %v5314 = vunpack.c.h.b16 %v3758
    %v5315 = vunpack.c.l.b16 %v3759
    %v5316 = vunpack.c.h.b16 %v3759
    %v5317 = vunpack.c.l.b16 %v3760
    %v5318 = vunpack.c.h.b16 %v3760
    %v5319 = vunpack.c.l.b16 %v3761
    %v5320 = vunpack.c.h.b16 %v3761
    %v5321 = vunpack.c.l.b16 %v3762
    %v5322 = vunpack.c.h.b16 %v3762
    %v5323 = vunpack.c.l.b16 %v3763
    %v5324 = vunpack.c.h.b16 %v3763
    %v5325 = vunpack.c.l.b16 %v3764
    %v5326 = vunpack.c.h.b16 %v3764
    %v5327 = vunpack.c.l.b16 %v3765
    %v5328 = vunpack.c.h.b16 %v3765
    %v5329 = vunpack.c.l.b16 %v3766
    %v5330 = vunpack.c.h.b16 %v3766
    %v5331 = vunpack.c.l.b16 %v3767
    %v5332 = vunpack.c.h.b16 %v3767
    %v5333 = vunpack.c.l.b16 %v3768
    %v5334 = vunpack.c.h.b16 %v3768
    %v5335 = vunpack.c.l.b16 %v3769
    %v5336 = vunpack.c.h.b16 %v3769
    %v5337 = vunpack.c.l.b16 %v3770
    %v5338 = vunpack.c.h.b16 %v3770
    %v5339 = vunpack.c.l.b16 %v3771
    %v5340 = vunpack.c.h.b16 %v3771
    %v5341 = vunpack.c.l.b16 %v3772
    %v5342 = vunpack.c.h.b16 %v3772
    %v5343 = vunpack.c.l.b16 %v3773
    %v5344 = vunpack.c.h.b16 %v3773
    %v5345 = vunpack.c.l.b16 %v3774
    %v5346 = vunpack.c.h.b16 %v3774
    %v5347 = vunpack.c.l.b16 %v3775
    %v5348 = vunpack.c.h.b16 %v3775
    %v5349 = vunpack.c.l.b16 %v3776
    %v5350 = vunpack.c.h.b16 %v3776
    %v5351 = vunpack.c.l.b16 %v3777
    %v5352 = vunpack.c.h.b16 %v3777
    %v5353 = vunpack.c.l.b16 %v3778
    %v5354 = vunpack.c.h.b16 %v3778
    %v5355 = vunpack.c.l.b16 %v3779
    %v5356 = vunpack.c.h.b16 %v3779
    %v5357 = vunpack.c.l.b16 %v3780
    %v5358 = vunpack.c.h.b16 %v3780
    %v5359 = vunpack.c.l.b16 %v3781
    %v5360 = vunpack.c.h.b16 %v3781
    %v5361 = vunpack.c.l.b16 %v3782
    %v5362 = vunpack.c.h.b16 %v3782
    %v5363 = vunpack.c.l.b16 %v3783
    %v5364 = vunpack.c.h.b16 %v3783
    %v5365 = vunpack.c.l.b16 %v3784
    %v5366 = vunpack.c.h.b16 %v3784
    %v5367 = vunpack.c.l.b16 %v3785
    %v5368 = vunpack.c.h.b16 %v3785
    %v5369 = vunpack.c.l.b16 %v3786
    %v5370 = vunpack.c.h.b16 %v3786
    %v5371 = vunpack.c.l.b16 %v3787
    %v5372 = vunpack.c.h.b16 %v3787
    %v5373 = vunpack.c.l.b16 %v3788
    %v5374 = vunpack.c.h.b16 %v3788
    %v5375 = vunpack.c.l.b16 %v3789
    %v5376 = vunpack.c.h.b16 %v3789
    %v5377 = vunpack.c.l.b16 %v3790
    %v5378 = vunpack.c.h.b16 %v3790
    %v5379 = vunpack.c.l.b16 %v3791
    %v5380 = vunpack.c.h.b16 %v3791
    %v5381 = vunpack.c.l.b16 %v3792
    %v5382 = vunpack.c.h.b16 %v3792
    %v5383 = vunpack.c.l.b16 %v3793
    %v5384 = vunpack.c.h.b16 %v3793
    %v5385 = vunpack.c.l.b16 %v3794
    %v5386 = vunpack.c.h.b16 %v3794
    %v5387 = vunpack.c.l.b16 %v3795
    %v5388 = vunpack.c.h.b16 %v3795
    %v5389 = vunpack.c.l.b16 %v3796
    %v5390 = vunpack.c.h.b16 %v3796
    %v5391 = vunpack.c.l.b16 %v3797
    %v5392 = vunpack.c.h.b16 %v3797
    %v5393 = vunpack.c.l.b16 %v3798
    %v5394 = vunpack.c.h.b16 %v3798
    %v5395 = vunpack.c.l.b16 %v3799
    %v5396 = vunpack.c.h.b16 %v3799
    %v5397 = vunpack.c.l.b16 %v3800
    %v5398 = vunpack.c.h.b16 %v3800
    %v5399 = vunpack.c.l.b16 %v3801
    %v5400 = vunpack.c.h.b16 %v3801
    %v5401 = vunpack.c.l.b16 %v3802
    %v5402 = vunpack.c.h.b16 %v3802
    %v5403 = vunpack.c.l.b16 %v3803
    %v5404 = vunpack.c.h.b16 %v3803
    %v5405 = vunpack.c.l.b16 %v3804
    %v5406 = vunpack.c.h.b16 %v3804
    %v5407 = vunpack.c.l.b16 %v3805
    %v5408 = vunpack.c.h.b16 %v3805
    %v5409 = vunpack.c.l.b16 %v3806
    %v5410 = vunpack.c.h.b16 %v3806
    %v5411 = vunpack.c.l.b16 %v3807
    %v5412 = vunpack.c.h.b16 %v3807
    %v5413 = vunpack.c.l.b16 %v3808
    %v5414 = vunpack.c.h.b16 %v3808
    %v5415 = vunpack.c.l.b16 %v3809
    %v5416 = vunpack.c.h.b16 %v3809
    %v5417 = vunpack.c.l.b16 %v3810
    %v5418 = vunpack.c.h.b16 %v3810
    %v5419 = vunpack.c.l.b16 %v3811
    %v5420 = vunpack.c.h.b16 %v3811
    %v5421 = vunpack.c.l.b16 %v3812
    %v5422 = vunpack.c.h.b16 %v3812
    %v5423 = vunpack.c.l.b16 %v3813
    %v5424 = vunpack.c.h.b16 %v3813
    %v5425 = vunpack.c.l.b16 %v3814
    %v5426 = vunpack.c.h.b16 %v3814
    %v5427 = vunpack.c.l.b16 %v3815
    %v5428 = vunpack.c.h.b16 %v3815
    %v5429 = vunpack.c.l.b16 %v3816
    %v5430 = vunpack.c.h.b16 %v3816
    %v5431 = vunpack.c.l.b16 %v3817
    %v5432 = vunpack.c.h.b16 %v3817
    %v5433 = vunpack.c.l.b16 %v3818
    %v5434 = vunpack.c.h.b16 %v3818
    %v5435 = vunpack.c.l.b16 %v3819
    %v5436 = vunpack.c.h.b16 %v3819
    %v5437 = vunpack.c.l.b16 %v3820
    %v5438 = vunpack.c.h.b16 %v3820
    %v5439 = vunpack.c.l.b16 %v3821
    %v5440 = vunpack.c.h.b16 %v3821
    %v5441 = vunpack.c.l.b16 %v3822
    %v5442 = vunpack.c.h.b16 %v3822
    %v5443 = vunpack.c.l.b16 %v3823
    %v5444 = vunpack.c.h.b16 %v3823
    %v5445 = vunpack.c.l.b16 %v3824
    %v5446 = vunpack.c.h.b16 %v3824
    %v5447 = vunpack.c.l.b16 %v3825
    %v5448 = vunpack.c.h.b16 %v3825
    %v5449 = vunpack.c.l.b16 %v3826
    %v5450 = vunpack.c.h.b16 %v3826
    %v5451 = vunpack.c.l.b16 %v3827
    %v5452 = vunpack.c.h.b16 %v3827
    %v5453 = vunpack.c.l.b16 %v3828
    %v5454 = vunpack.c.h.b16 %v3828
    %v5455 = vunpack.c.l.b16 %v3829
    %v5456 = vunpack.c.h.b16 %v3829
    %v5457 = vunpack.c.l.b16 %v3830
    %v5458 = vunpack.c.h.b16 %v3830
    %v5459 = vunpack.c.l.b16 %v3831
    %v5460 = vunpack.c.h.b16 %v3831
    %v5461 = vunpack.c.l.b16 %v3832
    %v5462 = vunpack.c.h.b16 %v3832
    %v5463 = vunpack.c.l.b16 %v3833
    %v5464 = vunpack.c.h.b16 %v3833
    %v5465 = vunpack.c.l.b16 %v3834
    %v5466 = vunpack.c.h.b16 %v3834
    %v5467 = vunpack.c.l.b16 %v3835
    %v5468 = vunpack.c.h.b16 %v3835
    %v5469 = vunpack.c.l.b16 %v3836
    %v5470 = vunpack.c.h.b16 %v3836
    %v5471 = vunpack.c.l.b16 %v3837
    %v5472 = vunpack.c.h.b16 %v3837
    %v5473 = vunpack.c.l.b16 %v3838
    %v5474 = vunpack.c.h.b16 %v3838
    %v5475 = vunpack.c.l.b16 %v3839
    %v5476 = vunpack.c.h.b16 %v3839
    %v5477 = vunpack.c.l.b16 %v3840
    %v5478 = vunpack.c.h.b16 %v3840
    %v5479 = vunpack.c.l.b16 %v3841
    %v5480 = vunpack.c.h.b16 %v3841
    %v5481 = vunpack.c.l.b16 %v3842
    %v5482 = vunpack.c.h.b16 %v3842
    %v5483 = vunpack.c.l.b16 %v3843
    %v5484 = vunpack.c.h.b16 %v3843
    %v5485 = vunpack.c.l.b16 %v3844
    %v5486 = vunpack.c.h.b16 %v3844
    %v5487 = vunpack.c.l.b16 %v3845
    %v5488 = vunpack.c.h.b16 %v3845
    %v5489 = vunpack.c.l.b16 %v3846
    %v5490 = vunpack.c.h.b16 %v3846
    %v5491 = vunpack.c.l.b16 %v3847
    %v5492 = vunpack.c.h.b16 %v3847
    %v5493 = vunpack.c.l.b16 %v3848
    %v5494 = vunpack.c.h.b16 %v3848
    %v5495 = vunpack.c.l.b16 %v3849
    %v5496 = vunpack.c.h.b16 %v3849
    %v5497 = vunpack.c.l.b16 %v3850
    %v5498 = vunpack.c.h.b16 %v3850
    %v5499 = vunpack.c.l.b16 %v3851
    %v5500 = vunpack.c.h.b16 %v3851
    %v5501 = vunpack.c.l.b16 %v3852
    %v5502 = vunpack.c.h.b16 %v3852
    %v5503 = vunpack.c.l.b16 %v3853
    %v5504 = vunpack.c.h.b16 %v3853
    %v5505 = vunpack.c.l.b16 %v3854
    %v5506 = vunpack.c.h.b16 %v3854
    %v5507 = vunpack.c.l.b16 %v3855
    %v5508 = vunpack.c.h.b16 %v3855
    %v5509 = vunpack.c.l.b16 %v3856
    %v5510 = vunpack.c.h.b16 %v3856
    %v5511 = vunpack.c.l.b16 %v3857
    %v5512 = vunpack.c.h.b16 %v3857
    %v5513 = vunpack.c.l.b16 %v3858
    %v5514 = vunpack.c.h.b16 %v3858
    %v5515 = vunpack.c.l.b16 %v3859
    %v5516 = vunpack.c.h.b16 %v3859
    %v5517 = vunpack.c.l.b16 %v3860
    %v5518 = vunpack.c.h.b16 %v3860
    %v5519 = vunpack.c.l.b16 %v3861
    %v5520 = vunpack.c.h.b16 %v3861
    %v5521 = vunpack.c.l.b16 %v3862
    %v5522 = vunpack.c.h.b16 %v3862
    %v5523 = vunpack.c.l.b16 %v3863
    %v5524 = vunpack.c.h.b16 %v3863
    %v5525 = vunpack.c.l.b16 %v3864
    %v5526 = vunpack.c.h.b16 %v3864
    %v5527 = vunpack.c.l.b16 %v3865
    %v5528 = vunpack.c.h.b16 %v3865
    %v5529 = vunpack.c.l.b16 %v3866
    %v5530 = vunpack.c.h.b16 %v3866
    %v5531 = vunpack.c.l.b16 %v3867
    %v5532 = vunpack.c.h.b16 %v3867
    %v5533 = vunpack.c.l.b16 %v3868
    %v5534 = vunpack.c.h.b16 %v3868
    %v5535 = vunpack.c.l.b16 %v3869
    %v5536 = vunpack.c.h.b16 %v3869
    %v5537 = vunpack.c.l.b16 %v3870
    %v5538 = vunpack.c.h.b16 %v3870
    %v5539 = vunpack.c.l.b16 %v3871
    %v5540 = vunpack.c.h.b16 %v3871
    %v5541 = vunpack.c.l.b16 %v3872
    %v5542 = vunpack.c.h.b16 %v3872
    %v5543 = vunpack.c.l.b16 %v3873
    %v5544 = vunpack.c.h.b16 %v3873
    %v5545 = vunpack.c.l.b16 %v3874
    %v5546 = vunpack.c.h.b16 %v3874
    %v5547 = vunpack.c.l.b16 %v3875
    %v5548 = vunpack.c.h.b16 %v3875
    %v5549 = vunpack.c.l.b16 %v3876
    %v5550 = vunpack.c.h.b16 %v3876
    %v5551 = vunpack.c.l.b16 %v3877
    %v5552 = vunpack.c.h.b16 %v3877
    %v5553 = vunpack.c.l.b16 %v3878
    %v5554 = vunpack.c.h.b16 %v3878
    %v5555 = vunpack.c.l.b16 %v3879
    %v5556 = vunpack.c.h.b16 %v3879
    %v5557 = vunpack.c.l.b16 %v3880
    %v5558 = vunpack.c.h.b16 %v3880
    %v5559 = vunpack.c.l.b16 %v3881
    %v5560 = vunpack.c.h.b16 %v3881
    %v5561 = vunpack.c.l.b16 %v3882
    %v5562 = vunpack.c.h.b16 %v3882
    %v5563 = vunpack.c.l.b16 %v3883
    %v5564 = vunpack.c.h.b16 %v3883
    %v5565 = vunpack.c.l.b16 %v3884
    %v5566 = vunpack.c.h.b16 %v3884
    %v5567 = vunpack.c.l.b16 %v3885
    %v5568 = vunpack.c.h.b16 %v3885
    %v5569 = vunpack.c.l.b16 %v3886
    %v5570 = vunpack.c.h.b16 %v3886
    %v5571 = vunpack.c.l.b16 %v3887
    %v5572 = vunpack.c.h.b16 %v3887
    %v5573 = vunpack.c.l.b16 %v3888
    %v5574 = vunpack.c.h.b16 %v3888
    %v5575 = vunpack.c.l.b16 %v3889
    %v5576 = vunpack.c.h.b16 %v3889
    %v5577 = vunpack.c.l.b16 %v3890
    %v5578 = vunpack.c.h.b16 %v3890
    %v5579 = vunpack.c.l.b16 %v3891
    %v5580 = vunpack.c.h.b16 %v3891
    %v5581 = vunpack.c.l.b16 %v3892
    %v5582 = vunpack.c.h.b16 %v3892
    %v5583 = vunpack.c.l.b16 %v3893
    %v5584 = vunpack.c.h.b16 %v3893
    %v5585 = vunpack.c.l.b16 %v3894
    %v5586 = vunpack.c.h.b16 %v3894
    %v5587 = vunpack.c.l.b16 %v3895
    %v5588 = vunpack.c.h.b16 %v3895
    %v5589 = vunpack.c.l.b16 %v3896
    %v5590 = vunpack.c.h.b16 %v3896
    %v5591 = vunpack.c.l.b16 %v3897
    %v5592 = vunpack.c.h.b16 %v3897
    %v5593 = vunpack.c.l.b16 %v3898
    %v5594 = vunpack.c.h.b16 %v3898
    %v5595 = vunpack.c.l.b16 %v3899
    %v5596 = vunpack.c.h.b16 %v3899
    %v5597 = vunpack.c.l.b16 %v3900
    %v5598 = vunpack.c.h.b16 %v3900
    %v5599 = vunpack.c.l.b16 %v3901
    %v5600 = vunpack.c.h.b16 %v3901
    %v5601 = vunpack.c.l.b16 %v3902
    %v5602 = vunpack.c.h.b16 %v3902
    %v5603 = vunpack.c.l.b16 %v3903
    %v5604 = vunpack.c.h.b16 %v3903
    %v5605 = vunpack.c.l.b16 %v3904
    %v5606 = vunpack.c.h.b16 %v3904
    %v5607 = vunpack.c.l.b16 %v3905
    %v5608 = vunpack.c.h.b16 %v3905
    %v5609 = vunpack.c.l.b16 %v3906
    %v5610 = vunpack.c.h.b16 %v3906
    %v5611 = vunpack.c.l.b16 %v3907
    %v5612 = vunpack.c.h.b16 %v3907
    %v5613 = vunpack.c.l.b16 %v3908
    %v5614 = vunpack.c.h.b16 %v3908
    %v5615 = vunpack.c.l.b16 %v3909
    %v5616 = vunpack.c.h.b16 %v3909
    %v5617 = vunpack.c.l.b16 %v3910
    %v5618 = vunpack.c.h.b16 %v3910
    %v5619 = vunpack.c.l.b16 %v3911
    %v5620 = vunpack.c.h.b16 %v3911
    %v5621 = vunpack.c.l.b16 %v3912
    %v5622 = vunpack.c.h.b16 %v3912
    %v5623 = vunpack.c.l.b16 %v3913
    %v5624 = vunpack.c.h.b16 %v3913
    %v5625 = vunpack.c.l.b16 %v3914
    %v5626 = vunpack.c.h.b16 %v3914
    %v5627 = vunpack.c.l.b16 %v3915
    %v5628 = vunpack.c.h.b16 %v3915
    %v5629 = vunpack.c.l.b16 %v3916
    %v5630 = vunpack.c.h.b16 %v3916
    %v5631 = vunpack.c.l.b16 %v3917
    %v5632 = vunpack.c.h.b16 %v3917
    %v5633 = vunpack.c.l.b16 %v3918
    %v5634 = vunpack.c.h.b16 %v3918
    %v5635 = vunpack.c.l.b16 %v3919
    %v5636 = vunpack.c.h.b16 %v3919
    %v5637 = vunpack.c.l.b16 %v3920
    %v5638 = vunpack.c.h.b16 %v3920
    %v5639 = vunpack.c.l.b16 %v3921
    %v5640 = vunpack.c.h.b16 %v3921
    %v5641 = vunpack.c.l.b16 %v3922
    %v5642 = vunpack.c.h.b16 %v3922
    %v5643 = vunpack.c.l.b16 %v3923
    %v5644 = vunpack.c.h.b16 %v3923
    %v5645 = vunpack.c.l.b16 %v3924
    %v5646 = vunpack.c.h.b16 %v3924
    %v5647 = vunpack.c.l.b16 %v3925
    %v5648 = vunpack.c.h.b16 %v3925
    %v5649 = vunpack.c.l.b16 %v3926
    %v5650 = vunpack.c.h.b16 %v3926
    %v5651 = vunpack.c.l.b16 %v3927
    %v5652 = vunpack.c.h.b16 %v3927
    %v5653 = vunpack.c.l.b16 %v3928
    %v5654 = vunpack.c.h.b16 %v3928
    %v5655 = vunpack.c.l.b16 %v3929
    %v5656 = vunpack.c.h.b16 %v3929
    %v5657 = vunpack.c.l.b16 %v3930
    %v5658 = vunpack.c.h.b16 %v3930
    %v5659 = vunpack.c.l.b16 %v3931
    %v5660 = vunpack.c.h.b16 %v3931
    %v5661 = vunpack.c.l.b16 %v3932
    %v5662 = vunpack.c.h.b16 %v3932
    %v5663 = vunpack.c.l.b16 %v3933
    %v5664 = vunpack.c.h.b16 %v3933
    %v5665 = vunpack.c.l.b16 %v3934
    %v5666 = vunpack.c.h.b16 %v3934
    %v5667 = vunpack.c.l.b16 %v3935
    %v5668 = vunpack.c.h.b16 %v3935
    %v5669 = vunpack.c.l.b16 %v3936
    %v5670 = vunpack.c.h.b16 %v3936
    %v5671 = vunpack.c.l.b16 %v3937
    %v5672 = vunpack.c.h.b16 %v3937
    %v5673 = vunpack.c.l.b16 %v3938
    %v5674 = vunpack.c.h.b16 %v3938
    %v5675 = vunpack.c.l.b16 %v3939
    %v5676 = vunpack.c.h.b16 %v3939
    %v5677 = vunpack.c.l.b16 %v3940
    %v5678 = vunpack.c.h.b16 %v3940
    %v5679 = vunpack.c.l.b16 %v3941
    %v5680 = vunpack.c.h.b16 %v3941
    %v5681 = vunpack.c.l.b16 %v3942
    %v5682 = vunpack.c.h.b16 %v3942
    %v5683 = vunpack.c.l.b16 %v3943
    %v5684 = vunpack.c.h.b16 %v3943
    %v5685 = vunpack.c.l.b16 %v3944
    %v5686 = vunpack.c.h.b16 %v3944
    %v5687 = vunpack.c.l.b16 %v3945
    %v5688 = vunpack.c.h.b16 %v3945
    %v5689 = vunpack.c.l.b16 %v3946
    %v5690 = vunpack.c.h.b16 %v3946
    %v5691 = vunpack.c.l.b16 %v3947
    %v5692 = vunpack.c.h.b16 %v3947
    %v5693 = vunpack.c.l.b16 %v3948
    %v5694 = vunpack.c.h.b16 %v3948
    %v5695 = vunpack.c.l.b16 %v3949
    %v5696 = vunpack.c.h.b16 %v3949
    %v5697 = vunpack.c.l.b16 %v3950
    %v5698 = vunpack.c.h.b16 %v3950
    %v5699 = vunpack.c.l.b16 %v3951
    %v5700 = vunpack.c.h.b16 %v3951
    %v5701 = vunpack.c.l.b16 %v3952
    %v5702 = vunpack.c.h.b16 %v3952
    %v5703 = vpack.c.b16 %v4555, %v4551
    %v5704 = vpack.c.b16 %v4556, %v4552
    %v5705 = vpack.c.b16 %v4557, %v4553
    %v5706 = vpack.c.b16 %v4558, %v4554
    %v5707 = vpack.c.b16 %v4563, %v4559
    %v5708 = vpack.c.b16 %v4564, %v4560
    %v5709 = vpack.c.b16 %v4565, %v4561
    %v5710 = vpack.c.b16 %v4566, %v4562
    %v5711 = vpack.c.b16 %v4571, %v4567
    %v5712 = vpack.c.b16 %v4572, %v4568
    %v5713 = vpack.c.b16 %v4573, %v4569
    %v5714 = vpack.c.b16 %v4574, %v4570
    %v5715 = vpack.c.b16 %v4579, %v4575
    %v5716 = vpack.c.b16 %v4580, %v4576
    %v5717 = vpack.c.b16 %v4581, %v4577
    %v5718 = vpack.c.b16 %v4582, %v4578
    %v5719 = vpack.c.b16 %v4587, %v4583
    %v5720 = vpack.c.b16 %v4588, %v4584
    %v5721 = vpack.c.b16 %v4589, %v4585
    %v5722 = vpack.c.b16 %v4590, %v4586
    %v5723 = vpack.c.b16 %v4595, %v4591
    %v5724 = vpack.c.b16 %v4596, %v4592
    %v5725 = vpack.c.b16 %v4597, %v4593
    %v5726 = vpack.c.b16 %v4598, %v4594
    %v5727 = vpack.c.b16 %v4603, %v4599
    %v5728 = vpack.c.b16 %v4604, %v4600
    %v5729 = vpack.c.b16 %v4605, %v4601
    %v5730 = vpack.c.b16 %v4606, %v4602
    %v5731 = vpack.c.b16 %v4611, %v4607
    %v5732 = vpack.c.b16 %v4612, %v4608
    %v5733 = vpack.c.b16 %v4613, %v4609
    %v5734 = vpack.c.b16 %v4614, %v4610
    %v5735 = vpack.c.b16 %v4619, %v4615
    %v5736 = vpack.c.b16 %v4620, %v4616
    %v5737 = vpack.c.b16 %v4621, %v4617
    %v5738 = vpack.c.b16 %v4622, %v4618
    %v5739 = vpack.c.b16 %v4627, %v4623
    %v5740 = vpack.c.b16 %v4628, %v4624
    %v5741 = vpack.c.b16 %v4629, %v4625
    %v5742 = vpack.c.b16 %v4630, %v4626
    %v5743 = vpack.c.b16 %v4635, %v4631
    %v5744 = vpack.c.b16 %v4636, %v4632
    %v5745 = vpack.c.b16 %v4637, %v4633
    %v5746 = vpack.c.b16 %v4638, %v4634
    %v5747 = vpack.c.b16 %v4643, %v4639
    %v5748 = vpack.c.b16 %v4644, %v4640
    %v5749 = vpack.c.b16 %v4645, %v4641
    %v5750 = vpack.c.b16 %v4646, %v4642
    %v5751 = vpack.c.b16 %v4651, %v4647
    %v5752 = vpack.c.b16 %v4652, %v4648
    %v5753 = vpack.c.b16 %v4653, %v4649
    %v5754 = vpack.c.b16 %v4654, %v4650
    %v5755 = vpack.c.b16 %v4659, %v4655
    %v5756 = vpack.c.b16 %v4660, %v4656
    %v5757 = vpack.c.b16 %v4661, %v4657
    %v5758 = vpack.c.b16 %v4662, %v4658
    %v5759 = vpack.c.b16 %v4667, %v4663
    %v5760 = vpack.c.b16 %v4668, %v4664
    %v5761 = vpack.c.b16 %v4669, %v4665
    %v5762 = vpack.c.b16 %v4670, %v4666
    %v5763 = vpack.c.b16 %v4675, %v4671
    %v5764 = vpack.c.b16 %v4676, %v4672
    %v5765 = vpack.c.b16 %v4677, %v4673
    %v5766 = vpack.c.b16 %v4678, %v4674
    %v5767 = vpack.c.b16 %v4683, %v4679
    %v5768 = vpack.c.b16 %v4684, %v4680
    %v5769 = vpack.c.b16 %v4685, %v4681
    %v5770 = vpack.c.b16 %v4686, %v4682
    %v5771 = vpack.c.b16 %v4691, %v4687
    %v5772 = vpack.c.b16 %v4692, %v4688
    %v5773 = vpack.c.b16 %v4693, %v4689
    %v5774 = vpack.c.b16 %v4694, %v4690
    %v5775 = vpack.c.b16 %v4699, %v4695
    %v5776 = vpack.c.b16 %v4700, %v4696
    %v5777 = vpack.c.b16 %v4701, %v4697
    %v5778 = vpack.c.b16 %v4702, %v4698
    %v5779 = vpack.c.b16 %v4707, %v4703
    %v5780 = vpack.c.b16 %v4708, %v4704
    %v5781 = vpack.c.b16 %v4709, %v4705
    %v5782 = vpack.c.b16 %v4710, %v4706
    %v5783 = vpack.c.b16 %v4715, %v4711
    %v5784 = vpack.c.b16 %v4716, %v4712
    %v5785 = vpack.c.b16 %v4717, %v4713
    %v5786 = vpack.c.b16 %v4718, %v4714
    %v5787 = vpack.c.b16 %v4723, %v4719
    %v5788 = vpack.c.b16 %v4724, %v4720
    %v5789 = vpack.c.b16 %v4725, %v4721
    %v5790 = vpack.c.b16 %v4726, %v4722
    %v5791 = vpack.c.b16 %v4731, %v4727
    %v5792 = vpack.c.b16 %v4732, %v4728
    %v5793 = vpack.c.b16 %v4733, %v4729
    %v5794 = vpack.c.b16 %v4734, %v4730
    %v5795 = vpack.c.b16 %v4739, %v4735
    %v5796 = vpack.c.b16 %v4740, %v4736
    %v5797 = vpack.c.b16 %v4741, %v4737
    %v5798 = vpack.c.b16 %v4742, %v4738
    %v5799 = vpack.c.b16 %v4747, %v4743
    %v5800 = vpack.c.b16 %v4748, %v4744
    %v5801 = vpack.c.b16 %v4749, %v4745
    %v5802 = vpack.c.b16 %v4750, %v4746
    %v5803 = vpack.c.b16 %v4755, %v4751
    %v5804 = vpack.c.b16 %v4756, %v4752
    %v5805 = vpack.c.b16 %v4757, %v4753
    %v5806 = vpack.c.b16 %v4758, %v4754
    %v5807 = vpack.c.b16 %v4763, %v4759
    %v5808 = vpack.c.b16 %v4764, %v4760
    %v5809 = vpack.c.b16 %v4765, %v4761
    %v5810 = vpack.c.b16 %v4766, %v4762
    %v5811 = vpack.c.b16 %v4771, %v4767
    %v5812 = vpack.c.b16 %v4772, %v4768
    %v5813 = vpack.c.b16 %v4773, %v4769
    %v5814 = vpack.c.b16 %v4774, %v4770
    %v5815 = vpack.c.b16 %v4779, %v4775
    %v5816 = vpack.c.b16 %v4780, %v4776
    %v5817 = vpack.c.b16 %v4781, %v4777
    %v5818 = vpack.c.b16 %v4782, %v4778
    %v5819 = vpack.c.b16 %v4787, %v4783
    %v5820 = vpack.c.b16 %v4788, %v4784
    %v5821 = vpack.c.b16 %v4789, %v4785
    %v5822 = vpack.c.b16 %v4790, %v4786
    %v5823 = vpack.c.b16 %v4795, %v4791
    %v5824 = vpack.c.b16 %v4796, %v4792
    %v5825 = vpack.c.b16 %v4797, %v4793
    %v5826 = vpack.c.b16 %v4798, %v4794
    %v5827 = vpack.c.b16 %v4803, %v4799
    %v5828 = vpack.c.b16 %v4804, %v4800
    %v5829 = vpack.c.b16 %v4805, %v4801
    %v5830 = vpack.c.b16 %v4806, %v4802
    %v5831 = vpack.c.b16 %v4811, %v4807
    %v5832 = vpack.c.b16 %v4812, %v4808
    %v5833 = vpack.c.b16 %v4813, %v4809
    %v5834 = vpack.c.b16 %v4814, %v4810
    %v5835 = vpack.c.b16 %v4819, %v4815
    %v5836 = vpack.c.b16 %v4820, %v4816
    %v5837 = vpack.c.b16 %v4821, %v4817
    %v5838 = vpack.c.b16 %v4822, %v4818
    %v5839 = vpack.c.b16 %v4827, %v4823
    %v5840 = vpack.c.b16 %v4828, %v4824
    %v5841 = vpack.c.b16 %v4829, %v4825
    %v5842 = vpack.c.b16 %v4830, %v4826
    %v5843 = vpack.c.b16 %v4835, %v4831
    %v5844 = vpack.c.b16 %v4836, %v4832
    %v5845 = vpack.c.b16 %v4837, %v4833
    %v5846 = vpack.c.b16 %v4838, %v4834
    %v5847 = vpack.c.b16 %v4843, %v4839
    %v5848 = vpack.c.b16 %v4844, %v4840
    %v5849 = vpack.c.b16 %v4845, %v4841
    %v5850 = vpack.c.b16 %v4846, %v4842
    %v5851 = vpack.c.b16 %v4851, %v4847
    %v5852 = vpack.c.b16 %v4852, %v4848
    %v5853 = vpack.c.b16 %v4853, %v4849
    %v5854 = vpack.c.b16 %v4854, %v4850
    %v5855 = vpack.c.b16 %v4859, %v4855
    %v5856 = vpack.c.b16 %v4860, %v4856
    %v5857 = vpack.c.b16 %v4861, %v4857
    %v5858 = vpack.c.b16 %v4862, %v4858
    %v5859 = vpack.c.b16 %v4867, %v4863
    %v5860 = vpack.c.b16 %v4868, %v4864
    %v5861 = vpack.c.b16 %v4869, %v4865
    %v5862 = vpack.c.b16 %v4870, %v4866
    %v5863 = vpack.c.b16 %v4875, %v4871
    %v5864 = vpack.c.b16 %v4876, %v4872
    %v5865 = vpack.c.b16 %v4877, %v4873
    %v5866 = vpack.c.b16 %v4878, %v4874
    %v5867 = vpack.c.b16 %v4883, %v4879
    %v5868 = vpack.c.b16 %v4884, %v4880
    %v5869 = vpack.c.b16 %v4885, %v4881
    %v5870 = vpack.c.b16 %v4886, %v4882
    %v5871 = vpack.c.b16 %v4891, %v4887
    %v5872 = vpack.c.b16 %v4892, %v4888
    %v5873 = vpack.c.b16 %v4893, %v4889
    %v5874 = vpack.c.b16 %v4894, %v4890
    %v5875 = vpack.c.b16 %v4899, %v4895
    %v5876 = vpack.c.b16 %v4900, %v4896
    %v5877 = vpack.c.b16 %v4901, %v4897
    %v5878 = vpack.c.b16 %v4902, %v4898
    %v5879 = vpack.c.b16 %v4907, %v4903
    %v5880 = vpack.c.b16 %v4908, %v4904
    %v5881 = vpack.c.b16 %v4909, %v4905
    %v5882 = vpack.c.b16 %v4910, %v4906
    %v5883 = vpack.c.b16 %v4915, %v4911
    %v5884 = vpack.c.b16 %v4916, %v4912
    %v5885 = vpack.c.b16 %v4917, %v4913
    %v5886 = vpack.c.b16 %v4918, %v4914
    %v5887 = vpack.c.b16 %v4923, %v4919
    %v5888 = vpack.c.b16 %v4924, %v4920
    %v5889 = vpack.c.b16 %v4925, %v4921
    %v5890 = vpack.c.b16 %v4926, %v4922
    %v5891 = vpack.c.b16 %v4931, %v4927
    %v5892 = vpack.c.b16 %v4932, %v4928
    %v5893 = vpack.c.b16 %v4933, %v4929
    %v5894 = vpack.c.b16 %v4934, %v4930
    %v5895 = vpack.c.b16 %v4939, %v4935
    %v5896 = vpack.c.b16 %v4940, %v4936
    %v5897 = vpack.c.b16 %v4941, %v4937
    %v5898 = vpack.c.b16 %v4942, %v4938
    %v5899 = vpack.c.b16 %v4947, %v4943
    %v5900 = vpack.c.b16 %v4948, %v4944
    %v5901 = vpack.c.b16 %v4949, %v4945
    %v5902 = vpack.c.b16 %v4950, %v4946
    %v5903 = vpack.c.b16 %v4955, %v4951
    %v5904 = vpack.c.b16 %v4956, %v4952
    %v5905 = vpack.c.b16 %v4957, %v4953
    %v5906 = vpack.c.b16 %v4958, %v4954
    %v5907 = vpack.c.b16 %v4963, %v4959
    %v5908 = vpack.c.b16 %v4964, %v4960
    %v5909 = vpack.c.b16 %v4965, %v4961
    %v5910 = vpack.c.b16 %v4966, %v4962
    %v5911 = vpack.c.b16 %v4971, %v4967
    %v5912 = vpack.c.b16 %v4972, %v4968
    %v5913 = vpack.c.b16 %v4973, %v4969
    %v5914 = vpack.c.b16 %v4974, %v4970
    %v5915 = vpack.c.b16 %v4979, %v4975
    %v5916 = vpack.c.b16 %v4980, %v4976
    %v5917 = vpack.c.b16 %v4981, %v4977
    %v5918 = vpack.c.b16 %v4982, %v4978
    %v5919 = vpack.c.b16 %v4987, %v4983
    %v5920 = vpack.c.b16 %v4988, %v4984
    %v5921 = vpack.c.b16 %v4989, %v4985
    %v5922 = vpack.c.b16 %v4990, %v4986
    %v5923 = vpack.c.b16 %v4995, %v4991
    %v5924 = vpack.c.b16 %v4996, %v4992
    %v5925 = vpack.c.b16 %v4997, %v4993
    %v5926 = vpack.c.b16 %v4998, %v4994
    %v5927 = vpack.c.b16 %v5003, %v4999
    %v5928 = vpack.c.b16 %v5004, %v5000
    %v5929 = vpack.c.b16 %v5005, %v5001
    %v5930 = vpack.c.b16 %v5006, %v5002
    %v5931 = vpack.c.b16 %v5011, %v5007
    %v5932 = vpack.c.b16 %v5012, %v5008
    %v5933 = vpack.c.b16 %v5013, %v5009
    %v5934 = vpack.c.b16 %v5014, %v5010
    %v5935 = vpack.c.b16 %v5019, %v5015
    %v5936 = vpack.c.b16 %v5020, %v5016
    %v5937 = vpack.c.b16 %v5021, %v5017
    %v5938 = vpack.c.b16 %v5022, %v5018
    %v5939 = vpack.c.b16 %v5027, %v5023
    %v5940 = vpack.c.b16 %v5028, %v5024
    %v5941 = vpack.c.b16 %v5029, %v5025
    %v5942 = vpack.c.b16 %v5030, %v5026
    %v5943 = vpack.c.b16 %v5035, %v5031
    %v5944 = vpack.c.b16 %v5036, %v5032
    %v5945 = vpack.c.b16 %v5037, %v5033
    %v5946 = vpack.c.b16 %v5038, %v5034
    %v5947 = vpack.c.b16 %v5043, %v5039
    %v5948 = vpack.c.b16 %v5044, %v5040
    %v5949 = vpack.c.b16 %v5045, %v5041
    %v5950 = vpack.c.b16 %v5046, %v5042
    %v5951 = vpack.c.b16 %v5051, %v5047
    %v5952 = vpack.c.b16 %v5052, %v5048
    %v5953 = vpack.c.b16 %v5053, %v5049
    %v5954 = vpack.c.b16 %v5054, %v5050
    %v5955 = vpack.c.b16 %v5059, %v5055
    %v5956 = vpack.c.b16 %v5060, %v5056
    %v5957 = vpack.c.b16 %v5061, %v5057
    %v5958 = vpack.c.b16 %v5062, %v5058
    %v5959 = vpack.c.b16 %v5067, %v5063
    %v5960 = vpack.c.b16 %v5068, %v5064
    %v5961 = vpack.c.b16 %v5069, %v5065
    %v5962 = vpack.c.b16 %v5070, %v5066
    %v5963 = vpack.c.b16 %v5075, %v5071
    %v5964 = vpack.c.b16 %v5076, %v5072
    %v5965 = vpack.c.b16 %v5077, %v5073
    %v5966 = vpack.c.b16 %v5078, %v5074
    %v5967 = vpack.c.b16 %v5083, %v5079
    %v5968 = vpack.c.b16 %v5084, %v5080
    %v5969 = vpack.c.b16 %v5085, %v5081
    %v5970 = vpack.c.b16 %v5086, %v5082
    %v5971 = vpack.c.b16 %v5091, %v5087
    %v5972 = vpack.c.b16 %v5092, %v5088
    %v5973 = vpack.c.b16 %v5093, %v5089
    %v5974 = vpack.c.b16 %v5094, %v5090
    %v5975 = vpack.c.b16 %v5099, %v5095
    %v5976 = vpack.c.b16 %v5100, %v5096
    %v5977 = vpack.c.b16 %v5101, %v5097
    %v5978 = vpack.c.b16 %v5102, %v5098
    %v5979 = vpack.c.b16 %v5107, %v5103
    %v5980 = vpack.c.b16 %v5108, %v5104
    %v5981 = vpack.c.b16 %v5109, %v5105
    %v5982 = vpack.c.b16 %v5110, %v5106
    %v5983 = vpack.c.b16 %v5115, %v5111
    %v5984 = vpack.c.b16 %v5116, %v5112
    %v5985 = vpack.c.b16 %v5117, %v5113
    %v5986 = vpack.c.b16 %v5118, %v5114
    %v5987 = vpack.c.b16 %v5123, %v5119
    %v5988 = vpack.c.b16 %v5124, %v5120
    %v5989 = vpack.c.b16 %v5125, %v5121
    %v5990 = vpack.c.b16 %v5126, %v5122
    %v5991 = vpack.c.b16 %v5131, %v5127
    %v5992 = vpack.c.b16 %v5132, %v5128
    %v5993 = vpack.c.b16 %v5133, %v5129
    %v5994 = vpack.c.b16 %v5134, %v5130
    %v5995 = vpack.c.b16 %v5139, %v5135
    %v5996 = vpack.c.b16 %v5140, %v5136
    %v5997 = vpack.c.b16 %v5141, %v5137
    %v5998 = vpack.c.b16 %v5142, %v5138
    %v5999 = vpack.c.b16 %v5147, %v5143
    %v6000 = vpack.c.b16 %v5148, %v5144
    %v6001 = vpack.c.b16 %v5149, %v5145
    %v6002 = vpack.c.b16 %v5150, %v5146
    %v6003 = vpack.c.b16 %v5155, %v5151
    %v6004 = vpack.c.b16 %v5156, %v5152
    %v6005 = vpack.c.b16 %v5157, %v5153
    %v6006 = vpack.c.b16 %v5158, %v5154
    %v6007 = vpack.c.b16 %v5163, %v5159
    %v6008 = vpack.c.b16 %v5164, %v5160
    %v6009 = vpack.c.b16 %v5165, %v5161
    %v6010 = vpack.c.b16 %v5166, %v5162
    %v6011 = vpack.c.b16 %v5171, %v5167
    %v6012 = vpack.c.b16 %v5172, %v5168
    %v6013 = vpack.c.b16 %v5173, %v5169
    %v6014 = vpack.c.b16 %v5174, %v5170
    %v6015 = vpack.c.b16 %v5179, %v5175
    %v6016 = vpack.c.b16 %v5180, %v5176
    %v6017 = vpack.c.b16 %v5181, %v5177
    %v6018 = vpack.c.b16 %v5182, %v5178
    %v6019 = vpack.c.b16 %v5187, %v5183
    %v6020 = vpack.c.b16 %v5188, %v5184
    %v6021 = vpack.c.b16 %v5189, %v5185
    %v6022 = vpack.c.b16 %v5190, %v5186
    %v6023 = vpack.c.b16 %v5195, %v5191
    %v6024 = vpack.c.b16 %v5196, %v5192
    %v6025 = vpack.c.b16 %v5197, %v5193
    %v6026 = vpack.c.b16 %v5198, %v5194
    %v6027 = vpack.c.b16 %v5203, %v5199
    %v6028 = vpack.c.b16 %v5204, %v5200
    %v6029 = vpack.c.b16 %v5205, %v5201
    %v6030 = vpack.c.b16 %v5206, %v5202
    %v6031 = vpack.c.b16 %v5211, %v5207
    %v6032 = vpack.c.b16 %v5212, %v5208
    %v6033 = vpack.c.b16 %v5213, %v5209
    %v6034 = vpack.c.b16 %v5214, %v5210
    %v6035 = vpack.c.b16 %v5219, %v5215
    %v6036 = vpack.c.b16 %v5220, %v5216
    %v6037 = vpack.c.b16 %v5221, %v5217
    %v6038 = vpack.c.b16 %v5222, %v5218
    %v6039 = vpack.c.b16 %v5227, %v5223
    %v6040 = vpack.c.b16 %v5228, %v5224
    %v6041 = vpack.c.b16 %v5229, %v5225
    %v6042 = vpack.c.b16 %v5230, %v5226
    %v6043 = vpack.c.b16 %v5235, %v5231
    %v6044 = vpack.c.b16 %v5236, %v5232
    %v6045 = vpack.c.b16 %v5237, %v5233
    %v6046 = vpack.c.b16 %v5238, %v5234
    %v6047 = vpack.c.b16 %v5243, %v5239
    %v6048 = vpack.c.b16 %v5244, %v5240
    %v6049 = vpack.c.b16 %v5245, %v5241
    %v6050 = vpack.c.b16 %v5246, %v5242
    %v6051 = vpack.c.b16 %v5251, %v5247
    %v6052 = vpack.c.b16 %v5252, %v5248
    %v6053 = vpack.c.b16 %v5253, %v5249
    %v6054 = vpack.c.b16 %v5254, %v5250
    %v6055 = vpack.c.b16 %v5259, %v5255
    %v6056 = vpack.c.b16 %v5260, %v5256
    %v6057 = vpack.c.b16 %v5261, %v5257
    %v6058 = vpack.c.b16 %v5262, %v5258
    %v6059 = vpack.c.b16 %v5267, %v5263
    %v6060 = vpack.c.b16 %v5268, %v5264
    %v6061 = vpack.c.b16 %v5269, %v5265
    %v6062 = vpack.c.b16 %v5270, %v5266
    %v6063 = vpack.c.b16 %v5275, %v5271
    %v6064 = vpack.c.b16 %v5276, %v5272
    %v6065 = vpack.c.b16 %v5277, %v5273
    %v6066 = vpack.c.b16 %v5278, %v5274
    %v6067 = vpack.c.b16 %v5283, %v5279
    %v6068 = vpack.c.b16 %v5284, %v5280
    %v6069 = vpack.c.b16 %v5285, %v5281
    %v6070 = vpack.c.b16 %v5286, %v5282
    %v6071 = vpack.c.b16 %v5291, %v5287
    %v6072 = vpack.c.b16 %v5292, %v5288
    %v6073 = vpack.c.b16 %v5293, %v5289
    %v6074 = vpack.c.b16 %v5294, %v5290
    %v6075 = vpack.c.b16 %v5299, %v5295
    %v6076 = vpack.c.b16 %v5300, %v5296
    %v6077 = vpack.c.b16 %v5301, %v5297
    %v6078 = vpack.c.b16 %v5302, %v5298
    %v6079 = vpack.c.b16 %v5307, %v5303
    %v6080 = vpack.c.b16 %v5308, %v5304
    %v6081 = vpack.c.b16 %v5309, %v5305
    %v6082 = vpack.c.b16 %v5310, %v5306
    %v6083 = vpack.c.b16 %v5315, %v5311
    %v6084 = vpack.c.b16 %v5316, %v5312
    %v6085 = vpack.c.b16 %v5317, %v5313
    %v6086 = vpack.c.b16 %v5318, %v5314
    %v6087 = vpack.c.b16 %v5323, %v5319
    %v6088 = vpack.c.b16 %v5324, %v5320
    %v6089 = vpack.c.b16 %v5325, %v5321
    %v6090 = vpack.c.b16 %v5326, %v5322
    %v6091 = vpack.c.b16 %v5331, %v5327
    %v6092 = vpack.c.b16 %v5332, %v5328
    %v6093 = vpack.c.b16 %v5333, %v5329
    %v6094 = vpack.c.b16 %v5334, %v5330
    %v6095 = vpack.c.b16 %v5339, %v5335
    %v6096 = vpack.c.b16 %v5340, %v5336
    %v6097 = vpack.c.b16 %v5341, %v5337
    %v6098 = vpack.c.b16 %v5342, %v5338
    %v6099 = vpack.c.b16 %v5347, %v5343
    %v6100 = vpack.c.b16 %v5348, %v5344
    %v6101 = vpack.c.b16 %v5349, %v5345
    %v6102 = vpack.c.b16 %v5350, %v5346
    %v6103 = vpack.c.b16 %v5355, %v5351
    %v6104 = vpack.c.b16 %v5356, %v5352
    %v6105 = vpack.c.b16 %v5357, %v5353
    %v6106 = vpack.c.b16 %v5358, %v5354
    %v6107 = vpack.c.b16 %v5363, %v5359
    %v6108 = vpack.c.b16 %v5364, %v5360
    %v6109 = vpack.c.b16 %v5365, %v5361
    %v6110 = vpack.c.b16 %v5366, %v5362
    %v6111 = vpack.c.b16 %v5371, %v5367
    %v6112 = vpack.c.b16 %v5372, %v5368
    %v6113 = vpack.c.b16 %v5373, %v5369
    %v6114 = vpack.c.b16 %v5374, %v5370
    %v6115 = vpack.c.b16 %v5379, %v5375
    %v6116 = vpack.c.b16 %v5380, %v5376
    %v6117 = vpack.c.b16 %v5381, %v5377
    %v6118 = vpack.c.b16 %v5382, %v5378
    %v6119 = vpack.c.b16 %v5387, %v5383
    %v6120 = vpack.c.b16 %v5388, %v5384
    %v6121 = vpack.c.b16 %v5389, %v5385
    %v6122 = vpack.c.b16 %v5390, %v5386
    %v6123 = vpack.c.b16 %v5395, %v5391
    %v6124 = vpack.c.b16 %v5396, %v5392
    %v6125 = vpack.c.b16 %v5397, %v5393
    %v6126 = vpack.c.b16 %v5398, %v5394
    %v6127 = vpack.c.b16 %v5403, %v5399
    %v6128 = vpack.c.b16 %v5404, %v5400
    %v6129 = vpack.c.b16 %v5405, %v5401
    %v6130 = vpack.c.b16 %v5406, %v5402
    %v6131 = vpack.c.b16 %v5411, %v5407
    %v6132 = vpack.c.b16 %v5412, %v5408
    %v6133 = vpack.c.b16 %v5413, %v5409
    %v6134 = vpack.c.b16 %v5414, %v5410
    %v6135 = vpack.c.b16 %v5419, %v5415
    %v6136 = vpack.c.b16 %v5420, %v5416
    %v6137 = vpack.c.b16 %v5421, %v5417
    %v6138 = vpack.c.b16 %v5422, %v5418
    %v6139 = vpack.c.b16 %v5427, %v5423
    %v6140 = vpack.c.b16 %v5428, %v5424
    %v6141 = vpack.c.b16 %v5429, %v5425
    %v6142 = vpack.c.b16 %v5430, %v5426
    %v6143 = vpack.c.b16 %v5435, %v5431
    %v6144 = vpack.c.b16 %v5436, %v5432
    %v6145 = vpack.c.b16 %v5437, %v5433
    %v6146 = vpack.c.b16 %v5438, %v5434
    %v6147 = vpack.c.b16 %v5443, %v5439
    %v6148 = vpack.c.b16 %v5444, %v5440
    %v6149 = vpack.c.b16 %v5445, %v5441
    %v6150 = vpack.c.b16 %v5446, %v5442
    %v6151 = vpack.c.b16 %v5451, %v5447
    %v6152 = vpack.c.b16 %v5452, %v5448
    %v6153 = vpack.c.b16 %v5453, %v5449
    %v6154 = vpack.c.b16 %v5454, %v5450
    %v6155 = vpack.c.b16 %v5459, %v5455
    %v6156 = vpack.c.b16 %v5460, %v5456
    %v6157 = vpack.c.b16 %v5461, %v5457
    %v6158 = vpack.c.b16 %v5462, %v5458
    %v6159 = vpack.c.b16 %v5467, %v5463
    %v6160 = vpack.c.b16 %v5468, %v5464
    %v6161 = vpack.c.b16 %v5469, %v5465
    %v6162 = vpack.c.b16 %v5470, %v5466
    %v6163 = vpack.c.b16 %v5475, %v5471
    %v6164 = vpack.c.b16 %v5476, %v5472
    %v6165 = vpack.c.b16 %v5477, %v5473
    %v6166 = vpack.c.b16 %v5478, %v5474
    %v6167 = vpack.c.b16 %v5483, %v5479
    %v6168 = vpack.c.b16 %v5484, %v5480
    %v6169 = vpack.c.b16 %v5485, %v5481
    %v6170 = vpack.c.b16 %v5486, %v5482
    %v6171 = vpack.c.b16 %v5491, %v5487
    %v6172 = vpack.c.b16 %v5492, %v5488
    %v6173 = vpack.c.b16 %v5493, %v5489
    %v6174 = vpack.c.b16 %v5494, %v5490
    %v6175 = vpack.c.b16 %v5499, %v5495
    %v6176 = vpack.c.b16 %v5500, %v5496
    %v6177 = vpack.c.b16 %v5501, %v5497
    %v6178 = vpack.c.b16 %v5502, %v5498
    %v6179 = vpack.c.b16 %v5507, %v5503
    %v6180 = vpack.c.b16 %v5508, %v5504
    %v6181 = vpack.c.b16 %v5509, %v5505
    %v6182 = vpack.c.b16 %v5510, %v5506
    %v6183 = vpack.c.b16 %v5515, %v5511
    %v6184 = vpack.c.b16 %v5516, %v5512
    %v6185 = vpack.c.b16 %v5517, %v5513
    %v6186 = vpack.c.b16 %v5518, %v5514
    %v6187 = vpack.c.b16 %v5523, %v5519
    %v6188 = vpack.c.b16 %v5524, %v5520
    %v6189 = vpack.c.b16 %v5525, %v5521
    %v6190 = vpack.c.b16 %v5526, %v5522
    %v6191 = vpack.c.b16 %v5531, %v5527
    %v6192 = vpack.c.b16 %v5532, %v5528
    %v6193 = vpack.c.b16 %v5533, %v5529
    %v6194 = vpack.c.b16 %v5534, %v5530
    %v6195 = vpack.c.b16 %v5539, %v5535
    %v6196 = vpack.c.b16 %v5540, %v5536
    %v6197 = vpack.c.b16 %v5541, %v5537
    %v6198 = vpack.c.b16 %v5542, %v5538
    %v6199 = vpack.c.b16 %v5547, %v5543
    %v6200 = vpack.c.b16 %v5548, %v5544
    %v6201 = vpack.c.b16 %v5549, %v5545
    %v6202 = vpack.c.b16 %v5550, %v5546
    %v6203 = vpack.c.b16 %v5555, %v5551
    %v6204 = vpack.c.b16 %v5556, %v5552
    %v6205 = vpack.c.b16 %v5557, %v5553
    %v6206 = vpack.c.b16 %v5558, %v5554
    %v6207 = vpack.c.b16 %v5563, %v5559
    %v6208 = vpack.c.b16 %v5564, %v5560
    %v6209 = vpack.c.b16 %v5565, %v5561
    %v6210 = vpack.c.b16 %v5566, %v5562
    %v6211 = vpack.c.b16 %v5571, %v5567
    %v6212 = vpack.c.b16 %v5572, %v5568
    %v6213 = vpack.c.b16 %v5573, %v5569
    %v6214 = vpack.c.b16 %v5574, %v5570
    %v6215 = vpack.c.b16 %v5579, %v5575
    %v6216 = vpack.c.b16 %v5580, %v5576
    %v6217 = vpack.c.b16 %v5581, %v5577
    %v6218 = vpack.c.b16 %v5582, %v5578
    %v6219 = vpack.c.b16 %v5587, %v5583
    %v6220 = vpack.c.b16 %v5588, %v5584
    %v6221 = vpack.c.b16 %v5589, %v5585
    %v6222 = vpack.c.b16 %v5590, %v5586
    %v6223 = vpack.c.b16 %v5595, %v5591
    %v6224 = vpack.c.b16 %v5596, %v5592
    %v6225 = vpack.c.b16 %v5597, %v5593
    %v6226 = vpack.c.b16 %v5598, %v5594
    %v6227 = vpack.c.b16 %v5603, %v5599
    %v6228 = vpack.c.b16 %v5604, %v5600
    %v6229 = vpack.c.b16 %v5605, %v5601
    %v6230 = vpack.c.b16 %v5606, %v5602
    %v6231 = vpack.c.b16 %v5611, %v5607
    %v6232 = vpack.c.b16 %v5612, %v5608
    %v6233 = vpack.c.b16 %v5613, %v5609
    %v6234 = vpack.c.b16 %v5614, %v5610
    %v6235 = vpack.c.b16 %v5619, %v5615
    %v6236 = vpack.c.b16 %v5620, %v5616
    %v6237 = vpack.c.b16 %v5621, %v5617
    %v6238 = vpack.c.b16 %v5622, %v5618
    %v6239 = vpack.c.b16 %v5627, %v5623
    %v6240 = vpack.c.b16 %v5628, %v5624
    %v6241 = vpack.c.b16 %v5629, %v5625
    %v6242 = vpack.c.b16 %v5630, %v5626
    %v6243 = vpack.c.b16 %v5635, %v5631
    %v6244 = vpack.c.b16 %v5636, %v5632
    %v6245 = vpack.c.b16 %v5637, %v5633
    %v6246 = vpack.c.b16 %v5638, %v5634
    %v6247 = vpack.c.b16 %v5643, %v5639
    %v6248 = vpack.c.b16 %v5644, %v5640
    %v6249 = vpack.c.b16 %v5645, %v5641
    %v6250 = vpack.c.b16 %v5646, %v5642
    %v6251 = vpack.c.b16 %v5651, %v5647
    %v6252 = vpack.c.b16 %v5652, %v5648
    %v6253 = vpack.c.b16 %v5653, %v5649
    %v6254 = vpack.c.b16 %v5654, %v5650
    %v6255 = vpack.c.b16 %v5659, %v5655
    %v6256 = vpack.c.b16 %v5660, %v5656
    %v6257 = vpack.c.b16 %v5661, %v5657
    %v6258 = vpack.c.b16 %v5662, %v5658
    %v6259 = vpack.c.b16 %v5667, %v5663
    %v6260 = vpack.c.b16 %v5668, %v5664
    %v6261 = vpack.c.b16 %v5669, %v5665
    %v6262 = vpack.c.b16 %v5670, %v5666
    %v6263 = vpack.c.b16 %v5675, %v5671
    %v6264 = vpack.c.b16 %v5676, %v5672
    %v6265 = vpack.c.b16 %v5677, %v5673
    %v6266 = vpack.c.b16 %v5678, %v5674
    %v6267 = vpack.c.b16 %v5683, %v5679
    %v6268 = vpack.c.b16 %v5684, %v5680
    %v6269 = vpack.c.b16 %v5685, %v5681
    %v6270 = vpack.c.b16 %v5686, %v5682
    %v6271 = vpack.c.b16 %v5691, %v5687
    %v6272 = vpack.c.b16 %v5692, %v5688
    %v6273 = vpack.c.b16 %v5693, %v5689
    %v6274 = vpack.c.b16 %v5694, %v5690
    %v6275 = vpack.c.b16 %v5699, %v5695
    %v6276 = vpack.c.b16 %v5700, %v5696
    %v6277 = vpack.c.b16 %v5701, %v5697
    %v6278 = vpack.c.b16 %v5702, %v5698
    %6855 = vmatprep.subr.bf16.mxu0 %v5732
    %6856 = vmatpush1.bf16.msra.mxu0 %v5731
    %6857 = vmatprep.subr.bf16.mxu0 %v5728
    %6858 = vmatpush1.bf16.msra.mxu0 %v5727
    %6859 = vmatprep.subr.bf16.mxu0 %v5724
    %6860 = vmatpush1.bf16.msra.mxu0 %v5723
    %6861 = vmatprep.subr.bf16.mxu0 %v5720
    %6862 = vmatpush1.bf16.msra.mxu0 %v5719
    %6863 = vmatprep.subr.bf16.mxu0 %v5716
    %6864 = vmatpush1.bf16.msra.mxu0 %v5715
    %6865 = vmatprep.subr.bf16.mxu0 %v5712
    %6866 = vmatpush1.bf16.msra.mxu0 %v5711
    %6867 = vmatprep.subr.bf16.mxu0 %v5708
    %6868 = vmatpush1.bf16.msra.mxu0 %v5707
    %6869 = vmatprep.subr.bf16.mxu0 %v5704
    %6870 = vmatpush1.bf16.msra.mxu0 %v5703
    %6871 = vmatprep.subr.bf16.mxu0 %v5764
    %6872 = vmatpush2.bf16.msra.mxu0 %v5763
    %6873 = vmatprep.subr.bf16.mxu0 %v5760
    %6874 = vmatpush2.bf16.msra.mxu0 %v5759
    %6875 = vmatprep.subr.bf16.mxu0 %v5756
    %6876 = vmatpush2.bf16.msra.mxu0 %v5755
    %6877 = vmatprep.subr.bf16.mxu0 %v5752
    %6878 = vmatpush2.bf16.msra.mxu0 %v5751
    %6879 = vmatprep.subr.bf16.mxu0 %v5748
    %6880 = vmatpush2.bf16.msra.mxu0 %v5747
    %6881 = vmatprep.subr.bf16.mxu0 %v5744
    %6882 = vmatpush2.bf16.msra.mxu0 %v5743
    %6883 = vmatprep.subr.bf16.mxu0 %v5740
    %6884 = vmatpush2.bf16.msra.mxu0 %v5739
    %6885 = vmatprep.subr.bf16.mxu0 %v5736
    %6886 = vmatpush2.bf16.msra.mxu0 %v5735
    %6887 = vmatprep.mubr.bf16.mxu0 %v3360
    %6888 = vmatmul.mubr.bf16.gmra.mxu0 %v3359
    %v6889 = vpop.f32.mrf.mxu0
    %v6890 = vadd.f32 %v3958, %v6889
    %v6891 = vpop.f32.mrf.mxu0
    %v6892 = vadd.f32 %v3962, %v6891
    %v6893 = vpop.f32.mrf.mxu0
    %v6894 = vpop.f32.mrf.mxu0
    %6895 = vdwg.mxu0
    %6896 = vmatprep.subr.bf16.mxu0 %v5796
    %6897 = vmatpush1.bf16.msra.mxu0 %v5795
    %6898 = vmatprep.subr.bf16.mxu0 %v5792
    %6899 = vmatpush1.bf16.msra.mxu0 %v5791
    %6900 = vmatprep.subr.bf16.mxu0 %v5788
    %6901 = vmatpush1.bf16.msra.mxu0 %v5787
    %6902 = vmatprep.subr.bf16.mxu0 %v5784
    %6903 = vmatpush1.bf16.msra.mxu0 %v5783
    %6904 = vmatprep.subr.bf16.mxu0 %v5780
    %6905 = vmatpush1.bf16.msra.mxu0 %v5779
    %6906 = vmatprep.subr.bf16.mxu0 %v5776
    %6907 = vmatpush1.bf16.msra.mxu0 %v5775
    %6908 = vmatprep.subr.bf16.mxu0 %v5772
    %6909 = vmatpush1.bf16.msra.mxu0 %v5771
    %6910 = vmatprep.subr.bf16.mxu0 %v5768
    %6911 = vmatpush1.bf16.msra.mxu0 %v5767
    %6912 = vmatprep.subr.bf16.mxu0 %v5828
    %6913 = vmatpush2.bf16.msra.mxu0 %v5827
    %6914 = vmatprep.subr.bf16.mxu0 %v5824
    %6915 = vmatpush2.bf16.msra.mxu0 %v5823
    %6916 = vmatprep.subr.bf16.mxu0 %v5820
    %6917 = vmatpush2.bf16.msra.mxu0 %v5819
    %6918 = vmatprep.subr.bf16.mxu0 %v5816
    %6919 = vmatpush2.bf16.msra.mxu0 %v5815
    %6920 = vmatprep.subr.bf16.mxu0 %v5812
    %6921 = vmatpush2.bf16.msra.mxu0 %v5811
    %6922 = vmatprep.subr.bf16.mxu0 %v5808
    %6923 = vmatpush2.bf16.msra.mxu0 %v5807
    %6924 = vmatprep.subr.bf16.mxu0 %v5804
    %6925 = vmatpush2.bf16.msra.mxu0 %v5803
    %6926 = vmatprep.subr.bf16.mxu0 %v5800
    %6927 = vmatpush2.bf16.msra.mxu0 %v5799
    %6928 = vmatprep.mubr.bf16.mxu0 %v3362
    %6929 = vmatmul.mubr.bf16.gmra.mxu0 %v3361
    %v6930 = vpop.f32.mrf.mxu0
    %v6931 = vadd.f32 %v6890, %v6930
    %v6932 = vpop.f32.mrf.mxu0
    %v6933 = vadd.f32 %v6892, %v6932
    %v6934 = vpop.f32.mrf.mxu0
    %v6935 = vpop.f32.mrf.mxu0
    %6936 = vdwg.mxu0
    %6937 = vmatprep.subr.bf16.mxu0 %v5860
    %6938 = vmatpush1.bf16.msra.mxu0 %v5859
    %6939 = vmatprep.subr.bf16.mxu0 %v5856
    %6940 = vmatpush1.bf16.msra.mxu0 %v5855
    %6941 = vmatprep.subr.bf16.mxu0 %v5852
    %6942 = vmatpush1.bf16.msra.mxu0 %v5851
    %6943 = vmatprep.subr.bf16.mxu0 %v5848
    %6944 = vmatpush1.bf16.msra.mxu0 %v5847
    %6945 = vmatprep.subr.bf16.mxu0 %v5844
    %6946 = vmatpush1.bf16.msra.mxu0 %v5843
    %6947 = vmatprep.subr.bf16.mxu0 %v5840
    %6948 = vmatpush1.bf16.msra.mxu0 %v5839
    %6949 = vmatprep.subr.bf16.mxu0 %v5836
    %6950 = vmatpush1.bf16.msra.mxu0 %v5835
    %6951 = vmatprep.subr.bf16.mxu0 %v5832
    %6952 = vmatpush1.bf16.msra.mxu0 %v5831
    %6953 = vmatprep.subr.bf16.mxu0 %v5892
    %6954 = vmatpush2.bf16.msra.mxu0 %v5891
    %6955 = vmatprep.subr.bf16.mxu0 %v5888
    %6956 = vmatpush2.bf16.msra.mxu0 %v5887
    %6957 = vmatprep.subr.bf16.mxu0 %v5884
    %6958 = vmatpush2.bf16.msra.mxu0 %v5883
    %6959 = vmatprep.subr.bf16.mxu0 %v5880
    %6960 = vmatpush2.bf16.msra.mxu0 %v5879
    %6961 = vmatprep.subr.bf16.mxu0 %v5876
    %6962 = vmatpush2.bf16.msra.mxu0 %v5875
    %6963 = vmatprep.subr.bf16.mxu0 %v5872
    %6964 = vmatpush2.bf16.msra.mxu0 %v5871
    %6965 = vmatprep.subr.bf16.mxu0 %v5868
    %6966 = vmatpush2.bf16.msra.mxu0 %v5867
    %6967 = vmatprep.subr.bf16.mxu0 %v5864
    %6968 = vmatpush2.bf16.msra.mxu0 %v5863
    %6969 = vmatprep.mubr.bf16.mxu0 %v3364
    %6970 = vmatmul.mubr.bf16.gmra.mxu0 %v3363
    %v6971 = vpop.f32.mrf.mxu0
    %v6972 = vadd.f32 %v6931, %v6971
    %v6973 = vpop.f32.mrf.mxu0
    %v6974 = vadd.f32 %v6933, %v6973
    %v6975 = vpop.f32.mrf.mxu0
    %v6976 = vpop.f32.mrf.mxu0
    %6977 = vdwg.mxu0
    %6978 = vmatprep.subr.bf16.mxu0 %v5924
    %6979 = vmatpush1.bf16.msra.mxu0 %v5923
    %6980 = vmatprep.subr.bf16.mxu0 %v5920
    %6981 = vmatpush1.bf16.msra.mxu0 %v5919
    %6982 = vmatprep.subr.bf16.mxu0 %v5916
    %6983 = vmatpush1.bf16.msra.mxu0 %v5915
    %6984 = vmatprep.subr.bf16.mxu0 %v5912
    %6985 = vmatpush1.bf16.msra.mxu0 %v5911
    %6986 = vmatprep.subr.bf16.mxu0 %v5908
    %6987 = vmatpush1.bf16.msra.mxu0 %v5907
    %6988 = vmatprep.subr.bf16.mxu0 %v5904
    %6989 = vmatpush1.bf16.msra.mxu0 %v5903
    %6990 = vmatprep.subr.bf16.mxu0 %v5900
    %6991 = vmatpush1.bf16.msra.mxu0 %v5899
    %6992 = vmatprep.subr.bf16.mxu0 %v5896
    %6993 = vmatpush1.bf16.msra.mxu0 %v5895
    %6994 = vmatprep.subr.bf16.mxu0 %v5956
    %6995 = vmatpush2.bf16.msra.mxu0 %v5955
    %6996 = vmatprep.subr.bf16.mxu0 %v5952
    %6997 = vmatpush2.bf16.msra.mxu0 %v5951
    %6998 = vmatprep.subr.bf16.mxu0 %v5948
    %6999 = vmatpush2.bf16.msra.mxu0 %v5947
    %7000 = vmatprep.subr.bf16.mxu0 %v5944
    %7001 = vmatpush2.bf16.msra.mxu0 %v5943
    %7002 = vmatprep.subr.bf16.mxu0 %v5940
    %7003 = vmatpush2.bf16.msra.mxu0 %v5939
    %7004 = vmatprep.subr.bf16.mxu0 %v5936
    %7005 = vmatpush2.bf16.msra.mxu0 %v5935
    %7006 = vmatprep.subr.bf16.mxu0 %v5932
    %7007 = vmatpush2.bf16.msra.mxu0 %v5931
    %7008 = vmatprep.subr.bf16.mxu0 %v5928
    %7009 = vmatpush2.bf16.msra.mxu0 %v5927
    %7010 = vmatprep.mubr.bf16.mxu0 %v3366
    %7011 = vmatmul.mubr.bf16.gmra.mxu0 %v3365
    %v7012 = vpop.f32.mrf.mxu0
    %v7013 = vadd.f32 %v6972, %v7012
    %v7014 = vpop.f32.mrf.mxu0
    %v7015 = vadd.f32 %v6974, %v7014
    %v7016 = vpop.f32.mrf.mxu0
    %v7017 = vpop.f32.mrf.mxu0
    %7018 = vdwg.mxu0
    %7019 = vmatprep.subr.bf16.mxu0 %v5988
    %7020 = vmatpush1.bf16.msra.mxu0 %v5987
    %7021 = vmatprep.subr.bf16.mxu0 %v5984
    %7022 = vmatpush1.bf16.msra.mxu0 %v5983
    %7023 = vmatprep.subr.bf16.mxu0 %v5980
    %7024 = vmatpush1.bf16.msra.mxu0 %v5979
    %7025 = vmatprep.subr.bf16.mxu0 %v5976
    %7026 = vmatpush1.bf16.msra.mxu0 %v5975
    %7027 = vmatprep.subr.bf16.mxu0 %v5972
    %7028 = vmatpush1.bf16.msra.mxu0 %v5971
    %7029 = vmatprep.subr.bf16.mxu0 %v5968
    %7030 = vmatpush1.bf16.msra.mxu0 %v5967
    %7031 = vmatprep.subr.bf16.mxu0 %v5964
    %7032 = vmatpush1.bf16.msra.mxu0 %v5963
    %7033 = vmatprep.subr.bf16.mxu0 %v5960
    %7034 = vmatpush1.bf16.msra.mxu0 %v5959
    %7035 = vmatprep.subr.bf16.mxu0 %v6020
    %7036 = vmatpush2.bf16.msra.mxu0 %v6019
    %7037 = vmatprep.subr.bf16.mxu0 %v6016
    %7038 = vmatpush2.bf16.msra.mxu0 %v6015
    %7039 = vmatprep.subr.bf16.mxu0 %v6012
    %7040 = vmatpush2.bf16.msra.mxu0 %v6011
    %7041 = vmatprep.subr.bf16.mxu0 %v6008
    %7042 = vmatpush2.bf16.msra.mxu0 %v6007
    %7043 = vmatprep.subr.bf16.mxu0 %v6004
    %7044 = vmatpush2.bf16.msra.mxu0 %v6003
    %7045 = vmatprep.subr.bf16.mxu0 %v6000
    %7046 = vmatpush2.bf16.msra.mxu0 %v5999
    %7047 = vmatprep.subr.bf16.mxu0 %v5996
    %7048 = vmatpush2.bf16.msra.mxu0 %v5995
    %7049 = vmatprep.subr.bf16.mxu0 %v5992
    %7050 = vmatpush2.bf16.msra.mxu0 %v5991
    %7051 = vmatprep.mubr.bf16.mxu0 %v3368
    %7052 = vmatmul.mubr.bf16.gmra.mxu0 %v3367
    %v7053 = vpop.f32.mrf.mxu0
    %v7054 = vadd.f32 %v7013, %v7053
    %v7055 = vpop.f32.mrf.mxu0
    %v7056 = vadd.f32 %v7015, %v7055
    %v7057 = vpop.f32.mrf.mxu0
    %v7058 = vpop.f32.mrf.mxu0
    %7059 = vdwg.mxu0
    %7060 = vmatprep.subr.bf16.mxu0 %v6052
    %7061 = vmatpush1.bf16.msra.mxu0 %v6051
    %7062 = vmatprep.subr.bf16.mxu0 %v6048
    %7063 = vmatpush1.bf16.msra.mxu0 %v6047
    %7064 = vmatprep.subr.bf16.mxu0 %v6044
    %7065 = vmatpush1.bf16.msra.mxu0 %v6043
    %7066 = vmatprep.subr.bf16.mxu0 %v6040
    %7067 = vmatpush1.bf16.msra.mxu0 %v6039
    %7068 = vmatprep.subr.bf16.mxu0 %v6036
    %7069 = vmatpush1.bf16.msra.mxu0 %v6035
    %7070 = vmatprep.subr.bf16.mxu0 %v6032
    %7071 = vmatpush1.bf16.msra.mxu0 %v6031
    %7072 = vmatprep.subr.bf16.mxu0 %v6028
    %7073 = vmatpush1.bf16.msra.mxu0 %v6027
    %7074 = vmatprep.subr.bf16.mxu0 %v6024
    %7075 = vmatpush1.bf16.msra.mxu0 %v6023
    %7076 = vmatprep.subr.bf16.mxu0 %v6084
    %7077 = vmatpush2.bf16.msra.mxu0 %v6083
    %7078 = vmatprep.subr.bf16.mxu0 %v6080
    %7079 = vmatpush2.bf16.msra.mxu0 %v6079
    %7080 = vmatprep.subr.bf16.mxu0 %v6076
    %7081 = vmatpush2.bf16.msra.mxu0 %v6075
    %7082 = vmatprep.subr.bf16.mxu0 %v6072
    %7083 = vmatpush2.bf16.msra.mxu0 %v6071
    %7084 = vmatprep.subr.bf16.mxu0 %v6068
    %7085 = vmatpush2.bf16.msra.mxu0 %v6067
    %7086 = vmatprep.subr.bf16.mxu0 %v6064
    %7087 = vmatpush2.bf16.msra.mxu0 %v6063
    %7088 = vmatprep.subr.bf16.mxu0 %v6060
    %7089 = vmatpush2.bf16.msra.mxu0 %v6059
    %7090 = vmatprep.subr.bf16.mxu0 %v6056
    %7091 = vmatpush2.bf16.msra.mxu0 %v6055
    %7092 = vmatprep.mubr.bf16.mxu0 %v3370
    %7093 = vmatmul.mubr.bf16.gmra.mxu0 %v3369
    %v7094 = vpop.f32.mrf.mxu0
    %v7095 = vadd.f32 %v7054, %v7094
    %v7096 = vpop.f32.mrf.mxu0
    %v7097 = vadd.f32 %v7056, %v7096
    %v7098 = vpop.f32.mrf.mxu0
    %v7099 = vpop.f32.mrf.mxu0
    %7100 = vdwg.mxu0
    %7101 = vmatprep.subr.bf16.mxu0 %v6116
    %7102 = vmatpush1.bf16.msra.mxu0 %v6115
    %7103 = vmatprep.subr.bf16.mxu0 %v6112
    %7104 = vmatpush1.bf16.msra.mxu0 %v6111
    %7105 = vmatprep.subr.bf16.mxu0 %v6108
    %7106 = vmatpush1.bf16.msra.mxu0 %v6107
    %7107 = vmatprep.subr.bf16.mxu0 %v6104
    %7108 = vmatpush1.bf16.msra.mxu0 %v6103
    %7109 = vmatprep.subr.bf16.mxu0 %v6100
    %7110 = vmatpush1.bf16.msra.mxu0 %v6099
    %7111 = vmatprep.subr.bf16.mxu0 %v6096
    %7112 = vmatpush1.bf16.msra.mxu0 %v6095
    %7113 = vmatprep.subr.bf16.mxu0 %v6092
    %7114 = vmatpush1.bf16.msra.mxu0 %v6091
    %7115 = vmatprep.subr.bf16.mxu0 %v6088
    %7116 = vmatpush1.bf16.msra.mxu0 %v6087
    %7117 = vmatprep.subr.bf16.mxu0 %v6148
    %7118 = vmatpush2.bf16.msra.mxu0 %v6147
    %7119 = vmatprep.subr.bf16.mxu0 %v6144
    %7120 = vmatpush2.bf16.msra.mxu0 %v6143
    %7121 = vmatprep.subr.bf16.mxu0 %v6140
    %7122 = vmatpush2.bf16.msra.mxu0 %v6139
    %7123 = vmatprep.subr.bf16.mxu0 %v6136
    %7124 = vmatpush2.bf16.msra.mxu0 %v6135
    %7125 = vmatprep.subr.bf16.mxu0 %v6132
    %7126 = vmatpush2.bf16.msra.mxu0 %v6131
    %7127 = vmatprep.subr.bf16.mxu0 %v6128
    %7128 = vmatpush2.bf16.msra.mxu0 %v6127
    %7129 = vmatprep.subr.bf16.mxu0 %v6124
    %7130 = vmatpush2.bf16.msra.mxu0 %v6123
    %7131 = vmatprep.subr.bf16.mxu0 %v6120
    %7132 = vmatpush2.bf16.msra.mxu0 %v6119
    %7133 = vmatprep.mubr.bf16.mxu0 %v3372
    %7134 = vmatmul.mubr.bf16.gmra.mxu0 %v3371
    %v7135 = vpop.f32.mrf.mxu0
    %v7136 = vadd.f32 %v7095, %v7135
    %v7137 = vpop.f32.mrf.mxu0
    %v7138 = vadd.f32 %v7097, %v7137
    %v7139 = vpop.f32.mrf.mxu0
    %v7140 = vpop.f32.mrf.mxu0
    %7141 = vdwg.mxu0
    %7142 = vmatprep.subr.bf16.mxu0 %v6180
    %7143 = vmatpush1.bf16.msra.mxu0 %v6179
    %7144 = vmatprep.subr.bf16.mxu0 %v6176
    %7145 = vmatpush1.bf16.msra.mxu0 %v6175
    %7146 = vmatprep.subr.bf16.mxu0 %v6172
    %7147 = vmatpush1.bf16.msra.mxu0 %v6171
    %7148 = vmatprep.subr.bf16.mxu0 %v6168
    %7149 = vmatpush1.bf16.msra.mxu0 %v6167
    %7150 = vmatprep.subr.bf16.mxu0 %v6164
    %7151 = vmatpush1.bf16.msra.mxu0 %v6163
    %7152 = vmatprep.subr.bf16.mxu0 %v6160
    %7153 = vmatpush1.bf16.msra.mxu0 %v6159
    %7154 = vmatprep.subr.bf16.mxu0 %v6156
    %7155 = vmatpush1.bf16.msra.mxu0 %v6155
    %7156 = vmatprep.subr.bf16.mxu0 %v6152
    %7157 = vmatpush1.bf16.msra.mxu0 %v6151
    %7158 = vmatprep.subr.bf16.mxu0 %v6212
    %7159 = vmatpush2.bf16.msra.mxu0 %v6211
    %7160 = vmatprep.subr.bf16.mxu0 %v6208
    %7161 = vmatpush2.bf16.msra.mxu0 %v6207
    %7162 = vmatprep.subr.bf16.mxu0 %v6204
    %7163 = vmatpush2.bf16.msra.mxu0 %v6203
    %7164 = vmatprep.subr.bf16.mxu0 %v6200
    %7165 = vmatpush2.bf16.msra.mxu0 %v6199
    %7166 = vmatprep.subr.bf16.mxu0 %v6196
    %7167 = vmatpush2.bf16.msra.mxu0 %v6195
    %7168 = vmatprep.subr.bf16.mxu0 %v6192
    %7169 = vmatpush2.bf16.msra.mxu0 %v6191
    %7170 = vmatprep.subr.bf16.mxu0 %v6188
    %7171 = vmatpush2.bf16.msra.mxu0 %v6187
    %7172 = vmatprep.subr.bf16.mxu0 %v6184
    %7173 = vmatpush2.bf16.msra.mxu0 %v6183
    %7174 = vmatprep.mubr.bf16.mxu0 %v3374
    %7175 = vmatmul.mubr.bf16.gmra.mxu0 %v3373
    %v7176 = vpop.f32.mrf.mxu0
    %v7177 = vadd.f32 %v7136, %v7176
    %v7178 = vpop.f32.mrf.mxu0
    %v7179 = vadd.f32 %v7138, %v7178
    %v7180 = vpop.f32.mrf.mxu0
    %v7181 = vpop.f32.mrf.mxu0
    %7182 = vdwg.mxu0
    %7183 = vmatprep.subr.bf16.mxu0 %v6244
    %7184 = vmatpush1.bf16.msra.mxu0 %v6243
    %7185 = vmatprep.subr.bf16.mxu0 %v6240
    %7186 = vmatpush1.bf16.msra.mxu0 %v6239
    %7187 = vmatprep.subr.bf16.mxu0 %v6236
    %7188 = vmatpush1.bf16.msra.mxu0 %v6235
    %7189 = vmatprep.subr.bf16.mxu0 %v6232
    %7190 = vmatpush1.bf16.msra.mxu0 %v6231
    %7191 = vmatprep.subr.bf16.mxu0 %v6228
    %7192 = vmatpush1.bf16.msra.mxu0 %v6227
    %7193 = vmatprep.subr.bf16.mxu0 %v6224
    %7194 = vmatpush1.bf16.msra.mxu0 %v6223
    %7195 = vmatprep.subr.bf16.mxu0 %v6220
    %7196 = vmatpush1.bf16.msra.mxu0 %v6219
    %7197 = vmatprep.subr.bf16.mxu0 %v6216
    %7198 = vmatpush1.bf16.msra.mxu0 %v6215
    %7199 = vmatprep.subr.bf16.mxu0 %v6276
    %7200 = vmatpush2.bf16.msra.mxu0 %v6275
    %7201 = vmatprep.subr.bf16.mxu0 %v6272
    %7202 = vmatpush2.bf16.msra.mxu0 %v6271
    %7203 = vmatprep.subr.bf16.mxu0 %v6268
    %7204 = vmatpush2.bf16.msra.mxu0 %v6267
    %7205 = vmatprep.subr.bf16.mxu0 %v6264
    %7206 = vmatpush2.bf16.msra.mxu0 %v6263
    %7207 = vmatprep.subr.bf16.mxu0 %v6260
    %7208 = vmatpush2.bf16.msra.mxu0 %v6259
    %7209 = vmatprep.subr.bf16.mxu0 %v6256
    %7210 = vmatpush2.bf16.msra.mxu0 %v6255
    %7211 = vmatprep.subr.bf16.mxu0 %v6252
    %7212 = vmatpush2.bf16.msra.mxu0 %v6251
    %7213 = vmatprep.subr.bf16.mxu0 %v6248
    %7214 = vmatpush2.bf16.msra.mxu0 %v6247
    %7215 = vmatprep.mubr.bf16.mxu0 %v3376
    %7216 = vmatmul.mubr.bf16.gmra.mxu0 %v3375
    %v7217 = vpop.f32.mrf.mxu0
    %v7218 = vadd.f32 %v7177, %v7217
    %v7219 = vpop.f32.mrf.mxu0
    %v7220 = vadd.f32 %v7179, %v7219
    %v7221 = vpop.f32.mrf.mxu0
    %v7222 = vpop.f32.mrf.mxu0
    %7223 = vdwg.mxu0
    %7224 = vmatprep.subr.bf16.mxu0 %v5734
    %7225 = vmatpush1.bf16.msra.mxu0 %v5733
    %7226 = vmatprep.subr.bf16.mxu0 %v5730
    %7227 = vmatpush1.bf16.msra.mxu0 %v5729
    %7228 = vmatprep.subr.bf16.mxu0 %v5726
    %7229 = vmatpush1.bf16.msra.mxu0 %v5725
    %7230 = vmatprep.subr.bf16.mxu0 %v5722
    %7231 = vmatpush1.bf16.msra.mxu0 %v5721
    %7232 = vmatprep.subr.bf16.mxu0 %v5718
    %7233 = vmatpush1.bf16.msra.mxu0 %v5717
    %7234 = vmatprep.subr.bf16.mxu0 %v5714
    %7235 = vmatpush1.bf16.msra.mxu0 %v5713
    %7236 = vmatprep.subr.bf16.mxu0 %v5710
    %7237 = vmatpush1.bf16.msra.mxu0 %v5709
    %7238 = vmatprep.subr.bf16.mxu0 %v5706
    %7239 = vmatpush1.bf16.msra.mxu0 %v5705
    %7240 = vmatprep.subr.bf16.mxu0 %v5766
    %7241 = vmatpush2.bf16.msra.mxu0 %v5765
    %7242 = vmatprep.subr.bf16.mxu0 %v5762
    %7243 = vmatpush2.bf16.msra.mxu0 %v5761
    %7244 = vmatprep.subr.bf16.mxu0 %v5758
    %7245 = vmatpush2.bf16.msra.mxu0 %v5757
    %7246 = vmatprep.subr.bf16.mxu0 %v5754
    %7247 = vmatpush2.bf16.msra.mxu0 %v5753
    %7248 = vmatprep.subr.bf16.mxu0 %v5750
    %7249 = vmatpush2.bf16.msra.mxu0 %v5749
    %7250 = vmatprep.subr.bf16.mxu0 %v5746
    %7251 = vmatpush2.bf16.msra.mxu0 %v5745
    %7252 = vmatprep.subr.bf16.mxu0 %v5742
    %7253 = vmatpush2.bf16.msra.mxu0 %v5741
    %7254 = vmatprep.subr.bf16.mxu0 %v5738
    %7255 = vmatpush2.bf16.msra.mxu0 %v5737
    %7256 = vmatprep.mubr.bf16.mxu0 %v3360
    %7257 = vmatmul.mubr.bf16.gmra.mxu0 %v3359
    %v7258 = vpop.f32.mrf.mxu0
    %v7259 = vadd.f32 %v3966, %v7258
    %v7260 = vpop.f32.mrf.mxu0
    %v7261 = vadd.f32 %v3970, %v7260
    %v7262 = vpop.f32.mrf.mxu0
    %v7263 = vpop.f32.mrf.mxu0
    %7264 = vdwg.mxu0
    %7265 = vmatprep.subr.bf16.mxu0 %v5798
    %7266 = vmatpush1.bf16.msra.mxu0 %v5797
    %7267 = vmatprep.subr.bf16.mxu0 %v5794
    %7268 = vmatpush1.bf16.msra.mxu0 %v5793
    %7269 = vmatprep.subr.bf16.mxu0 %v5790
    %7270 = vmatpush1.bf16.msra.mxu0 %v5789
    %7271 = vmatprep.subr.bf16.mxu0 %v5786
    %7272 = vmatpush1.bf16.msra.mxu0 %v5785
    %7273 = vmatprep.subr.bf16.mxu0 %v5782
    %7274 = vmatpush1.bf16.msra.mxu0 %v5781
    %7275 = vmatprep.subr.bf16.mxu0 %v5778
    %7276 = vmatpush1.bf16.msra.mxu0 %v5777
    %7277 = vmatprep.subr.bf16.mxu0 %v5774
    %7278 = vmatpush1.bf16.msra.mxu0 %v5773
    %7279 = vmatprep.subr.bf16.mxu0 %v5770
    %7280 = vmatpush1.bf16.msra.mxu0 %v5769
    %7281 = vmatprep.subr.bf16.mxu0 %v5830
    %7282 = vmatpush2.bf16.msra.mxu0 %v5829
    %7283 = vmatprep.subr.bf16.mxu0 %v5826
    %7284 = vmatpush2.bf16.msra.mxu0 %v5825
    %7285 = vmatprep.subr.bf16.mxu0 %v5822
    %7286 = vmatpush2.bf16.msra.mxu0 %v5821
    %7287 = vmatprep.subr.bf16.mxu0 %v5818
    %7288 = vmatpush2.bf16.msra.mxu0 %v5817
    %7289 = vmatprep.subr.bf16.mxu0 %v5814
    %7290 = vmatpush2.bf16.msra.mxu0 %v5813
    %7291 = vmatprep.subr.bf16.mxu0 %v5810
    %7292 = vmatpush2.bf16.msra.mxu0 %v5809
    %7293 = vmatprep.subr.bf16.mxu0 %v5806
    %7294 = vmatpush2.bf16.msra.mxu0 %v5805
    %7295 = vmatprep.subr.bf16.mxu0 %v5802
    %7296 = vmatpush2.bf16.msra.mxu0 %v5801
    %7297 = vmatprep.mubr.bf16.mxu0 %v3362
    %7298 = vmatmul.mubr.bf16.gmra.mxu0 %v3361
    %v7299 = vpop.f32.mrf.mxu0
    %v7300 = vadd.f32 %v7259, %v7299
    %v7301 = vpop.f32.mrf.mxu0
    %v7302 = vadd.f32 %v7261, %v7301
    %v7303 = vpop.f32.mrf.mxu0
    %v7304 = vpop.f32.mrf.mxu0
    %7305 = vdwg.mxu0
    %7306 = vmatprep.subr.bf16.mxu0 %v5862
    %7307 = vmatpush1.bf16.msra.mxu0 %v5861
    %7308 = vmatprep.subr.bf16.mxu0 %v5858
    %7309 = vmatpush1.bf16.msra.mxu0 %v5857
    %7310 = vmatprep.subr.bf16.mxu0 %v5854
    %7311 = vmatpush1.bf16.msra.mxu0 %v5853
    %7312 = vmatprep.subr.bf16.mxu0 %v5850
    %7313 = vmatpush1.bf16.msra.mxu0 %v5849
    %7314 = vmatprep.subr.bf16.mxu0 %v5846
    %7315 = vmatpush1.bf16.msra.mxu0 %v5845
    %7316 = vmatprep.subr.bf16.mxu0 %v5842
    %7317 = vmatpush1.bf16.msra.mxu0 %v5841
    %7318 = vmatprep.subr.bf16.mxu0 %v5838
    %7319 = vmatpush1.bf16.msra.mxu0 %v5837
    %7320 = vmatprep.subr.bf16.mxu0 %v5834
    %7321 = vmatpush1.bf16.msra.mxu0 %v5833
    %7322 = vmatprep.subr.bf16.mxu0 %v5894
    %7323 = vmatpush2.bf16.msra.mxu0 %v5893
    %7324 = vmatprep.subr.bf16.mxu0 %v5890
    %7325 = vmatpush2.bf16.msra.mxu0 %v5889
    %7326 = vmatprep.subr.bf16.mxu0 %v5886
    %7327 = vmatpush2.bf16.msra.mxu0 %v5885
    %7328 = vmatprep.subr.bf16.mxu0 %v5882
    %7329 = vmatpush2.bf16.msra.mxu0 %v5881
    %7330 = vmatprep.subr.bf16.mxu0 %v5878
    %7331 = vmatpush2.bf16.msra.mxu0 %v5877
    %7332 = vmatprep.subr.bf16.mxu0 %v5874
    %7333 = vmatpush2.bf16.msra.mxu0 %v5873
    %7334 = vmatprep.subr.bf16.mxu0 %v5870
    %7335 = vmatpush2.bf16.msra.mxu0 %v5869
    %7336 = vmatprep.subr.bf16.mxu0 %v5866
    %7337 = vmatpush2.bf16.msra.mxu0 %v5865
    %7338 = vmatprep.mubr.bf16.mxu0 %v3364
    %7339 = vmatmul.mubr.bf16.gmra.mxu0 %v3363
    %v7340 = vpop.f32.mrf.mxu0
    %v7341 = vadd.f32 %v7300, %v7340
    %v7342 = vpop.f32.mrf.mxu0
    %v7343 = vadd.f32 %v7302, %v7342
    %v7344 = vpop.f32.mrf.mxu0
    %v7345 = vpop.f32.mrf.mxu0
    %7346 = vdwg.mxu0
    %7347 = vmatprep.subr.bf16.mxu0 %v5926
    %7348 = vmatpush1.bf16.msra.mxu0 %v5925
    %7349 = vmatprep.subr.bf16.mxu0 %v5922
    %7350 = vmatpush1.bf16.msra.mxu0 %v5921
    %7351 = vmatprep.subr.bf16.mxu0 %v5918
    %7352 = vmatpush1.bf16.msra.mxu0 %v5917
    %7353 = vmatprep.subr.bf16.mxu0 %v5914
    %7354 = vmatpush1.bf16.msra.mxu0 %v5913
    %7355 = vmatprep.subr.bf16.mxu0 %v5910
    %7356 = vmatpush1.bf16.msra.mxu0 %v5909
    %7357 = vmatprep.subr.bf16.mxu0 %v5906
    %7358 = vmatpush1.bf16.msra.mxu0 %v5905
    %7359 = vmatprep.subr.bf16.mxu0 %v5902
    %7360 = vmatpush1.bf16.msra.mxu0 %v5901
    %7361 = vmatprep.subr.bf16.mxu0 %v5898
    %7362 = vmatpush1.bf16.msra.mxu0 %v5897
    %7363 = vmatprep.subr.bf16.mxu0 %v5958
    %7364 = vmatpush2.bf16.msra.mxu0 %v5957
    %7365 = vmatprep.subr.bf16.mxu0 %v5954
    %7366 = vmatpush2.bf16.msra.mxu0 %v5953
    %7367 = vmatprep.subr.bf16.mxu0 %v5950
    %7368 = vmatpush2.bf16.msra.mxu0 %v5949
    %7369 = vmatprep.subr.bf16.mxu0 %v5946
    %7370 = vmatpush2.bf16.msra.mxu0 %v5945
    %7371 = vmatprep.subr.bf16.mxu0 %v5942
    %7372 = vmatpush2.bf16.msra.mxu0 %v5941
    %7373 = vmatprep.subr.bf16.mxu0 %v5938
    %7374 = vmatpush2.bf16.msra.mxu0 %v5937
    %7375 = vmatprep.subr.bf16.mxu0 %v5934
    %7376 = vmatpush2.bf16.msra.mxu0 %v5933
    %7377 = vmatprep.subr.bf16.mxu0 %v5930
    %7378 = vmatpush2.bf16.msra.mxu0 %v5929
    %7379 = vmatprep.mubr.bf16.mxu0 %v3366
    %7380 = vmatmul.mubr.bf16.gmra.mxu0 %v3365
    %v7381 = vpop.f32.mrf.mxu0
    %v7382 = vadd.f32 %v7341, %v7381
    %v7383 = vpop.f32.mrf.mxu0
    %v7384 = vadd.f32 %v7343, %v7383
    %v7385 = vpop.f32.mrf.mxu0
    %v7386 = vpop.f32.mrf.mxu0
    %7387 = vdwg.mxu0
    %7388 = vmatprep.subr.bf16.mxu0 %v5990
    %7389 = vmatpush1.bf16.msra.mxu0 %v5989
    %7390 = vmatprep.subr.bf16.mxu0 %v5986
    %7391 = vmatpush1.bf16.msra.mxu0 %v5985
    %7392 = vmatprep.subr.bf16.mxu0 %v5982
    %7393 = vmatpush1.bf16.msra.mxu0 %v5981
    %7394 = vmatprep.subr.bf16.mxu0 %v5978
    %7395 = vmatpush1.bf16.msra.mxu0 %v5977
    %7396 = vmatprep.subr.bf16.mxu0 %v5974
    %7397 = vmatpush1.bf16.msra.mxu0 %v5973
    %7398 = vmatprep.subr.bf16.mxu0 %v5970
    %7399 = vmatpush1.bf16.msra.mxu0 %v5969
    %7400 = vmatprep.subr.bf16.mxu0 %v5966
    %7401 = vmatpush1.bf16.msra.mxu0 %v5965
    %7402 = vmatprep.subr.bf16.mxu0 %v5962
    %7403 = vmatpush1.bf16.msra.mxu0 %v5961
    %7404 = vmatprep.subr.bf16.mxu0 %v6022
    %7405 = vmatpush2.bf16.msra.mxu0 %v6021
    %7406 = vmatprep.subr.bf16.mxu0 %v6018
    %7407 = vmatpush2.bf16.msra.mxu0 %v6017
    %7408 = vmatprep.subr.bf16.mxu0 %v6014
    %7409 = vmatpush2.bf16.msra.mxu0 %v6013
    %7410 = vmatprep.subr.bf16.mxu0 %v6010
    %7411 = vmatpush2.bf16.msra.mxu0 %v6009
    %7412 = vmatprep.subr.bf16.mxu0 %v6006
    %7413 = vmatpush2.bf16.msra.mxu0 %v6005
    %7414 = vmatprep.subr.bf16.mxu0 %v6002
    %7415 = vmatpush2.bf16.msra.mxu0 %v6001
    %7416 = vmatprep.subr.bf16.mxu0 %v5998
    %7417 = vmatpush2.bf16.msra.mxu0 %v5997
    %7418 = vmatprep.subr.bf16.mxu0 %v5994
    %7419 = vmatpush2.bf16.msra.mxu0 %v5993
    %7420 = vmatprep.mubr.bf16.mxu0 %v3368
    %7421 = vmatmul.mubr.bf16.gmra.mxu0 %v3367
    %v7422 = vpop.f32.mrf.mxu0
    %v7423 = vadd.f32 %v7382, %v7422
    %v7424 = vpop.f32.mrf.mxu0
    %v7425 = vadd.f32 %v7384, %v7424
    %v7426 = vpop.f32.mrf.mxu0
    %v7427 = vpop.f32.mrf.mxu0
    %7428 = vdwg.mxu0
    %7429 = vmatprep.subr.bf16.mxu0 %v6054
    %7430 = vmatpush1.bf16.msra.mxu0 %v6053
    %7431 = vmatprep.subr.bf16.mxu0 %v6050
    %7432 = vmatpush1.bf16.msra.mxu0 %v6049
    %7433 = vmatprep.subr.bf16.mxu0 %v6046
    %7434 = vmatpush1.bf16.msra.mxu0 %v6045
    %7435 = vmatprep.subr.bf16.mxu0 %v6042
    %7436 = vmatpush1.bf16.msra.mxu0 %v6041
    %7437 = vmatprep.subr.bf16.mxu0 %v6038
    %7438 = vmatpush1.bf16.msra.mxu0 %v6037
    %7439 = vmatprep.subr.bf16.mxu0 %v6034
    %7440 = vmatpush1.bf16.msra.mxu0 %v6033
    %7441 = vmatprep.subr.bf16.mxu0 %v6030
    %7442 = vmatpush1.bf16.msra.mxu0 %v6029
    %7443 = vmatprep.subr.bf16.mxu0 %v6026
    %7444 = vmatpush1.bf16.msra.mxu0 %v6025
    %7445 = vmatprep.subr.bf16.mxu0 %v6086
    %7446 = vmatpush2.bf16.msra.mxu0 %v6085
    %7447 = vmatprep.subr.bf16.mxu0 %v6082
    %7448 = vmatpush2.bf16.msra.mxu0 %v6081
    %7449 = vmatprep.subr.bf16.mxu0 %v6078
    %7450 = vmatpush2.bf16.msra.mxu0 %v6077
    %7451 = vmatprep.subr.bf16.mxu0 %v6074
    %7452 = vmatpush2.bf16.msra.mxu0 %v6073
    %7453 = vmatprep.subr.bf16.mxu0 %v6070
    %7454 = vmatpush2.bf16.msra.mxu0 %v6069
    %7455 = vmatprep.subr.bf16.mxu0 %v6066
    %7456 = vmatpush2.bf16.msra.mxu0 %v6065
    %7457 = vmatprep.subr.bf16.mxu0 %v6062
    %7458 = vmatpush2.bf16.msra.mxu0 %v6061
    %7459 = vmatprep.subr.bf16.mxu0 %v6058
    %7460 = vmatpush2.bf16.msra.mxu0 %v6057
    %7461 = vmatprep.mubr.bf16.mxu0 %v3370
    %7462 = vmatmul.mubr.bf16.gmra.mxu0 %v3369
    %v7463 = vpop.f32.mrf.mxu0
    %v7464 = vadd.f32 %v7423, %v7463
    %v7465 = vpop.f32.mrf.mxu0
    %v7466 = vadd.f32 %v7425, %v7465
    %v7467 = vpop.f32.mrf.mxu0
    %v7468 = vpop.f32.mrf.mxu0
    %7469 = vdwg.mxu0
    %7470 = vmatprep.subr.bf16.mxu0 %v6118
    %7471 = vmatpush1.bf16.msra.mxu0 %v6117
    %7472 = vmatprep.subr.bf16.mxu0 %v6114
    %7473 = vmatpush1.bf16.msra.mxu0 %v6113
    %7474 = vmatprep.subr.bf16.mxu0 %v6110
    %7475 = vmatpush1.bf16.msra.mxu0 %v6109
    %7476 = vmatprep.subr.bf16.mxu0 %v6106
    %7477 = vmatpush1.bf16.msra.mxu0 %v6105
    %7478 = vmatprep.subr.bf16.mxu0 %v6102
    %7479 = vmatpush1.bf16.msra.mxu0 %v6101
    %7480 = vmatprep.subr.bf16.mxu0 %v6098
    %7481 = vmatpush1.bf16.msra.mxu0 %v6097
    %7482 = vmatprep.subr.bf16.mxu0 %v6094
    %7483 = vmatpush1.bf16.msra.mxu0 %v6093
    %7484 = vmatprep.subr.bf16.mxu0 %v6090
    %7485 = vmatpush1.bf16.msra.mxu0 %v6089
    %7486 = vmatprep.subr.bf16.mxu0 %v6150
    %7487 = vmatpush2.bf16.msra.mxu0 %v6149
    %7488 = vmatprep.subr.bf16.mxu0 %v6146
    %7489 = vmatpush2.bf16.msra.mxu0 %v6145
    %7490 = vmatprep.subr.bf16.mxu0 %v6142
    %7491 = vmatpush2.bf16.msra.mxu0 %v6141
    %7492 = vmatprep.subr.bf16.mxu0 %v6138
    %7493 = vmatpush2.bf16.msra.mxu0 %v6137
    %7494 = vmatprep.subr.bf16.mxu0 %v6134
    %7495 = vmatpush2.bf16.msra.mxu0 %v6133
    %7496 = vmatprep.subr.bf16.mxu0 %v6130
    %7497 = vmatpush2.bf16.msra.mxu0 %v6129
    %7498 = vmatprep.subr.bf16.mxu0 %v6126
    %7499 = vmatpush2.bf16.msra.mxu0 %v6125
    %7500 = vmatprep.subr.bf16.mxu0 %v6122
    %7501 = vmatpush2.bf16.msra.mxu0 %v6121
    %7502 = vmatprep.mubr.bf16.mxu0 %v3372
    %7503 = vmatmul.mubr.bf16.gmra.mxu0 %v3371
    %v7504 = vpop.f32.mrf.mxu0
    %v7505 = vadd.f32 %v7464, %v7504
    %v7506 = vpop.f32.mrf.mxu0
    %v7507 = vadd.f32 %v7466, %v7506
    %v7508 = vpop.f32.mrf.mxu0
    %v7509 = vpop.f32.mrf.mxu0
    %7510 = vdwg.mxu0
    %7511 = vmatprep.subr.bf16.mxu0 %v6182
    %7512 = vmatpush1.bf16.msra.mxu0 %v6181
    %7513 = vmatprep.subr.bf16.mxu0 %v6178
    %7514 = vmatpush1.bf16.msra.mxu0 %v6177
    %7515 = vmatprep.subr.bf16.mxu0 %v6174
    %7516 = vmatpush1.bf16.msra.mxu0 %v6173
    %7517 = vmatprep.subr.bf16.mxu0 %v6170
    %7518 = vmatpush1.bf16.msra.mxu0 %v6169
    %7519 = vmatprep.subr.bf16.mxu0 %v6166
    %7520 = vmatpush1.bf16.msra.mxu0 %v6165
    %7521 = vmatprep.subr.bf16.mxu0 %v6162
    %7522 = vmatpush1.bf16.msra.mxu0 %v6161
    %7523 = vmatprep.subr.bf16.mxu0 %v6158
    %7524 = vmatpush1.bf16.msra.mxu0 %v6157
    %7525 = vmatprep.subr.bf16.mxu0 %v6154
    %7526 = vmatpush1.bf16.msra.mxu0 %v6153
    %7527 = vmatprep.subr.bf16.mxu0 %v6214
    %7528 = vmatpush2.bf16.msra.mxu0 %v6213
    %7529 = vmatprep.subr.bf16.mxu0 %v6210
    %7530 = vmatpush2.bf16.msra.mxu0 %v6209
    %7531 = vmatprep.subr.bf16.mxu0 %v6206
    %7532 = vmatpush2.bf16.msra.mxu0 %v6205
    %7533 = vmatprep.subr.bf16.mxu0 %v6202
    %7534 = vmatpush2.bf16.msra.mxu0 %v6201
    %7535 = vmatprep.subr.bf16.mxu0 %v6198
    %7536 = vmatpush2.bf16.msra.mxu0 %v6197
    %7537 = vmatprep.subr.bf16.mxu0 %v6194
    %7538 = vmatpush2.bf16.msra.mxu0 %v6193
    %7539 = vmatprep.subr.bf16.mxu0 %v6190
    %7540 = vmatpush2.bf16.msra.mxu0 %v6189
    %7541 = vmatprep.subr.bf16.mxu0 %v6186
    %7542 = vmatpush2.bf16.msra.mxu0 %v6185
    %7543 = vmatprep.mubr.bf16.mxu0 %v3374
    %7544 = vmatmul.mubr.bf16.gmra.mxu0 %v3373
    %v7545 = vpop.f32.mrf.mxu0
    %v7546 = vadd.f32 %v7505, %v7545
    %v7547 = vpop.f32.mrf.mxu0
    %v7548 = vadd.f32 %v7507, %v7547
    %v7549 = vpop.f32.mrf.mxu0
    %v7550 = vpop.f32.mrf.mxu0
    %7551 = vdwg.mxu0
    %7552 = vmatprep.subr.bf16.mxu0 %v6246
    %7553 = vmatpush1.bf16.msra.mxu0 %v6245
    %7554 = vmatprep.subr.bf16.mxu0 %v6242
    %7555 = vmatpush1.bf16.msra.mxu0 %v6241
    %7556 = vmatprep.subr.bf16.mxu0 %v6238
    %7557 = vmatpush1.bf16.msra.mxu0 %v6237
    %7558 = vmatprep.subr.bf16.mxu0 %v6234
    %7559 = vmatpush1.bf16.msra.mxu0 %v6233
    %7560 = vmatprep.subr.bf16.mxu0 %v6230
    %7561 = vmatpush1.bf16.msra.mxu0 %v6229
    %7562 = vmatprep.subr.bf16.mxu0 %v6226
    %7563 = vmatpush1.bf16.msra.mxu0 %v6225
    %7564 = vmatprep.subr.bf16.mxu0 %v6222
    %7565 = vmatpush1.bf16.msra.mxu0 %v6221
    %7566 = vmatprep.subr.bf16.mxu0 %v6218
    %7567 = vmatpush1.bf16.msra.mxu0 %v6217
    %7568 = vmatprep.subr.bf16.mxu0 %v6278
    %7569 = vmatpush2.bf16.msra.mxu0 %v6277
    %7570 = vmatprep.subr.bf16.mxu0 %v6274
    %7571 = vmatpush2.bf16.msra.mxu0 %v6273
    %7572 = vmatprep.subr.bf16.mxu0 %v6270
    %7573 = vmatpush2.bf16.msra.mxu0 %v6269
    %7574 = vmatprep.subr.bf16.mxu0 %v6266
    %7575 = vmatpush2.bf16.msra.mxu0 %v6265
    %7576 = vmatprep.subr.bf16.mxu0 %v6262
    %7577 = vmatpush2.bf16.msra.mxu0 %v6261
    %7578 = vmatprep.subr.bf16.mxu0 %v6258
    %7579 = vmatpush2.bf16.msra.mxu0 %v6257
    %7580 = vmatprep.subr.bf16.mxu0 %v6254
    %7581 = vmatpush2.bf16.msra.mxu0 %v6253
    %7582 = vmatprep.subr.bf16.mxu0 %v6250
    %7583 = vmatpush2.bf16.msra.mxu0 %v6249
    %7584 = vmatprep.mubr.bf16.mxu0 %v3376
    %7585 = vmatmul.mubr.bf16.gmra.mxu0 %v3375
    %v7586 = vpop.f32.mrf.mxu0
    %v7587 = vadd.f32 %v7546, %v7586
    %v7588 = vpop.f32.mrf.mxu0
    %v7589 = vadd.f32 %v7548, %v7588
    %v7590 = vpop.f32.mrf.mxu0
    %v7591 = vpop.f32.mrf.mxu0
    %7592 = vdwg.mxu0
    %v7593 = vmax.f32 %v7218, 0.0
    %v7594 = vmax.f32 %v7220, 0.0
    %v7595 = vmax.f32 %v7587, 0.0
    %v7596 = vmax.f32 %v7589, 0.0
    %v7597 = vld [vmem:[#allocation12] sm:$0xff]
    %v7598 = vld [vmem:[#allocation12 + $0x8] sm:$0xff]
    %v7599 = vld [vmem:[#allocation12 + $0x10] sm:$0xff]
    %v7600 = vld [vmem:[#allocation12 + $0x18] sm:$0xff]
    %v7601 = vld [vmem:[#allocation12 + $0x20] sm:$0xff]
    %v7602 = vld [vmem:[#allocation12 + $0x28] sm:$0xff]
    %v7603 = vld [vmem:[#allocation12 + $0x30] sm:$0xff]
    %v7604 = vld [vmem:[#allocation12 + $0x38] sm:$0xff]
    %v7605 = vld [vmem:[#allocation12 + $0x40] sm:$0xff]
    %v7606 = vld [vmem:[#allocation12 + $0x48] sm:$0xff]
    %v7607 = vld [vmem:[#allocation12 + $0x50] sm:$0xff]
    %v7608 = vld [vmem:[#allocation12 + $0x58] sm:$0xff]
    %v7609 = vld [vmem:[#allocation12 + $0x60] sm:$0xff]
    %v7610 = vld [vmem:[#allocation12 + $0x68] sm:$0xff]
    %v7611 = vld [vmem:[#allocation12 + $0x70] sm:$0xff]
    %v7612 = vld [vmem:[#allocation12 + $0x78] sm:$0xff]
    %v7613 = vld [vmem:[#allocation12 + $0x80] sm:$0xff]
    %v7614 = vld [vmem:[#allocation12 + $0x88] sm:$0xff]
    %v7615 = vld [vmem:[#allocation12 + $0x90] sm:$0xff]
    %v7616 = vld [vmem:[#allocation12 + $0x98] sm:$0xff]
    %v7617 = vld [vmem:[#allocation12 + $0xa0] sm:$0xff]
    %v7618 = vld [vmem:[#allocation12 + $0xa8] sm:$0xff]
    %v7619 = vld [vmem:[#allocation12 + $0xb0] sm:$0xff]
    %v7620 = vld [vmem:[#allocation12 + $0xb8] sm:$0xff]
    %v7621 = vld [vmem:[#allocation12 + $0xc0] sm:$0xff]
    %v7622 = vld [vmem:[#allocation12 + $0xc8] sm:$0xff]
    %v7623 = vld [vmem:[#allocation12 + $0xd0] sm:$0xff]
    %v7624 = vld [vmem:[#allocation12 + $0xd8] sm:$0xff]
    %v7625 = vld [vmem:[#allocation12 + $0xe0] sm:$0xff]
    %v7626 = vld [vmem:[#allocation12 + $0xe8] sm:$0xff]
    %v7627 = vld [vmem:[#allocation12 + $0xf0] sm:$0xff]
    %v7628 = vld [vmem:[#allocation12 + $0xf8] sm:$0xff]
    %v7629 = vld [vmem:[#allocation12 + $0x100] sm:$0xff]
    %v7630 = vld [vmem:[#allocation12 + $0x108] sm:$0xff]
    %v7631 = vld [vmem:[#allocation12 + $0x110] sm:$0xff]
    %v7632 = vld [vmem:[#allocation12 + $0x118] sm:$0xff]
    %v7633 = vld [vmem:[#allocation12 + $0x120] sm:$0xff]
    %v7634 = vld [vmem:[#allocation12 + $0x128] sm:$0xff]
    %v7635 = vld [vmem:[#allocation12 + $0x130] sm:$0xff]
    %v7636 = vld [vmem:[#allocation12 + $0x138] sm:$0xff]
    %v7637 = vld [vmem:[#allocation12 + $0x140] sm:$0xff]
    %v7638 = vld [vmem:[#allocation12 + $0x148] sm:$0xff]
    %v7639 = vld [vmem:[#allocation12 + $0x150] sm:$0xff]
    %v7640 = vld [vmem:[#allocation12 + $0x158] sm:$0xff]
    %v7641 = vld [vmem:[#allocation12 + $0x160] sm:$0xff]
    %v7642 = vld [vmem:[#allocation12 + $0x168] sm:$0xff]
    %v7643 = vld [vmem:[#allocation12 + $0x170] sm:$0xff]
    %v7644 = vld [vmem:[#allocation12 + $0x178] sm:$0xff]
    %v7645 = vld [vmem:[#allocation12 + $0x180] sm:$0xff]
    %v7646 = vld [vmem:[#allocation12 + $0x188] sm:$0xff]
    %v7647 = vld [vmem:[#allocation12 + $0x190] sm:$0xff]
    %v7648 = vld [vmem:[#allocation12 + $0x198] sm:$0xff]
    %v7649 = vld [vmem:[#allocation12 + $0x1a0] sm:$0xff]
    %v7650 = vld [vmem:[#allocation12 + $0x1a8] sm:$0xff]
    %v7651 = vld [vmem:[#allocation12 + $0x1b0] sm:$0xff]
    %v7652 = vld [vmem:[#allocation12 + $0x1b8] sm:$0xff]
    %v7653 = vld [vmem:[#allocation12 + $0x1c0] sm:$0xff]
    %v7654 = vld [vmem:[#allocation12 + $0x1c8] sm:$0xff]
    %v7655 = vld [vmem:[#allocation12 + $0x1d0] sm:$0xff]
    %v7656 = vld [vmem:[#allocation12 + $0x1d8] sm:$0xff]
    %v7657 = vld [vmem:[#allocation12 + $0x1e0] sm:$0xff]
    %v7658 = vld [vmem:[#allocation12 + $0x1e8] sm:$0xff]
    %v7659 = vld [vmem:[#allocation12 + $0x1f0] sm:$0xff]
    %v7660 = vld [vmem:[#allocation12 + $0x1f8] sm:$0xff]
    %v7661 = vld [vmem:[#allocation12 + $0x200] sm:$0xff]
    %v7662 = vld [vmem:[#allocation12 + $0x208] sm:$0xff]
    %v7663 = vld [vmem:[#allocation12 + $0x210] sm:$0xff]
    %v7664 = vld [vmem:[#allocation12 + $0x218] sm:$0xff]
    %v7665 = vld [vmem:[#allocation12 + $0x220] sm:$0xff]
    %v7666 = vld [vmem:[#allocation12 + $0x228] sm:$0xff]
    %v7667 = vld [vmem:[#allocation12 + $0x230] sm:$0xff]
    %v7668 = vld [vmem:[#allocation12 + $0x238] sm:$0xff]
    %v7669 = vld [vmem:[#allocation12 + $0x240] sm:$0xff]
    %v7670 = vld [vmem:[#allocation12 + $0x248] sm:$0xff]
    %v7671 = vld [vmem:[#allocation12 + $0x250] sm:$0xff]
    %v7672 = vld [vmem:[#allocation12 + $0x258] sm:$0xff]
    %v7673 = vld [vmem:[#allocation12 + $0x260] sm:$0xff]
    %v7674 = vld [vmem:[#allocation12 + $0x268] sm:$0xff]
    %v7675 = vld [vmem:[#allocation12 + $0x270] sm:$0xff]
    %v7676 = vld [vmem:[#allocation12 + $0x278] sm:$0xff]
    %v7677 = vld [vmem:[#allocation12 + $0x280] sm:$0xff]
    %v7678 = vld [vmem:[#allocation12 + $0x288] sm:$0xff]
    %v7679 = vld [vmem:[#allocation12 + $0x290] sm:$0xff]
    %v7680 = vld [vmem:[#allocation12 + $0x298] sm:$0xff]
    %v7681 = vld [vmem:[#allocation12 + $0x2a0] sm:$0xff]
    %v7682 = vld [vmem:[#allocation12 + $0x2a8] sm:$0xff]
    %v7683 = vld [vmem:[#allocation12 + $0x2b0] sm:$0xff]
    %v7684 = vld [vmem:[#allocation12 + $0x2b8] sm:$0xff]
    %v7685 = vld [vmem:[#allocation12 + $0x2c0] sm:$0xff]
    %v7686 = vld [vmem:[#allocation12 + $0x2c8] sm:$0xff]
    %v7687 = vld [vmem:[#allocation12 + $0x2d0] sm:$0xff]
    %v7688 = vld [vmem:[#allocation12 + $0x2d8] sm:$0xff]
    %v7689 = vld [vmem:[#allocation12 + $0x2e0] sm:$0xff]
    %v7690 = vld [vmem:[#allocation12 + $0x2e8] sm:$0xff]
    %v7691 = vld [vmem:[#allocation12 + $0x2f0] sm:$0xff]
    %v7692 = vld [vmem:[#allocation12 + $0x2f8] sm:$0xff]
    %v7693 = vld [vmem:[#allocation12 + $0x300] sm:$0xff]
    %v7694 = vld [vmem:[#allocation12 + $0x308] sm:$0xff]
    %v7695 = vld [vmem:[#allocation12 + $0x310] sm:$0xff]
    %v7696 = vld [vmem:[#allocation12 + $0x318] sm:$0xff]
    %v7697 = vld [vmem:[#allocation12 + $0x320] sm:$0xff]
    %v7698 = vld [vmem:[#allocation12 + $0x328] sm:$0xff]
    %v7699 = vld [vmem:[#allocation12 + $0x330] sm:$0xff]
    %v7700 = vld [vmem:[#allocation12 + $0x338] sm:$0xff]
    %v7701 = vld [vmem:[#allocation12 + $0x340] sm:$0xff]
    %v7702 = vld [vmem:[#allocation12 + $0x348] sm:$0xff]
    %v7703 = vld [vmem:[#allocation12 + $0x350] sm:$0xff]
    %v7704 = vld [vmem:[#allocation12 + $0x358] sm:$0xff]
    %v7705 = vld [vmem:[#allocation12 + $0x360] sm:$0xff]
    %v7706 = vld [vmem:[#allocation12 + $0x368] sm:$0xff]
    %v7707 = vld [vmem:[#allocation12 + $0x370] sm:$0xff]
    %v7708 = vld [vmem:[#allocation12 + $0x378] sm:$0xff]
    %v7709 = vld [vmem:[#allocation12 + $0x380] sm:$0xff]
    %v7710 = vld [vmem:[#allocation12 + $0x388] sm:$0xff]
    %v7711 = vld [vmem:[#allocation12 + $0x390] sm:$0xff]
    %v7712 = vld [vmem:[#allocation12 + $0x398] sm:$0xff]
    %v7713 = vld [vmem:[#allocation12 + $0x3a0] sm:$0xff]
    %v7714 = vld [vmem:[#allocation12 + $0x3a8] sm:$0xff]
    %v7715 = vld [vmem:[#allocation12 + $0x3b0] sm:$0xff]
    %v7716 = vld [vmem:[#allocation12 + $0x3b8] sm:$0xff]
    %v7717 = vld [vmem:[#allocation12 + $0x3c0] sm:$0xff]
    %v7718 = vld [vmem:[#allocation12 + $0x3c8] sm:$0xff]
    %v7719 = vld [vmem:[#allocation12 + $0x3d0] sm:$0xff]
    %v7720 = vld [vmem:[#allocation12 + $0x3d8] sm:$0xff]
    %v7721 = vld [vmem:[#allocation12 + $0x3e0] sm:$0xff]
    %v7722 = vld [vmem:[#allocation12 + $0x3e8] sm:$0xff]
    %v7723 = vld [vmem:[#allocation12 + $0x3f0] sm:$0xff]
    %v7724 = vld [vmem:[#allocation12 + $0x3f8] sm:$0xff]
    %v7725 = vld [vmem:[#allocation13] sm:$0xf]
    %v7726 = vpack.c.bf16 %v7593, %v7593
    %v7727 = vpack.c.bf16 %v7594, %v7594
    %v7728 = vpack.c.bf16 %v7595, %v7595
    %v7729 = vpack.c.bf16 %v7596, %v7596
    %v7731 = vlaneseq
    %v7732 = vshrl.u32 %v7731, 7
    %v7733 = vsub.s32 0, %v7732
    %v7734 = vrot.slane %v7725, %v7733
    %v7735 = vlaneseq
    %v7736 = vshrl.u32 %v7735, 7
    %v7737 = vsub.s32 1, %v7736
    %v7738 = vrot.slane %v7725, %v7737
    %v7739 = vlaneseq
    %v7740 = vshrl.u32 %v7739, 7
    %v7741 = vsub.s32 2, %v7740
    %v7742 = vrot.slane %v7725, %v7741
    %v7743 = vlaneseq
    %v7744 = vshrl.u32 %v7743, 7
    %v7745 = vsub.s32 3, %v7744
    %v7746 = vrot.slane %v7725, %v7745
    %v7879 = vunpack.c.l.b16 %v7597
    %v7880 = vunpack.c.h.b16 %v7597
    %v7881 = vunpack.c.l.b16 %v7598
    %v7882 = vunpack.c.h.b16 %v7598
    %v7883 = vunpack.c.l.b16 %v7599
    %v7884 = vunpack.c.h.b16 %v7599
    %v7885 = vunpack.c.l.b16 %v7600
    %v7886 = vunpack.c.h.b16 %v7600
    %v7887 = vunpack.c.l.b16 %v7601
    %v7888 = vunpack.c.h.b16 %v7601
    %v7889 = vunpack.c.l.b16 %v7602
    %v7890 = vunpack.c.h.b16 %v7602
    %v7891 = vunpack.c.l.b16 %v7603
    %v7892 = vunpack.c.h.b16 %v7603
    %v7893 = vunpack.c.l.b16 %v7604
    %v7894 = vunpack.c.h.b16 %v7604
    %v7895 = vunpack.c.l.b16 %v7605
    %v7896 = vunpack.c.h.b16 %v7605
    %v7897 = vunpack.c.l.b16 %v7606
    %v7898 = vunpack.c.h.b16 %v7606
    %v7899 = vunpack.c.l.b16 %v7607
    %v7900 = vunpack.c.h.b16 %v7607
    %v7901 = vunpack.c.l.b16 %v7608
    %v7902 = vunpack.c.h.b16 %v7608
    %v7903 = vunpack.c.l.b16 %v7609
    %v7904 = vunpack.c.h.b16 %v7609
    %v7905 = vunpack.c.l.b16 %v7610
    %v7906 = vunpack.c.h.b16 %v7610
    %v7907 = vunpack.c.l.b16 %v7611
    %v7908 = vunpack.c.h.b16 %v7611
    %v7909 = vunpack.c.l.b16 %v7612
    %v7910 = vunpack.c.h.b16 %v7612
    %v7911 = vunpack.c.l.b16 %v7613
    %v7912 = vunpack.c.h.b16 %v7613
    %v7913 = vunpack.c.l.b16 %v7614
    %v7914 = vunpack.c.h.b16 %v7614
    %v7915 = vunpack.c.l.b16 %v7615
    %v7916 = vunpack.c.h.b16 %v7615
    %v7917 = vunpack.c.l.b16 %v7616
    %v7918 = vunpack.c.h.b16 %v7616
    %v7919 = vunpack.c.l.b16 %v7617
    %v7920 = vunpack.c.h.b16 %v7617
    %v7921 = vunpack.c.l.b16 %v7618
    %v7922 = vunpack.c.h.b16 %v7618
    %v7923 = vunpack.c.l.b16 %v7619
    %v7924 = vunpack.c.h.b16 %v7619
    %v7925 = vunpack.c.l.b16 %v7620
    %v7926 = vunpack.c.h.b16 %v7620
    %v7927 = vunpack.c.l.b16 %v7621
    %v7928 = vunpack.c.h.b16 %v7621
    %v7929 = vunpack.c.l.b16 %v7622
    %v7930 = vunpack.c.h.b16 %v7622
    %v7931 = vunpack.c.l.b16 %v7623
    %v7932 = vunpack.c.h.b16 %v7623
    %v7933 = vunpack.c.l.b16 %v7624
    %v7934 = vunpack.c.h.b16 %v7624
    %v7935 = vunpack.c.l.b16 %v7625
    %v7936 = vunpack.c.h.b16 %v7625
    %v7937 = vunpack.c.l.b16 %v7626
    %v7938 = vunpack.c.h.b16 %v7626
    %v7939 = vunpack.c.l.b16 %v7627
    %v7940 = vunpack.c.h.b16 %v7627
    %v7941 = vunpack.c.l.b16 %v7628
    %v7942 = vunpack.c.h.b16 %v7628
    %v7943 = vunpack.c.l.b16 %v7629
    %v7944 = vunpack.c.h.b16 %v7629
    %v7945 = vunpack.c.l.b16 %v7630
    %v7946 = vunpack.c.h.b16 %v7630
    %v7947 = vunpack.c.l.b16 %v7631
    %v7948 = vunpack.c.h.b16 %v7631
    %v7949 = vunpack.c.l.b16 %v7632
    %v7950 = vunpack.c.h.b16 %v7632
    %v7951 = vunpack.c.l.b16 %v7633
    %v7952 = vunpack.c.h.b16 %v7633
    %v7953 = vunpack.c.l.b16 %v7634
    %v7954 = vunpack.c.h.b16 %v7634
    %v7955 = vunpack.c.l.b16 %v7635
    %v7956 = vunpack.c.h.b16 %v7635
    %v7957 = vunpack.c.l.b16 %v7636
    %v7958 = vunpack.c.h.b16 %v7636
    %v7959 = vunpack.c.l.b16 %v7637
    %v7960 = vunpack.c.h.b16 %v7637
    %v7961 = vunpack.c.l.b16 %v7638
    %v7962 = vunpack.c.h.b16 %v7638
    %v7963 = vunpack.c.l.b16 %v7639
    %v7964 = vunpack.c.h.b16 %v7639
    %v7965 = vunpack.c.l.b16 %v7640
    %v7966 = vunpack.c.h.b16 %v7640
    %v7967 = vunpack.c.l.b16 %v7641
    %v7968 = vunpack.c.h.b16 %v7641
    %v7969 = vunpack.c.l.b16 %v7642
    %v7970 = vunpack.c.h.b16 %v7642
    %v7971 = vunpack.c.l.b16 %v7643
    %v7972 = vunpack.c.h.b16 %v7643
    %v7973 = vunpack.c.l.b16 %v7644
    %v7974 = vunpack.c.h.b16 %v7644
    %v7975 = vunpack.c.l.b16 %v7645
    %v7976 = vunpack.c.h.b16 %v7645
    %v7977 = vunpack.c.l.b16 %v7646
    %v7978 = vunpack.c.h.b16 %v7646
    %v7979 = vunpack.c.l.b16 %v7647
    %v7980 = vunpack.c.h.b16 %v7647
    %v7981 = vunpack.c.l.b16 %v7648
    %v7982 = vunpack.c.h.b16 %v7648
    %v7983 = vunpack.c.l.b16 %v7649
    %v7984 = vunpack.c.h.b16 %v7649
    %v7985 = vunpack.c.l.b16 %v7650
    %v7986 = vunpack.c.h.b16 %v7650
    %v7987 = vunpack.c.l.b16 %v7651
    %v7988 = vunpack.c.h.b16 %v7651
    %v7989 = vunpack.c.l.b16 %v7652
    %v7990 = vunpack.c.h.b16 %v7652
    %v7991 = vunpack.c.l.b16 %v7653
    %v7992 = vunpack.c.h.b16 %v7653
    %v7993 = vunpack.c.l.b16 %v7654
    %v7994 = vunpack.c.h.b16 %v7654
    %v7995 = vunpack.c.l.b16 %v7655
    %v7996 = vunpack.c.h.b16 %v7655
    %v7997 = vunpack.c.l.b16 %v7656
    %v7998 = vunpack.c.h.b16 %v7656
    %v7999 = vunpack.c.l.b16 %v7657
    %v8000 = vunpack.c.h.b16 %v7657
    %v8001 = vunpack.c.l.b16 %v7658
    %v8002 = vunpack.c.h.b16 %v7658
    %v8003 = vunpack.c.l.b16 %v7659
    %v8004 = vunpack.c.h.b16 %v7659
    %v8005 = vunpack.c.l.b16 %v7660
    %v8006 = vunpack.c.h.b16 %v7660
    %v8007 = vunpack.c.l.b16 %v7661
    %v8008 = vunpack.c.h.b16 %v7661
    %v8009 = vunpack.c.l.b16 %v7662
    %v8010 = vunpack.c.h.b16 %v7662
    %v8011 = vunpack.c.l.b16 %v7663
    %v8012 = vunpack.c.h.b16 %v7663
    %v8013 = vunpack.c.l.b16 %v7664
    %v8014 = vunpack.c.h.b16 %v7664
    %v8015 = vunpack.c.l.b16 %v7665
    %v8016 = vunpack.c.h.b16 %v7665
    %v8017 = vunpack.c.l.b16 %v7666
    %v8018 = vunpack.c.h.b16 %v7666
    %v8019 = vunpack.c.l.b16 %v7667
    %v8020 = vunpack.c.h.b16 %v7667
    %v8021 = vunpack.c.l.b16 %v7668
    %v8022 = vunpack.c.h.b16 %v7668
    %v8023 = vunpack.c.l.b16 %v7669
    %v8024 = vunpack.c.h.b16 %v7669
    %v8025 = vunpack.c.l.b16 %v7670
    %v8026 = vunpack.c.h.b16 %v7670
    %v8027 = vunpack.c.l.b16 %v7671
    %v8028 = vunpack.c.h.b16 %v7671
    %v8029 = vunpack.c.l.b16 %v7672
    %v8030 = vunpack.c.h.b16 %v7672
    %v8031 = vunpack.c.l.b16 %v7673
    %v8032 = vunpack.c.h.b16 %v7673
    %v8033 = vunpack.c.l.b16 %v7674
    %v8034 = vunpack.c.h.b16 %v7674
    %v8035 = vunpack.c.l.b16 %v7675
    %v8036 = vunpack.c.h.b16 %v7675
    %v8037 = vunpack.c.l.b16 %v7676
    %v8038 = vunpack.c.h.b16 %v7676
    %v8039 = vunpack.c.l.b16 %v7677
    %v8040 = vunpack.c.h.b16 %v7677
    %v8041 = vunpack.c.l.b16 %v7678
    %v8042 = vunpack.c.h.b16 %v7678
    %v8043 = vunpack.c.l.b16 %v7679
    %v8044 = vunpack.c.h.b16 %v7679
    %v8045 = vunpack.c.l.b16 %v7680
    %v8046 = vunpack.c.h.b16 %v7680
    %v8047 = vunpack.c.l.b16 %v7681
    %v8048 = vunpack.c.h.b16 %v7681
    %v8049 = vunpack.c.l.b16 %v7682
    %v8050 = vunpack.c.h.b16 %v7682
    %v8051 = vunpack.c.l.b16 %v7683
    %v8052 = vunpack.c.h.b16 %v7683
    %v8053 = vunpack.c.l.b16 %v7684
    %v8054 = vunpack.c.h.b16 %v7684
    %v8055 = vunpack.c.l.b16 %v7685
    %v8056 = vunpack.c.h.b16 %v7685
    %v8057 = vunpack.c.l.b16 %v7686
    %v8058 = vunpack.c.h.b16 %v7686
    %v8059 = vunpack.c.l.b16 %v7687
    %v8060 = vunpack.c.h.b16 %v7687
    %v8061 = vunpack.c.l.b16 %v7688
    %v8062 = vunpack.c.h.b16 %v7688
    %v8063 = vunpack.c.l.b16 %v7689
    %v8064 = vunpack.c.h.b16 %v7689
    %v8065 = vunpack.c.l.b16 %v7690
    %v8066 = vunpack.c.h.b16 %v7690
    %v8067 = vunpack.c.l.b16 %v7691
    %v8068 = vunpack.c.h.b16 %v7691
    %v8069 = vunpack.c.l.b16 %v7692
    %v8070 = vunpack.c.h.b16 %v7692
    %v8071 = vunpack.c.l.b16 %v7693
    %v8072 = vunpack.c.h.b16 %v7693
    %v8073 = vunpack.c.l.b16 %v7694
    %v8074 = vunpack.c.h.b16 %v7694
    %v8075 = vunpack.c.l.b16 %v7695
    %v8076 = vunpack.c.h.b16 %v7695
    %v8077 = vunpack.c.l.b16 %v7696
    %v8078 = vunpack.c.h.b16 %v7696
    %v8079 = vunpack.c.l.b16 %v7697
    %v8080 = vunpack.c.h.b16 %v7697
    %v8081 = vunpack.c.l.b16 %v7698
    %v8082 = vunpack.c.h.b16 %v7698
    %v8083 = vunpack.c.l.b16 %v7699
    %v8084 = vunpack.c.h.b16 %v7699
    %v8085 = vunpack.c.l.b16 %v7700
    %v8086 = vunpack.c.h.b16 %v7700
    %v8087 = vunpack.c.l.b16 %v7701
    %v8088 = vunpack.c.h.b16 %v7701
    %v8089 = vunpack.c.l.b16 %v7702
    %v8090 = vunpack.c.h.b16 %v7702
    %v8091 = vunpack.c.l.b16 %v7703
    %v8092 = vunpack.c.h.b16 %v7703
    %v8093 = vunpack.c.l.b16 %v7704
    %v8094 = vunpack.c.h.b16 %v7704
    %v8095 = vunpack.c.l.b16 %v7705
    %v8096 = vunpack.c.h.b16 %v7705
    %v8097 = vunpack.c.l.b16 %v7706
    %v8098 = vunpack.c.h.b16 %v7706
    %v8099 = vunpack.c.l.b16 %v7707
    %v8100 = vunpack.c.h.b16 %v7707
    %v8101 = vunpack.c.l.b16 %v7708
    %v8102 = vunpack.c.h.b16 %v7708
    %v8103 = vunpack.c.l.b16 %v7709
    %v8104 = vunpack.c.h.b16 %v7709
    %v8105 = vunpack.c.l.b16 %v7710
    %v8106 = vunpack.c.h.b16 %v7710
    %v8107 = vunpack.c.l.b16 %v7711
    %v8108 = vunpack.c.h.b16 %v7711
    %v8109 = vunpack.c.l.b16 %v7712
    %v8110 = vunpack.c.h.b16 %v7712
    %v8111 = vunpack.c.l.b16 %v7713
    %v8112 = vunpack.c.h.b16 %v7713
    %v8113 = vunpack.c.l.b16 %v7714
    %v8114 = vunpack.c.h.b16 %v7714
    %v8115 = vunpack.c.l.b16 %v7715
    %v8116 = vunpack.c.h.b16 %v7715
    %v8117 = vunpack.c.l.b16 %v7716
    %v8118 = vunpack.c.h.b16 %v7716
    %v8119 = vunpack.c.l.b16 %v7717
    %v8120 = vunpack.c.h.b16 %v7717
    %v8121 = vunpack.c.l.b16 %v7718
    %v8122 = vunpack.c.h.b16 %v7718
    %v8123 = vunpack.c.l.b16 %v7719
    %v8124 = vunpack.c.h.b16 %v7719
    %v8125 = vunpack.c.l.b16 %v7720
    %v8126 = vunpack.c.h.b16 %v7720
    %v8127 = vunpack.c.l.b16 %v7721
    %v8128 = vunpack.c.h.b16 %v7721
    %v8129 = vunpack.c.l.b16 %v7722
    %v8130 = vunpack.c.h.b16 %v7722
    %v8131 = vunpack.c.l.b16 %v7723
    %v8132 = vunpack.c.h.b16 %v7723
    %v8133 = vunpack.c.l.b16 %v7724
    %v8134 = vunpack.c.h.b16 %v7724
    %v8135 = vpack.c.b16 %v7883, %v7879
    %v8136 = vpack.c.b16 %v7884, %v7880
    %v8137 = vpack.c.b16 %v7885, %v7881
    %v8138 = vpack.c.b16 %v7886, %v7882
    %v8139 = vpack.c.b16 %v7891, %v7887
    %v8140 = vpack.c.b16 %v7892, %v7888
    %v8141 = vpack.c.b16 %v7893, %v7889
    %v8142 = vpack.c.b16 %v7894, %v7890
    %v8143 = vpack.c.b16 %v7899, %v7895
    %v8144 = vpack.c.b16 %v7900, %v7896
    %v8145 = vpack.c.b16 %v7901, %v7897
    %v8146 = vpack.c.b16 %v7902, %v7898
    %v8147 = vpack.c.b16 %v7907, %v7903
    %v8148 = vpack.c.b16 %v7908, %v7904
    %v8149 = vpack.c.b16 %v7909, %v7905
    %v8150 = vpack.c.b16 %v7910, %v7906
    %v8151 = vpack.c.b16 %v7915, %v7911
    %v8152 = vpack.c.b16 %v7916, %v7912
    %v8153 = vpack.c.b16 %v7917, %v7913
    %v8154 = vpack.c.b16 %v7918, %v7914
    %v8155 = vpack.c.b16 %v7923, %v7919
    %v8156 = vpack.c.b16 %v7924, %v7920
    %v8157 = vpack.c.b16 %v7925, %v7921
    %v8158 = vpack.c.b16 %v7926, %v7922
    %v8159 = vpack.c.b16 %v7931, %v7927
    %v8160 = vpack.c.b16 %v7932, %v7928
    %v8161 = vpack.c.b16 %v7933, %v7929
    %v8162 = vpack.c.b16 %v7934, %v7930
    %v8163 = vpack.c.b16 %v7939, %v7935
    %v8164 = vpack.c.b16 %v7940, %v7936
    %v8165 = vpack.c.b16 %v7941, %v7937
    %v8166 = vpack.c.b16 %v7942, %v7938
    %v8167 = vpack.c.b16 %v7947, %v7943
    %v8168 = vpack.c.b16 %v7948, %v7944
    %v8169 = vpack.c.b16 %v7949, %v7945
    %v8170 = vpack.c.b16 %v7950, %v7946
    %v8171 = vpack.c.b16 %v7955, %v7951
    %v8172 = vpack.c.b16 %v7956, %v7952
    %v8173 = vpack.c.b16 %v7957, %v7953
    %v8174 = vpack.c.b16 %v7958, %v7954
    %v8175 = vpack.c.b16 %v7963, %v7959
    %v8176 = vpack.c.b16 %v7964, %v7960
    %v8177 = vpack.c.b16 %v7965, %v7961
    %v8178 = vpack.c.b16 %v7966, %v7962
    %v8179 = vpack.c.b16 %v7971, %v7967
    %v8180 = vpack.c.b16 %v7972, %v7968
    %v8181 = vpack.c.b16 %v7973, %v7969
    %v8182 = vpack.c.b16 %v7974, %v7970
    %v8183 = vpack.c.b16 %v7979, %v7975
    %v8184 = vpack.c.b16 %v7980, %v7976
    %v8185 = vpack.c.b16 %v7981, %v7977
    %v8186 = vpack.c.b16 %v7982, %v7978
    %v8187 = vpack.c.b16 %v7987, %v7983
    %v8188 = vpack.c.b16 %v7988, %v7984
    %v8189 = vpack.c.b16 %v7989, %v7985
    %v8190 = vpack.c.b16 %v7990, %v7986
    %v8191 = vpack.c.b16 %v7995, %v7991
    %v8192 = vpack.c.b16 %v7996, %v7992
    %v8193 = vpack.c.b16 %v7997, %v7993
    %v8194 = vpack.c.b16 %v7998, %v7994
    %v8195 = vpack.c.b16 %v8003, %v7999
    %v8196 = vpack.c.b16 %v8004, %v8000
    %v8197 = vpack.c.b16 %v8005, %v8001
    %v8198 = vpack.c.b16 %v8006, %v8002
    %v8199 = vpack.c.b16 %v8011, %v8007
    %v8200 = vpack.c.b16 %v8012, %v8008
    %v8201 = vpack.c.b16 %v8013, %v8009
    %v8202 = vpack.c.b16 %v8014, %v8010
    %v8203 = vpack.c.b16 %v8019, %v8015
    %v8204 = vpack.c.b16 %v8020, %v8016
    %v8205 = vpack.c.b16 %v8021, %v8017
    %v8206 = vpack.c.b16 %v8022, %v8018
    %v8207 = vpack.c.b16 %v8027, %v8023
    %v8208 = vpack.c.b16 %v8028, %v8024
    %v8209 = vpack.c.b16 %v8029, %v8025
    %v8210 = vpack.c.b16 %v8030, %v8026
    %v8211 = vpack.c.b16 %v8035, %v8031
    %v8212 = vpack.c.b16 %v8036, %v8032
    %v8213 = vpack.c.b16 %v8037, %v8033
    %v8214 = vpack.c.b16 %v8038, %v8034
    %v8215 = vpack.c.b16 %v8043, %v8039
    %v8216 = vpack.c.b16 %v8044, %v8040
    %v8217 = vpack.c.b16 %v8045, %v8041
    %v8218 = vpack.c.b16 %v8046, %v8042
    %v8219 = vpack.c.b16 %v8051, %v8047
    %v8220 = vpack.c.b16 %v8052, %v8048
    %v8221 = vpack.c.b16 %v8053, %v8049
    %v8222 = vpack.c.b16 %v8054, %v8050
    %v8223 = vpack.c.b16 %v8059, %v8055
    %v8224 = vpack.c.b16 %v8060, %v8056
    %v8225 = vpack.c.b16 %v8061, %v8057
    %v8226 = vpack.c.b16 %v8062, %v8058
    %v8227 = vpack.c.b16 %v8067, %v8063
    %v8228 = vpack.c.b16 %v8068, %v8064
    %v8229 = vpack.c.b16 %v8069, %v8065
    %v8230 = vpack.c.b16 %v8070, %v8066
    %v8231 = vpack.c.b16 %v8075, %v8071
    %v8232 = vpack.c.b16 %v8076, %v8072
    %v8233 = vpack.c.b16 %v8077, %v8073
    %v8234 = vpack.c.b16 %v8078, %v8074
    %v8235 = vpack.c.b16 %v8083, %v8079
    %v8236 = vpack.c.b16 %v8084, %v8080
    %v8237 = vpack.c.b16 %v8085, %v8081
    %v8238 = vpack.c.b16 %v8086, %v8082
    %v8239 = vpack.c.b16 %v8091, %v8087
    %v8240 = vpack.c.b16 %v8092, %v8088
    %v8241 = vpack.c.b16 %v8093, %v8089
    %v8242 = vpack.c.b16 %v8094, %v8090
    %v8243 = vpack.c.b16 %v8099, %v8095
    %v8244 = vpack.c.b16 %v8100, %v8096
    %v8245 = vpack.c.b16 %v8101, %v8097
    %v8246 = vpack.c.b16 %v8102, %v8098
    %v8247 = vpack.c.b16 %v8107, %v8103
    %v8248 = vpack.c.b16 %v8108, %v8104
    %v8249 = vpack.c.b16 %v8109, %v8105
    %v8250 = vpack.c.b16 %v8110, %v8106
    %v8251 = vpack.c.b16 %v8115, %v8111
    %v8252 = vpack.c.b16 %v8116, %v8112
    %v8253 = vpack.c.b16 %v8117, %v8113
    %v8254 = vpack.c.b16 %v8118, %v8114
    %v8255 = vpack.c.b16 %v8123, %v8119
    %v8256 = vpack.c.b16 %v8124, %v8120
    %v8257 = vpack.c.b16 %v8125, %v8121
    %v8258 = vpack.c.b16 %v8126, %v8122
    %v8259 = vpack.c.b16 %v8131, %v8127
    %v8260 = vpack.c.b16 %v8132, %v8128
    %v8261 = vpack.c.b16 %v8133, %v8129
    %v8262 = vpack.c.b16 %v8134, %v8130
    %8391 = vmatprep.subr.bf16.mxu0 %v8164
    %8392 = vmatpush1.bf16.msra.mxu0 %v8163
    %8393 = vmatprep.subr.bf16.mxu0 %v8160
    %8394 = vmatpush1.bf16.msra.mxu0 %v8159
    %8395 = vmatprep.subr.bf16.mxu0 %v8156
    %8396 = vmatpush1.bf16.msra.mxu0 %v8155
    %8397 = vmatprep.subr.bf16.mxu0 %v8152
    %8398 = vmatpush1.bf16.msra.mxu0 %v8151
    %8399 = vmatprep.subr.bf16.mxu0 %v8148
    %8400 = vmatpush1.bf16.msra.mxu0 %v8147
    %8401 = vmatprep.subr.bf16.mxu0 %v8144
    %8402 = vmatpush1.bf16.msra.mxu0 %v8143
    %8403 = vmatprep.subr.bf16.mxu0 %v8140
    %8404 = vmatpush1.bf16.msra.mxu0 %v8139
    %8405 = vmatprep.subr.bf16.mxu0 %v8136
    %8406 = vmatpush1.bf16.msra.mxu0 %v8135
    %8407 = vmatprep.subr.bf16.mxu0 %v8196
    %8408 = vmatpush2.bf16.msra.mxu0 %v8195
    %8409 = vmatprep.subr.bf16.mxu0 %v8192
    %8410 = vmatpush2.bf16.msra.mxu0 %v8191
    %8411 = vmatprep.subr.bf16.mxu0 %v8188
    %8412 = vmatpush2.bf16.msra.mxu0 %v8187
    %8413 = vmatprep.subr.bf16.mxu0 %v8184
    %8414 = vmatpush2.bf16.msra.mxu0 %v8183
    %8415 = vmatprep.subr.bf16.mxu0 %v8180
    %8416 = vmatpush2.bf16.msra.mxu0 %v8179
    %8417 = vmatprep.subr.bf16.mxu0 %v8176
    %8418 = vmatpush2.bf16.msra.mxu0 %v8175
    %8419 = vmatprep.subr.bf16.mxu0 %v8172
    %8420 = vmatpush2.bf16.msra.mxu0 %v8171
    %8421 = vmatprep.subr.bf16.mxu0 %v8168
    %8422 = vmatpush2.bf16.msra.mxu0 %v8167
    %8423 = vmatprep.mubr.bf16.mxu0 %v7727
    %8424 = vmatmul.mubr.bf16.gmra.mxu0 %v7726
    %v8425 = vpop.f32.mrf.mxu0
    %v8426 = vadd.f32 %v7734, %v8425
    %v8427 = vpop.f32.mrf.mxu0
    %v8428 = vadd.f32 %v7738, %v8427
    %v8429 = vpop.f32.mrf.mxu0
    %v8430 = vpop.f32.mrf.mxu0
    %8431 = vdwg.mxu0
    %8432 = vmatprep.subr.bf16.mxu0 %v8228
    %8433 = vmatpush1.bf16.msra.mxu0 %v8227
    %8434 = vmatprep.subr.bf16.mxu0 %v8224
    %8435 = vmatpush1.bf16.msra.mxu0 %v8223
    %8436 = vmatprep.subr.bf16.mxu0 %v8220
    %8437 = vmatpush1.bf16.msra.mxu0 %v8219
    %8438 = vmatprep.subr.bf16.mxu0 %v8216
    %8439 = vmatpush1.bf16.msra.mxu0 %v8215
    %8440 = vmatprep.subr.bf16.mxu0 %v8212
    %8441 = vmatpush1.bf16.msra.mxu0 %v8211
    %8442 = vmatprep.subr.bf16.mxu0 %v8208
    %8443 = vmatpush1.bf16.msra.mxu0 %v8207
    %8444 = vmatprep.subr.bf16.mxu0 %v8204
    %8445 = vmatpush1.bf16.msra.mxu0 %v8203
    %8446 = vmatprep.subr.bf16.mxu0 %v8200
    %8447 = vmatpush1.bf16.msra.mxu0 %v8199
    %8448 = vmatprep.subr.bf16.mxu0 %v8260
    %8449 = vmatpush2.bf16.msra.mxu0 %v8259
    %8450 = vmatprep.subr.bf16.mxu0 %v8256
    %8451 = vmatpush2.bf16.msra.mxu0 %v8255
    %8452 = vmatprep.subr.bf16.mxu0 %v8252
    %8453 = vmatpush2.bf16.msra.mxu0 %v8251
    %8454 = vmatprep.subr.bf16.mxu0 %v8248
    %8455 = vmatpush2.bf16.msra.mxu0 %v8247
    %8456 = vmatprep.subr.bf16.mxu0 %v8244
    %8457 = vmatpush2.bf16.msra.mxu0 %v8243
    %8458 = vmatprep.subr.bf16.mxu0 %v8240
    %8459 = vmatpush2.bf16.msra.mxu0 %v8239
    %8460 = vmatprep.subr.bf16.mxu0 %v8236
    %8461 = vmatpush2.bf16.msra.mxu0 %v8235
    %8462 = vmatprep.subr.bf16.mxu0 %v8232
    %8463 = vmatpush2.bf16.msra.mxu0 %v8231
    %8464 = vmatprep.mubr.bf16.mxu0 %v7729
    %8465 = vmatmul.mubr.bf16.gmra.mxu0 %v7728
    %v8466 = vpop.f32.mrf.mxu0
    %v8467 = vadd.f32 %v8426, %v8466
    %v8468 = vpop.f32.mrf.mxu0
    %v8469 = vadd.f32 %v8428, %v8468
    %v8470 = vpop.f32.mrf.mxu0
    %v8471 = vpop.f32.mrf.mxu0
    %8472 = vdwg.mxu0
    %8473 = vmatprep.subr.bf16.mxu0 %v8166
    %8474 = vmatpush1.bf16.msra.mxu0 %v8165
    %8475 = vmatprep.subr.bf16.mxu0 %v8162
    %8476 = vmatpush1.bf16.msra.mxu0 %v8161
    %8477 = vmatprep.subr.bf16.mxu0 %v8158
    %8478 = vmatpush1.bf16.msra.mxu0 %v8157
    %8479 = vmatprep.subr.bf16.mxu0 %v8154
    %8480 = vmatpush1.bf16.msra.mxu0 %v8153
    %8481 = vmatprep.subr.bf16.mxu0 %v8150
    %8482 = vmatpush1.bf16.msra.mxu0 %v8149
    %8483 = vmatprep.subr.bf16.mxu0 %v8146
    %8484 = vmatpush1.bf16.msra.mxu0 %v8145
    %8485 = vmatprep.subr.bf16.mxu0 %v8142
    %8486 = vmatpush1.bf16.msra.mxu0 %v8141
    %8487 = vmatprep.subr.bf16.mxu0 %v8138
    %8488 = vmatpush1.bf16.msra.mxu0 %v8137
    %8489 = vmatprep.subr.bf16.mxu0 %v8198
    %8490 = vmatpush2.bf16.msra.mxu0 %v8197
    %8491 = vmatprep.subr.bf16.mxu0 %v8194
    %8492 = vmatpush2.bf16.msra.mxu0 %v8193
    %8493 = vmatprep.subr.bf16.mxu0 %v8190
    %8494 = vmatpush2.bf16.msra.mxu0 %v8189
    %8495 = vmatprep.subr.bf16.mxu0 %v8186
    %8496 = vmatpush2.bf16.msra.mxu0 %v8185
    %8497 = vmatprep.subr.bf16.mxu0 %v8182
    %8498 = vmatpush2.bf16.msra.mxu0 %v8181
    %8499 = vmatprep.subr.bf16.mxu0 %v8178
    %8500 = vmatpush2.bf16.msra.mxu0 %v8177
    %8501 = vmatprep.subr.bf16.mxu0 %v8174
    %8502 = vmatpush2.bf16.msra.mxu0 %v8173
    %8503 = vmatprep.subr.bf16.mxu0 %v8170
    %8504 = vmatpush2.bf16.msra.mxu0 %v8169
    %8505 = vmatprep.mubr.bf16.mxu0 %v7727
    %8506 = vmatmul.mubr.bf16.gmra.mxu0 %v7726
    %v8507 = vpop.f32.mrf.mxu0
    %v8508 = vadd.f32 %v7742, %v8507
    %v8509 = vpop.f32.mrf.mxu0
    %v8510 = vadd.f32 %v7746, %v8509
    %v8511 = vpop.f32.mrf.mxu0
    %v8512 = vpop.f32.mrf.mxu0
    %8513 = vdwg.mxu0
    %8514 = vmatprep.subr.bf16.mxu0 %v8230
    %8515 = vmatpush1.bf16.msra.mxu0 %v8229
    %8516 = vmatprep.subr.bf16.mxu0 %v8226
    %8517 = vmatpush1.bf16.msra.mxu0 %v8225
    %8518 = vmatprep.subr.bf16.mxu0 %v8222
    %8519 = vmatpush1.bf16.msra.mxu0 %v8221
    %8520 = vmatprep.subr.bf16.mxu0 %v8218
    %8521 = vmatpush1.bf16.msra.mxu0 %v8217
    %8522 = vmatprep.subr.bf16.mxu0 %v8214
    %8523 = vmatpush1.bf16.msra.mxu0 %v8213
    %8524 = vmatprep.subr.bf16.mxu0 %v8210
    %8525 = vmatpush1.bf16.msra.mxu0 %v8209
    %8526 = vmatprep.subr.bf16.mxu0 %v8206
    %8527 = vmatpush1.bf16.msra.mxu0 %v8205
    %8528 = vmatprep.subr.bf16.mxu0 %v8202
    %8529 = vmatpush1.bf16.msra.mxu0 %v8201
    %8530 = vmatprep.subr.bf16.mxu0 %v8262
    %8531 = vmatpush2.bf16.msra.mxu0 %v8261
    %8532 = vmatprep.subr.bf16.mxu0 %v8258
    %8533 = vmatpush2.bf16.msra.mxu0 %v8257
    %8534 = vmatprep.subr.bf16.mxu0 %v8254
    %8535 = vmatpush2.bf16.msra.mxu0 %v8253
    %8536 = vmatprep.subr.bf16.mxu0 %v8250
    %8537 = vmatpush2.bf16.msra.mxu0 %v8249
    %8538 = vmatprep.subr.bf16.mxu0 %v8246
    %8539 = vmatpush2.bf16.msra.mxu0 %v8245
    %8540 = vmatprep.subr.bf16.mxu0 %v8242
    %8541 = vmatpush2.bf16.msra.mxu0 %v8241
    %8542 = vmatprep.subr.bf16.mxu0 %v8238
    %8543 = vmatpush2.bf16.msra.mxu0 %v8237
    %8544 = vmatprep.subr.bf16.mxu0 %v8234
    %8545 = vmatpush2.bf16.msra.mxu0 %v8233
    %8546 = vmatprep.mubr.bf16.mxu0 %v7729
    %8547 = vmatmul.mubr.bf16.gmra.mxu0 %v7728
    %v8548 = vpop.f32.mrf.mxu0
    %v8549 = vadd.f32 %v8508, %v8548
    %v8550 = vpop.f32.mrf.mxu0
    %v8551 = vadd.f32 %v8510, %v8550
    %v8552 = vpop.f32.mrf.mxu0
    %v8553 = vpop.f32.mrf.mxu0
    %8554 = vdwg.mxu0
    %v8555 = vmax.f32 %v8467, 0.0
    %v8556 = vmax.f32 %v8469, 0.0
    %v8557 = vmax.f32 %v8549, 0.0
    %v8558 = vmax.f32 %v8551, 0.0
    %v8559 = vpack.c.bf16 %v8555, %v8555
    %v8560 = vpack.c.bf16 %v8556, %v8556
    %v8561 = vpack.c.bf16 %v8557, %v8557
    %v8562 = vpack.c.bf16 %v8558, %v8558
    %8563 = vmatprep.subr.bf16.mxu0 %v8164
    %8564 = vmatpush1.bf16.msra.mxu0 %v8163
    %8565 = vmatprep.subr.bf16.mxu0 %v8160
    %8566 = vmatpush1.bf16.msra.mxu0 %v8159
    %8567 = vmatprep.subr.bf16.mxu0 %v8156
    %8568 = vmatpush1.bf16.msra.mxu0 %v8155
    %8569 = vmatprep.subr.bf16.mxu0 %v8152
    %8570 = vmatpush1.bf16.msra.mxu0 %v8151
    %8571 = vmatprep.subr.bf16.mxu0 %v8148
    %8572 = vmatpush1.bf16.msra.mxu0 %v8147
    %8573 = vmatprep.subr.bf16.mxu0 %v8144
    %8574 = vmatpush1.bf16.msra.mxu0 %v8143
    %8575 = vmatprep.subr.bf16.mxu0 %v8140
    %8576 = vmatpush1.bf16.msra.mxu0 %v8139
    %8577 = vmatprep.subr.bf16.mxu0 %v8136
    %8578 = vmatpush1.bf16.msra.mxu0 %v8135
    %8579 = vmatprep.subr.bf16.mxu0 %v8196
    %8580 = vmatpush2.bf16.msra.mxu0 %v8195
    %8581 = vmatprep.subr.bf16.mxu0 %v8192
    %8582 = vmatpush2.bf16.msra.mxu0 %v8191
    %8583 = vmatprep.subr.bf16.mxu0 %v8188
    %8584 = vmatpush2.bf16.msra.mxu0 %v8187
    %8585 = vmatprep.subr.bf16.mxu0 %v8184
    %8586 = vmatpush2.bf16.msra.mxu0 %v8183
    %8587 = vmatprep.subr.bf16.mxu0 %v8180
    %8588 = vmatpush2.bf16.msra.mxu0 %v8179
    %8589 = vmatprep.subr.bf16.mxu0 %v8176
    %8590 = vmatpush2.bf16.msra.mxu0 %v8175
    %8591 = vmatprep.subr.bf16.mxu0 %v8172
    %8592 = vmatpush2.bf16.msra.mxu0 %v8171
    %8593 = vmatprep.subr.bf16.mxu0 %v8168
    %8594 = vmatpush2.bf16.msra.mxu0 %v8167
    %8595 = vmatprep.mubr.bf16.mxu0 %v8560
    %8596 = vmatmul.mubr.bf16.gmra.mxu0 %v8559
    %v8597 = vpop.f32.mrf.mxu0
    %v8598 = vadd.f32 %v7734, %v8597
    %v8599 = vpop.f32.mrf.mxu0
    %v8600 = vadd.f32 %v7738, %v8599
    %v8601 = vpop.f32.mrf.mxu0
    %v8602 = vpop.f32.mrf.mxu0
    %8603 = vdwg.mxu0
    %8604 = vmatprep.subr.bf16.mxu0 %v8228
    %8605 = vmatpush1.bf16.msra.mxu0 %v8227
    %8606 = vmatprep.subr.bf16.mxu0 %v8224
    %8607 = vmatpush1.bf16.msra.mxu0 %v8223
    %8608 = vmatprep.subr.bf16.mxu0 %v8220
    %8609 = vmatpush1.bf16.msra.mxu0 %v8219
    %8610 = vmatprep.subr.bf16.mxu0 %v8216
    %8611 = vmatpush1.bf16.msra.mxu0 %v8215
    %8612 = vmatprep.subr.bf16.mxu0 %v8212
    %8613 = vmatpush1.bf16.msra.mxu0 %v8211
    %8614 = vmatprep.subr.bf16.mxu0 %v8208
    %8615 = vmatpush1.bf16.msra.mxu0 %v8207
    %8616 = vmatprep.subr.bf16.mxu0 %v8204
    %8617 = vmatpush1.bf16.msra.mxu0 %v8203
    %8618 = vmatprep.subr.bf16.mxu0 %v8200
    %8619 = vmatpush1.bf16.msra.mxu0 %v8199
    %8620 = vmatprep.subr.bf16.mxu0 %v8260
    %8621 = vmatpush2.bf16.msra.mxu0 %v8259
    %8622 = vmatprep.subr.bf16.mxu0 %v8256
    %8623 = vmatpush2.bf16.msra.mxu0 %v8255
    %8624 = vmatprep.subr.bf16.mxu0 %v8252
    %8625 = vmatpush2.bf16.msra.mxu0 %v8251
    %8626 = vmatprep.subr.bf16.mxu0 %v8248
    %8627 = vmatpush2.bf16.msra.mxu0 %v8247
    %8628 = vmatprep.subr.bf16.mxu0 %v8244
    %8629 = vmatpush2.bf16.msra.mxu0 %v8243
    %8630 = vmatprep.subr.bf16.mxu0 %v8240
    %8631 = vmatpush2.bf16.msra.mxu0 %v8239
    %8632 = vmatprep.subr.bf16.mxu0 %v8236
    %8633 = vmatpush2.bf16.msra.mxu0 %v8235
    %8634 = vmatprep.subr.bf16.mxu0 %v8232
    %8635 = vmatpush2.bf16.msra.mxu0 %v8231
    %8636 = vmatprep.mubr.bf16.mxu0 %v8562
    %8637 = vmatmul.mubr.bf16.gmra.mxu0 %v8561
    %v8638 = vpop.f32.mrf.mxu0
    %v8639 = vadd.f32 %v8598, %v8638
    %v8640 = vpop.f32.mrf.mxu0
    %v8641 = vadd.f32 %v8600, %v8640
    %v8642 = vpop.f32.mrf.mxu0
    %v8643 = vpop.f32.mrf.mxu0
    %8644 = vdwg.mxu0
    %8645 = vmatprep.subr.bf16.mxu0 %v8166
    %8646 = vmatpush1.bf16.msra.mxu0 %v8165
    %8647 = vmatprep.subr.bf16.mxu0 %v8162
    %8648 = vmatpush1.bf16.msra.mxu0 %v8161
    %8649 = vmatprep.subr.bf16.mxu0 %v8158
    %8650 = vmatpush1.bf16.msra.mxu0 %v8157
    %8651 = vmatprep.subr.bf16.mxu0 %v8154
    %8652 = vmatpush1.bf16.msra.mxu0 %v8153
    %8653 = vmatprep.subr.bf16.mxu0 %v8150
    %8654 = vmatpush1.bf16.msra.mxu0 %v8149
    %8655 = vmatprep.subr.bf16.mxu0 %v8146
    %8656 = vmatpush1.bf16.msra.mxu0 %v8145
    %8657 = vmatprep.subr.bf16.mxu0 %v8142
    %8658 = vmatpush1.bf16.msra.mxu0 %v8141
    %8659 = vmatprep.subr.bf16.mxu0 %v8138
    %8660 = vmatpush1.bf16.msra.mxu0 %v8137
    %8661 = vmatprep.subr.bf16.mxu0 %v8198
    %8662 = vmatpush2.bf16.msra.mxu0 %v8197
    %8663 = vmatprep.subr.bf16.mxu0 %v8194
    %8664 = vmatpush2.bf16.msra.mxu0 %v8193
    %8665 = vmatprep.subr.bf16.mxu0 %v8190
    %8666 = vmatpush2.bf16.msra.mxu0 %v8189
    %8667 = vmatprep.subr.bf16.mxu0 %v8186
    %8668 = vmatpush2.bf16.msra.mxu0 %v8185
    %8669 = vmatprep.subr.bf16.mxu0 %v8182
    %8670 = vmatpush2.bf16.msra.mxu0 %v8181
    %8671 = vmatprep.subr.bf16.mxu0 %v8178
    %8672 = vmatpush2.bf16.msra.mxu0 %v8177
    %8673 = vmatprep.subr.bf16.mxu0 %v8174
    %8674 = vmatpush2.bf16.msra.mxu0 %v8173
    %8675 = vmatprep.subr.bf16.mxu0 %v8170
    %8676 = vmatpush2.bf16.msra.mxu0 %v8169
    %8677 = vmatprep.mubr.bf16.mxu0 %v8560
    %8678 = vmatmul.mubr.bf16.gmra.mxu0 %v8559
    %v8679 = vpop.f32.mrf.mxu0
    %v8680 = vadd.f32 %v7742, %v8679
    %v8681 = vpop.f32.mrf.mxu0
    %v8682 = vadd.f32 %v7746, %v8681
    %v8683 = vpop.f32.mrf.mxu0
    %v8684 = vpop.f32.mrf.mxu0
    %8685 = vdwg.mxu0
    %8686 = vmatprep.subr.bf16.mxu0 %v8230
    %8687 = vmatpush1.bf16.msra.mxu0 %v8229
    %8688 = vmatprep.subr.bf16.mxu0 %v8226
    %8689 = vmatpush1.bf16.msra.mxu0 %v8225
    %8690 = vmatprep.subr.bf16.mxu0 %v8222
    %8691 = vmatpush1.bf16.msra.mxu0 %v8221
    %8692 = vmatprep.subr.bf16.mxu0 %v8218
    %8693 = vmatpush1.bf16.msra.mxu0 %v8217
    %8694 = vmatprep.subr.bf16.mxu0 %v8214
    %8695 = vmatpush1.bf16.msra.mxu0 %v8213
    %8696 = vmatprep.subr.bf16.mxu0 %v8210
    %8697 = vmatpush1.bf16.msra.mxu0 %v8209
    %8698 = vmatprep.subr.bf16.mxu0 %v8206
    %8699 = vmatpush1.bf16.msra.mxu0 %v8205
    %8700 = vmatprep.subr.bf16.mxu0 %v8202
    %8701 = vmatpush1.bf16.msra.mxu0 %v8201
    %8702 = vmatprep.subr.bf16.mxu0 %v8262
    %8703 = vmatpush2.bf16.msra.mxu0 %v8261
    %8704 = vmatprep.subr.bf16.mxu0 %v8258
    %8705 = vmatpush2.bf16.msra.mxu0 %v8257
    %8706 = vmatprep.subr.bf16.mxu0 %v8254
    %8707 = vmatpush2.bf16.msra.mxu0 %v8253
    %8708 = vmatprep.subr.bf16.mxu0 %v8250
    %8709 = vmatpush2.bf16.msra.mxu0 %v8249
    %8710 = vmatprep.subr.bf16.mxu0 %v8246
    %8711 = vmatpush2.bf16.msra.mxu0 %v8245
    %8712 = vmatprep.subr.bf16.mxu0 %v8242
    %8713 = vmatpush2.bf16.msra.mxu0 %v8241
    %8714 = vmatprep.subr.bf16.mxu0 %v8238
    %8715 = vmatpush2.bf16.msra.mxu0 %v8237
    %8716 = vmatprep.subr.bf16.mxu0 %v8234
    %8717 = vmatpush2.bf16.msra.mxu0 %v8233
    %8718 = vmatprep.mubr.bf16.mxu0 %v8562
    %8719 = vmatmul.mubr.bf16.gmra.mxu0 %v8561
    %v8720 = vpop.f32.mrf.mxu0
    %v8721 = vadd.f32 %v8680, %v8720
    %v8722 = vpop.f32.mrf.mxu0
    %v8723 = vadd.f32 %v8682, %v8722
    %v8724 = vpop.f32.mrf.mxu0
    %v8725 = vpop.f32.mrf.mxu0
    %8726 = vdwg.mxu0
    %v8727 = vmax.f32 %v8639, 0.0
    %v8728 = vmax.f32 %v8641, 0.0
    %v8729 = vmax.f32 %v8721, 0.0
    %v8730 = vmax.f32 %v8723, 0.0
    %v8731 = vld [vmem:[#allocation15] sm:$0xf]
    %v8732 = vld [vmem:[#allocation15 + $0x4] sm:$0xf]
    %v8733 = vld [vmem:[#allocation15 + $0x8] sm:$0xf]
    %v8734 = vld [vmem:[#allocation15 + $0xc] sm:$0xf]
    %v8735 = vld [vmem:[#allocation15 + $0x10] sm:$0xf]
    %v8736 = vld [vmem:[#allocation15 + $0x14] sm:$0xf]
    %v8737 = vld [vmem:[#allocation15 + $0x18] sm:$0xf]
    %v8738 = vld [vmem:[#allocation15 + $0x1c] sm:$0xf]
    %v8739 = vld [vmem:[#allocation15 + $0x20] sm:$0xf]
    %v8740 = vld [vmem:[#allocation15 + $0x24] sm:$0xf]
    %v8741 = vld [vmem:[#allocation15 + $0x28] sm:$0xf]
    %v8742 = vld [vmem:[#allocation15 + $0x2c] sm:$0xf]
    %v8743 = vld [vmem:[#allocation15 + $0x30] sm:$0xf]
    %v8744 = vld [vmem:[#allocation15 + $0x34] sm:$0xf]
    %v8745 = vld [vmem:[#allocation15 + $0x38] sm:$0xf]
    %v8746 = vld [vmem:[#allocation15 + $0x3c] sm:$0xf]
    %v8747 = vld [vmem:[#allocation15 + $0x40] sm:$0xf]
    %v8748 = vld [vmem:[#allocation15 + $0x44] sm:$0xf]
    %v8749 = vld [vmem:[#allocation15 + $0x48] sm:$0xf]
    %v8750 = vld [vmem:[#allocation15 + $0x4c] sm:$0xf]
    %v8751 = vld [vmem:[#allocation15 + $0x50] sm:$0xf]
    %v8752 = vld [vmem:[#allocation15 + $0x54] sm:$0xf]
    %v8753 = vld [vmem:[#allocation15 + $0x58] sm:$0xf]
    %v8754 = vld [vmem:[#allocation15 + $0x5c] sm:$0xf]
    %v8755 = vld [vmem:[#allocation15 + $0x60] sm:$0xf]
    %v8756 = vld [vmem:[#allocation15 + $0x64] sm:$0xf]
    %v8757 = vld [vmem:[#allocation15 + $0x68] sm:$0xf]
    %v8758 = vld [vmem:[#allocation15 + $0x6c] sm:$0xf]
    %v8759 = vld [vmem:[#allocation15 + $0x70] sm:$0xf]
    %v8760 = vld [vmem:[#allocation15 + $0x74] sm:$0xf]
    %v8761 = vld [vmem:[#allocation15 + $0x78] sm:$0xf]
    %v8762 = vld [vmem:[#allocation15 + $0x7c] sm:$0xf]
    %v8763 = vld [vmem:[#allocation15 + $0x80] sm:$0xf]
    %v8764 = vld [vmem:[#allocation15 + $0x84] sm:$0xf]
    %v8765 = vld [vmem:[#allocation15 + $0x88] sm:$0xf]
    %v8766 = vld [vmem:[#allocation15 + $0x8c] sm:$0xf]
    %v8767 = vld [vmem:[#allocation15 + $0x90] sm:$0xf]
    %v8768 = vld [vmem:[#allocation15 + $0x94] sm:$0xf]
    %v8769 = vld [vmem:[#allocation15 + $0x98] sm:$0xf]
    %v8770 = vld [vmem:[#allocation15 + $0x9c] sm:$0xf]
    %v8771 = vld [vmem:[#allocation15 + $0xa0] sm:$0xf]
    %v8772 = vld [vmem:[#allocation15 + $0xa4] sm:$0xf]
    %v8773 = vld [vmem:[#allocation15 + $0xa8] sm:$0xf]
    %v8774 = vld [vmem:[#allocation15 + $0xac] sm:$0xf]
    %v8775 = vld [vmem:[#allocation15 + $0xb0] sm:$0xf]
    %v8776 = vld [vmem:[#allocation15 + $0xb4] sm:$0xf]
    %v8777 = vld [vmem:[#allocation15 + $0xb8] sm:$0xf]
    %v8778 = vld [vmem:[#allocation15 + $0xbc] sm:$0xf]
    %v8779 = vld [vmem:[#allocation15 + $0xc0] sm:$0xf]
    %v8780 = vld [vmem:[#allocation15 + $0xc4] sm:$0xf]
    %v8781 = vld [vmem:[#allocation15 + $0xc8] sm:$0xf]
    %v8782 = vld [vmem:[#allocation15 + $0xcc] sm:$0xf]
    %v8783 = vld [vmem:[#allocation15 + $0xd0] sm:$0xf]
    %v8784 = vld [vmem:[#allocation15 + $0xd4] sm:$0xf]
    %v8785 = vld [vmem:[#allocation15 + $0xd8] sm:$0xf]
    %v8786 = vld [vmem:[#allocation15 + $0xdc] sm:$0xf]
    %v8787 = vld [vmem:[#allocation15 + $0xe0] sm:$0xf]
    %v8788 = vld [vmem:[#allocation15 + $0xe4] sm:$0xf]
    %v8789 = vld [vmem:[#allocation15 + $0xe8] sm:$0xf]
    %v8790 = vld [vmem:[#allocation15 + $0xec] sm:$0xf]
    %v8791 = vld [vmem:[#allocation15 + $0xf0] sm:$0xf]
    %v8792 = vld [vmem:[#allocation15 + $0xf4] sm:$0xf]
    %v8793 = vld [vmem:[#allocation15 + $0xf8] sm:$0xf]
    %v8794 = vld [vmem:[#allocation15 + $0xfc] sm:$0xf]
    %v8795 = vld [vmem:[#allocation16] sm:$0x1]
    %vm8796 = vcmask 1043456
    %v8797 = vsel %vm8796, %v8727, 0.0
    %v8798 = vrot.slane %v8797, 4
    %v8799 = vadd.f32 %v8797, %v8798
    %v8800 = vrot.slane %v8799, 2
    %v8801 = vadd.f32 %v8799, %v8800
    %v8802 = vrot.slane %v8801, 1
    %v8803 = vadd.f32 %v8801, %v8802
    %v8804 = vsel %vm8796, %v8728, 0.0
    %v8805 = vrot.slane %v8804, 4
    %v8806 = vadd.f32 %v8804, %v8805
    %v8807 = vrot.slane %v8806, 2
    %v8808 = vadd.f32 %v8806, %v8807
    %v8809 = vrot.slane %v8808, 1
    %v8810 = vadd.f32 %v8808, %v8809
    %v8811 = vsel %vm8796, %v8729, 0.0
    %v8812 = vrot.slane %v8811, 4
    %v8813 = vadd.f32 %v8811, %v8812
    %v8814 = vrot.slane %v8813, 2
    %v8815 = vadd.f32 %v8813, %v8814
    %v8816 = vrot.slane %v8815, 1
    %v8817 = vadd.f32 %v8815, %v8816
    %v8818 = vsel %vm8796, %v8730, 0.0
    %v8819 = vrot.slane %v8818, 4
    %v8820 = vadd.f32 %v8818, %v8819
    %v8821 = vrot.slane %v8820, 2
    %v8822 = vadd.f32 %v8820, %v8821
    %v8823 = vrot.slane %v8822, 1
    %v8824 = vadd.f32 %v8822, %v8823
    %v8825 = vrcp.pop 4.0
    %v8826 = vmul.f32 %v8803, %v8825
    %v8827 = vmul.f32 %v8810, %v8825
    %v8828 = vmul.f32 %v8817, %v8825
    %v8829 = vmul.f32 %v8824, %v8825
    %v8830 = vpack.c.bf16 %v8826, %v8826
    %v8831 = vpack.c.bf16 %v8827, %v8827
    %v8832 = vpack.c.bf16 %v8828, %v8828
    %v8833 = vpack.c.bf16 %v8829, %v8829
    %v8898 = vunpack.c.l.b16 %v8731
    %v8899 = vunpack.c.l.b16 %v8732
    %v8900 = vunpack.c.l.b16 %v8733
    %v8901 = vunpack.c.l.b16 %v8734
    %v8902 = vunpack.c.l.b16 %v8735
    %v8903 = vunpack.c.l.b16 %v8736
    %v8904 = vunpack.c.l.b16 %v8737
    %v8905 = vunpack.c.l.b16 %v8738
    %v8906 = vunpack.c.l.b16 %v8739
    %v8907 = vunpack.c.l.b16 %v8740
    %v8908 = vunpack.c.l.b16 %v8741
    %v8909 = vunpack.c.l.b16 %v8742
    %v8910 = vunpack.c.l.b16 %v8743
    %v8911 = vunpack.c.l.b16 %v8744
    %v8912 = vunpack.c.l.b16 %v8745
    %v8913 = vunpack.c.l.b16 %v8746
    %v8914 = vunpack.c.l.b16 %v8747
    %v8915 = vunpack.c.l.b16 %v8748
    %v8916 = vunpack.c.l.b16 %v8749
    %v8917 = vunpack.c.l.b16 %v8750
    %v8918 = vunpack.c.l.b16 %v8751
    %v8919 = vunpack.c.l.b16 %v8752
    %v8920 = vunpack.c.l.b16 %v8753
    %v8921 = vunpack.c.l.b16 %v8754
    %v8922 = vunpack.c.l.b16 %v8755
    %v8923 = vunpack.c.l.b16 %v8756
    %v8924 = vunpack.c.l.b16 %v8757
    %v8925 = vunpack.c.l.b16 %v8758
    %v8926 = vunpack.c.l.b16 %v8759
    %v8927 = vunpack.c.l.b16 %v8760
    %v8928 = vunpack.c.l.b16 %v8761
    %v8929 = vunpack.c.l.b16 %v8762
    %v8930 = vunpack.c.l.b16 %v8763
    %v8931 = vunpack.c.l.b16 %v8764
    %v8932 = vunpack.c.l.b16 %v8765
    %v8933 = vunpack.c.l.b16 %v8766
    %v8934 = vunpack.c.l.b16 %v8767
    %v8935 = vunpack.c.l.b16 %v8768
    %v8936 = vunpack.c.l.b16 %v8769
    %v8937 = vunpack.c.l.b16 %v8770
    %v8938 = vunpack.c.l.b16 %v8771
    %v8939 = vunpack.c.l.b16 %v8772
    %v8940 = vunpack.c.l.b16 %v8773
    %v8941 = vunpack.c.l.b16 %v8774
    %v8942 = vunpack.c.l.b16 %v8775
    %v8943 = vunpack.c.l.b16 %v8776
    %v8944 = vunpack.c.l.b16 %v8777
    %v8945 = vunpack.c.l.b16 %v8778
    %v8946 = vunpack.c.l.b16 %v8779
    %v8947 = vunpack.c.l.b16 %v8780
    %v8948 = vunpack.c.l.b16 %v8781
    %v8949 = vunpack.c.l.b16 %v8782
    %v8950 = vunpack.c.l.b16 %v8783
    %v8951 = vunpack.c.l.b16 %v8784
    %v8952 = vunpack.c.l.b16 %v8785
    %v8953 = vunpack.c.l.b16 %v8786
    %v8954 = vunpack.c.l.b16 %v8787
    %v8955 = vunpack.c.l.b16 %v8788
    %v8956 = vunpack.c.l.b16 %v8789
    %v8957 = vunpack.c.l.b16 %v8790
    %v8958 = vunpack.c.l.b16 %v8791
    %v8959 = vunpack.c.l.b16 %v8792
    %v8960 = vunpack.c.l.b16 %v8793
    %v8961 = vunpack.c.l.b16 %v8794
    %v8962 = vpack.c.b16 %v8899, %v8898
    %v8963 = vpack.c.b16 %v8901, %v8900
    %v8964 = vpack.c.b16 %v8903, %v8902
    %v8965 = vpack.c.b16 %v8905, %v8904
    %v8966 = vpack.c.b16 %v8907, %v8906
    %v8967 = vpack.c.b16 %v8909, %v8908
    %v8968 = vpack.c.b16 %v8911, %v8910
    %v8969 = vpack.c.b16 %v8913, %v8912
    %v8970 = vpack.c.b16 %v8915, %v8914
    %v8971 = vpack.c.b16 %v8917, %v8916
    %v8972 = vpack.c.b16 %v8919, %v8918
    %v8973 = vpack.c.b16 %v8921, %v8920
    %v8974 = vpack.c.b16 %v8923, %v8922
    %v8975 = vpack.c.b16 %v8925, %v8924
    %v8976 = vpack.c.b16 %v8927, %v8926
    %v8977 = vpack.c.b16 %v8929, %v8928
    %v8978 = vpack.c.b16 %v8931, %v8930
    %v8979 = vpack.c.b16 %v8933, %v8932
    %v8980 = vpack.c.b16 %v8935, %v8934
    %v8981 = vpack.c.b16 %v8937, %v8936
    %v8982 = vpack.c.b16 %v8939, %v8938
    %v8983 = vpack.c.b16 %v8941, %v8940
    %v8984 = vpack.c.b16 %v8943, %v8942
    %v8985 = vpack.c.b16 %v8945, %v8944
    %v8986 = vpack.c.b16 %v8947, %v8946
    %v8987 = vpack.c.b16 %v8949, %v8948
    %v8988 = vpack.c.b16 %v8951, %v8950
    %v8989 = vpack.c.b16 %v8953, %v8952
    %v8990 = vpack.c.b16 %v8955, %v8954
    %v8991 = vpack.c.b16 %v8957, %v8956
    %v8992 = vpack.c.b16 %v8959, %v8958
    %v8993 = vpack.c.b16 %v8961, %v8960
    %9026 = vmatprep.subr.bf16.mxu0 0
    %9027 = vmatpush1.bf16.msra.mxu0 %v8969
    %9028 = vmatprep.subr.bf16.mxu0 0
    %9029 = vmatpush1.bf16.msra.mxu0 %v8968
    %9030 = vmatprep.subr.bf16.mxu0 0
    %9031 = vmatpush1.bf16.msra.mxu0 %v8967
    %9032 = vmatprep.subr.bf16.mxu0 0
    %9033 = vmatpush1.bf16.msra.mxu0 %v8966
    %9034 = vmatprep.subr.bf16.mxu0 0
    %9035 = vmatpush1.bf16.msra.mxu0 %v8965
    %9036 = vmatprep.subr.bf16.mxu0 0
    %9037 = vmatpush1.bf16.msra.mxu0 %v8964
    %9038 = vmatprep.subr.bf16.mxu0 0
    %9039 = vmatpush1.bf16.msra.mxu0 %v8963
    %9040 = vmatprep.subr.bf16.mxu0 0
    %9041 = vmatpush1.bf16.msra.mxu0 %v8962
    %9042 = vmatprep.subr.bf16.mxu0 0
    %9043 = vmatpush2.bf16.msra.mxu0 %v8977
    %9044 = vmatprep.subr.bf16.mxu0 0
    %9045 = vmatpush2.bf16.msra.mxu0 %v8976
    %9046 = vmatprep.subr.bf16.mxu0 0
    %9047 = vmatpush2.bf16.msra.mxu0 %v8975
    %9048 = vmatprep.subr.bf16.mxu0 0
    %9049 = vmatpush2.bf16.msra.mxu0 %v8974
    %9050 = vmatprep.subr.bf16.mxu0 0
    %9051 = vmatpush2.bf16.msra.mxu0 %v8973
    %9052 = vmatprep.subr.bf16.mxu0 0
    %9053 = vmatpush2.bf16.msra.mxu0 %v8972
    %9054 = vmatprep.subr.bf16.mxu0 0
    %9055 = vmatpush2.bf16.msra.mxu0 %v8971
    %9056 = vmatprep.subr.bf16.mxu0 0
    %9057 = vmatpush2.bf16.msra.mxu0 %v8970
    %9058 = vmatprep.mubr.bf16.mxu0 %v8831
    %9059 = vmatmul.mubr.bf16.gmra.mxu0 %v8830
    %v9060 = vpop.f32.mrf.mxu0
    %v9061 = vadd.f32 %v8795, %v9060
    %v9062 = vpop.f32.mrf.mxu0
    %v9063 = vpop.f32.mrf.mxu0
    %v9064 = vpop.f32.mrf.mxu0
    %9065 = vdwg.mxu0
    %9066 = vmatprep.subr.bf16.mxu0 0
    %9067 = vmatpush1.bf16.msra.mxu0 %v8985
    %9068 = vmatprep.subr.bf16.mxu0 0
    %9069 = vmatpush1.bf16.msra.mxu0 %v8984
    %9070 = vmatprep.subr.bf16.mxu0 0
    %9071 = vmatpush1.bf16.msra.mxu0 %v8983
    %9072 = vmatprep.subr.bf16.mxu0 0
    %9073 = vmatpush1.bf16.msra.mxu0 %v8982
    %9074 = vmatprep.subr.bf16.mxu0 0
    %9075 = vmatpush1.bf16.msra.mxu0 %v8981
    %9076 = vmatprep.subr.bf16.mxu0 0
    %9077 = vmatpush1.bf16.msra.mxu0 %v8980
    %9078 = vmatprep.subr.bf16.mxu0 0
    %9079 = vmatpush1.bf16.msra.mxu0 %v8979
    %9080 = vmatprep.subr.bf16.mxu0 0
    %9081 = vmatpush1.bf16.msra.mxu0 %v8978
    %9082 = vmatprep.subr.bf16.mxu0 0
    %9083 = vmatpush2.bf16.msra.mxu0 %v8993
    %9084 = vmatprep.subr.bf16.mxu0 0
    %9085 = vmatpush2.bf16.msra.mxu0 %v8992
    %9086 = vmatprep.subr.bf16.mxu0 0
    %9087 = vmatpush2.bf16.msra.mxu0 %v8991
    %9088 = vmatprep.subr.bf16.mxu0 0
    %9089 = vmatpush2.bf16.msra.mxu0 %v8990
    %9090 = vmatprep.subr.bf16.mxu0 0
    %9091 = vmatpush2.bf16.msra.mxu0 %v8989
    %9092 = vmatprep.subr.bf16.mxu0 0
    %9093 = vmatpush2.bf16.msra.mxu0 %v8988
    %9094 = vmatprep.subr.bf16.mxu0 0
    %9095 = vmatpush2.bf16.msra.mxu0 %v8987
    %9096 = vmatprep.subr.bf16.mxu0 0
    %9097 = vmatpush2.bf16.msra.mxu0 %v8986
    %9098 = vmatprep.mubr.bf16.mxu0 %v8833
    %9099 = vmatmul.mubr.bf16.gmra.mxu0 %v8832
    %v9100 = vpop.f32.mrf.mxu0
    %v9101 = vadd.f32 %v9061, %v9100
    %v9102 = vpop.f32.mrf.mxu0
    %v9103 = vpop.f32.mrf.mxu0
    %v9104 = vpop.f32.mrf.mxu0
    %9105 = vdwg.mxu0
    %vm9106 = vcmask 1040384
    %v9107 = vsel %vm9106, %v9101, -inf
    %9108 = vmax.xlane.f32.xlu0 %v9107
    %v9109 = vpop.xlane.xlu0 %9108
    %v9110 = vsub.f32 %v9101, %v9109
    %v9111 = vmul.f32 %v9110, 1.442695
    %v9112 = vpow.pop %v9111
    %v9113 = vsel %vm9106, %v9112, 0.0
    %9114 = vadd.xlane.f32.xlu0 %v9113
    %v9115 = vpop.xlane.xlu0 %9114
    %v9116 = vlog2.pop %v9115
    %v9117 = vmul.f32 %v9116, 0.6931472
    %v9118 = vsub.f32 %v9110, %v9117
    %9119 = vst [vmem:[#allocation18] sm:$0x1] %v9118
    %v9124 = vrot.slane %v8727, 4
    %v9125 = vrot.slane %v8728, 4
    %v9126 = vrot.slane %v8729, 4
    %v9127 = vrot.slane %v8730, 4
    %v9132 = vsel %vm8796, %v9124, 0.0
    %v9133 = vrot.slane %v9132, 4
    %v9134 = vadd.f32 %v9132, %v9133
    %v9135 = vrot.slane %v9134, 2
    %v9136 = vadd.f32 %v9134, %v9135
    %v9137 = vrot.slane %v9136, 1
    %v9138 = vadd.f32 %v9136, %v9137
    %v9139 = vsel %vm8796, %v9125, 0.0
    %v9140 = vrot.slane %v9139, 4
    %v9141 = vadd.f32 %v9139, %v9140
    %v9142 = vrot.slane %v9141, 2
    %v9143 = vadd.f32 %v9141, %v9142
    %v9144 = vrot.slane %v9143, 1
    %v9145 = vadd.f32 %v9143, %v9144
    %v9146 = vsel %vm8796, %v9126, 0.0
    %v9147 = vrot.slane %v9146, 4
    %v9148 = vadd.f32 %v9146, %v9147
    %v9149 = vrot.slane %v9148, 2
    %v9150 = vadd.f32 %v9148, %v9149
    %v9151 = vrot.slane %v9150, 1
    %v9152 = vadd.f32 %v9150, %v9151
    %v9153 = vsel %vm8796, %v9127, 0.0
    %v9154 = vrot.slane %v9153, 4
    %v9155 = vadd.f32 %v9153, %v9154
    %v9156 = vrot.slane %v9155, 2
    %v9157 = vadd.f32 %v9155, %v9156
    %v9158 = vrot.slane %v9157, 1
    %v9159 = vadd.f32 %v9157, %v9158
    %v9160 = vmul.f32 %v9138, %v8825
    %v9161 = vmul.f32 %v9145, %v8825
    %v9162 = vmul.f32 %v9152, %v8825
    %v9163 = vmul.f32 %v9159, %v8825
    %v9164 = vpack.c.bf16 %v9160, %v9160
    %v9165 = vpack.c.bf16 %v9161, %v9161
    %v9166 = vpack.c.bf16 %v9162, %v9162
    %v9167 = vpack.c.bf16 %v9163, %v9163
    %9168 = vmatprep.subr.bf16.mxu0 0
    %9169 = vmatpush1.bf16.msra.mxu0 %v8969
    %9170 = vmatprep.subr.bf16.mxu0 0
    %9171 = vmatpush1.bf16.msra.mxu0 %v8968
    %9172 = vmatprep.subr.bf16.mxu0 0
    %9173 = vmatpush1.bf16.msra.mxu0 %v8967
    %9174 = vmatprep.subr.bf16.mxu0 0
    %9175 = vmatpush1.bf16.msra.mxu0 %v8966
    %9176 = vmatprep.subr.bf16.mxu0 0
    %9177 = vmatpush1.bf16.msra.mxu0 %v8965
    %9178 = vmatprep.subr.bf16.mxu0 0
    %9179 = vmatpush1.bf16.msra.mxu0 %v8964
    %9180 = vmatprep.subr.bf16.mxu0 0
    %9181 = vmatpush1.bf16.msra.mxu0 %v8963
    %9182 = vmatprep.subr.bf16.mxu0 0
    %9183 = vmatpush1.bf16.msra.mxu0 %v8962
    %9184 = vmatprep.subr.bf16.mxu0 0
    %9185 = vmatpush2.bf16.msra.mxu0 %v8977
    %9186 = vmatprep.subr.bf16.mxu0 0
    %9187 = vmatpush2.bf16.msra.mxu0 %v8976
    %9188 = vmatprep.subr.bf16.mxu0 0
    %9189 = vmatpush2.bf16.msra.mxu0 %v8975
    %9190 = vmatprep.subr.bf16.mxu0 0
    %9191 = vmatpush2.bf16.msra.mxu0 %v8974
    %9192 = vmatprep.subr.bf16.mxu0 0
    %9193 = vmatpush2.bf16.msra.mxu0 %v8973
    %9194 = vmatprep.subr.bf16.mxu0 0
    %9195 = vmatpush2.bf16.msra.mxu0 %v8972
    %9196 = vmatprep.subr.bf16.mxu0 0
    %9197 = vmatpush2.bf16.msra.mxu0 %v8971
    %9198 = vmatprep.subr.bf16.mxu0 0
    %9199 = vmatpush2.bf16.msra.mxu0 %v8970
    %9200 = vmatprep.mubr.bf16.mxu0 %v9165
    %9201 = vmatmul.mubr.bf16.gmra.mxu0 %v9164
    %v9202 = vpop.f32.mrf.mxu0
    %v9203 = vadd.f32 %v8795, %v9202
    %v9204 = vpop.f32.mrf.mxu0
    %v9205 = vpop.f32.mrf.mxu0
    %v9206 = vpop.f32.mrf.mxu0
    %9207 = vdwg.mxu0
    %9208 = vmatprep.subr.bf16.mxu0 0
    %9209 = vmatpush1.bf16.msra.mxu0 %v8985
    %9210 = vmatprep.subr.bf16.mxu0 0
    %9211 = vmatpush1.bf16.msra.mxu0 %v8984
    %9212 = vmatprep.subr.bf16.mxu0 0
    %9213 = vmatpush1.bf16.msra.mxu0 %v8983
    %9214 = vmatprep.subr.bf16.mxu0 0
    %9215 = vmatpush1.bf16.msra.mxu0 %v8982
    %9216 = vmatprep.subr.bf16.mxu0 0
    %9217 = vmatpush1.bf16.msra.mxu0 %v8981
    %9218 = vmatprep.subr.bf16.mxu0 0
    %9219 = vmatpush1.bf16.msra.mxu0 %v8980
    %9220 = vmatprep.subr.bf16.mxu0 0
    %9221 = vmatpush1.bf16.msra.mxu0 %v8979
    %9222 = vmatprep.subr.bf16.mxu0 0
    %9223 = vmatpush1.bf16.msra.mxu0 %v8978
    %9224 = vmatprep.subr.bf16.mxu0 0
    %9225 = vmatpush2.bf16.msra.mxu0 %v8993
    %9226 = vmatprep.subr.bf16.mxu0 0
    %9227 = vmatpush2.bf16.msra.mxu0 %v8992
    %9228 = vmatprep.subr.bf16.mxu0 0
    %9229 = vmatpush2.bf16.msra.mxu0 %v8991
    %9230 = vmatprep.subr.bf16.mxu0 0
    %9231 = vmatpush2.bf16.msra.mxu0 %v8990
    %9232 = vmatprep.subr.bf16.mxu0 0
    %9233 = vmatpush2.bf16.msra.mxu0 %v8989
    %9234 = vmatprep.subr.bf16.mxu0 0
    %9235 = vmatpush2.bf16.msra.mxu0 %v8988
    %9236 = vmatprep.subr.bf16.mxu0 0
    %9237 = vmatpush2.bf16.msra.mxu0 %v8987
    %9238 = vmatprep.subr.bf16.mxu0 0
    %9239 = vmatpush2.bf16.msra.mxu0 %v8986
    %9240 = vmatprep.mubr.bf16.mxu0 %v9167
    %9241 = vmatmul.mubr.bf16.gmra.mxu0 %v9166
    %v9242 = vpop.f32.mrf.mxu0
    %v9243 = vadd.f32 %v9203, %v9242
    %v9244 = vpop.f32.mrf.mxu0
    %v9245 = vpop.f32.mrf.mxu0
    %v9246 = vpop.f32.mrf.mxu0
    %9247 = vdwg.mxu0
    %v9248 = vsel %vm9106, %v9243, -inf
    %9249 = vmax.xlane.f32.xlu0 %v9248
    %v9250 = vpop.xlane.xlu0 %9249
    %v9251 = vsub.f32 %v9243, %v9250
    %v9252 = vmul.f32 %v9251, 1.442695
    %v9253 = vpow.pop %v9252
    %v9254 = vsel %vm9106, %v9253, 0.0
    %9255 = vadd.xlane.f32.xlu0 %v9254
    %v9256 = vpop.xlane.xlu0 %9255
    %v9257 = vlog2.pop %v9256
    %v9258 = vmul.f32 %v9257, 0.6931472
    %v9259 = vsub.f32 %v9251, %v9258
    %9260 = vst [vmem:[#allocation18 + $0x1] sm:$0x1] %v9259
    // Predicated region
    $region70: #{m2_forward.1} parent=1 // pred_check
      _
    $region71: #{m2_forward.1} parent=1 // pred_check_branch
      %9262 = sbr.rel (0) target = $region73
    $region72: #{m2_forward.1} parent=1 // pred_region
      %s9264 = ssub.s32 32, 32
      %9265 = vsyncadd [#allocation6], %s9264
      %s9267 = sshll.u32 [#allocation18], 4
      %s9268 = int_to_ptr.vmem [resolvable:$true] %s9267
      %9270 = dma.vmem_to_hbm [thread:$0]  %s9268, 32, %s9, [#allocation6]
    $region73: #{m2_forward.1} parent=1 // pred_fallthru
      _
    // Predicated region
    $region74: #{m2_forward.1} parent=1 // pred_check
      _
    $region75: #{m2_forward.1} parent=1 // pred_check_branch
      %9272 = sbr.rel (0) target = $region77
    $region76: #{m2_forward.1} parent=1 // pred_region
      %9273 = dma.done [#allocation6], 32
    $region77: #{m2_forward.1} parent=1 // pred_fallthru
      _
    %9274 = vsyncpa [#allocation5], 1
    %9275 = vsyncpa [#allocation8], 1
    %9276 = vsyncpa [#allocation11], 1
    %9277 = vsyncpa [#allocation14], 1
    %9278 = vsyncpa [#allocation17], 1
    %9279 = vsyncpa [#allocation6], 1

</llo_original>
